<compile_context>
chip_gen: v5e
topology: v5e:2x2
jax: 0.10.0
libtpu: 0.0.40
codegen_flags: <defaults>
</compile_context>

<pallas_src>
import functools

import jax
import jax.numpy as jnp
from jax import lax
from jax.experimental import pallas as pl
from jax.experimental.pallas import tpu as pltpu

BN_EPS = 1e-5
_F32 = 4  # bytes per float32


def _vmem_limit(block_bytes):
    """Scoped-VMEM limit: room for double-buffered blocks, capped below v7x's
    64 MiB physical VMEM and never below the conservative 16 MiB default."""
    need = int(2.5 * block_bytes) + (2 << 20)
    return int(min(max(need, 16 << 20), 48 << 20))


# ----------------------------- Pallas kernels ------------------------------

def _lif_conv_kernel(x_ref, scale_ref, shift_ref, w_ref, b_ref,
                     y_ref, sum_ref, sq_ref,
                     v_scr, s_scr, q_scr, *, tau, v_th, n_t):
    """Per-channel affine (BN apply) + LIF time scan + 1x1-conv matmul + stats.

    One grid point = one lane tile (a batch element's tokens).  T runs as an
    unrolled in-kernel loop; membrane + per-lane stat sums live in VMEM
    scratch; the cross-lane stat reduction happens once in the epilogue.
    """
    v_scr[...] = jnp.zeros_like(v_scr)
    s_scr[...] = jnp.zeros_like(s_scr)
    q_scr[...] = jnp.zeros_like(q_scr)
    scale = scale_ref[...]
    shift = shift_ref[...]
    w = w_ref[...]
    b = b_ref[...]

    def step(t, carry):
        u = x_ref[t] * scale + shift                         # (Cin, Mt)
        v = v_scr[...] + (u - v_scr[...]) * (1.0 / tau)
        spike = (v >= v_th).astype(jnp.float32)
        v_scr[...] = v * (1.0 - spike)                        # hard reset to 0
        y = jnp.dot(w, spike, preferred_element_type=jnp.float32) + b
        y_ref[t] = y
        s_scr[...] += y                                       # per-lane sums
        q_scr[...] += y * y
        return carry

    lax.fori_loop(0, n_t, step, 0, unroll=True)
    sum_ref[0] = jnp.sum(s_scr[...], axis=1, keepdims=True)   # one XLU reduce
    sq_ref[0] = jnp.sum(q_scr[...], axis=1, keepdims=True)


def _qkv_attn_proj_kernel(yqkv_ref, scale_ref, shift_ref, wp_ref, bp_ref,
                          yp_ref, sum_ref, sq_ref,
                          vqkv_scr, vattn_scr, s_scr, q_scr,
                          *, tau, num_heads, head_dim, n_t):
    """qkv BN-apply + q/k/v LIF + all-heads attention + attn_lif + proj conv.

    One grid point = one batch element; the lane axis is that element's
    (128-multiple) token axis, so every attention operand is lane-dense —
    no per-batch lane slicing / concatenation.
    """
    C = num_heads * head_dim
    n_tok = vattn_scr.shape[-1]
    vqkv_scr[...] = jnp.zeros_like(vqkv_scr)
    vattn_scr[...] = jnp.zeros_like(vattn_scr)
    s_scr[...] = jnp.zeros_like(s_scr)
    q_scr[...] = jnp.zeros_like(q_scr)
    scale = scale_ref[...]
    shift = shift_ref[...]
    wp = wp_ref[...]
    bp = bp_ref[...]

    def step(t, carry):
        # q/k/v BN apply + LIF (three LIF nodes fused over the 3C channel rows)
        u = yqkv_ref[t] * scale + shift                       # (3C, N)
        v = vqkv_scr[...] + (u - vqkv_scr[...]) * (1.0 / tau)
        s = (v >= 1.0).astype(jnp.float32)
        vqkv_scr[...] = v * (1.0 - s)

        # channel-major attention, all heads at once.  Channel rows are
        # head-major (rows [h*d, (h+1)*d) = head h), so the reshape is a
        # sublane-block view.  Spikes / counts are exact in bf16
        # (counts <= head_dim <= 256).
        qb = s[0:C].reshape(num_heads, head_dim, n_tok).astype(jnp.bfloat16)
        kb = s[C:2 * C].reshape(num_heads, head_dim, n_tok).astype(jnp.bfloat16)
        vb = s[2 * C:3 * C].reshape(num_heads, head_dim, n_tok).astype(jnp.bfloat16)
        a = jnp.einsum('hem,hen->hmn', kb, qb,
                       preferred_element_type=jnp.float32)    # spike counts
        o = jnp.einsum('hem,hmn->hen', vb, a.astype(jnp.bfloat16),
                       preferred_element_type=jnp.float32) * 0.125
        o = o.reshape(C, n_tok)

        # attn_lif (v_th = 0.5)
        va = vattn_scr[...] + (o - vattn_scr[...]) * (1.0 / tau)
        sa = (va >= 0.5).astype(jnp.float32)
        vattn_scr[...] = va * (1.0 - sa)

        # projection 1x1 conv + per-lane BN stat accumulation
        yp = jnp.dot(wp, sa, preferred_element_type=jnp.float32) + bp
        yp_ref[t] = yp
        s_scr[...] += yp
        q_scr[...] += yp * yp
        return carry

    lax.fori_loop(0, n_t, step, 0, unroll=True)
    sum_ref[0] = jnp.sum(s_scr[...], axis=1, keepdims=True)
    sq_ref[0] = jnp.sum(q_scr[...], axis=1, keepdims=True)


def _bnres_lif_conv_kernel(y_ref, scale_ref, shift_ref, r_ref, w_ref, b_ref,
                           yo_ref, sum_ref, sq_ref,
                           v_scr, s_scr, q_scr, *, tau, v_th, n_t):
    """h = BN(y) + r, then LIF + 1x1 conv + stats.  h is NOT written to HBM;
    the final kernel recomputes it from y / BN params / r."""
    v_scr[...] = jnp.zeros_like(v_scr)
    s_scr[...] = jnp.zeros_like(s_scr)
    q_scr[...] = jnp.zeros_like(q_scr)
    scale = scale_ref[...]
    shift = shift_ref[...]
    w = w_ref[...]
    b = b_ref[...]

    def step(t, carry):
        h = y_ref[t] * scale + shift + r_ref[t]               # x + attn(x)
        v = v_scr[...] + (h - v_scr[...]) * (1.0 / tau)
        spike = (v >= v_th).astype(jnp.float32)
        v_scr[...] = v * (1.0 - spike)
        y = jnp.dot(w, spike, preferred_element_type=jnp.float32) + b
        yo_ref[t] = y
        s_scr[...] += y
        q_scr[...] += y * y
        return carry

    lax.fori_loop(0, n_t, step, 0, unroll=True)
    sum_ref[0] = jnp.sum(s_scr[...], axis=1, keepdims=True)
    sq_ref[0] = jnp.sum(q_scr[...], axis=1, keepdims=True)


def _final_kernel(y2_ref, sc2_ref, sh2_ref, yp_ref, scp_ref, shp_ref, x_ref,
                  o_ref):
    """out = BN2(y2) + (BN_p(yp) + x)   (residual recomputed in-register)."""
    h1 = yp_ref[...] * scp_ref[...] + shp_ref[...] + x_ref[...]
    o_ref[...] = y2_ref[...] * sc2_ref[...] + sh2_ref[...] + h1


# ------------------------------ kernel wrappers -----------------------------

def _finalize_stats(s, sq, count):
    """Combine per-tile partial sums (n_tiles, C, 1) into BN mean / biased var."""
    s = jnp.sum(s, axis=0)
    sq = jnp.sum(sq, axis=0)
    mean = s / count
    var = jnp.maximum(sq / count - mean * mean, 0.0)   # clamp f32 cancellation
    return mean, var


def lif_conv_stats(x, scale, shift, w, b, *, m_tile, tau=1.5, v_th=1.0):
    """x: (T, Cin, M); scale/shift: (Cin,1); w: (Cout,Cin); b: (Cout,1)."""
    T, Cin, M = x.shape
    Cout = w.shape[0]
    assert M % m_tile == 0 and m_tile % 128 == 0
    n_tiles = M // m_tile
    kern = functools.partial(_lif_conv_kernel, tau=tau, v_th=v_th, n_t=T)
    blk_bytes = _F32 * (T * (Cin + Cout) * m_tile + Cin * Cout
                        + (Cin + 2 * Cout) * m_tile)
    cost = pl.CostEstimate(
        flops=2 * T * M * Cin * Cout + 10 * T * M * Cin,
        transcendentals=0,
        bytes_accessed=_F32 * (T * M * (Cin + Cout) + Cin * Cout))
    y, s, sq = pl.pallas_call(
        kern,
        out_shape=(jax.ShapeDtypeStruct((T, Cout, M), jnp.float32),
                   jax.ShapeDtypeStruct((n_tiles, Cout, 1), jnp.float32),
                   jax.ShapeDtypeStruct((n_tiles, Cout, 1), jnp.float32)),
        grid_spec=pltpu.PrefetchScalarGridSpec(
            num_scalar_prefetch=0, grid=(n_tiles,),
            in_specs=[pl.BlockSpec((T, Cin, m_tile), lambda i: (0, 0, i)),
                      pl.BlockSpec((Cin, 1), lambda i: (0, 0)),
                      pl.BlockSpec((Cin, 1), lambda i: (0, 0)),
                      pl.BlockSpec((Cout, Cin), lambda i: (0, 0)),
                      pl.BlockSpec((Cout, 1), lambda i: (0, 0))],
            out_specs=(pl.BlockSpec((T, Cout, m_tile), lambda i: (0, 0, i)),
                       pl.BlockSpec((1, Cout, 1), lambda i: (i, 0, 0)),
                       pl.BlockSpec((1, Cout, 1), lambda i: (i, 0, 0))),
            scratch_shapes=[pltpu.VMEM((Cin, m_tile), jnp.float32),
                            pltpu.VMEM((Cout, m_tile), jnp.float32),
                            pltpu.VMEM((Cout, m_tile), jnp.float32)]),
        compiler_params=pltpu.CompilerParams(
            dimension_semantics=("parallel",),
            vmem_limit_bytes=_vmem_limit(blk_bytes)),
        cost_estimate=cost,
    )(x, scale, shift, w, b)
    mean, var = _finalize_stats(s, sq, T * M)
    return y, mean, var


def qkv_attn_proj(y_qkv, scale, shift, wp, bp, *, num_heads, n_tok, tau=1.5):
    """y_qkv: (T, 3C, M) conv output -> proj conv output (T, C, M) + stats."""
    T, C3, M = y_qkv.shape
    C = C3 // 3
    head_dim = C // num_heads
    assert M % n_tok == 0 and n_tok % 128 == 0
    n_tiles = M // n_tok                       # = batch
    kern = functools.partial(_qkv_attn_proj_kernel, tau=tau,
                             num_heads=num_heads, head_dim=head_dim, n_t=T)
    blk_bytes = _F32 * (T * (C3 + C) * n_tok + C * C + (C3 + 3 * C) * n_tok)
    cost = pl.CostEstimate(
        flops=2 * T * M * C * C + 4 * T * M * C * n_tok + 14 * T * M * C3,
        transcendentals=0,
        bytes_accessed=_F32 * (T * M * (C3 + C) + C * C))
    yp, s, sq = pl.pallas_call(
        kern,
        out_shape=(jax.ShapeDtypeStruct((T, C, M), jnp.float32),
                   jax.ShapeDtypeStruct((n_tiles, C, 1), jnp.float32),
                   jax.ShapeDtypeStruct((n_tiles, C, 1), jnp.float32)),
        grid_spec=pltpu.PrefetchScalarGridSpec(
            num_scalar_prefetch=0, grid=(n_tiles,),
            in_specs=[pl.BlockSpec((T, C3, n_tok), lambda i: (0, 0, i)),
                      pl.BlockSpec((C3, 1), lambda i: (0, 0)),
                      pl.BlockSpec((C3, 1), lambda i: (0, 0)),
                      pl.BlockSpec((C, C), lambda i: (0, 0)),
                      pl.BlockSpec((C, 1), lambda i: (0, 0))],
            out_specs=(pl.BlockSpec((T, C, n_tok), lambda i: (0, 0, i)),
                       pl.BlockSpec((1, C, 1), lambda i: (i, 0, 0)),
                       pl.BlockSpec((1, C, 1), lambda i: (i, 0, 0))),
            scratch_shapes=[pltpu.VMEM((C3, n_tok), jnp.float32),
                            pltpu.VMEM((C, n_tok), jnp.float32),
                            pltpu.VMEM((C, n_tok), jnp.float32),
                            pltpu.VMEM((C, n_tok), jnp.float32)]),
        compiler_params=pltpu.CompilerParams(
            dimension_semantics=("parallel",),
            vmem_limit_bytes=_vmem_limit(blk_bytes)),
        cost_estimate=cost,
    )(y_qkv, scale, shift, wp, bp)
    mean, var = _finalize_stats(s, sq, T * M)
    return yp, mean, var


def bnres_lif_conv(y, scale, shift, res, w, b, *, m_tile, tau=1.5, v_th=1.0):
    """LIF(BN(y)+res) -> 1x1 conv + stats (the residual h is not re-emitted)."""
    T, C, M = y.shape
    Cout = w.shape[0]
    assert M % m_tile == 0 and m_tile % 128 == 0
    n_tiles = M // m_tile
    kern = functools.partial(_bnres_lif_conv_kernel, tau=tau, v_th=v_th, n_t=T)
    blk_bytes = _F32 * (T * (2 * C + Cout) * m_tile + C * Cout
                        + (C + 2 * Cout) * m_tile)
    cost = pl.CostEstimate(
        flops=2 * T * M * C * Cout + 12 * T * M * C,
        transcendentals=0,
        bytes_accessed=_F32 * (T * M * (2 * C + Cout) + C * Cout))
    yo, s, sq = pl.pallas_call(
        kern,
        out_shape=(jax.ShapeDtypeStruct((T, Cout, M), jnp.float32),
                   jax.ShapeDtypeStruct((n_tiles, Cout, 1), jnp.float32),
                   jax.ShapeDtypeStruct((n_tiles, Cout, 1), jnp.float32)),
        grid_spec=pltpu.PrefetchScalarGridSpec(
            num_scalar_prefetch=0, grid=(n_tiles,),
            in_specs=[pl.BlockSpec((T, C, m_tile), lambda i: (0, 0, i)),
                      pl.BlockSpec((C, 1), lambda i: (0, 0)),
                      pl.BlockSpec((C, 1), lambda i: (0, 0)),
                      pl.BlockSpec((T, C, m_tile), lambda i: (0, 0, i)),
                      pl.BlockSpec((Cout, C), lambda i: (0, 0)),
                      pl.BlockSpec((Cout, 1), lambda i: (0, 0))],
            out_specs=(pl.BlockSpec((T, Cout, m_tile), lambda i: (0, 0, i)),
                       pl.BlockSpec((1, Cout, 1), lambda i: (i, 0, 0)),
                       pl.BlockSpec((1, Cout, 1), lambda i: (i, 0, 0))),
            scratch_shapes=[pltpu.VMEM((C, m_tile), jnp.float32),
                            pltpu.VMEM((Cout, m_tile), jnp.float32),
                            pltpu.VMEM((Cout, m_tile), jnp.float32)]),
        compiler_params=pltpu.CompilerParams(
            dimension_semantics=("parallel",),
            vmem_limit_bytes=_vmem_limit(blk_bytes)),
        cost_estimate=cost,
    )(y, scale, shift, res, w, b)
    mean, var = _finalize_stats(s, sq, T * M)
    return yo, mean, var


def bn_residual_out(y2, sc2, sh2, yp, scp, shp, x, *, m_tile):
    """out = BN2(y2) + BN_p(yp) + x ; all slabs (T, C, M)."""
    T, C, M = y2.shape
    n_tiles = M // m_tile
    blk_bytes = _F32 * 4 * T * C * m_tile
    cost = pl.CostEstimate(flops=6 * T * M * C, transcendentals=0,
                           bytes_accessed=_F32 * 4 * T * M * C)
    return pl.pallas_call(
        _final_kernel,
        out_shape=jax.ShapeDtypeStruct((T, C, M), jnp.float32),
        grid_spec=pltpu.PrefetchScalarGridSpec(
            num_scalar_prefetch=0, grid=(n_tiles,),
            in_specs=[pl.BlockSpec((T, C, m_tile), lambda i: (0, 0, i)),
                      pl.BlockSpec((C, 1), lambda i: (0, 0)),
                      pl.BlockSpec((C, 1), lambda i: (0, 0)),
                      pl.BlockSpec((T, C, m_tile), lambda i: (0, 0, i)),
                      pl.BlockSpec((C, 1), lambda i: (0, 0)),
                      pl.BlockSpec((C, 1), lambda i: (0, 0)),
                      pl.BlockSpec((T, C, m_tile), lambda i: (0, 0, i))],
            out_specs=pl.BlockSpec((T, C, m_tile), lambda i: (0, 0, i))),
        compiler_params=pltpu.CompilerParams(
            dimension_semantics=("parallel",),
            vmem_limit_bytes=_vmem_limit(blk_bytes)),
        cost_estimate=cost,
    )(y2, sc2, sh2, yp, scp, shp, x)


# ------------------------------- forward pass -------------------------------

def _bn_scale_shift(mean, var, gamma, beta):
    inv = 1.0 / jnp.sqrt(var + BN_EPS)
    scale = gamma * inv
    shift = beta - mean * scale
    return scale, shift


def spiking_transformer(x, params, num_heads):
    """One SpikingTransformer block: x + attn(x), then + mlp(.)."""
    T, B, C, H, W = x.shape
    assert C % num_heads == 0
    N = H * W
    M = B * N
    assert N % 128 == 0, "token count per image must be a multiple of 128"
    pa, pm = params["attn"], params["mlp"]
    ones_c = jnp.ones((C, 1), jnp.float32)
    zeros_c = jnp.zeros((C, 1), jnp.float32)
    zeros_3c = jnp.zeros((3 * C, 1), jnp.float32)

    # channel-major slab layout: (T, C, B*N); lanes [b*N, (b+1)*N) = batch b
    xs = jnp.transpose(x, (0, 2, 1, 3, 4)).reshape(T, C, M)

    # ----- attention sub-block -----
    # K1: proj_lif + fused q|k|v 1x1 conv (no bias) + batch stats
    w_qkv = jnp.concatenate([pa["wq"], pa["wk"], pa["wv"]], axis=0)
    y_qkv, m_qkv, v_qkv = lif_conv_stats(xs, ones_c, zeros_c, w_qkv, zeros_3c,
                                         m_tile=N, tau=1.5, v_th=1.0)
    g_qkv = jnp.concatenate([pa["q_gamma"], pa["k_gamma"], pa["v_gamma"]], 0)
    b_qkv = jnp.concatenate([pa["q_beta"], pa["k_beta"], pa["v_beta"]], 0)
    sc_qkv, sh_qkv = _bn_scale_shift(m_qkv, v_qkv, g_qkv, b_qkv)

    # K2: qkv BN + q/k/v LIF + attention + attn_lif + proj conv + stats
    yp, m_p, v_p = qkv_attn_proj(y_qkv, sc_qkv, sh_qkv, pa["wp"], pa["bp"],
                                 num_heads=num_heads, n_tok=N, tau=1.5)
    sc_p, sh_p = _bn_scale_shift(m_p, v_p, pa["p_gamma"], pa["p_beta"])

    # ----- MLP sub-block -----
    # K3: proj BN + residual (h1 = x + attn(x)) + mlp1_lif + mlp1 conv + stats
    y1, m1, v1 = bnres_lif_conv(yp, sc_p, sh_p, xs, pm["w1"], pm["b1"],
                                m_tile=N, tau=1.5, v_th=1.0)
    sc1, sh1 = _bn_scale_shift(m1, v1, pm["g1"], pm["be1"])

    # K4: mlp1 BN + mlp2_lif + mlp2 conv + stats
    y2, m2, v2 = lif_conv_stats(y1, sc1, sh1, pm["w2"], pm["b2"],
                                m_tile=N, tau=1.5, v_th=1.0)
    sc2, sh2 = _bn_scale_shift(m2, v2, pm["g2"], pm["be2"])

    # K5: out = BN2(y2) + (BN_p(yp) + x)   (h1 recomputed in-kernel)
    out = bn_residual_out(y2, sc2, sh2, yp, sc_p, sh_p, xs, m_tile=N)

    return jnp.transpose(out.reshape(T, C, B, H, W), (0, 2, 1, 3, 4))


def vit_snn_forward(x, block_params, num_heads):
    """Block stack + spatial-mean head of vit_snn on patch-embedded features.

    x: (T, B, C, H, W) already patch-embedded.
    TODO(synk): SpikingTokenizer (3x3 convs + maxpools) is not reimplemented.
    """
    h = x
    for p in block_params:
        h = spiking_transformer(h, p, num_heads)
    feats = h.mean(axis=(-2, -1))               # (T, B, C) spatial mean
    return jnp.transpose(feats, (1, 0, 2))      # (B, T, C) as in vit_snn


# ------------------------------ parameter init ------------------------------

def init_params(key, dim, mlp_ratio=4.0):
    hidden = int(dim * mlp_ratio)
    ks = iter(jax.random.split(key, 32))

    def w(cout, cin):
        return jax.random.normal(next(ks), (cout, cin), jnp.float32) / jnp.sqrt(cin)

    def bias(c):
        return 0.1 * jax.random.normal(next(ks), (c, 1), jnp.float32)

    def gamma(c):
        return 1.0 + 0.1 * jax.random.normal(next(ks), (c, 1), jnp.float32)

    def beta(c):
        return 0.1 * jax.random.normal(next(ks), (c, 1), jnp.float32)

    attn = dict(
        wq=w(dim, dim), q_gamma=gamma(dim), q_beta=beta(dim),
        wk=w(dim, dim), k_gamma=gamma(dim), k_beta=beta(dim),
        wv=w(dim, dim), v_gamma=gamma(dim), v_beta=beta(dim),
        wp=w(dim, dim), bp=bias(dim), p_gamma=gamma(dim), p_beta=beta(dim),
    )
    mlp = dict(
        w1=w(hidden, dim), b1=bias(hidden), g1=gamma(hidden), be1=beta(hidden),
        w2=w(dim, hidden), b2=bias(dim), g2=gamma(dim), be2=beta(dim),
    )
    return dict(attn=attn, mlp=mlp)


# ----------------------------------- main ------------------------------------

if __name__ == "__main__":
    T, B, dim, H, W = 2, 2, 32, 8, 16          # N = H*W = 128 lane-dense tokens
    num_heads = 4                               # head_dim = 8
    depth = 2

    key = jax.random.PRNGKey(0)
    kx, kp = jax.random.split(key)
    x = jax.random.normal(kx, (T, B, dim, H, W), jnp.float32)
    block_params = [init_params(k, dim, mlp_ratio=4.0)
                    for k in jax.random.split(kp, depth)]

    fwd = jax.jit(functools.partial(vit_snn_forward, num_heads=num_heads))
    out = fwd(x, block_params)
    jax.block_until_ready(out)

    assert out.shape == (B, T, dim), out.shape
    assert bool(jnp.all(jnp.isfinite(out)))
    print("KERNEL_OK")
</pallas_src>

<mosaic_0001>
module attributes {stable_mosaic.version = 11 : i64} {
  func.func @_bnres_lif_conv_kernel(%arg0: i32, %arg1: memref<2x32x128xf32, #tpu.memory_space<vmem>>, %arg2: memref<32x1xf32, #tpu.memory_space<vmem>>, %arg3: memref<32x1xf32, #tpu.memory_space<vmem>>, %arg4: memref<2x32x128xf32, #tpu.memory_space<vmem>>, %arg5: memref<128x32xf32, #tpu.memory_space<vmem>>, %arg6: memref<128x1xf32, #tpu.memory_space<vmem>>, %arg7: memref<2x128x128xf32, #tpu.memory_space<vmem>>, %arg8: memref<1x128x1xf32, #tpu.memory_space<vmem>>, %arg9: memref<1x128x1xf32, #tpu.memory_space<vmem>>, %arg10: memref<32x128xf32, #tpu.memory_space<vmem>>, %arg11: memref<128x128xf32, #tpu.memory_space<vmem>>, %arg12: memref<128x128xf32, #tpu.memory_space<vmem>>) attributes {dimension_semantics = [#tpu.dimension_semantics<parallel>], iteration_bounds = array<i64: 2>, scalar_prefetch = 0 : i64, scratch_operands = 3 : i64, tpu.core_type = #tpu.core_type<tc>, window_params = [{transform_indices = @transform_0, window_bounds = array<i64: 2, 32, 128>}, {pipeline_mode = #tpu.pipeline_mode<synchronous>, transform_indices = @transform_1, window_bounds = array<i64: 32, 1>}, {pipeline_mode = #tpu.pipeline_mode<synchronous>, transform_indices = @transform_2, window_bounds = array<i64: 32, 1>}, {transform_indices = @transform_3, window_bounds = array<i64: 2, 32, 128>}, {pipeline_mode = #tpu.pipeline_mode<synchronous>, transform_indices = @transform_4, window_bounds = array<i64: 128, 32>}, {pipeline_mode = #tpu.pipeline_mode<synchronous>, transform_indices = @transform_5, window_bounds = array<i64: 128, 1>}, {transform_indices = @transform_6, window_bounds = array<i64: 2, 128, 128>}, {transform_indices = @transform_7, window_bounds = array<i64: 1, 128, 1>}, {transform_indices = @transform_8, window_bounds = array<i64: 1, 128, 1>}]} {
    %cst = arith.constant 0.000000e+00 : f32
    %0 = vector.broadcast %cst : f32 to vector<32x128xf32>
    %c0 = arith.constant 0 : index
    %c0_0 = arith.constant 0 : index
    %1 = vector.load %arg10[%c0, %c0_0] : memref<32x128xf32, #tpu.memory_space<vmem>>, vector<32x128xf32>
    tpu.vector_store %arg10[%c0, %c0_0], %0 {strides = array<i32>} : memref<32x128xf32, #tpu.memory_space<vmem>>, vector<32x128xf32>,
    %cst_1 = arith.constant 0.000000e+00 : f32
    %2 = vector.broadcast %cst_1 : f32 to vector<128x128xf32>
    %c0_2 = arith.constant 0 : index
    %c0_3 = arith.constant 0 : index
    %3 = vector.load %arg11[%c0_2, %c0_3] : memref<128x128xf32, #tpu.memory_space<vmem>>, vector<128x128xf32>
    tpu.vector_store %arg11[%c0_2, %c0_3], %2 {strides = array<i32>} : memref<128x128xf32, #tpu.memory_space<vmem>>, vector<128x128xf32>,
    %cst_4 = arith.constant 0.000000e+00 : f32
    %4 = vector.broadcast %cst_4 : f32 to vector<128x128xf32>
    %c0_5 = arith.constant 0 : index
    %c0_6 = arith.constant 0 : index
    %5 = vector.load %arg12[%c0_5, %c0_6] : memref<128x128xf32, #tpu.memory_space<vmem>>, vector<128x128xf32>
    tpu.vector_store %arg12[%c0_5, %c0_6], %4 {strides = array<i32>} : memref<128x128xf32, #tpu.memory_space<vmem>>, vector<128x128xf32>,
    %c0_7 = arith.constant 0 : index
    %c0_8 = arith.constant 0 : index
    %6 = vector.load %arg2[%c0_7, %c0_8] : memref<32x1xf32, #tpu.memory_space<vmem>>, vector<32x1xf32>
    %c0_9 = arith.constant 0 : index
    %c0_10 = arith.constant 0 : index
    %7 = vector.load %arg3[%c0_9, %c0_10] : memref<32x1xf32, #tpu.memory_space<vmem>>, vector<32x1xf32>
    %c0_11 = arith.constant 0 : index
    %c0_12 = arith.constant 0 : index
    %8 = vector.load %arg5[%c0_11, %c0_12] : memref<128x32xf32, #tpu.memory_space<vmem>>, vector<128x32xf32>
    %c0_13 = arith.constant 0 : index
    %c0_14 = arith.constant 0 : index
    %9 = vector.load %arg6[%c0_13, %c0_14] : memref<128x1xf32, #tpu.memory_space<vmem>>, vector<128x1xf32>
    %c0_i32 = arith.constant 0 : i32
    %10 = arith.index_cast %c0_i32 : i32 to index
    %c0_15 = arith.constant 0 : index
    %c0_16 = arith.constant 0 : index
    %11 = vector.load %arg1[%10, %c0_15, %c0_16] : memref<2x32x128xf32, #tpu.memory_space<vmem>>, vector<1x32x128xf32>
    %12 = vector.shape_cast %11 : vector<1x32x128xf32> to vector<32x128xf32>
    %13 = vector.broadcast %6 : vector<32x1xf32> to vector<32x128xf32>
    %14 = arith.mulf %12, %13 : vector<32x128xf32>
    %15 = vector.broadcast %7 : vector<32x1xf32> to vector<32x128xf32>
    %16 = arith.addf %14, %15 : vector<32x128xf32>
    %17 = arith.index_cast %c0_i32 : i32 to index
    %c0_17 = arith.constant 0 : index
    %c0_18 = arith.constant 0 : index
    %18 = vector.load %arg4[%17, %c0_17, %c0_18] : memref<2x32x128xf32, #tpu.memory_space<vmem>>, vector<1x32x128xf32>
    %19 = vector.shape_cast %18 : vector<1x32x128xf32> to vector<32x128xf32>
    %20 = arith.addf %16, %19 : vector<32x128xf32>
    %c0_19 = arith.constant 0 : index
    %c0_20 = arith.constant 0 : index
    %21 = vector.load %arg10[%c0_19, %c0_20] : memref<32x128xf32, #tpu.memory_space<vmem>>, vector<32x128xf32>
    %c0_21 = arith.constant 0 : index
    %c0_22 = arith.constant 0 : index
    %22 = vector.load %arg10[%c0_21, %c0_22] : memref<32x128xf32, #tpu.memory_space<vmem>>, vector<32x128xf32>
    %23 = arith.subf %20, %22 : vector<32x128xf32>
    %cst_23 = arith.constant 0.666666686 : f32
    %24 = vector.broadcast %cst_23 : f32 to vector<32x128xf32>
    %25 = arith.mulf %23, %24 : vector<32x128xf32>
    %26 = arith.addf %21, %25 : vector<32x128xf32>
    %cst_24 = arith.constant 1.000000e+00 : f32
    %27 = vector.broadcast %cst_24 : f32 to vector<32x128xf32>
    %28 = arith.cmpf oge, %26, %27 : vector<32x128xf32>
    %29 = arith.extui %28 : vector<32x128xi1> to vector<32x128xi32>
    %30 = arith.sitofp %29 : vector<32x128xi32> to vector<32x128xf32>
    %cst_25 = arith.constant 1.000000e+00 : f32
    %31 = vector.broadcast %cst_25 : f32 to vector<32x128xf32>
    %32 = arith.subf %31, %30 : vector<32x128xf32>
    %33 = arith.mulf %26, %32 : vector<32x128xf32>
    %c0_26 = arith.constant 0 : index
    %c0_27 = arith.constant 0 : index
    %34 = vector.load %arg10[%c0_26, %c0_27] : memref<32x128xf32, #tpu.memory_space<vmem>>, vector<32x128xf32>
    tpu.vector_store %arg10[%c0_26, %c0_27], %33 {strides = array<i32>} : memref<32x128xf32, #tpu.memory_space<vmem>>, vector<32x128xf32>,
    %cst_28 = arith.constant dense<0.000000e+00> : vector<128x128xf32>
    %35 = tpu.matmul %8, %30, %cst_28 {dimension_numbers = #tpu.dot_dimension_numbers<[1], [0], [0], [1], [0, 0, 1, 1], [], []>} : vector<128x32xf32>, vector<32x128xf32>, vector<128x128xf32> -> vector<128x128xf32>
    %36 = vector.broadcast %9 : vector<128x1xf32> to vector<128x128xf32>
    %37 = arith.addf %35, %36 : vector<128x128xf32>
    %38 = arith.index_cast %c0_i32 : i32 to index
    %c0_29 = arith.constant 0 : index
    %c0_30 = arith.constant 0 : index
    %39 = vector.load %arg7[%38, %c0_29, %c0_30] : memref<2x128x128xf32, #tpu.memory_space<vmem>>, vector<1x128x128xf32>
    %40 = vector.shape_cast %39 : vector<1x128x128xf32> to vector<128x128xf32>
    %41 = vector.shape_cast %37 : vector<128x128xf32> to vector<1x128x128xf32>
    tpu.vector_store %arg7[%38, %c0_29, %c0_30], %41 {strides = array<i32>} : memref<2x128x128xf32, #tpu.memory_space<vmem>>, vector<1x128x128xf32>,
    %c0_31 = arith.constant 0 : index
    %c0_32 = arith.constant 0 : index
    %42 = vector.load %arg11[%c0_31, %c0_32] : memref<128x128xf32, #tpu.memory_space<vmem>>, vector<128x128xf32>
    %43 = arith.addf %42, %37 : vector<128x128xf32>
    %c0_33 = arith.constant 0 : index
    %c0_34 = arith.constant 0 : index
    %44 = vector.load %arg11[%c0_33, %c0_34] : memref<128x128xf32, #tpu.memory_space<vmem>>, vector<128x128xf32>
    tpu.vector_store %arg11[%c0_33, %c0_34], %43 {strides = array<i32>} : memref<128x128xf32, #tpu.memory_space<vmem>>, vector<128x128xf32>,
    %c0_35 = arith.constant 0 : index
    %c0_36 = arith.constant 0 : index
    %45 = vector.load %arg12[%c0_35, %c0_36] : memref<128x128xf32, #tpu.memory_space<vmem>>, vector<128x128xf32>
    %46 = arith.mulf %37, %37 : vector<128x128xf32>
    %47 = arith.addf %45, %46 : vector<128x128xf32>
    %c0_37 = arith.constant 0 : index
    %c0_38 = arith.constant 0 : index
    %48 = vector.load %arg12[%c0_37, %c0_38] : memref<128x128xf32, #tpu.memory_space<vmem>>, vector<128x128xf32>
    tpu.vector_store %arg12[%c0_37, %c0_38], %47 {strides = array<i32>} : memref<128x128xf32, #tpu.memory_space<vmem>>, vector<128x128xf32>,
    %c1_i32 = arith.constant 1 : i32
    %49 = arith.index_cast %c1_i32 : i32 to index
    %c0_39 = arith.constant 0 : index
    %c0_40 = arith.constant 0 : index
    %50 = vector.load %arg1[%49, %c0_39, %c0_40] : memref<2x32x128xf32, #tpu.memory_space<vmem>>, vector<1x32x128xf32>
    %51 = vector.shape_cast %50 : vector<1x32x128xf32> to vector<32x128xf32>
    %52 = vector.broadcast %6 : vector<32x1xf32> to vector<32x128xf32>
    %53 = arith.mulf %51, %52 : vector<32x128xf32>
    %54 = vector.broadcast %7 : vector<32x1xf32> to vector<32x128xf32>
    %55 = arith.addf %53, %54 : vector<32x128xf32>
    %56 = arith.index_cast %c1_i32 : i32 to index
    %c0_41 = arith.constant 0 : index
    %c0_42 = arith.constant 0 : index
    %57 = vector.load %arg4[%56, %c0_41, %c0_42] : memref<2x32x128xf32, #tpu.memory_space<vmem>>, vector<1x32x128xf32>
    %58 = vector.shape_cast %57 : vector<1x32x128xf32> to vector<32x128xf32>
    %59 = arith.addf %55, %58 : vector<32x128xf32>
    %c0_43 = arith.constant 0 : index
    %c0_44 = arith.constant 0 : index
    %60 = vector.load %arg10[%c0_43, %c0_44] : memref<32x128xf32, #tpu.memory_space<vmem>>, vector<32x128xf32>
    %c0_45 = arith.constant 0 : index
    %c0_46 = arith.constant 0 : index
    %61 = vector.load %arg10[%c0_45, %c0_46] : memref<32x128xf32, #tpu.memory_space<vmem>>, vector<32x128xf32>
    %62 = arith.subf %59, %61 : vector<32x128xf32>
    %cst_47 = arith.constant 0.666666686 : f32
    %63 = vector.broadcast %cst_47 : f32 to vector<32x128xf32>
    %64 = arith.mulf %62, %63 : vector<32x128xf32>
    %65 = arith.addf %60, %64 : vector<32x128xf32>
    %cst_48 = arith.constant 1.000000e+00 : f32
    %66 = vector.broadcast %cst_48 : f32 to vector<32x128xf32>
    %67 = arith.cmpf oge, %65, %66 : vector<32x128xf32>
    %68 = arith.extui %67 : vector<32x128xi1> to vector<32x128xi32>
    %69 = arith.sitofp %68 : vector<32x128xi32> to vector<32x128xf32>
    %cst_49 = arith.constant 1.000000e+00 : f32
    %70 = vector.broadcast %cst_49 : f32 to vector<32x128xf32>
    %71 = arith.subf %70, %69 : vector<32x128xf32>
    %72 = arith.mulf %65, %71 : vector<32x128xf32>
    %c0_50 = arith.constant 0 : index
    %c0_51 = arith.constant 0 : index
    %73 = vector.load %arg10[%c0_50, %c0_51] : memref<32x128xf32, #tpu.memory_space<vmem>>, vector<32x128xf32>
    tpu.vector_store %arg10[%c0_50, %c0_51], %72 {strides = array<i32>} : memref<32x128xf32, #tpu.memory_space<vmem>>, vector<32x128xf32>,
    %cst_52 = arith.constant dense<0.000000e+00> : vector<128x128xf32>
    %74 = tpu.matmul %8, %69, %cst_52 {dimension_numbers = #tpu.dot_dimension_numbers<[1], [0], [0], [1], [0, 0, 1, 1], [], []>} : vector<128x32xf32>, vector<32x128xf32>, vector<128x128xf32> -> vector<128x128xf32>
    %75 = vector.broadcast %9 : vector<128x1xf32> to vector<128x128xf32>
    %76 = arith.addf %74, %75 : vector<128x128xf32>
    %77 = arith.index_cast %c1_i32 : i32 to index
    %c0_53 = arith.constant 0 : index
    %c0_54 = arith.constant 0 : index
    %78 = vector.load %arg7[%77, %c0_53, %c0_54] : memref<2x128x128xf32, #tpu.memory_space<vmem>>, vector<1x128x128xf32>
    %79 = vector.shape_cast %78 : vector<1x128x128xf32> to vector<128x128xf32>
    %80 = vector.shape_cast %76 : vector<128x128xf32> to vector<1x128x128xf32>
    tpu.vector_store %arg7[%77, %c0_53, %c0_54], %80 {strides = array<i32>} : memref<2x128x128xf32, #tpu.memory_space<vmem>>, vector<1x128x128xf32>,
    %c0_55 = arith.constant 0 : index
    %c0_56 = arith.constant 0 : index
    %81 = vector.load %arg11[%c0_55, %c0_56] : memref<128x128xf32, #tpu.memory_space<vmem>>, vector<128x128xf32>
    %82 = arith.addf %81, %76 : vector<128x128xf32>
    %c0_57 = arith.constant 0 : index
    %c0_58 = arith.constant 0 : index
    %83 = vector.load %arg11[%c0_57, %c0_58] : memref<128x128xf32, #tpu.memory_space<vmem>>, vector<128x128xf32>
    tpu.vector_store %arg11[%c0_57, %c0_58], %82 {strides = array<i32>} : memref<128x128xf32, #tpu.memory_space<vmem>>, vector<128x128xf32>,
    %c0_59 = arith.constant 0 : index
    %c0_60 = arith.constant 0 : index
    %84 = vector.load %arg12[%c0_59, %c0_60] : memref<128x128xf32, #tpu.memory_space<vmem>>, vector<128x128xf32>
    %85 = arith.mulf %76, %76 : vector<128x128xf32>
    %86 = arith.addf %84, %85 : vector<128x128xf32>
    %c0_61 = arith.constant 0 : index
    %c0_62 = arith.constant 0 : index
    %87 = vector.load %arg12[%c0_61, %c0_62] : memref<128x128xf32, #tpu.memory_space<vmem>>, vector<128x128xf32>
    tpu.vector_store %arg12[%c0_61, %c0_62], %86 {strides = array<i32>} : memref<128x128xf32, #tpu.memory_space<vmem>>, vector<128x128xf32>,
    %c2_i32 = arith.constant 2 : i32
    %c0_63 = arith.constant 0 : index
    %c0_64 = arith.constant 0 : index
    %88 = vector.load %arg11[%c0_63, %c0_64] : memref<128x128xf32, #tpu.memory_space<vmem>>, vector<128x128xf32>
    %cst_65 = arith.constant dense<0.000000e+00> : vector<128xf32>
    %89 = vector.multi_reduction <add>, %88, %cst_65 [1] : vector<128x128xf32> to vector<128xf32>
    %90 = vector.shape_cast %89 : vector<128xf32> to vector<128x1xf32>
    %c0_66 = arith.constant 0 : index
    %c0_67 = arith.constant 0 : index
    %c0_68 = arith.constant 0 : index
    %91 = vector.load %arg8[%c0_66, %c0_67, %c0_68] : memref<1x128x1xf32, #tpu.memory_space<vmem>>, vector<1x128x1xf32>
    %92 = vector.shape_cast %91 : vector<1x128x1xf32> to vector<128x1xf32>
    %93 = vector.shape_cast %90 : vector<128x1xf32> to vector<1x128x1xf32>
    tpu.vector_store %arg8[%c0_66, %c0_67, %c0_68], %93 {strides = array<i32>} : memref<1x128x1xf32, #tpu.memory_space<vmem>>, vector<1x128x1xf32>,
    %c0_69 = arith.constant 0 : index
    %c0_70 = arith.constant 0 : index
    %94 = vector.load %arg12[%c0_69, %c0_70] : memref<128x128xf32, #tpu.memory_space<vmem>>, vector<128x128xf32>
    %cst_71 = arith.constant dense<0.000000e+00> : vector<128xf32>
    %95 = vector.multi_reduction <add>, %94, %cst_71 [1] : vector<128x128xf32> to vector<128xf32>
    %96 = vector.shape_cast %95 : vector<128xf32> to vector<128x1xf32>
    %c0_72 = arith.constant 0 : index
    %c0_73 = arith.constant 0 : index
    %c0_74 = arith.constant 0 : index
    %97 = vector.load %arg9[%c0_72, %c0_73, %c0_74] : memref<1x128x1xf32, #tpu.memory_space<vmem>>, vector<1x128x1xf32>
    %98 = vector.shape_cast %97 : vector<1x128x1xf32> to vector<128x1xf32>
    %99 = vector.shape_cast %96 : vector<128x1xf32> to vector<1x128x1xf32>
    tpu.vector_store %arg9[%c0_72, %c0_73, %c0_74], %99 {strides = array<i32>} : memref<1x128x1xf32, #tpu.memory_space<vmem>>, vector<1x128x1xf32>,
    return
  }
  func.func @transform_0(%arg0: i32) -> (i32, i32, i32) {
    %c0_i32 = arith.constant 0 : i32
    %c0_i32_0 = arith.constant 0 : i32
    %c0_i32_1 = arith.constant 0 : i32
    return %c0_i32, %c0_i32_0, %arg0 : i32, i32, i32
  }
  func.func @transform_1(%arg0: i32) -> (i32, i32) {
    %c0_i32 = arith.constant 0 : i32
    %c0_i32_0 = arith.constant 0 : i32
    %c0_i32_1 = arith.constant 0 : i32
    return %c0_i32, %c0_i32_0 : i32, i32
  }
  func.func @transform_2(%arg0: i32) -> (i32, i32) {
    %c0_i32 = arith.constant 0 : i32
    %c0_i32_0 = arith.constant 0 : i32
    %c0_i32_1 = arith.constant 0 : i32
    return %c0_i32, %c0_i32_0 : i32, i32
  }
  func.func @transform_3(%arg0: i32) -> (i32, i32, i32) {
    %c0_i32 = arith.constant 0 : i32
    %c0_i32_0 = arith.constant 0 : i32
    %c0_i32_1 = arith.constant 0 : i32
    return %c0_i32, %c0_i32_0, %arg0 : i32, i32, i32
  }
  func.func @transform_4(%arg0: i32) -> (i32, i32) {
    %c0_i32 = arith.constant 0 : i32
    %c0_i32_0 = arith.constant 0 : i32
    %c0_i32_1 = arith.constant 0 : i32
    return %c0_i32, %c0_i32_0 : i32, i32
  }
  func.func @transform_5(%arg0: i32) -> (i32, i32) {
    %c0_i32 = arith.constant 0 : i32
    %c0_i32_0 = arith.constant 0 : i32
    %c0_i32_1 = arith.constant 0 : i32
    return %c0_i32, %c0_i32_0 : i32, i32
  }
  func.func @transform_6(%arg0: i32) -> (i32, i32, i32) {
    %c0_i32 = arith.constant 0 : i32
    %c0_i32_0 = arith.constant 0 : i32
    %c0_i32_1 = arith.constant 0 : i32
    return %c0_i32, %c0_i32_0, %arg0 : i32, i32, i32
  }
  func.func @transform_7(%arg0: i32) -> (i32, i32, i32) {
    %c0_i32 = arith.constant 0 : i32
    %c0_i32_0 = arith.constant 0 : i32
    %c0_i32_1 = arith.constant 0 : i32
    return %arg0, %c0_i32, %c0_i32_0 : i32, i32, i32
  }
  func.func @transform_8(%arg0: i32) -> (i32, i32, i32) {
    %c0_i32 = arith.constant 0 : i32
    %c0_i32_0 = arith.constant 0 : i32
    %c0_i32_1 = arith.constant 0 : i32
    return %arg0, %c0_i32, %c0_i32_0 : i32, i32, i32
  }
}

module attributes {stable_mosaic.version = 11 : i64} {
  func.func @_qkv_attn_proj_kernel(%arg0: i32, %arg1: memref<2x96x128xf32, #tpu.memory_space<vmem>>, %arg2: memref<96x1xf32, #tpu.memory_space<vmem>>, %arg3: memref<96x1xf32, #tpu.memory_space<vmem>>, %arg4: memref<32x32xf32, #tpu.memory_space<vmem>>, %arg5: memref<32x1xf32, #tpu.memory_space<vmem>>, %arg6: memref<2x32x128xf32, #tpu.memory_space<vmem>>, %arg7: memref<1x32x1xf32, #tpu.memory_space<vmem>>, %arg8: memref<1x32x1xf32, #tpu.memory_space<vmem>>, %arg9: memref<96x128xf32, #tpu.memory_space<vmem>>, %arg10: memref<32x128xf32, #tpu.memory_space<vmem>>, %arg11: memref<32x128xf32, #tpu.memory_space<vmem>>, %arg12: memref<32x128xf32, #tpu.memory_space<vmem>>) attributes {dimension_semantics = [#tpu.dimension_semantics<parallel>], iteration_bounds = array<i64: 2>, scalar_prefetch = 0 : i64, scratch_operands = 4 : i64, tpu.core_type = #tpu.core_type<tc>, window_params = [{transform_indices = @transform_0, window_bounds = array<i64: 2, 96, 128>}, {pipeline_mode = #tpu.pipeline_mode<synchronous>, transform_indices = @transform_1, window_bounds = array<i64: 96, 1>}, {pipeline_mode = #tpu.pipeline_mode<synchronous>, transform_indices = @transform_2, window_bounds = array<i64: 96, 1>}, {pipeline_mode = #tpu.pipeline_mode<synchronous>, transform_indices = @transform_3, window_bounds = array<i64: 32, 32>}, {pipeline_mode = #tpu.pipeline_mode<synchronous>, transform_indices = @transform_4, window_bounds = array<i64: 32, 1>}, {transform_indices = @transform_5, window_bounds = array<i64: 2, 32, 128>}, {transform_indices = @transform_6, window_bounds = array<i64: 1, 32, 1>}, {transform_indices = @transform_7, window_bounds = array<i64: 1, 32, 1>}]} {
    %cst = arith.constant 0.000000e+00 : f32
    %0 = vector.broadcast %cst : f32 to vector<96x128xf32>
    %c0 = arith.constant 0 : index
    %c0_0 = arith.constant 0 : index
    %1 = vector.load %arg9[%c0, %c0_0] : memref<96x128xf32, #tpu.memory_space<vmem>>, vector<96x128xf32>
    tpu.vector_store %arg9[%c0, %c0_0], %0 {strides = array<i32>} : memref<96x128xf32, #tpu.memory_space<vmem>>, vector<96x128xf32>,
    %cst_1 = arith.constant 0.000000e+00 : f32
    %2 = vector.broadcast %cst_1 : f32 to vector<32x128xf32>
    %c0_2 = arith.constant 0 : index
    %c0_3 = arith.constant 0 : index
    %3 = vector.load %arg10[%c0_2, %c0_3] : memref<32x128xf32, #tpu.memory_space<vmem>>, vector<32x128xf32>
    tpu.vector_store %arg10[%c0_2, %c0_3], %2 {strides = array<i32>} : memref<32x128xf32, #tpu.memory_space<vmem>>, vector<32x128xf32>,
    %cst_4 = arith.constant 0.000000e+00 : f32
    %4 = vector.broadcast %cst_4 : f32 to vector<32x128xf32>
    %c0_5 = arith.constant 0 : index
    %c0_6 = arith.constant 0 : index
    %5 = vector.load %arg11[%c0_5, %c0_6] : memref<32x128xf32, #tpu.memory_space<vmem>>, vector<32x128xf32>
    tpu.vector_store %arg11[%c0_5, %c0_6], %4 {strides = array<i32>} : memref<32x128xf32, #tpu.memory_space<vmem>>, vector<32x128xf32>,
    %cst_7 = arith.constant 0.000000e+00 : f32
    %6 = vector.broadcast %cst_7 : f32 to vector<32x128xf32>
    %c0_8 = arith.constant 0 : index
    %c0_9 = arith.constant 0 : index
    %7 = vector.load %arg12[%c0_8, %c0_9] : memref<32x128xf32, #tpu.memory_space<vmem>>, vector<32x128xf32>
    tpu.vector_store %arg12[%c0_8, %c0_9], %6 {strides = array<i32>} : memref<32x128xf32, #tpu.memory_space<vmem>>, vector<32x128xf32>,
    %c0_10 = arith.constant 0 : index
    %c0_11 = arith.constant 0 : index
    %8 = vector.load %arg2[%c0_10, %c0_11] : memref<96x1xf32, #tpu.memory_space<vmem>>, vector<96x1xf32>
    %c0_12 = arith.constant 0 : index
    %c0_13 = arith.constant 0 : index
    %9 = vector.load %arg3[%c0_12, %c0_13] : memref<96x1xf32, #tpu.memory_space<vmem>>, vector<96x1xf32>
    %c0_14 = arith.constant 0 : index
    %c0_15 = arith.constant 0 : index
    %10 = vector.load %arg4[%c0_14, %c0_15] : memref<32x32xf32, #tpu.memory_space<vmem>>, vector<32x32xf32>
    %c0_16 = arith.constant 0 : index
    %c0_17 = arith.constant 0 : index
    %11 = vector.load %arg5[%c0_16, %c0_17] : memref<32x1xf32, #tpu.memory_space<vmem>>, vector<32x1xf32>
    %c0_i32 = arith.constant 0 : i32
    %12 = arith.index_cast %c0_i32 : i32 to index
    %c0_18 = arith.constant 0 : index
    %c0_19 = arith.constant 0 : index
    %13 = vector.load %arg1[%12, %c0_18, %c0_19] : memref<2x96x128xf32, #tpu.memory_space<vmem>>, vector<1x96x128xf32>
    %14 = vector.shape_cast %13 : vector<1x96x128xf32> to vector<96x128xf32>
    %15 = vector.broadcast %8 : vector<96x1xf32> to vector<96x128xf32>
    %16 = arith.mulf %14, %15 : vector<96x128xf32>
    %17 = vector.broadcast %9 : vector<96x1xf32> to vector<96x128xf32>
    %18 = arith.addf %16, %17 : vector<96x128xf32>
    %c0_20 = arith.constant 0 : index
    %c0_21 = arith.constant 0 : index
    %19 = vector.load %arg9[%c0_20, %c0_21] : memref<96x128xf32, #tpu.memory_space<vmem>>, vector<96x128xf32>
    %c0_22 = arith.constant 0 : index
    %c0_23 = arith.constant 0 : index
    %20 = vector.load %arg9[%c0_22, %c0_23] : memref<96x128xf32, #tpu.memory_space<vmem>>, vector<96x128xf32>
    %21 = arith.subf %18, %20 : vector<96x128xf32>
    %cst_24 = arith.constant 0.666666686 : f32
    %22 = vector.broadcast %cst_24 : f32 to vector<96x128xf32>
    %23 = arith.mulf %21, %22 : vector<96x128xf32>
    %24 = arith.addf %19, %23 : vector<96x128xf32>
    %cst_25 = arith.constant 1.000000e+00 : f32
    %25 = vector.broadcast %cst_25 : f32 to vector<96x128xf32>
    %26 = arith.cmpf oge, %24, %25 : vector<96x128xf32>
    %27 = arith.extui %26 : vector<96x128xi1> to vector<96x128xi32>
    %28 = arith.sitofp %27 : vector<96x128xi32> to vector<96x128xf32>
    %cst_26 = arith.constant 1.000000e+00 : f32
    %29 = vector.broadcast %cst_26 : f32 to vector<96x128xf32>
    %30 = arith.subf %29, %28 : vector<96x128xf32>
    %31 = arith.mulf %24, %30 : vector<96x128xf32>
    %c0_27 = arith.constant 0 : index
    %c0_28 = arith.constant 0 : index
    %32 = vector.load %arg9[%c0_27, %c0_28] : memref<96x128xf32, #tpu.memory_space<vmem>>, vector<96x128xf32>
    tpu.vector_store %arg9[%c0_27, %c0_28], %31 {strides = array<i32>} : memref<96x128xf32, #tpu.memory_space<vmem>>, vector<96x128xf32>,
    %33 = vector.extract_strided_slice %28 {offsets = [0, 0], sizes = [32, 128], strides = [1, 1]} : vector<96x128xf32> to vector<32x128xf32>
    %34 = vector.shape_cast %33 : vector<32x128xf32> to vector<4x8x128xf32>
    %35 = arith.truncf %34 : vector<4x8x128xf32> to vector<4x8x128xbf16>
    %36 = vector.extract_strided_slice %28 {offsets = [32, 0], sizes = [32, 128], strides = [1, 1]} : vector<96x128xf32> to vector<32x128xf32>
    %37 = vector.shape_cast %36 : vector<32x128xf32> to vector<4x8x128xf32>
    %38 = arith.truncf %37 : vector<4x8x128xf32> to vector<4x8x128xbf16>
    %39 = vector.extract_strided_slice %28 {offsets = [64, 0], sizes = [32, 128], strides = [1, 1]} : vector<96x128xf32> to vector<32x128xf32>
    %40 = vector.shape_cast %39 : vector<32x128xf32> to vector<4x8x128xf32>
    %41 = arith.truncf %40 : vector<4x8x128xf32> to vector<4x8x128xbf16>
    "tpu.trace_start"() <{level = 10 : i32, message = "hem,hen->hmn"}> : () -> ()
    %cst_29 = arith.constant dense<0.000000e+00> : vector<4x128x128xf32>
    %42 = tpu.matmul %38, %35, %cst_29 {dimension_numbers = #tpu.dot_dimension_numbers<[1], [1], [2], [2], [0, 0, 0, 2, 1, 2], [0], [0]>} : vector<4x8x128xbf16>, vector<4x8x128xbf16>, vector<4x128x128xf32> -> vector<4x128x128xf32>
    "tpu.trace_stop"() : () -> ()
    %43 = arith.truncf %42 : vector<4x128x128xf32> to vector<4x128x128xbf16>
    "tpu.trace_start"() <{level = 10 : i32, message = "hem,hmn->hen"}> : () -> ()
    %cst_30 = arith.constant dense<0.000000e+00> : vector<4x8x128xf32>
    %44 = tpu.matmul %41, %43, %cst_30 {dimension_numbers = #tpu.dot_dimension_numbers<[2], [1], [1], [2], [0, 0, 0, 1, 1, 2], [0], [0]>} : vector<4x8x128xbf16>, vector<4x128x128xbf16>, vector<4x8x128xf32> -> vector<4x8x128xf32>
    "tpu.trace_stop"() : () -> ()
    %cst_31 = arith.constant 1.250000e-01 : f32
    %45 = vector.broadcast %cst_31 : f32 to vector<4x8x128xf32>
    %46 = arith.mulf %44, %45 : vector<4x8x128xf32>
    %47 = vector.shape_cast %46 : vector<4x8x128xf32> to vector<32x128xf32>
    %c0_32 = arith.constant 0 : index
    %c0_33 = arith.constant 0 : index
    %48 = vector.load %arg10[%c0_32, %c0_33] : memref<32x128xf32, #tpu.memory_space<vmem>>, vector<32x128xf32>
    %c0_34 = arith.constant 0 : index
    %c0_35 = arith.constant 0 : index
    %49 = vector.load %arg10[%c0_34, %c0_35] : memref<32x128xf32, #tpu.memory_space<vmem>>, vector<32x128xf32>
    %50 = arith.subf %47, %49 : vector<32x128xf32>
    %cst_36 = arith.constant 0.666666686 : f32
    %51 = vector.broadcast %cst_36 : f32 to vector<32x128xf32>
    %52 = arith.mulf %50, %51 : vector<32x128xf32>
    %53 = arith.addf %48, %52 : vector<32x128xf32>
    %cst_37 = arith.constant 5.000000e-01 : f32
    %54 = vector.broadcast %cst_37 : f32 to vector<32x128xf32>
    %55 = arith.cmpf oge, %53, %54 : vector<32x128xf32>
    %56 = arith.extui %55 : vector<32x128xi1> to vector<32x128xi32>
    %57 = arith.sitofp %56 : vector<32x128xi32> to vector<32x128xf32>
    %cst_38 = arith.constant 1.000000e+00 : f32
    %58 = vector.broadcast %cst_38 : f32 to vector<32x128xf32>
    %59 = arith.subf %58, %57 : vector<32x128xf32>
    %60 = arith.mulf %53, %59 : vector<32x128xf32>
    %c0_39 = arith.constant 0 : index
    %c0_40 = arith.constant 0 : index
    %61 = vector.load %arg10[%c0_39, %c0_40] : memref<32x128xf32, #tpu.memory_space<vmem>>, vector<32x128xf32>
    tpu.vector_store %arg10[%c0_39, %c0_40], %60 {strides = array<i32>} : memref<32x128xf32, #tpu.memory_space<vmem>>, vector<32x128xf32>,
    %cst_41 = arith.constant dense<0.000000e+00> : vector<32x128xf32>
    %62 = tpu.matmul %10, %57, %cst_41 {dimension_numbers = #tpu.dot_dimension_numbers<[1], [0], [0], [1], [0, 0, 1, 1], [], []>} : vector<32x32xf32>, vector<32x128xf32>, vector<32x128xf32> -> vector<32x128xf32>
    %63 = vector.broadcast %11 : vector<32x1xf32> to vector<32x128xf32>
    %64 = arith.addf %62, %63 : vector<32x128xf32>
    %65 = arith.index_cast %c0_i32 : i32 to index
    %c0_42 = arith.constant 0 : index
    %c0_43 = arith.constant 0 : index
    %66 = vector.load %arg6[%65, %c0_42, %c0_43] : memref<2x32x128xf32, #tpu.memory_space<vmem>>, vector<1x32x128xf32>
    %67 = vector.shape_cast %66 : vector<1x32x128xf32> to vector<32x128xf32>
    %68 = vector.shape_cast %64 : vector<32x128xf32> to vector<1x32x128xf32>
    tpu.vector_store %arg6[%65, %c0_42, %c0_43], %68 {strides = array<i32>} : memref<2x32x128xf32, #tpu.memory_space<vmem>>, vector<1x32x128xf32>,
    %c0_44 = arith.constant 0 : index
    %c0_45 = arith.constant 0 : index
    %69 = vector.load %arg11[%c0_44, %c0_45] : memref<32x128xf32, #tpu.memory_space<vmem>>, vector<32x128xf32>
    %70 = arith.addf %69, %64 : vector<32x128xf32>
    %c0_46 = arith.constant 0 : index
    %c0_47 = arith.constant 0 : index
    %71 = vector.load %arg11[%c0_46, %c0_47] : memref<32x128xf32, #tpu.memory_space<vmem>>, vector<32x128xf32>
    tpu.vector_store %arg11[%c0_46, %c0_47], %70 {strides = array<i32>} : memref<32x128xf32, #tpu.memory_space<vmem>>, vector<32x128xf32>,
    %c0_48 = arith.constant 0 : index
    %c0_49 = arith.constant 0 : index
    %72 = vector.load %arg12[%c0_48, %c0_49] : memref<32x128xf32, #tpu.memory_space<vmem>>, vector<32x128xf32>
    %73 = arith.mulf %64, %64 : vector<32x128xf32>
    %74 = arith.addf %72, %73 : vector<32x128xf32>
    %c0_50 = arith.constant 0 : index
    %c0_51 = arith.constant 0 : index
    %75 = vector.load %arg12[%c0_50, %c0_51] : memref<32x128xf32, #tpu.memory_space<vmem>>, vector<32x128xf32>
    tpu.vector_store %arg12[%c0_50, %c0_51], %74 {strides = array<i32>} : memref<32x128xf32, #tpu.memory_space<vmem>>, vector<32x128xf32>,
    %c1_i32 = arith.constant 1 : i32
    %76 = arith.index_cast %c1_i32 : i32 to index
    %c0_52 = arith.constant 0 : index
    %c0_53 = arith.constant 0 : index
    %77 = vector.load %arg1[%76, %c0_52, %c0_53] : memref<2x96x128xf32, #tpu.memory_space<vmem>>, vector<1x96x128xf32>
    %78 = vector.shape_cast %77 : vector<1x96x128xf32> to vector<96x128xf32>
    %79 = vector.broadcast %8 : vector<96x1xf32> to vector<96x128xf32>
    %80 = arith.mulf %78, %79 : vector<96x128xf32>
    %81 = vector.broadcast %9 : vector<96x1xf32> to vector<96x128xf32>
    %82 = arith.addf %80, %81 : vector<96x128xf32>
    %c0_54 = arith.constant 0 : index
    %c0_55 = arith.constant 0 : index
    %83 = vector.load %arg9[%c0_54, %c0_55] : memref<96x128xf32, #tpu.memory_space<vmem>>, vector<96x128xf32>
    %c0_56 = arith.constant 0 : index
    %c0_57 = arith.constant 0 : index
    %84 = vector.load %arg9[%c0_56, %c0_57] : memref<96x128xf32, #tpu.memory_space<vmem>>, vector<96x128xf32>
    %85 = arith.subf %82, %84 : vector<96x128xf32>
    %cst_58 = arith.constant 0.666666686 : f32
    %86 = vector.broadcast %cst_58 : f32 to vector<96x128xf32>
    %87 = arith.mulf %85, %86 : vector<96x128xf32>
    %88 = arith.addf %83, %87 : vector<96x128xf32>
    %cst_59 = arith.constant 1.000000e+00 : f32
    %89 = vector.broadcast %cst_59 : f32 to vector<96x128xf32>
    %90 = arith.cmpf oge, %88, %89 : vector<96x128xf32>
    %91 = arith.extui %90 : vector<96x128xi1> to vector<96x128xi32>
    %92 = arith.sitofp %91 : vector<96x128xi32> to vector<96x128xf32>
    %cst_60 = arith.constant 1.000000e+00 : f32
    %93 = vector.broadcast %cst_60 : f32 to vector<96x128xf32>
    %94 = arith.subf %93, %92 : vector<96x128xf32>
    %95 = arith.mulf %88, %94 : vector<96x128xf32>
    %c0_61 = arith.constant 0 : index
    %c0_62 = arith.constant 0 : index
    %96 = vector.load %arg9[%c0_61, %c0_62] : memref<96x128xf32, #tpu.memory_space<vmem>>, vector<96x128xf32>
    tpu.vector_store %arg9[%c0_61, %c0_62], %95 {strides = array<i32>} : memref<96x128xf32, #tpu.memory_space<vmem>>, vector<96x128xf32>,
    %97 = vector.extract_strided_slice %92 {offsets = [0, 0], sizes = [32, 128], strides = [1, 1]} : vector<96x128xf32> to vector<32x128xf32>
    %98 = vector.shape_cast %97 : vector<32x128xf32> to vector<4x8x128xf32>
    %99 = arith.truncf %98 : vector<4x8x128xf32> to vector<4x8x128xbf16>
    %100 = vector.extract_strided_slice %92 {offsets = [32, 0], sizes = [32, 128], strides = [1, 1]} : vector<96x128xf32> to vector<32x128xf32>
    %101 = vector.shape_cast %100 : vector<32x128xf32> to vector<4x8x128xf32>
    %102 = arith.truncf %101 : vector<4x8x128xf32> to vector<4x8x128xbf16>
    %103 = vector.extract_strided_slice %92 {offsets = [64, 0], sizes = [32, 128], strides = [1, 1]} : vector<96x128xf32> to vector<32x128xf32>
    %104 = vector.shape_cast %103 : vector<32x128xf32> to vector<4x8x128xf32>
    %105 = arith.truncf %104 : vector<4x8x128xf32> to vector<4x8x128xbf16>
    "tpu.trace_start"() <{level = 10 : i32, message = "hem,hen->hmn"}> : () -> ()
    %cst_63 = arith.constant dense<0.000000e+00> : vector<4x128x128xf32>
    %106 = tpu.matmul %102, %99, %cst_63 {dimension_numbers = #tpu.dot_dimension_numbers<[1], [1], [2], [2], [0, 0, 0, 2, 1, 2], [0], [0]>} : vector<4x8x128xbf16>, vector<4x8x128xbf16>, vector<4x128x128xf32> -> vector<4x128x128xf32>
    "tpu.trace_stop"() : () -> ()
    %107 = arith.truncf %106 : vector<4x128x128xf32> to vector<4x128x128xbf16>
    "tpu.trace_start"() <{level = 10 : i32, message = "hem,hmn->hen"}> : () -> ()
    %cst_64 = arith.constant dense<0.000000e+00> : vector<4x8x128xf32>
    %108 = tpu.matmul %105, %107, %cst_64 {dimension_numbers = #tpu.dot_dimension_numbers<[2], [1], [1], [2], [0, 0, 0, 1, 1, 2], [0], [0]>} : vector<4x8x128xbf16>, vector<4x128x128xbf16>, vector<4x8x128xf32> -> vector<4x8x128xf32>
    "tpu.trace_stop"() : () -> ()
    %cst_65 = arith.constant 1.250000e-01 : f32
    %109 = vector.broadcast %cst_65 : f32 to vector<4x8x128xf32>
    %110 = arith.mulf %108, %109 : vector<4x8x128xf32>
    %111 = vector.shape_cast %110 : vector<4x8x128xf32> to vector<32x128xf32>
    %c0_66 = arith.constant 0 : index
    %c0_67 = arith.constant 0 : index
    %112 = vector.load %arg10[%c0_66, %c0_67] : memref<32x128xf32, #tpu.memory_space<vmem>>, vector<32x128xf32>
    %c0_68 = arith.constant 0 : index
    %c0_69 = arith.constant 0 : index
    %113 = vector.load %arg10[%c0_68, %c0_69] : memref<32x128xf32, #tpu.memory_space<vmem>>, vector<32x128xf32>
    %114 = arith.subf %111, %113 : vector<32x128xf32>
    %cst_70 = arith.constant 0.666666686 : f32
    %115 = vector.broadcast %cst_70 : f32 to vector<32x128xf32>
    %116 = arith.mulf %114, %115 : vector<32x128xf32>
    %117 = arith.addf %112, %116 : vector<32x128xf32>
    %cst_71 = arith.constant 5.000000e-01 : f32
    %118 = vector.broadcast %cst_71 : f32 to vector<32x128xf32>
    %119 = arith.cmpf oge, %117, %118 : vector<32x128xf32>
    %120 = arith.extui %119 : vector<32x128xi1> to vector<32x128xi32>
    %121 = arith.sitofp %120 : vector<32x128xi32> to vector<32x128xf32>
    %cst_72 = arith.constant 1.000000e+00 : f32
    %122 = vector.broadcast %cst_72 : f32 to vector<32x128xf32>
    %123 = arith.subf %122, %121 : vector<32x128xf32>
    %124 = arith.mulf %117, %123 : vector<32x128xf32>
    %c0_73 = arith.constant 0 : index
    %c0_74 = arith.constant 0 : index
    %125 = vector.load %arg10[%c0_73, %c0_74] : memref<32x128xf32, #tpu.memory_space<vmem>>, vector<32x128xf32>
    tpu.vector_store %arg10[%c0_73, %c0_74], %124 {strides = array<i32>} : memref<32x128xf32, #tpu.memory_space<vmem>>, vector<32x128xf32>,
    %cst_75 = arith.constant dense<0.000000e+00> : vector<32x128xf32>
    %126 = tpu.matmul %10, %121, %cst_75 {dimension_numbers = #tpu.dot_dimension_numbers<[1], [0], [0], [1], [0, 0, 1, 1], [], []>} : vector<32x32xf32>, vector<32x128xf32>, vector<32x128xf32> -> vector<32x128xf32>
    %127 = vector.broadcast %11 : vector<32x1xf32> to vector<32x128xf32>
    %128 = arith.addf %126, %127 : vector<32x128xf32>
    %129 = arith.index_cast %c1_i32 : i32 to index
    %c0_76 = arith.constant 0 : index
    %c0_77 = arith.constant 0 : index
    %130 = vector.load %arg6[%129, %c0_76, %c0_77] : memref<2x32x128xf32, #tpu.memory_space<vmem>>, vector<1x32x128xf32>
    %131 = vector.shape_cast %130 : vector<1x32x128xf32> to vector<32x128xf32>
    %132 = vector.shape_cast %128 : vector<32x128xf32> to vector<1x32x128xf32>
    tpu.vector_store %arg6[%129, %c0_76, %c0_77], %132 {strides = array<i32>} : memref<2x32x128xf32, #tpu.memory_space<vmem>>, vector<1x32x128xf32>,
    %c0_78 = arith.constant 0 : index
    %c0_79 = arith.constant 0 : index
    %133 = vector.load %arg11[%c0_78, %c0_79] : memref<32x128xf32, #tpu.memory_space<vmem>>, vector<32x128xf32>
    %134 = arith.addf %133, %128 : vector<32x128xf32>
    %c0_80 = arith.constant 0 : index
    %c0_81 = arith.constant 0 : index
    %135 = vector.load %arg11[%c0_80, %c0_81] : memref<32x128xf32, #tpu.memory_space<vmem>>, vector<32x128xf32>
    tpu.vector_store %arg11[%c0_80, %c0_81], %134 {strides = array<i32>} : memref<32x128xf32, #tpu.memory_space<vmem>>, vector<32x128xf32>,
    %c0_82 = arith.constant 0 : index
    %c0_83 = arith.constant 0 : index
    %136 = vector.load %arg12[%c0_82, %c0_83] : memref<32x128xf32, #tpu.memory_space<vmem>>, vector<32x128xf32>
    %137 = arith.mulf %128, %128 : vector<32x128xf32>
    %138 = arith.addf %136, %137 : vector<32x128xf32>
    %c0_84 = arith.constant 0 : index
    %c0_85 = arith.constant 0 : index
    %139 = vector.load %arg12[%c0_84, %c0_85] : memref<32x128xf32, #tpu.memory_space<vmem>>, vector<32x128xf32>
    tpu.vector_store %arg12[%c0_84, %c0_85], %138 {strides = array<i32>} : memref<32x128xf32, #tpu.memory_space<vmem>>, vector<32x128xf32>,
    %c2_i32 = arith.constant 2 : i32
    %c0_86 = arith.constant 0 : index
    %c0_87 = arith.constant 0 : index
    %140 = vector.load %arg11[%c0_86, %c0_87] : memref<32x128xf32, #tpu.memory_space<vmem>>, vector<32x128xf32>
    %cst_88 = arith.constant dense<0.000000e+00> : vector<32xf32>
    %141 = vector.multi_reduction <add>, %140, %cst_88 [1] : vector<32x128xf32> to vector<32xf32>
    %142 = vector.shape_cast %141 : vector<32xf32> to vector<32x1xf32>
    %c0_89 = arith.constant 0 : index
    %c0_90 = arith.constant 0 : index
    %c0_91 = arith.constant 0 : index
    %143 = vector.load %arg7[%c0_89, %c0_90, %c0_91] : memref<1x32x1xf32, #tpu.memory_space<vmem>>, vector<1x32x1xf32>
    %144 = vector.shape_cast %143 : vector<1x32x1xf32> to vector<32x1xf32>
    %145 = vector.shape_cast %142 : vector<32x1xf32> to vector<1x32x1xf32>
    tpu.vector_store %arg7[%c0_89, %c0_90, %c0_91], %145 {strides = array<i32>} : memref<1x32x1xf32, #tpu.memory_space<vmem>>, vector<1x32x1xf32>,
    %c0_92 = arith.constant 0 : index
    %c0_93 = arith.constant 0 : index
    %146 = vector.load %arg12[%c0_92, %c0_93] : memref<32x128xf32, #tpu.memory_space<vmem>>, vector<32x128xf32>
    %cst_94 = arith.constant dense<0.000000e+00> : vector<32xf32>
    %147 = vector.multi_reduction <add>, %146, %cst_94 [1] : vector<32x128xf32> to vector<32xf32>
    %148 = vector.shape_cast %147 : vector<32xf32> to vector<32x1xf32>
    %c0_95 = arith.constant 0 : index
    %c0_96 = arith.constant 0 : index
    %c0_97 = arith.constant 0 : index
    %149 = vector.load %arg8[%c0_95, %c0_96, %c0_97] : memref<1x32x1xf32, #tpu.memory_space<vmem>>, vector<1x32x1xf32>
    %150 = vector.shape_cast %149 : vector<1x32x1xf32> to vector<32x1xf32>
    %151 = vector.shape_cast %148 : vector<32x1xf32> to vector<1x32x1xf32>
    tpu.vector_store %arg8[%c0_95, %c0_96, %c0_97], %151 {strides = array<i32>} : memref<1x32x1xf32, #tpu.memory_space<vmem>>, vector<1x32x1xf32>,
    return
  }
  func.func @transform_0(%arg0: i32) -> (i32, i32, i32) {
    %c0_i32 = arith.constant 0 : i32
    %c0_i32_0 = arith.constant 0 : i32
    %c0_i32_1 = arith.constant 0 : i32
    return %c0_i32, %c0_i32_0, %arg0 : i32, i32, i32
  }
  func.func @transform_1(%arg0: i32) -> (i32, i32) {
    %c0_i32 = arith.constant 0 : i32
    %c0_i32_0 = arith.constant 0 : i32
    %c0_i32_1 = arith.constant 0 : i32
    return %c0_i32, %c0_i32_0 : i32, i32
  }
  func.func @transform_2(%arg0: i32) -> (i32, i32) {
    %c0_i32 = arith.constant 0 : i32
    %c0_i32_0 = arith.constant 0 : i32
    %c0_i32_1 = arith.constant 0 : i32
    return %c0_i32, %c0_i32_0 : i32, i32
  }
  func.func @transform_3(%arg0: i32) -> (i32, i32) {
    %c0_i32 = arith.constant 0 : i32
    %c0_i32_0 = arith.constant 0 : i32
    %c0_i32_1 = arith.constant 0 : i32
    return %c0_i32, %c0_i32_0 : i32, i32
  }
  func.func @transform_4(%arg0: i32) -> (i32, i32) {
    %c0_i32 = arith.constant 0 : i32
    %c0_i32_0 = arith.constant 0 : i32
    %c0_i32_1 = arith.constant 0 : i32
    return %c0_i32, %c0_i32_0 : i32, i32
  }
  func.func @transform_5(%arg0: i32) -> (i32, i32, i32) {
    %c0_i32 = arith.constant 0 : i32
    %c0_i32_0 = arith.constant 0 : i32
    %c0_i32_1 = arith.constant 0 : i32
    return %c0_i32, %c0_i32_0, %arg0 : i32, i32, i32
  }
  func.func @transform_6(%arg0: i32) -> (i32, i32, i32) {
    %c0_i32 = arith.constant 0 : i32
    %c0_i32_0 = arith.constant 0 : i32
    %c0_i32_1 = arith.constant 0 : i32
    return %arg0, %c0_i32, %c0_i32_0 : i32, i32, i32
  }
  func.func @transform_7(%arg0: i32) -> (i32, i32, i32) {
    %c0_i32 = arith.constant 0 : i32
    %c0_i32_0 = arith.constant 0 : i32
    %c0_i32_1 = arith.constant 0 : i32
    return %arg0, %c0_i32, %c0_i32_0 : i32, i32, i32
  }
}

module attributes {stable_mosaic.version = 11 : i64} {
  func.func @_lif_conv_kernel(%arg0: i32, %arg1: memref<2x32x128xf32, #tpu.memory_space<vmem>>, %arg2: memref<32x1xf32, #tpu.memory_space<vmem>>, %arg3: memref<32x1xf32, #tpu.memory_space<vmem>>, %arg4: memref<96x32xf32, #tpu.memory_space<vmem>>, %arg5: memref<96x1xf32, #tpu.memory_space<vmem>>, %arg6: memref<2x96x128xf32, #tpu.memory_space<vmem>>, %arg7: memref<1x96x1xf32, #tpu.memory_space<vmem>>, %arg8: memref<1x96x1xf32, #tpu.memory_space<vmem>>, %arg9: memref<32x128xf32, #tpu.memory_space<vmem>>, %arg10: memref<96x128xf32, #tpu.memory_space<vmem>>, %arg11: memref<96x128xf32, #tpu.memory_space<vmem>>) attributes {dimension_semantics = [#tpu.dimension_semantics<parallel>], iteration_bounds = array<i64: 2>, scalar_prefetch = 0 : i64, scratch_operands = 3 : i64, tpu.core_type = #tpu.core_type<tc>, window_params = [{transform_indices = @transform_0, window_bounds = array<i64: 2, 32, 128>}, {pipeline_mode = #tpu.pipeline_mode<synchronous>, transform_indices = @transform_1, window_bounds = array<i64: 32, 1>}, {pipeline_mode = #tpu.pipeline_mode<synchronous>, transform_indices = @transform_2, window_bounds = array<i64: 32, 1>}, {pipeline_mode = #tpu.pipeline_mode<synchronous>, transform_indices = @transform_3, window_bounds = array<i64: 96, 32>}, {pipeline_mode = #tpu.pipeline_mode<synchronous>, transform_indices = @transform_4, window_bounds = array<i64: 96, 1>}, {transform_indices = @transform_5, window_bounds = array<i64: 2, 96, 128>}, {transform_indices = @transform_6, window_bounds = array<i64: 1, 96, 1>}, {transform_indices = @transform_7, window_bounds = array<i64: 1, 96, 1>}]} {
    %cst = arith.constant 0.000000e+00 : f32
    %0 = vector.broadcast %cst : f32 to vector<32x128xf32>
    %c0 = arith.constant 0 : index
    %c0_0 = arith.constant 0 : index
    %1 = vector.load %arg9[%c0, %c0_0] : memref<32x128xf32, #tpu.memory_space<vmem>>, vector<32x128xf32>
    tpu.vector_store %arg9[%c0, %c0_0], %0 {strides = array<i32>} : memref<32x128xf32, #tpu.memory_space<vmem>>, vector<32x128xf32>,
    %cst_1 = arith.constant 0.000000e+00 : f32
    %2 = vector.broadcast %cst_1 : f32 to vector<96x128xf32>
    %c0_2 = arith.constant 0 : index
    %c0_3 = arith.constant 0 : index
    %3 = vector.load %arg10[%c0_2, %c0_3] : memref<96x128xf32, #tpu.memory_space<vmem>>, vector<96x128xf32>
    tpu.vector_store %arg10[%c0_2, %c0_3], %2 {strides = array<i32>} : memref<96x128xf32, #tpu.memory_space<vmem>>, vector<96x128xf32>,
    %cst_4 = arith.constant 0.000000e+00 : f32
    %4 = vector.broadcast %cst_4 : f32 to vector<96x128xf32>
    %c0_5 = arith.constant 0 : index
    %c0_6 = arith.constant 0 : index
    %5 = vector.load %arg11[%c0_5, %c0_6] : memref<96x128xf32, #tpu.memory_space<vmem>>, vector<96x128xf32>
    tpu.vector_store %arg11[%c0_5, %c0_6], %4 {strides = array<i32>} : memref<96x128xf32, #tpu.memory_space<vmem>>, vector<96x128xf32>,
    %c0_7 = arith.constant 0 : index
    %c0_8 = arith.constant 0 : index
    %6 = vector.load %arg2[%c0_7, %c0_8] : memref<32x1xf32, #tpu.memory_space<vmem>>, vector<32x1xf32>
    %c0_9 = arith.constant 0 : index
    %c0_10 = arith.constant 0 : index
    %7 = vector.load %arg3[%c0_9, %c0_10] : memref<32x1xf32, #tpu.memory_space<vmem>>, vector<32x1xf32>
    %c0_11 = arith.constant 0 : index
    %c0_12 = arith.constant 0 : index
    %8 = vector.load %arg4[%c0_11, %c0_12] : memref<96x32xf32, #tpu.memory_space<vmem>>, vector<96x32xf32>
    %c0_13 = arith.constant 0 : index
    %c0_14 = arith.constant 0 : index
    %9 = vector.load %arg5[%c0_13, %c0_14] : memref<96x1xf32, #tpu.memory_space<vmem>>, vector<96x1xf32>
    %c0_i32 = arith.constant 0 : i32
    %10 = arith.index_cast %c0_i32 : i32 to index
    %c0_15 = arith.constant 0 : index
    %c0_16 = arith.constant 0 : index
    %11 = vector.load %arg1[%10, %c0_15, %c0_16] : memref<2x32x128xf32, #tpu.memory_space<vmem>>, vector<1x32x128xf32>
    %12 = vector.shape_cast %11 : vector<1x32x128xf32> to vector<32x128xf32>
    %13 = vector.broadcast %6 : vector<32x1xf32> to vector<32x128xf32>
    %14 = arith.mulf %12, %13 : vector<32x128xf32>
    %15 = vector.broadcast %7 : vector<32x1xf32> to vector<32x128xf32>
    %16 = arith.addf %14, %15 : vector<32x128xf32>
    %c0_17 = arith.constant 0 : index
    %c0_18 = arith.constant 0 : index
    %17 = vector.load %arg9[%c0_17, %c0_18] : memref<32x128xf32, #tpu.memory_space<vmem>>, vector<32x128xf32>
    %c0_19 = arith.constant 0 : index
    %c0_20 = arith.constant 0 : index
    %18 = vector.load %arg9[%c0_19, %c0_20] : memref<32x128xf32, #tpu.memory_space<vmem>>, vector<32x128xf32>
    %19 = arith.subf %16, %18 : vector<32x128xf32>
    %cst_21 = arith.constant 0.666666686 : f32
    %20 = vector.broadcast %cst_21 : f32 to vector<32x128xf32>
    %21 = arith.mulf %19, %20 : vector<32x128xf32>
    %22 = arith.addf %17, %21 : vector<32x128xf32>
    %cst_22 = arith.constant 1.000000e+00 : f32
    %23 = vector.broadcast %cst_22 : f32 to vector<32x128xf32>
    %24 = arith.cmpf oge, %22, %23 : vector<32x128xf32>
    %25 = arith.extui %24 : vector<32x128xi1> to vector<32x128xi32>
    %26 = arith.sitofp %25 : vector<32x128xi32> to vector<32x128xf32>
    %cst_23 = arith.constant 1.000000e+00 : f32
    %27 = vector.broadcast %cst_23 : f32 to vector<32x128xf32>
    %28 = arith.subf %27, %26 : vector<32x128xf32>
    %29 = arith.mulf %22, %28 : vector<32x128xf32>
    %c0_24 = arith.constant 0 : index
    %c0_25 = arith.constant 0 : index
    %30 = vector.load %arg9[%c0_24, %c0_25] : memref<32x128xf32, #tpu.memory_space<vmem>>, vector<32x128xf32>
    tpu.vector_store %arg9[%c0_24, %c0_25], %29 {strides = array<i32>} : memref<32x128xf32, #tpu.memory_space<vmem>>, vector<32x128xf32>,
    %cst_26 = arith.constant dense<0.000000e+00> : vector<96x128xf32>
    %31 = tpu.matmul %8, %26, %cst_26 {dimension_numbers = #tpu.dot_dimension_numbers<[1], [0], [0], [1], [0, 0, 1, 1], [], []>} : vector<96x32xf32>, vector<32x128xf32>, vector<96x128xf32> -> vector<96x128xf32>
    %32 = vector.broadcast %9 : vector<96x1xf32> to vector<96x128xf32>
    %33 = arith.addf %31, %32 : vector<96x128xf32>
    %34 = arith.index_cast %c0_i32 : i32 to index
    %c0_27 = arith.constant 0 : index
    %c0_28 = arith.constant 0 : index
    %35 = vector.load %arg6[%34, %c0_27, %c0_28] : memref<2x96x128xf32, #tpu.memory_space<vmem>>, vector<1x96x128xf32>
    %36 = vector.shape_cast %35 : vector<1x96x128xf32> to vector<96x128xf32>
    %37 = vector.shape_cast %33 : vector<96x128xf32> to vector<1x96x128xf32>
    tpu.vector_store %arg6[%34, %c0_27, %c0_28], %37 {strides = array<i32>} : memref<2x96x128xf32, #tpu.memory_space<vmem>>, vector<1x96x128xf32>,
    %c0_29 = arith.constant 0 : index
    %c0_30 = arith.constant 0 : index
    %38 = vector.load %arg10[%c0_29, %c0_30] : memref<96x128xf32, #tpu.memory_space<vmem>>, vector<96x128xf32>
    %39 = arith.addf %38, %33 : vector<96x128xf32>
    %c0_31 = arith.constant 0 : index
    %c0_32 = arith.constant 0 : index
    %40 = vector.load %arg10[%c0_31, %c0_32] : memref<96x128xf32, #tpu.memory_space<vmem>>, vector<96x128xf32>
    tpu.vector_store %arg10[%c0_31, %c0_32], %39 {strides = array<i32>} : memref<96x128xf32, #tpu.memory_space<vmem>>, vector<96x128xf32>,
    %c0_33 = arith.constant 0 : index
    %c0_34 = arith.constant 0 : index
    %41 = vector.load %arg11[%c0_33, %c0_34] : memref<96x128xf32, #tpu.memory_space<vmem>>, vector<96x128xf32>
    %42 = arith.mulf %33, %33 : vector<96x128xf32>
    %43 = arith.addf %41, %42 : vector<96x128xf32>
    %c0_35 = arith.constant 0 : index
    %c0_36 = arith.constant 0 : index
    %44 = vector.load %arg11[%c0_35, %c0_36] : memref<96x128xf32, #tpu.memory_space<vmem>>, vector<96x128xf32>
    tpu.vector_store %arg11[%c0_35, %c0_36], %43 {strides = array<i32>} : memref<96x128xf32, #tpu.memory_space<vmem>>, vector<96x128xf32>,
    %c1_i32 = arith.constant 1 : i32
    %45 = arith.index_cast %c1_i32 : i32 to index
    %c0_37 = arith.constant 0 : index
    %c0_38 = arith.constant 0 : index
    %46 = vector.load %arg1[%45, %c0_37, %c0_38] : memref<2x32x128xf32, #tpu.memory_space<vmem>>, vector<1x32x128xf32>
    %47 = vector.shape_cast %46 : vector<1x32x128xf32> to vector<32x128xf32>
    %48 = vector.broadcast %6 : vector<32x1xf32> to vector<32x128xf32>
    %49 = arith.mulf %47, %48 : vector<32x128xf32>
    %50 = vector.broadcast %7 : vector<32x1xf32> to vector<32x128xf32>
    %51 = arith.addf %49, %50 : vector<32x128xf32>
    %c0_39 = arith.constant 0 : index
    %c0_40 = arith.constant 0 : index
    %52 = vector.load %arg9[%c0_39, %c0_40] : memref<32x128xf32, #tpu.memory_space<vmem>>, vector<32x128xf32>
    %c0_41 = arith.constant 0 : index
    %c0_42 = arith.constant 0 : index
    %53 = vector.load %arg9[%c0_41, %c0_42] : memref<32x128xf32, #tpu.memory_space<vmem>>, vector<32x128xf32>
    %54 = arith.subf %51, %53 : vector<32x128xf32>
    %cst_43 = arith.constant 0.666666686 : f32
    %55 = vector.broadcast %cst_43 : f32 to vector<32x128xf32>
    %56 = arith.mulf %54, %55 : vector<32x128xf32>
    %57 = arith.addf %52, %56 : vector<32x128xf32>
    %cst_44 = arith.constant 1.000000e+00 : f32
    %58 = vector.broadcast %cst_44 : f32 to vector<32x128xf32>
    %59 = arith.cmpf oge, %57, %58 : vector<32x128xf32>
    %60 = arith.extui %59 : vector<32x128xi1> to vector<32x128xi32>
    %61 = arith.sitofp %60 : vector<32x128xi32> to vector<32x128xf32>
    %cst_45 = arith.constant 1.000000e+00 : f32
    %62 = vector.broadcast %cst_45 : f32 to vector<32x128xf32>
    %63 = arith.subf %62, %61 : vector<32x128xf32>
    %64 = arith.mulf %57, %63 : vector<32x128xf32>
    %c0_46 = arith.constant 0 : index
    %c0_47 = arith.constant 0 : index
    %65 = vector.load %arg9[%c0_46, %c0_47] : memref<32x128xf32, #tpu.memory_space<vmem>>, vector<32x128xf32>
    tpu.vector_store %arg9[%c0_46, %c0_47], %64 {strides = array<i32>} : memref<32x128xf32, #tpu.memory_space<vmem>>, vector<32x128xf32>,
    %cst_48 = arith.constant dense<0.000000e+00> : vector<96x128xf32>
    %66 = tpu.matmul %8, %61, %cst_48 {dimension_numbers = #tpu.dot_dimension_numbers<[1], [0], [0], [1], [0, 0, 1, 1], [], []>} : vector<96x32xf32>, vector<32x128xf32>, vector<96x128xf32> -> vector<96x128xf32>
    %67 = vector.broadcast %9 : vector<96x1xf32> to vector<96x128xf32>
    %68 = arith.addf %66, %67 : vector<96x128xf32>
    %69 = arith.index_cast %c1_i32 : i32 to index
    %c0_49 = arith.constant 0 : index
    %c0_50 = arith.constant 0 : index
    %70 = vector.load %arg6[%69, %c0_49, %c0_50] : memref<2x96x128xf32, #tpu.memory_space<vmem>>, vector<1x96x128xf32>
    %71 = vector.shape_cast %70 : vector<1x96x128xf32> to vector<96x128xf32>
    %72 = vector.shape_cast %68 : vector<96x128xf32> to vector<1x96x128xf32>
    tpu.vector_store %arg6[%69, %c0_49, %c0_50], %72 {strides = array<i32>} : memref<2x96x128xf32, #tpu.memory_space<vmem>>, vector<1x96x128xf32>,
    %c0_51 = arith.constant 0 : index
    %c0_52 = arith.constant 0 : index
    %73 = vector.load %arg10[%c0_51, %c0_52] : memref<96x128xf32, #tpu.memory_space<vmem>>, vector<96x128xf32>
    %74 = arith.addf %73, %68 : vector<96x128xf32>
    %c0_53 = arith.constant 0 : index
    %c0_54 = arith.constant 0 : index
    %75 = vector.load %arg10[%c0_53, %c0_54] : memref<96x128xf32, #tpu.memory_space<vmem>>, vector<96x128xf32>
    tpu.vector_store %arg10[%c0_53, %c0_54], %74 {strides = array<i32>} : memref<96x128xf32, #tpu.memory_space<vmem>>, vector<96x128xf32>,
    %c0_55 = arith.constant 0 : index
    %c0_56 = arith.constant 0 : index
    %76 = vector.load %arg11[%c0_55, %c0_56] : memref<96x128xf32, #tpu.memory_space<vmem>>, vector<96x128xf32>
    %77 = arith.mulf %68, %68 : vector<96x128xf32>
    %78 = arith.addf %76, %77 : vector<96x128xf32>
    %c0_57 = arith.constant 0 : index
    %c0_58 = arith.constant 0 : index
    %79 = vector.load %arg11[%c0_57, %c0_58] : memref<96x128xf32, #tpu.memory_space<vmem>>, vector<96x128xf32>
    tpu.vector_store %arg11[%c0_57, %c0_58], %78 {strides = array<i32>} : memref<96x128xf32, #tpu.memory_space<vmem>>, vector<96x128xf32>,
    %c2_i32 = arith.constant 2 : i32
    %c0_59 = arith.constant 0 : index
    %c0_60 = arith.constant 0 : index
    %80 = vector.load %arg10[%c0_59, %c0_60] : memref<96x128xf32, #tpu.memory_space<vmem>>, vector<96x128xf32>
    %cst_61 = arith.constant dense<0.000000e+00> : vector<96xf32>
    %81 = vector.multi_reduction <add>, %80, %cst_61 [1] : vector<96x128xf32> to vector<96xf32>
    %82 = vector.shape_cast %81 : vector<96xf32> to vector<96x1xf32>
    %c0_62 = arith.constant 0 : index
    %c0_63 = arith.constant 0 : index
    %c0_64 = arith.constant 0 : index
    %83 = vector.load %arg7[%c0_62, %c0_63, %c0_64] : memref<1x96x1xf32, #tpu.memory_space<vmem>>, vector<1x96x1xf32>
    %84 = vector.shape_cast %83 : vector<1x96x1xf32> to vector<96x1xf32>
    %85 = vector.shape_cast %82 : vector<96x1xf32> to vector<1x96x1xf32>
    tpu.vector_store %arg7[%c0_62, %c0_63, %c0_64], %85 {strides = array<i32>} : memref<1x96x1xf32, #tpu.memory_space<vmem>>, vector<1x96x1xf32>,
    %c0_65 = arith.constant 0 : index
    %c0_66 = arith.constant 0 : index
    %86 = vector.load %arg11[%c0_65, %c0_66] : memref<96x128xf32, #tpu.memory_space<vmem>>, vector<96x128xf32>
    %cst_67 = arith.constant dense<0.000000e+00> : vector<96xf32>
    %87 = vector.multi_reduction <add>, %86, %cst_67 [1] : vector<96x128xf32> to vector<96xf32>
    %88 = vector.shape_cast %87 : vector<96xf32> to vector<96x1xf32>
    %c0_68 = arith.constant 0 : index
    %c0_69 = arith.constant 0 : index
    %c0_70 = arith.constant 0 : index
    %89 = vector.load %arg8[%c0_68, %c0_69, %c0_70] : memref<1x96x1xf32, #tpu.memory_space<vmem>>, vector<1x96x1xf32>
    %90 = vector.shape_cast %89 : vector<1x96x1xf32> to vector<96x1xf32>
    %91 = vector.shape_cast %88 : vector<96x1xf32> to vector<1x96x1xf32>
    tpu.vector_store %arg8[%c0_68, %c0_69, %c0_70], %91 {strides = array<i32>} : memref<1x96x1xf32, #tpu.memory_space<vmem>>, vector<1x96x1xf32>,
    return
  }
  func.func @transform_0(%arg0: i32) -> (i32, i32, i32) {
    %c0_i32 = arith.constant 0 : i32
    %c0_i32_0 = arith.constant 0 : i32
    %c0_i32_1 = arith.constant 0 : i32
    return %c0_i32, %c0_i32_0, %arg0 : i32, i32, i32
  }
  func.func @transform_1(%arg0: i32) -> (i32, i32) {
    %c0_i32 = arith.constant 0 : i32
    %c0_i32_0 = arith.constant 0 : i32
    %c0_i32_1 = arith.constant 0 : i32
    return %c0_i32, %c0_i32_0 : i32, i32
  }
  func.func @transform_2(%arg0: i32) -> (i32, i32) {
    %c0_i32 = arith.constant 0 : i32
    %c0_i32_0 = arith.constant 0 : i32
    %c0_i32_1 = arith.constant 0 : i32
    return %c0_i32, %c0_i32_0 : i32, i32
  }
  func.func @transform_3(%arg0: i32) -> (i32, i32) {
    %c0_i32 = arith.constant 0 : i32
    %c0_i32_0 = arith.constant 0 : i32
    %c0_i32_1 = arith.constant 0 : i32
    return %c0_i32, %c0_i32_0 : i32, i32
  }
  func.func @transform_4(%arg0: i32) -> (i32, i32) {
    %c0_i32 = arith.constant 0 : i32
    %c0_i32_0 = arith.constant 0 : i32
    %c0_i32_1 = arith.constant 0 : i32
    return %c0_i32, %c0_i32_0 : i32, i32
  }
  func.func @transform_5(%arg0: i32) -> (i32, i32, i32) {
    %c0_i32 = arith.constant 0 : i32
    %c0_i32_0 = arith.constant 0 : i32
    %c0_i32_1 = arith.constant 0 : i32
    return %c0_i32, %c0_i32_0, %arg0 : i32, i32, i32
  }
  func.func @transform_6(%arg0: i32) -> (i32, i32, i32) {
    %c0_i32 = arith.constant 0 : i32
    %c0_i32_0 = arith.constant 0 : i32
    %c0_i32_1 = arith.constant 0 : i32
    return %arg0, %c0_i32, %c0_i32_0 : i32, i32, i32
  }
  func.func @transform_7(%arg0: i32) -> (i32, i32, i32) {
    %c0_i32 = arith.constant 0 : i32
    %c0_i32_0 = arith.constant 0 : i32
    %c0_i32_1 = arith.constant 0 : i32
    return %arg0, %c0_i32, %c0_i32_0 : i32, i32, i32
  }
}

module attributes {stable_mosaic.version = 11 : i64} {
  func.func @_lif_conv_kernel(%arg0: i32, %arg1: memref<2x128x128xf32, #tpu.memory_space<vmem>>, %arg2: memref<128x1xf32, #tpu.memory_space<vmem>>, %arg3: memref<128x1xf32, #tpu.memory_space<vmem>>, %arg4: memref<32x128xf32, #tpu.memory_space<vmem>>, %arg5: memref<32x1xf32, #tpu.memory_space<vmem>>, %arg6: memref<2x32x128xf32, #tpu.memory_space<vmem>>, %arg7: memref<1x32x1xf32, #tpu.memory_space<vmem>>, %arg8: memref<1x32x1xf32, #tpu.memory_space<vmem>>, %arg9: memref<128x128xf32, #tpu.memory_space<vmem>>, %arg10: memref<32x128xf32, #tpu.memory_space<vmem>>, %arg11: memref<32x128xf32, #tpu.memory_space<vmem>>) attributes {dimension_semantics = [#tpu.dimension_semantics<parallel>], iteration_bounds = array<i64: 2>, scalar_prefetch = 0 : i64, scratch_operands = 3 : i64, tpu.core_type = #tpu.core_type<tc>, window_params = [{transform_indices = @transform_0, window_bounds = array<i64: 2, 128, 128>}, {pipeline_mode = #tpu.pipeline_mode<synchronous>, transform_indices = @transform_1, window_bounds = array<i64: 128, 1>}, {pipeline_mode = #tpu.pipeline_mode<synchronous>, transform_indices = @transform_2, window_bounds = array<i64: 128, 1>}, {pipeline_mode = #tpu.pipeline_mode<synchronous>, transform_indices = @transform_3, window_bounds = array<i64: 32, 128>}, {pipeline_mode = #tpu.pipeline_mode<synchronous>, transform_indices = @transform_4, window_bounds = array<i64: 32, 1>}, {transform_indices = @transform_5, window_bounds = array<i64: 2, 32, 128>}, {transform_indices = @transform_6, window_bounds = array<i64: 1, 32, 1>}, {transform_indices = @transform_7, window_bounds = array<i64: 1, 32, 1>}]} {
    %cst = arith.constant 0.000000e+00 : f32
    %0 = vector.broadcast %cst : f32 to vector<128x128xf32>
    %c0 = arith.constant 0 : index
    %c0_0 = arith.constant 0 : index
    %1 = vector.load %arg9[%c0, %c0_0] : memref<128x128xf32, #tpu.memory_space<vmem>>, vector<128x128xf32>
    tpu.vector_store %arg9[%c0, %c0_0], %0 {strides = array<i32>} : memref<128x128xf32, #tpu.memory_space<vmem>>, vector<128x128xf32>,
    %cst_1 = arith.constant 0.000000e+00 : f32
    %2 = vector.broadcast %cst_1 : f32 to vector<32x128xf32>
    %c0_2 = arith.constant 0 : index
    %c0_3 = arith.constant 0 : index
    %3 = vector.load %arg10[%c0_2, %c0_3] : memref<32x128xf32, #tpu.memory_space<vmem>>, vector<32x128xf32>
    tpu.vector_store %arg10[%c0_2, %c0_3], %2 {strides = array<i32>} : memref<32x128xf32, #tpu.memory_space<vmem>>, vector<32x128xf32>,
    %cst_4 = arith.constant 0.000000e+00 : f32
    %4 = vector.broadcast %cst_4 : f32 to vector<32x128xf32>
    %c0_5 = arith.constant 0 : index
    %c0_6 = arith.constant 0 : index
    %5 = vector.load %arg11[%c0_5, %c0_6] : memref<32x128xf32, #tpu.memory_space<vmem>>, vector<32x128xf32>
    tpu.vector_store %arg11[%c0_5, %c0_6], %4 {strides = array<i32>} : memref<32x128xf32, #tpu.memory_space<vmem>>, vector<32x128xf32>,
    %c0_7 = arith.constant 0 : index
    %c0_8 = arith.constant 0 : index
    %6 = vector.load %arg2[%c0_7, %c0_8] : memref<128x1xf32, #tpu.memory_space<vmem>>, vector<128x1xf32>
    %c0_9 = arith.constant 0 : index
    %c0_10 = arith.constant 0 : index
    %7 = vector.load %arg3[%c0_9, %c0_10] : memref<128x1xf32, #tpu.memory_space<vmem>>, vector<128x1xf32>
    %c0_11 = arith.constant 0 : index
    %c0_12 = arith.constant 0 : index
    %8 = vector.load %arg4[%c0_11, %c0_12] : memref<32x128xf32, #tpu.memory_space<vmem>>, vector<32x128xf32>
    %c0_13 = arith.constant 0 : index
    %c0_14 = arith.constant 0 : index
    %9 = vector.load %arg5[%c0_13, %c0_14] : memref<32x1xf32, #tpu.memory_space<vmem>>, vector<32x1xf32>
    %c0_i32 = arith.constant 0 : i32
    %10 = arith.index_cast %c0_i32 : i32 to index
    %c0_15 = arith.constant 0 : index
    %c0_16 = arith.constant 0 : index
    %11 = vector.load %arg1[%10, %c0_15, %c0_16] : memref<2x128x128xf32, #tpu.memory_space<vmem>>, vector<1x128x128xf32>
    %12 = vector.shape_cast %11 : vector<1x128x128xf32> to vector<128x128xf32>
    %13 = vector.broadcast %6 : vector<128x1xf32> to vector<128x128xf32>
    %14 = arith.mulf %12, %13 : vector<128x128xf32>
    %15 = vector.broadcast %7 : vector<128x1xf32> to vector<128x128xf32>
    %16 = arith.addf %14, %15 : vector<128x128xf32>
    %c0_17 = arith.constant 0 : index
    %c0_18 = arith.constant 0 : index
    %17 = vector.load %arg9[%c0_17, %c0_18] : memref<128x128xf32, #tpu.memory_space<vmem>>, vector<128x128xf32>
    %c0_19 = arith.constant 0 : index
    %c0_20 = arith.constant 0 : index
    %18 = vector.load %arg9[%c0_19, %c0_20] : memref<128x128xf32, #tpu.memory_space<vmem>>, vector<128x128xf32>
    %19 = arith.subf %16, %18 : vector<128x128xf32>
    %cst_21 = arith.constant 0.666666686 : f32
    %20 = vector.broadcast %cst_21 : f32 to vector<128x128xf32>
    %21 = arith.mulf %19, %20 : vector<128x128xf32>
    %22 = arith.addf %17, %21 : vector<128x128xf32>
    %cst_22 = arith.constant 1.000000e+00 : f32
    %23 = vector.broadcast %cst_22 : f32 to vector<128x128xf32>
    %24 = arith.cmpf oge, %22, %23 : vector<128x128xf32>
    %25 = arith.extui %24 : vector<128x128xi1> to vector<128x128xi32>
    %26 = arith.sitofp %25 : vector<128x128xi32> to vector<128x128xf32>
    %cst_23 = arith.constant 1.000000e+00 : f32
    %27 = vector.broadcast %cst_23 : f32 to vector<128x128xf32>
    %28 = arith.subf %27, %26 : vector<128x128xf32>
    %29 = arith.mulf %22, %28 : vector<128x128xf32>
    %c0_24 = arith.constant 0 : index
    %c0_25 = arith.constant 0 : index
    %30 = vector.load %arg9[%c0_24, %c0_25] : memref<128x128xf32, #tpu.memory_space<vmem>>, vector<128x128xf32>
    tpu.vector_store %arg9[%c0_24, %c0_25], %29 {strides = array<i32>} : memref<128x128xf32, #tpu.memory_space<vmem>>, vector<128x128xf32>,
    %cst_26 = arith.constant dense<0.000000e+00> : vector<32x128xf32>
    %31 = tpu.matmul %8, %26, %cst_26 {dimension_numbers = #tpu.dot_dimension_numbers<[1], [0], [0], [1], [0, 0, 1, 1], [], []>} : vector<32x128xf32>, vector<128x128xf32>, vector<32x128xf32> -> vector<32x128xf32>
    %32 = vector.broadcast %9 : vector<32x1xf32> to vector<32x128xf32>
    %33 = arith.addf %31, %32 : vector<32x128xf32>
    %34 = arith.index_cast %c0_i32 : i32 to index
    %c0_27 = arith.constant 0 : index
    %c0_28 = arith.constant 0 : index
    %35 = vector.load %arg6[%34, %c0_27, %c0_28] : memref<2x32x128xf32, #tpu.memory_space<vmem>>, vector<1x32x128xf32>
    %36 = vector.shape_cast %35 : vector<1x32x128xf32> to vector<32x128xf32>
    %37 = vector.shape_cast %33 : vector<32x128xf32> to vector<1x32x128xf32>
    tpu.vector_store %arg6[%34, %c0_27, %c0_28], %37 {strides = array<i32>} : memref<2x32x128xf32, #tpu.memory_space<vmem>>, vector<1x32x128xf32>,
    %c0_29 = arith.constant 0 : index
    %c0_30 = arith.constant 0 : index
    %38 = vector.load %arg10[%c0_29, %c0_30] : memref<32x128xf32, #tpu.memory_space<vmem>>, vector<32x128xf32>
    %39 = arith.addf %38, %33 : vector<32x128xf32>
    %c0_31 = arith.constant 0 : index
    %c0_32 = arith.constant 0 : index
    %40 = vector.load %arg10[%c0_31, %c0_32] : memref<32x128xf32, #tpu.memory_space<vmem>>, vector<32x128xf32>
    tpu.vector_store %arg10[%c0_31, %c0_32], %39 {strides = array<i32>} : memref<32x128xf32, #tpu.memory_space<vmem>>, vector<32x128xf32>,
    %c0_33 = arith.constant 0 : index
    %c0_34 = arith.constant 0 : index
    %41 = vector.load %arg11[%c0_33, %c0_34] : memref<32x128xf32, #tpu.memory_space<vmem>>, vector<32x128xf32>
    %42 = arith.mulf %33, %33 : vector<32x128xf32>
    %43 = arith.addf %41, %42 : vector<32x128xf32>
    %c0_35 = arith.constant 0 : index
    %c0_36 = arith.constant 0 : index
    %44 = vector.load %arg11[%c0_35, %c0_36] : memref<32x128xf32, #tpu.memory_space<vmem>>, vector<32x128xf32>
    tpu.vector_store %arg11[%c0_35, %c0_36], %43 {strides = array<i32>} : memref<32x128xf32, #tpu.memory_space<vmem>>, vector<32x128xf32>,
    %c1_i32 = arith.constant 1 : i32
    %45 = arith.index_cast %c1_i32 : i32 to index
    %c0_37 = arith.constant 0 : index
    %c0_38 = arith.constant 0 : index
    %46 = vector.load %arg1[%45, %c0_37, %c0_38] : memref<2x128x128xf32, #tpu.memory_space<vmem>>, vector<1x128x128xf32>
    %47 = vector.shape_cast %46 : vector<1x128x128xf32> to vector<128x128xf32>
    %48 = vector.broadcast %6 : vector<128x1xf32> to vector<128x128xf32>
    %49 = arith.mulf %47, %48 : vector<128x128xf32>
    %50 = vector.broadcast %7 : vector<128x1xf32> to vector<128x128xf32>
    %51 = arith.addf %49, %50 : vector<128x128xf32>
    %c0_39 = arith.constant 0 : index
    %c0_40 = arith.constant 0 : index
    %52 = vector.load %arg9[%c0_39, %c0_40] : memref<128x128xf32, #tpu.memory_space<vmem>>, vector<128x128xf32>
    %c0_41 = arith.constant 0 : index
    %c0_42 = arith.constant 0 : index
    %53 = vector.load %arg9[%c0_41, %c0_42] : memref<128x128xf32, #tpu.memory_space<vmem>>, vector<128x128xf32>
    %54 = arith.subf %51, %53 : vector<128x128xf32>
    %cst_43 = arith.constant 0.666666686 : f32
    %55 = vector.broadcast %cst_43 : f32 to vector<128x128xf32>
    %56 = arith.mulf %54, %55 : vector<128x128xf32>
    %57 = arith.addf %52, %56 : vector<128x128xf32>
    %cst_44 = arith.constant 1.000000e+00 : f32
    %58 = vector.broadcast %cst_44 : f32 to vector<128x128xf32>
    %59 = arith.cmpf oge, %57, %58 : vector<128x128xf32>
    %60 = arith.extui %59 : vector<128x128xi1> to vector<128x128xi32>
    %61 = arith.sitofp %60 : vector<128x128xi32> to vector<128x128xf32>
    %cst_45 = arith.constant 1.000000e+00 : f32
    %62 = vector.broadcast %cst_45 : f32 to vector<128x128xf32>
    %63 = arith.subf %62, %61 : vector<128x128xf32>
    %64 = arith.mulf %57, %63 : vector<128x128xf32>
    %c0_46 = arith.constant 0 : index
    %c0_47 = arith.constant 0 : index
    %65 = vector.load %arg9[%c0_46, %c0_47] : memref<128x128xf32, #tpu.memory_space<vmem>>, vector<128x128xf32>
    tpu.vector_store %arg9[%c0_46, %c0_47], %64 {strides = array<i32>} : memref<128x128xf32, #tpu.memory_space<vmem>>, vector<128x128xf32>,
    %cst_48 = arith.constant dense<0.000000e+00> : vector<32x128xf32>
    %66 = tpu.matmul %8, %61, %cst_48 {dimension_numbers = #tpu.dot_dimension_numbers<[1], [0], [0], [1], [0, 0, 1, 1], [], []>} : vector<32x128xf32>, vector<128x128xf32>, vector<32x128xf32> -> vector<32x128xf32>
    %67 = vector.broadcast %9 : vector<32x1xf32> to vector<32x128xf32>
    %68 = arith.addf %66, %67 : vector<32x128xf32>
    %69 = arith.index_cast %c1_i32 : i32 to index
    %c0_49 = arith.constant 0 : index
    %c0_50 = arith.constant 0 : index
    %70 = vector.load %arg6[%69, %c0_49, %c0_50] : memref<2x32x128xf32, #tpu.memory_space<vmem>>, vector<1x32x128xf32>
    %71 = vector.shape_cast %70 : vector<1x32x128xf32> to vector<32x128xf32>
    %72 = vector.shape_cast %68 : vector<32x128xf32> to vector<1x32x128xf32>
    tpu.vector_store %arg6[%69, %c0_49, %c0_50], %72 {strides = array<i32>} : memref<2x32x128xf32, #tpu.memory_space<vmem>>, vector<1x32x128xf32>,
    %c0_51 = arith.constant 0 : index
    %c0_52 = arith.constant 0 : index
    %73 = vector.load %arg10[%c0_51, %c0_52] : memref<32x128xf32, #tpu.memory_space<vmem>>, vector<32x128xf32>
    %74 = arith.addf %73, %68 : vector<32x128xf32>
    %c0_53 = arith.constant 0 : index
    %c0_54 = arith.constant 0 : index
    %75 = vector.load %arg10[%c0_53, %c0_54] : memref<32x128xf32, #tpu.memory_space<vmem>>, vector<32x128xf32>
    tpu.vector_store %arg10[%c0_53, %c0_54], %74 {strides = array<i32>} : memref<32x128xf32, #tpu.memory_space<vmem>>, vector<32x128xf32>,
    %c0_55 = arith.constant 0 : index
    %c0_56 = arith.constant 0 : index
    %76 = vector.load %arg11[%c0_55, %c0_56] : memref<32x128xf32, #tpu.memory_space<vmem>>, vector<32x128xf32>
    %77 = arith.mulf %68, %68 : vector<32x128xf32>
    %78 = arith.addf %76, %77 : vector<32x128xf32>
    %c0_57 = arith.constant 0 : index
    %c0_58 = arith.constant 0 : index
    %79 = vector.load %arg11[%c0_57, %c0_58] : memref<32x128xf32, #tpu.memory_space<vmem>>, vector<32x128xf32>
    tpu.vector_store %arg11[%c0_57, %c0_58], %78 {strides = array<i32>} : memref<32x128xf32, #tpu.memory_space<vmem>>, vector<32x128xf32>,
    %c2_i32 = arith.constant 2 : i32
    %c0_59 = arith.constant 0 : index
    %c0_60 = arith.constant 0 : index
    %80 = vector.load %arg10[%c0_59, %c0_60] : memref<32x128xf32, #tpu.memory_space<vmem>>, vector<32x128xf32>
    %cst_61 = arith.constant dense<0.000000e+00> : vector<32xf32>
    %81 = vector.multi_reduction <add>, %80, %cst_61 [1] : vector<32x128xf32> to vector<32xf32>
    %82 = vector.shape_cast %81 : vector<32xf32> to vector<32x1xf32>
    %c0_62 = arith.constant 0 : index
    %c0_63 = arith.constant 0 : index
    %c0_64 = arith.constant 0 : index
    %83 = vector.load %arg7[%c0_62, %c0_63, %c0_64] : memref<1x32x1xf32, #tpu.memory_space<vmem>>, vector<1x32x1xf32>
    %84 = vector.shape_cast %83 : vector<1x32x1xf32> to vector<32x1xf32>
    %85 = vector.shape_cast %82 : vector<32x1xf32> to vector<1x32x1xf32>
    tpu.vector_store %arg7[%c0_62, %c0_63, %c0_64], %85 {strides = array<i32>} : memref<1x32x1xf32, #tpu.memory_space<vmem>>, vector<1x32x1xf32>,
    %c0_65 = arith.constant 0 : index
    %c0_66 = arith.constant 0 : index
    %86 = vector.load %arg11[%c0_65, %c0_66] : memref<32x128xf32, #tpu.memory_space<vmem>>, vector<32x128xf32>
    %cst_67 = arith.constant dense<0.000000e+00> : vector<32xf32>
    %87 = vector.multi_reduction <add>, %86, %cst_67 [1] : vector<32x128xf32> to vector<32xf32>
    %88 = vector.shape_cast %87 : vector<32xf32> to vector<32x1xf32>
    %c0_68 = arith.constant 0 : index
    %c0_69 = arith.constant 0 : index
    %c0_70 = arith.constant 0 : index
    %89 = vector.load %arg8[%c0_68, %c0_69, %c0_70] : memref<1x32x1xf32, #tpu.memory_space<vmem>>, vector<1x32x1xf32>
    %90 = vector.shape_cast %89 : vector<1x32x1xf32> to vector<32x1xf32>
    %91 = vector.shape_cast %88 : vector<32x1xf32> to vector<1x32x1xf32>
    tpu.vector_store %arg8[%c0_68, %c0_69, %c0_70], %91 {strides = array<i32>} : memref<1x32x1xf32, #tpu.memory_space<vmem>>, vector<1x32x1xf32>,
    return
  }
  func.func @transform_0(%arg0: i32) -> (i32, i32, i32) {
    %c0_i32 = arith.constant 0 : i32
    %c0_i32_0 = arith.constant 0 : i32
    %c0_i32_1 = arith.constant 0 : i32
    return %c0_i32, %c0_i32_0, %arg0 : i32, i32, i32
  }
  func.func @transform_1(%arg0: i32) -> (i32, i32) {
    %c0_i32 = arith.constant 0 : i32
    %c0_i32_0 = arith.constant 0 : i32
    %c0_i32_1 = arith.constant 0 : i32
    return %c0_i32, %c0_i32_0 : i32, i32
  }
  func.func @transform_2(%arg0: i32) -> (i32, i32) {
    %c0_i32 = arith.constant 0 : i32
    %c0_i32_0 = arith.constant 0 : i32
    %c0_i32_1 = arith.constant 0 : i32
    return %c0_i32, %c0_i32_0 : i32, i32
  }
  func.func @transform_3(%arg0: i32) -> (i32, i32) {
    %c0_i32 = arith.constant 0 : i32
    %c0_i32_0 = arith.constant 0 : i32
    %c0_i32_1 = arith.constant 0 : i32
    return %c0_i32, %c0_i32_0 : i32, i32
  }
  func.func @transform_4(%arg0: i32) -> (i32, i32) {
    %c0_i32 = arith.constant 0 : i32
    %c0_i32_0 = arith.constant 0 : i32
    %c0_i32_1 = arith.constant 0 : i32
    return %c0_i32, %c0_i32_0 : i32, i32
  }
  func.func @transform_5(%arg0: i32) -> (i32, i32, i32) {
    %c0_i32 = arith.constant 0 : i32
    %c0_i32_0 = arith.constant 0 : i32
    %c0_i32_1 = arith.constant 0 : i32
    return %c0_i32, %c0_i32_0, %arg0 : i32, i32, i32
  }
  func.func @transform_6(%arg0: i32) -> (i32, i32, i32) {
    %c0_i32 = arith.constant 0 : i32
    %c0_i32_0 = arith.constant 0 : i32
    %c0_i32_1 = arith.constant 0 : i32
    return %arg0, %c0_i32, %c0_i32_0 : i32, i32, i32
  }
  func.func @transform_7(%arg0: i32) -> (i32, i32, i32) {
    %c0_i32 = arith.constant 0 : i32
    %c0_i32_0 = arith.constant 0 : i32
    %c0_i32_1 = arith.constant 0 : i32
    return %arg0, %c0_i32, %c0_i32_0 : i32, i32, i32
  }
}

module attributes {stable_mosaic.version = 11 : i64} {
  func.func @_final_kernel(%arg0: i32, %arg1: memref<2x32x128xf32, #tpu.memory_space<vmem>>, %arg2: memref<32x1xf32, #tpu.memory_space<vmem>>, %arg3: memref<32x1xf32, #tpu.memory_space<vmem>>, %arg4: memref<2x32x128xf32, #tpu.memory_space<vmem>>, %arg5: memref<32x1xf32, #tpu.memory_space<vmem>>, %arg6: memref<32x1xf32, #tpu.memory_space<vmem>>, %arg7: memref<2x32x128xf32, #tpu.memory_space<vmem>>, %arg8: memref<2x32x128xf32, #tpu.memory_space<vmem>>) attributes {dimension_semantics = [#tpu.dimension_semantics<parallel>], iteration_bounds = array<i64: 2>, scalar_prefetch = 0 : i64, scratch_operands = 0 : i64, tpu.core_type = #tpu.core_type<tc>, window_params = [{transform_indices = @transform_0, window_bounds = array<i64: 2, 32, 128>}, {pipeline_mode = #tpu.pipeline_mode<synchronous>, transform_indices = @transform_1, window_bounds = array<i64: 32, 1>}, {pipeline_mode = #tpu.pipeline_mode<synchronous>, transform_indices = @transform_2, window_bounds = array<i64: 32, 1>}, {transform_indices = @transform_3, window_bounds = array<i64: 2, 32, 128>}, {pipeline_mode = #tpu.pipeline_mode<synchronous>, transform_indices = @transform_4, window_bounds = array<i64: 32, 1>}, {pipeline_mode = #tpu.pipeline_mode<synchronous>, transform_indices = @transform_5, window_bounds = array<i64: 32, 1>}, {transform_indices = @transform_6, window_bounds = array<i64: 2, 32, 128>}, {transform_indices = @transform_7, window_bounds = array<i64: 2, 32, 128>}]} {
    %c0 = arith.constant 0 : index
    %c0_0 = arith.constant 0 : index
    %c0_1 = arith.constant 0 : index
    %0 = vector.load %arg4[%c0, %c0_0, %c0_1] : memref<2x32x128xf32, #tpu.memory_space<vmem>>, vector<2x32x128xf32>
    %c0_2 = arith.constant 0 : index
    %c0_3 = arith.constant 0 : index
    %1 = vector.load %arg5[%c0_2, %c0_3] : memref<32x1xf32, #tpu.memory_space<vmem>>, vector<32x1xf32>
    %2 = vector.shape_cast %1 : vector<32x1xf32> to vector<1x32x1xf32>
    %3 = vector.broadcast %2 : vector<1x32x1xf32> to vector<2x32x128xf32>
    %4 = arith.mulf %0, %3 : vector<2x32x128xf32>
    %c0_4 = arith.constant 0 : index
    %c0_5 = arith.constant 0 : index
    %5 = vector.load %arg6[%c0_4, %c0_5] : memref<32x1xf32, #tpu.memory_space<vmem>>, vector<32x1xf32>
    %6 = vector.shape_cast %5 : vector<32x1xf32> to vector<1x32x1xf32>
    %7 = vector.broadcast %6 : vector<1x32x1xf32> to vector<2x32x128xf32>
    %8 = arith.addf %4, %7 : vector<2x32x128xf32>
    %c0_6 = arith.constant 0 : index
    %c0_7 = arith.constant 0 : index
    %c0_8 = arith.constant 0 : index
    %9 = vector.load %arg7[%c0_6, %c0_7, %c0_8] : memref<2x32x128xf32, #tpu.memory_space<vmem>>, vector<2x32x128xf32>
    %10 = arith.addf %8, %9 : vector<2x32x128xf32>
    %c0_9 = arith.constant 0 : index
    %c0_10 = arith.constant 0 : index
    %c0_11 = arith.constant 0 : index
    %11 = vector.load %arg1[%c0_9, %c0_10, %c0_11] : memref<2x32x128xf32, #tpu.memory_space<vmem>>, vector<2x32x128xf32>
    %c0_12 = arith.constant 0 : index
    %c0_13 = arith.constant 0 : index
    %12 = vector.load %arg2[%c0_12, %c0_13] : memref<32x1xf32, #tpu.memory_space<vmem>>, vector<32x1xf32>
    %13 = vector.shape_cast %12 : vector<32x1xf32> to vector<1x32x1xf32>
    %14 = vector.broadcast %13 : vector<1x32x1xf32> to vector<2x32x128xf32>
    %15 = arith.mulf %11, %14 : vector<2x32x128xf32>
    %c0_14 = arith.constant 0 : index
    %c0_15 = arith.constant 0 : index
    %16 = vector.load %arg3[%c0_14, %c0_15] : memref<32x1xf32, #tpu.memory_space<vmem>>, vector<32x1xf32>
    %17 = vector.shape_cast %16 : vector<32x1xf32> to vector<1x32x1xf32>
    %18 = vector.broadcast %17 : vector<1x32x1xf32> to vector<2x32x128xf32>
    %19 = arith.addf %15, %18 : vector<2x32x128xf32>
    %20 = arith.addf %19, %10 : vector<2x32x128xf32>
    %c0_16 = arith.constant 0 : index
    %c0_17 = arith.constant 0 : index
    %c0_18 = arith.constant 0 : index
    %21 = vector.load %arg8[%c0_16, %c0_17, %c0_18] : memref<2x32x128xf32, #tpu.memory_space<vmem>>, vector<2x32x128xf32>
    tpu.vector_store %arg8[%c0_16, %c0_17, %c0_18], %20 {strides = array<i32>} : memref<2x32x128xf32, #tpu.memory_space<vmem>>, vector<2x32x128xf32>,
    return
  }
  func.func @transform_0(%arg0: i32) -> (i32, i32, i32) {
    %c0_i32 = arith.constant 0 : i32
    %c0_i32_0 = arith.constant 0 : i32
    %c0_i32_1 = arith.constant 0 : i32
    return %c0_i32, %c0_i32_0, %arg0 : i32, i32, i32
  }
  func.func @transform_1(%arg0: i32) -> (i32, i32) {
    %c0_i32 = arith.constant 0 : i32
    %c0_i32_0 = arith.constant 0 : i32
    %c0_i32_1 = arith.constant 0 : i32
    return %c0_i32, %c0_i32_0 : i32, i32
  }
  func.func @transform_2(%arg0: i32) -> (i32, i32) {
    %c0_i32 = arith.constant 0 : i32
    %c0_i32_0 = arith.constant 0 : i32
    %c0_i32_1 = arith.constant 0 : i32
    return %c0_i32, %c0_i32_0 : i32, i32
  }
  func.func @transform_3(%arg0: i32) -> (i32, i32, i32) {
    %c0_i32 = arith.constant 0 : i32
    %c0_i32_0 = arith.constant 0 : i32
    %c0_i32_1 = arith.constant 0 : i32
    return %c0_i32, %c0_i32_0, %arg0 : i32, i32, i32
  }
  func.func @transform_4(%arg0: i32) -> (i32, i32) {
    %c0_i32 = arith.constant 0 : i32
    %c0_i32_0 = arith.constant 0 : i32
    %c0_i32_1 = arith.constant 0 : i32
    return %c0_i32, %c0_i32_0 : i32, i32
  }
  func.func @transform_5(%arg0: i32) -> (i32, i32) {
    %c0_i32 = arith.constant 0 : i32
    %c0_i32_0 = arith.constant 0 : i32
    %c0_i32_1 = arith.constant 0 : i32
    return %c0_i32, %c0_i32_0 : i32, i32
  }
  func.func @transform_6(%arg0: i32) -> (i32, i32, i32) {
    %c0_i32 = arith.constant 0 : i32
    %c0_i32_0 = arith.constant 0 : i32
    %c0_i32_1 = arith.constant 0 : i32
    return %c0_i32, %c0_i32_0, %arg0 : i32, i32, i32
  }
  func.func @transform_7(%arg0: i32) -> (i32, i32, i32) {
    %c0_i32 = arith.constant 0 : i32
    %c0_i32_0 = arith.constant 0 : i32
    %c0_i32_1 = arith.constant 0 : i32
    return %c0_i32, %c0_i32_0, %arg0 : i32, i32, i32
  }
}

</mosaic_0001>

<llo_original>
// kernel: vit_snn_forward.10
$region0: #{vit_snn_forward.10}
  #allocation0 [shape = 'u32[]', space=smem, size = 0x4, offset = 0x4, fixed_abs, tag = 'smem constant byte address 0x4 - core index']
  #allocation1 [shape = 'u32[72,128]{1,0:T(1,128)}', space=vmem, size = 0x9000, scoped, tag = 'internal scratch']
  #allocation2 [shape = 'f32[32,128]{1,0:T(8,128)}', space=vmem, size = 0x4000, scoped, tag = 'scratch operand']
  #allocation3 [shape = 'f32[96,128]{1,0:T(8,128)}', space=vmem, size = 0xc000, scoped, tag = 'scratch operand']
  #allocation4 [shape = 'f32[96,128]{1,0:T(8,128)}', space=vmem, size = 0xc000, scoped, tag = 'scratch operand']
  %s0 = inlined_call_operand.vmem [shape: f32[2,32,256], index: 0, kind: input, shape index: {}]
  %s1 = inlined_call_operand.vmem [shape: f32[32,1], index: 1, kind: input, shape index: {}]
  %s2 = inlined_call_operand.vmem [shape: f32[32,1], index: 2, kind: input, shape index: {}]
  %s3 = inlined_call_operand.vmem [shape: f32[96,32], index: 3, kind: input, shape index: {}]
  %s4 = inlined_call_operand.vmem [shape: f32[96,1], index: 4, kind: input, shape index: {}]
  %s5 = inlined_call_operand.vmem [shape: f32[2,96,256], index: 5, kind: output, shape index: {0}]
  %s6 = inlined_call_operand.vmem [shape: f32[2,96,1], index: 6, kind: output, shape index: {1}]
  %s7 = inlined_call_operand.vmem [shape: f32[2,96,1], index: 7, kind: output, shape index: {2}]
  %8 = xla_tuple %s5, %s6, %s7
  %s9 = sld [smem:[#allocation0]]
  $region141: #{vit_snn_forward.10} parent=0
    _
  %s11 = ssub.s32 1, %s9
  %s12 = scalar_select 0, %s11, %s9
  $region1: #{vit_snn_forward.10} parent=0
    #allocation5 [shape = 'u8[65536]{0}', space=vmem, size = 0x10000, scoped, tag = 'input window, operand 0']
    #allocation6 [shape = 'u8[196608]{0}', space=vmem, size = 0x30000, scoped, tag = 'output window, operand 0']
    loop: start=0, step=1, limit=4
    $region2: #{vit_snn_forward.10} parent=1 // loop_pre_header
      _
    $region3: #{vit_snn_forward.10} parent=1 // loop_header
      %s14 = sphi 0, %s18
      %p15 = scmp.ge.s32.totalorder %s14, 4
      %s24 = sphi 0, %s26
      %s27 = sphi 0, %s24
      %s28 = sphi 0, %s27
      %s44 = sphi 0, %s28
      %s48 = sphi 0, %s48
      %s50 = sphi 0, %s48
      %s51 = sphi 0, %s50
      %s65 = sphi 0, %s51
      %s69 = sphi 0, %s69
      %s71 = sphi 0, %s69
      %s72 = sphi 0, %s71
      %s86 = sphi 0, %s72
      %s90 = sphi 0, %s90
      %s92 = sphi 0, %s90
      %s93 = sphi 0, %s92
      %s107 = sphi 0, %s93
      %s111 = sphi 0, %s111
      %s113 = sphi 0, %s111
      %s114 = sphi 0, %s113
      %s128 = sphi 0, %s114
      %s134 = sphi 0, %s136
      %s137 = sphi 0, %s134
      %s138 = sphi 0, %s137
      %s154 = sphi 0, %s138
      %s160 = sphi 0, %s162
      %s163 = sphi 0, %s160
      %s164 = sphi 0, %s163
      %s180 = sphi 0, %s164
      %s186 = sphi 0, %s188
      %s189 = sphi 0, %s186
      %s190 = sphi 0, %s189
      %s206 = sphi 0, %s190
    $region4: #{vit_snn_forward.10} parent=1 // loop_header_branch
      %17 = sbr.rel (%p15) target = $region8
    $region5: #{vit_snn_forward.10} parent=1 // loop_body
      %s19 = ssub.s32 %s14, 1
      %s20 = ssub.s32 %s14, 2
      %s21 = sadd.s32 %s14, 1
      %s22 = ssub.s32 %s14, %s21
      %p23 = scmp.eq.s32.totalorder %s22, 0
      %s25 = sadd.s32 %s24, 1
      %s26 = scalar_select %p23, %s24, %s25
      %p29 = pneg %p23
      %p30 = scmp.eq.s32.totalorder %s14, 1
      %p31 = por %p29, %p30
      %p32 = scmp.ne.s32.totalorder %s24, %s27
      %p33 = scmp.eq.s32.totalorder %s14, 0
      %p34 = por %p32, %p33
      %p35 = scmp.ne.s32.totalorder %s24, %s27
      %p36 = scmp.eq.s32.totalorder %s19, 1
      %p37 = por %p35, %p36
      %p38 = scmp.ne.s32.totalorder %s27, %s28
      %p39 = scmp.eq.s32.totalorder %s19, 0
      %p40 = por %p38, %p39
      %p41 = scmp.ne.s32.totalorder %s27, %s28
      %p42 = scmp.eq.s32.totalorder %s20, 1
      %p43 = por %p41, %p42
      %p45 = scmp.ne.s32.totalorder %s28, %s44
      %p46 = scmp.eq.s32.totalorder %s20, 0
      %p47 = por %p45, %p46
      %s49 = sadd.s32 %s48, 1
      %p52 = scmp.eq.s32.totalorder %s14, 1
      %p53 = scmp.ne.s32.totalorder %s48, %s50
      %p54 = scmp.eq.s32.totalorder %s14, 0
      %p55 = por %p53, %p54
      %p56 = scmp.ne.s32.totalorder %s48, %s50
      %p57 = scmp.eq.s32.totalorder %s19, 1
      %p58 = por %p56, %p57
      %p59 = scmp.ne.s32.totalorder %s50, %s51
      %p60 = scmp.eq.s32.totalorder %s19, 0
      %p61 = por %p59, %p60
      %p62 = scmp.ne.s32.totalorder %s50, %s51
      %p63 = scmp.eq.s32.totalorder %s20, 1
      %p64 = por %p62, %p63
      %p66 = scmp.ne.s32.totalorder %s51, %s65
      %p67 = scmp.eq.s32.totalorder %s20, 0
      %p68 = por %p66, %p67
      %s70 = sadd.s32 %s69, 1
      %p73 = scmp.eq.s32.totalorder %s14, 1
      %p74 = scmp.ne.s32.totalorder %s69, %s71
      %p75 = scmp.eq.s32.totalorder %s14, 0
      %p76 = por %p74, %p75
      %p77 = scmp.ne.s32.totalorder %s69, %s71
      %p78 = scmp.eq.s32.totalorder %s19, 1
      %p79 = por %p77, %p78
      %p80 = scmp.ne.s32.totalorder %s71, %s72
      %p81 = scmp.eq.s32.totalorder %s19, 0
      %p82 = por %p80, %p81
      %p83 = scmp.ne.s32.totalorder %s71, %s72
      %p84 = scmp.eq.s32.totalorder %s20, 1
      %p85 = por %p83, %p84
      %p87 = scmp.ne.s32.totalorder %s72, %s86
      %p88 = scmp.eq.s32.totalorder %s20, 0
      %p89 = por %p87, %p88
      %s91 = sadd.s32 %s90, 1
      %p94 = scmp.eq.s32.totalorder %s14, 1
      %p95 = scmp.ne.s32.totalorder %s90, %s92
      %p96 = scmp.eq.s32.totalorder %s14, 0
      %p97 = por %p95, %p96
      %p98 = scmp.ne.s32.totalorder %s90, %s92
      %p99 = scmp.eq.s32.totalorder %s19, 1
      %p100 = por %p98, %p99
      %p101 = scmp.ne.s32.totalorder %s92, %s93
      %p102 = scmp.eq.s32.totalorder %s19, 0
      %p103 = por %p101, %p102
      %p104 = scmp.ne.s32.totalorder %s92, %s93
      %p105 = scmp.eq.s32.totalorder %s20, 1
      %p106 = por %p104, %p105
      %p108 = scmp.ne.s32.totalorder %s93, %s107
      %p109 = scmp.eq.s32.totalorder %s20, 0
      %p110 = por %p108, %p109
      %s112 = sadd.s32 %s111, 1
      %p115 = scmp.eq.s32.totalorder %s14, 1
      %p116 = scmp.ne.s32.totalorder %s111, %s113
      %p117 = scmp.eq.s32.totalorder %s14, 0
      %p118 = por %p116, %p117
      %p119 = scmp.ne.s32.totalorder %s111, %s113
      %p120 = scmp.eq.s32.totalorder %s19, 1
      %p121 = por %p119, %p120
      %p122 = scmp.ne.s32.totalorder %s113, %s114
      %p123 = scmp.eq.s32.totalorder %s19, 0
      %p124 = por %p122, %p123
      %p125 = scmp.ne.s32.totalorder %s113, %s114
      %p126 = scmp.eq.s32.totalorder %s20, 1
      %p127 = por %p125, %p126
      %p129 = scmp.ne.s32.totalorder %s114, %s128
      %p130 = scmp.eq.s32.totalorder %s20, 0
      %p131 = por %p129, %p130
      %s132 = ssub.s32 %s14, %s21
      %p133 = scmp.eq.s32.totalorder %s132, 0
      %s135 = sadd.s32 %s134, 1
      %s136 = scalar_select %p133, %s134, %s135
      %p139 = pneg %p133
      %p140 = scmp.eq.s32.totalorder %s14, 1
      %p141 = por %p139, %p140
      %p142 = scmp.ne.s32.totalorder %s134, %s137
      %p143 = scmp.eq.s32.totalorder %s14, 0
      %p144 = por %p142, %p143
      %p145 = scmp.ne.s32.totalorder %s134, %s137
      %p146 = scmp.eq.s32.totalorder %s19, 1
      %p147 = por %p145, %p146
      %p148 = scmp.ne.s32.totalorder %s137, %s138
      %p149 = scmp.eq.s32.totalorder %s19, 0
      %p150 = por %p148, %p149
      %p151 = scmp.ne.s32.totalorder %s137, %s138
      %p152 = scmp.eq.s32.totalorder %s20, 1
      %p153 = por %p151, %p152
      %p155 = scmp.ne.s32.totalorder %s138, %s154
      %p156 = scmp.eq.s32.totalorder %s20, 0
      %p157 = por %p155, %p156
      %s158 = ssub.s32 %s14, %s21
      %p159 = scmp.eq.s32.totalorder %s158, 0
      %s161 = sadd.s32 %s160, 1
      %s162 = scalar_select %p159, %s160, %s161
      %p165 = pneg %p159
      %p166 = scmp.eq.s32.totalorder %s14, 1
      %p167 = por %p165, %p166
      %p168 = scmp.ne.s32.totalorder %s160, %s163
      %p169 = scmp.eq.s32.totalorder %s14, 0
      %p170 = por %p168, %p169
      %p171 = scmp.ne.s32.totalorder %s160, %s163
      %p172 = scmp.eq.s32.totalorder %s19, 1
      %p173 = por %p171, %p172
      %p174 = scmp.ne.s32.totalorder %s163, %s164
      %p175 = scmp.eq.s32.totalorder %s19, 0
      %p176 = por %p174, %p175
      %p177 = scmp.ne.s32.totalorder %s163, %s164
      %p178 = scmp.eq.s32.totalorder %s20, 1
      %p179 = por %p177, %p178
      %p181 = scmp.ne.s32.totalorder %s164, %s180
      %p182 = scmp.eq.s32.totalorder %s20, 0
      %p183 = por %p181, %p182
      %s184 = ssub.s32 %s14, %s21
      %p185 = scmp.eq.s32.totalorder %s184, 0
      %s187 = sadd.s32 %s186, 1
      %s188 = scalar_select %p185, %s186, %s187
      %p191 = pneg %p185
      %p192 = scmp.eq.s32.totalorder %s14, 1
      %p193 = por %p191, %p192
      %p194 = scmp.ne.s32.totalorder %s186, %s189
      %p195 = scmp.eq.s32.totalorder %s14, 0
      %p196 = por %p194, %p195
      %p197 = scmp.ne.s32.totalorder %s186, %s189
      %p198 = scmp.eq.s32.totalorder %s19, 1
      %p199 = por %p197, %p198
      %p200 = scmp.ne.s32.totalorder %s189, %s190
      %p201 = scmp.eq.s32.totalorder %s19, 0
      %p202 = por %p200, %p201
      %p203 = scmp.ne.s32.totalorder %s189, %s190
      %p204 = scmp.eq.s32.totalorder %s20, 1
      %p205 = por %p203, %p204
      %p207 = scmp.ne.s32.totalorder %s190, %s206
      %p208 = scmp.eq.s32.totalorder %s20, 0
      %p209 = por %p207, %p208
      %p210 = scmp.le.s32.totalorder 1, %s14
      %p211 = scmp.lt.s32.totalorder %s14, 3
      %p212 = pnand %p210, %p211
      %p213 = pneg %p212
      // Predicated region
      $region9: #{vit_snn_forward.10} parent=5 // pred_check
        _
      $region10: #{vit_snn_forward.10} parent=5 // pred_check_branch
        %215 = sbr.rel (%p212) target = $region12
      $region11: #{vit_snn_forward.10} parent=5 // pred_region
        %s216 = ssub.s32 %s14, 1
        // Predicated region
        $region13: #{vit_snn_forward.10} parent=11 // pred_check
          %p217 = pneg %p61
        $region14: #{vit_snn_forward.10} parent=11 // pred_check_branch
          %219 = sbr.rel (%p217) target = $region16
        $region15: #{vit_snn_forward.10} parent=11 // pred_region
          _
        $region16: #{vit_snn_forward.10} parent=11 // pred_fallthru
          _
        // Predicated region
        $region17: #{vit_snn_forward.10} parent=11 // pred_check
          %p220 = pneg %p82
        $region18: #{vit_snn_forward.10} parent=11 // pred_check_branch
          %222 = sbr.rel (%p220) target = $region20
        $region19: #{vit_snn_forward.10} parent=11 // pred_region
          _
        $region20: #{vit_snn_forward.10} parent=11 // pred_fallthru
          _
        // Predicated region
        $region21: #{vit_snn_forward.10} parent=11 // pred_check
          %p223 = pneg %p103
        $region22: #{vit_snn_forward.10} parent=11 // pred_check_branch
          %225 = sbr.rel (%p223) target = $region24
        $region23: #{vit_snn_forward.10} parent=11 // pred_region
          _
        $region24: #{vit_snn_forward.10} parent=11 // pred_fallthru
          _
        // Predicated region
        $region25: #{vit_snn_forward.10} parent=11 // pred_check
          %p226 = pneg %p124
        $region26: #{vit_snn_forward.10} parent=11 // pred_check_branch
          %228 = sbr.rel (%p226) target = $region28
        $region27: #{vit_snn_forward.10} parent=11 // pred_region
          _
        $region28: #{vit_snn_forward.10} parent=11 // pred_fallthru
          _
      $region12: #{vit_snn_forward.10} parent=5 // pred_fallthru
        _
      %p229 = scmp.lt.s32.totalorder %s14, 2
      // Predicated region
      $region29: #{vit_snn_forward.10} parent=5 // pred_check
        %p230 = pneg %p229
      $region30: #{vit_snn_forward.10} parent=5 // pred_check_branch
        %232 = sbr.rel (%p230) target = $region32
      $region31: #{vit_snn_forward.10} parent=5 // pred_region
        // Predicated region
        $region33: #{vit_snn_forward.10} parent=31 // pred_check
          %p233 = pneg %p34
        $region34: #{vit_snn_forward.10} parent=31 // pred_check_branch
          %235 = sbr.rel (%p233) target = $region36
        $region35: #{vit_snn_forward.10} parent=31 // pred_region
          %s236 = sand.u32 %s24, 1
          %s237 = sand.u32 %s24, 1
          %s238 = smul.addr %s237, 64
          %s239 = scalar_lea.vmem [#allocation5], %s238
          %s240 = smul.addr %s14, 8
          %s241 = scalar_lea.vmem %s0, %s240
          // Predicated region
          $region37: #{vit_snn_forward.10} parent=35 // pred_check
            _
          $region38: #{vit_snn_forward.10} parent=35 // pred_check_branch
            %243 = sbr.rel (0) target = $region40
          $region39: #{vit_snn_forward.10} parent=35 // pred_region
            // Predicated region
            $region41: #{vit_snn_forward.10} parent=39 // pred_check
              _
            $region42: #{vit_snn_forward.10} parent=39 // pred_check_branch
              %245 = sbr.rel (0) target = $region44
            $region43: #{vit_snn_forward.10} parent=39 // pred_region
              // Predicated region
              $region56: #{vit_snn_forward.10} parent=43 // pred_check
                _
              $region57: #{vit_snn_forward.10} parent=43 // pred_check_branch
                %275 = sbr.rel (0) target = $region59
              $region58: #{vit_snn_forward.10} parent=43 // pred_region
                loop: start=0, step=1, limit=1
                $region60: #{vit_snn_forward.10} parent=58 // loop_pre_header
                  _
                $region61: #{vit_snn_forward.10} parent=58 // loop_header
                  %s277 = sphi 0, %s281
                  %p278 = scmp.ge.s32.totalorder %s277, 1
                  %s282 = sphi %s241, %s241
                  %s283 = sphi %s239, %s239
                $region62: #{vit_snn_forward.10} parent=58 // loop_header_branch
                  %280 = sbr.rel (%p278) target = $region66
                $region63: #{vit_snn_forward.10} parent=58 // loop_body
                  %v284 = vld [vmem:[%s282] sm:$0xff]
                  %285 = vst [vmem:[%s283] sm:$0xff] %v284
                  %v286 = vld [vmem:[%s282 + $0x10] sm:$0xff]
                  %287 = vst [vmem:[%s283 + $0x8] sm:$0xff] %v286
                  %v288 = vld [vmem:[%s282 + $0x20] sm:$0xff]
                  %289 = vst [vmem:[%s283 + $0x10] sm:$0xff] %v288
                  %v290 = vld [vmem:[%s282 + $0x30] sm:$0xff]
                  %291 = vst [vmem:[%s283 + $0x18] sm:$0xff] %v290
                  %v292 = vld [vmem:[%s282 + $0x40] sm:$0xff]
                  %293 = vst [vmem:[%s283 + $0x20] sm:$0xff] %v292
                  %v294 = vld [vmem:[%s282 + $0x50] sm:$0xff]
                  %295 = vst [vmem:[%s283 + $0x28] sm:$0xff] %v294
                  %v296 = vld [vmem:[%s282 + $0x60] sm:$0xff]
                  %297 = vst [vmem:[%s283 + $0x30] sm:$0xff] %v296
                  %v298 = vld [vmem:[%s282 + $0x70] sm:$0xff]
                  %299 = vst [vmem:[%s283 + $0x38] sm:$0xff] %v298
                $region64: #{vit_snn_forward.10} parent=58 // loop_footer
                  %s281 = sadd.s32 1, %s277
                $region65: #{vit_snn_forward.10} parent=58 // loop_footer_branch
                  %276 = sbr.rel target = $region61
                $region66: #{vit_snn_forward.10} parent=58 // loop_exit
                  _
              $region59: #{vit_snn_forward.10} parent=43 // pred_fallthru
                _
              // Predicated region
              $region67: #{vit_snn_forward.10} parent=43 // pred_check
                _
              $region68: #{vit_snn_forward.10} parent=43 // pred_check_branch
                %301 = sbr.rel target = $region70
              $region69: #{vit_snn_forward.10} parent=43 // pred_region
                _
              $region70: #{vit_snn_forward.10} parent=43 // pred_fallthru
                _
            $region44: #{vit_snn_forward.10} parent=39 // pred_fallthru
              _
            // Predicated region
            $region45: #{vit_snn_forward.10} parent=39 // pred_check
              _
            $region46: #{vit_snn_forward.10} parent=39 // pred_check_branch
              %247 = sbr.rel target = $region48
            $region47: #{vit_snn_forward.10} parent=39 // pred_region
              %s249 = ssub.s32 256, 1
              loop: start=0, step=1, limit=1
              $region49: #{vit_snn_forward.10} parent=47 // loop_pre_header
                _
              $region50: #{vit_snn_forward.10} parent=47 // loop_header
                %s251 = sphi 0, %s255
                %p252 = scmp.ge.s32.totalorder %s251, 1
                %s256 = sphi %s241, %s241
                %s257 = sphi %s239, %s239
              $region51: #{vit_snn_forward.10} parent=47 // loop_header_branch
                %254 = sbr.rel (%p252) target = $region55
              $region52: #{vit_snn_forward.10} parent=47 // loop_body
                %v258 = vld [vmem:[%s256] sm:%s249]
                %259 = vst [vmem:[%s257] sm:%s249] %v258
                %v260 = vld [vmem:[%s256 + $0x10] sm:%s249]
                %261 = vst [vmem:[%s257 + $0x8] sm:%s249] %v260
                %v262 = vld [vmem:[%s256 + $0x20] sm:%s249]
                %263 = vst [vmem:[%s257 + $0x10] sm:%s249] %v262
                %v264 = vld [vmem:[%s256 + $0x30] sm:%s249]
                %265 = vst [vmem:[%s257 + $0x18] sm:%s249] %v264
                %v266 = vld [vmem:[%s256 + $0x40] sm:%s249]
                %267 = vst [vmem:[%s257 + $0x20] sm:%s249] %v266
                %v268 = vld [vmem:[%s256 + $0x50] sm:%s249]
                %269 = vst [vmem:[%s257 + $0x28] sm:%s249] %v268
                %v270 = vld [vmem:[%s256 + $0x60] sm:%s249]
                %271 = vst [vmem:[%s257 + $0x30] sm:%s249] %v270
                %v272 = vld [vmem:[%s256 + $0x70] sm:%s249]
                %273 = vst [vmem:[%s257 + $0x38] sm:%s249] %v272
              $region53: #{vit_snn_forward.10} parent=47 // loop_footer
                %s255 = sadd.s32 1, %s251
              $region54: #{vit_snn_forward.10} parent=47 // loop_footer_branch
                %250 = sbr.rel target = $region50
              $region55: #{vit_snn_forward.10} parent=47 // loop_exit
                _
            $region48: #{vit_snn_forward.10} parent=39 // pred_fallthru
              _
          $region40: #{vit_snn_forward.10} parent=35 // pred_fallthru
            _
          %302 = vnop
        $region36: #{vit_snn_forward.10} parent=31 // pred_fallthru
          _
      $region32: #{vit_snn_forward.10} parent=5 // pred_fallthru
        _
      %p303 = scmp.le.s32.totalorder 1, %s14
      %p304 = scmp.lt.s32.totalorder %s14, 3
      %p305 = pnand %p303, %p304
      %p306 = pneg %p305
      // Predicated region
      $region71: #{vit_snn_forward.10} parent=5 // pred_check
        _
      $region72: #{vit_snn_forward.10} parent=5 // pred_check_branch
        %308 = sbr.rel (%p305) target = $region74
      $region73: #{vit_snn_forward.10} parent=5 // pred_region
        %s309 = ssub.s32 %s14, 1
        %s310 = sand.u32 %s27, 1
        %s311 = sand.u32 %s27, 1
        %s312 = smul.addr %s311, 64
        %s313 = scalar_lea.vmem [#allocation5], %s312
        // Predicated region
        $region75: #{vit_snn_forward.10} parent=73 // pred_check
          %p314 = pneg %p40
        $region76: #{vit_snn_forward.10} parent=73 // pred_check_branch
          %316 = sbr.rel (%p314) target = $region78
        $region77: #{vit_snn_forward.10} parent=73 // pred_region
          _
        $region78: #{vit_snn_forward.10} parent=73 // pred_fallthru
          _
        %s317 = sand.u32 %s27, 1
        %s318 = sand.u32 %s27, 1
        %s319 = smul.addr %s318, 64
        %s320 = scalar_lea.vmem [#allocation5], %s319
        %p321 = pneg %p40
        %p322 = pneg %p37
        %p323 = pneg %p61
        %p324 = pneg %p58
        %p325 = pneg %p82
        %p326 = pneg %p79
        %p327 = pneg %p103
        %p328 = pneg %p100
        %p329 = pneg %p124
        %p330 = pneg %p121
        %p331 = pneg %p150
        %p332 = pneg %p147
        %s333 = sand.u32 %s137, 1
        %s334 = sand.u32 %s137, 1
        %s335 = smul.addr %s334, 192
        %s336 = scalar_lea.vmem [#allocation6], %s335
        %p337 = pneg %p176
        %p338 = pneg %p173
        %p339 = scmp.lt.s32.totalorder %s19, 1
        %s340 = scalar_select %p339, %s19, 1
        %s341 = smul.addr %s340, 12
        %s342 = smul.addr %s341, 8
        %s343 = scalar_lea.vmem %s6, %s342
        %p344 = pneg %p202
        %p345 = pneg %p199
        %p346 = scmp.lt.s32.totalorder %s19, 1
        %s347 = scalar_select %p346, %s19, 1
        %s348 = smul.addr %s347, 12
        %s349 = smul.addr %s348, 8
        %s350 = scalar_lea.vmem %s7, %s349
        %p351 = scmp.lt.s32.totalorder %s19, 1
        %s352 = scalar_select %p351, %s19, 1
        %s353 = smul.addr %s352, 12
        %s354 = smul.addr %s353, 8
        %s355 = scalar_lea.vmem %s6, %s354
        %p356 = scmp.lt.s32.totalorder %s19, 1
        %s357 = scalar_select %p356, %s19, 1
        %s358 = smul.addr %s357, 12
        %s359 = smul.addr %s358, 8
        %s360 = scalar_lea.vmem %s7, %s359
        %361 = vst [vmem:[#allocation2] sm:$0xff] 0.0
        %362 = vst [vmem:[#allocation2 + $0x8] sm:$0xff] 0.0
        %363 = vst [vmem:[#allocation2 + $0x10] sm:$0xff] 0.0
        %364 = vst [vmem:[#allocation2 + $0x18] sm:$0xff] 0.0
        %365 = vst [vmem:[#allocation3] sm:$0xff] 0.0
        %366 = vst [vmem:[#allocation3 + $0x8] sm:$0xff] 0.0
        %367 = vst [vmem:[#allocation3 + $0x10] sm:$0xff] 0.0
        %368 = vst [vmem:[#allocation3 + $0x18] sm:$0xff] 0.0
        %369 = vst [vmem:[#allocation3 + $0x20] sm:$0xff] 0.0
        %370 = vst [vmem:[#allocation3 + $0x28] sm:$0xff] 0.0
        %371 = vst [vmem:[#allocation3 + $0x30] sm:$0xff] 0.0
        %372 = vst [vmem:[#allocation3 + $0x38] sm:$0xff] 0.0
        %373 = vst [vmem:[#allocation3 + $0x40] sm:$0xff] 0.0
        %374 = vst [vmem:[#allocation3 + $0x48] sm:$0xff] 0.0
        %375 = vst [vmem:[#allocation3 + $0x50] sm:$0xff] 0.0
        %376 = vst [vmem:[#allocation3 + $0x58] sm:$0xff] 0.0
        %377 = vst [vmem:[#allocation4] sm:$0xff] 0.0
        %378 = vst [vmem:[#allocation4 + $0x8] sm:$0xff] 0.0
        %379 = vst [vmem:[#allocation4 + $0x10] sm:$0xff] 0.0
        %380 = vst [vmem:[#allocation4 + $0x18] sm:$0xff] 0.0
        %381 = vst [vmem:[#allocation4 + $0x20] sm:$0xff] 0.0
        %382 = vst [vmem:[#allocation4 + $0x28] sm:$0xff] 0.0
        %383 = vst [vmem:[#allocation4 + $0x30] sm:$0xff] 0.0
        %384 = vst [vmem:[#allocation4 + $0x38] sm:$0xff] 0.0
        %385 = vst [vmem:[#allocation4 + $0x40] sm:$0xff] 0.0
        %386 = vst [vmem:[#allocation4 + $0x48] sm:$0xff] 0.0
        %387 = vst [vmem:[#allocation4 + $0x50] sm:$0xff] 0.0
        %388 = vst [vmem:[#allocation4 + $0x58] sm:$0xff] 0.0
        %v389 = vld [vmem:[%s1] sm:$0xff]
        %v390 = vld [vmem:[%s1 + $0x8] sm:$0xff]
        %v391 = vld [vmem:[%s1 + $0x10] sm:$0xff]
        %v392 = vld [vmem:[%s1 + $0x18] sm:$0xff]
        %v393 = vld [vmem:[%s2] sm:$0xff]
        %v394 = vld [vmem:[%s2 + $0x8] sm:$0xff]
        %v395 = vld [vmem:[%s2 + $0x10] sm:$0xff]
        %v396 = vld [vmem:[%s2 + $0x18] sm:$0xff]
        %v397 = vld [vmem:[%s3] sm:$0xff]
        %v398 = vld [vmem:[%s3 + $0x8] sm:$0xff]
        %v399 = vld [vmem:[%s3 + $0x10] sm:$0xff]
        %v400 = vld [vmem:[%s3 + $0x18] sm:$0xff]
        %v401 = vld [vmem:[%s3 + $0x20] sm:$0xff]
        %v402 = vld [vmem:[%s3 + $0x28] sm:$0xff]
        %v403 = vld [vmem:[%s3 + $0x30] sm:$0xff]
        %v404 = vld [vmem:[%s3 + $0x38] sm:$0xff]
        %v405 = vld [vmem:[%s3 + $0x40] sm:$0xff]
        %v406 = vld [vmem:[%s3 + $0x48] sm:$0xff]
        %v407 = vld [vmem:[%s3 + $0x50] sm:$0xff]
        %v408 = vld [vmem:[%s3 + $0x58] sm:$0xff]
        %v409 = vld [vmem:[%s4] sm:$0xff]
        %v410 = vld [vmem:[%s4 + $0x8] sm:$0xff]
        %v411 = vld [vmem:[%s4 + $0x10] sm:$0xff]
        %v412 = vld [vmem:[%s4 + $0x18] sm:$0xff]
        %v413 = vld [vmem:[%s4 + $0x20] sm:$0xff]
        %v414 = vld [vmem:[%s4 + $0x28] sm:$0xff]
        %v415 = vld [vmem:[%s4 + $0x30] sm:$0xff]
        %v416 = vld [vmem:[%s4 + $0x38] sm:$0xff]
        %v417 = vld [vmem:[%s4 + $0x40] sm:$0xff]
        %v418 = vld [vmem:[%s4 + $0x48] sm:$0xff]
        %v419 = vld [vmem:[%s4 + $0x50] sm:$0xff]
        %v420 = vld [vmem:[%s4 + $0x58] sm:$0xff]
        %v421 = vld [vmem:[%s313] sm:$0xff]
        %v422 = vld [vmem:[%s313 + $0x8] sm:$0xff]
        %v423 = vld [vmem:[%s313 + $0x10] sm:$0xff]
        %v424 = vld [vmem:[%s313 + $0x18] sm:$0xff]
        %426 = vset.pattern.permute.xlu0 0
        %427 = vperm.xlu0 %426, %v389
        %v428 = vpop.permute.xlu0 %427
        %431 = vset.pattern.permute.xlu0 0
        %432 = vperm.xlu0 %431, %v390
        %v433 = vpop.permute.xlu0 %432
        %436 = vset.pattern.permute.xlu0 0
        %437 = vperm.xlu0 %436, %v391
        %v438 = vpop.permute.xlu0 %437
        %441 = vset.pattern.permute.xlu0 0
        %442 = vperm.xlu0 %441, %v392
        %v443 = vpop.permute.xlu0 %442
        %v445 = vmul.f32 %v421, %v428
        %v446 = vmul.f32 %v422, %v433
        %v447 = vmul.f32 %v423, %v438
        %v448 = vmul.f32 %v424, %v443
        %450 = vset.pattern.permute.xlu0 0
        %451 = vperm.xlu0 %450, %v393
        %v452 = vpop.permute.xlu0 %451
        %455 = vset.pattern.permute.xlu0 0
        %456 = vperm.xlu0 %455, %v394
        %v457 = vpop.permute.xlu0 %456
        %460 = vset.pattern.permute.xlu0 0
        %461 = vperm.xlu0 %460, %v395
        %v462 = vpop.permute.xlu0 %461
        %465 = vset.pattern.permute.xlu0 0
        %466 = vperm.xlu0 %465, %v396
        %v467 = vpop.permute.xlu0 %466
        %v469 = vadd.f32 %v445, %v452
        %v470 = vadd.f32 %v446, %v457
        %v471 = vadd.f32 %v447, %v462
        %v472 = vadd.f32 %v448, %v467
        %v473 = vld [vmem:[#allocation2] sm:$0xff]
        %v474 = vld [vmem:[#allocation2 + $0x8] sm:$0xff]
        %v475 = vld [vmem:[#allocation2 + $0x10] sm:$0xff]
        %v476 = vld [vmem:[#allocation2 + $0x18] sm:$0xff]
        %v477 = vsub.f32 %v469, %v473
        %v478 = vsub.f32 %v470, %v474
        %v479 = vsub.f32 %v471, %v475
        %v480 = vsub.f32 %v472, %v476
        %v481 = vmul.f32 %v477, 0.6666667
        %v482 = vmul.f32 %v478, 0.6666667
        %v483 = vmul.f32 %v479, 0.6666667
        %v484 = vmul.f32 %v480, 0.6666667
        %v485 = vadd.f32 %v473, %v481
        %v486 = vadd.f32 %v474, %v482
        %v487 = vadd.f32 %v475, %v483
        %v488 = vadd.f32 %v476, %v484
        %vm489 = vcmp.ge.f32.partialorder %v485, 1.0
        %vm490 = vcmp.ge.f32.partialorder %v486, 1.0
        %vm491 = vcmp.ge.f32.partialorder %v487, 1.0
        %vm492 = vcmp.ge.f32.partialorder %v488, 1.0
        %v493 = vsel %vm489, 1, 0
        %v494 = vsel %vm490, 1, 0
        %v495 = vsel %vm491, 1, 0
        %v496 = vsel %vm492, 1, 0
        %v497 = vcvt.s32.f32 %v493
        %v498 = vcvt.s32.f32 %v494
        %v499 = vcvt.s32.f32 %v495
        %v500 = vcvt.s32.f32 %v496
        %v501 = vsub.f32 1.0, %v497
        %v502 = vsub.f32 1.0, %v498
        %v503 = vsub.f32 1.0, %v499
        %v504 = vsub.f32 1.0, %v500
        %v505 = vmul.f32 %v485, %v501
        %v506 = vmul.f32 %v486, %v502
        %v507 = vmul.f32 %v487, %v503
        %v508 = vmul.f32 %v488, %v504
        %509 = vst [vmem:[#allocation2] sm:$0xff] %v505
        %510 = vst [vmem:[#allocation2 + $0x8] sm:$0xff] %v506
        %511 = vst [vmem:[#allocation2 + $0x10] sm:$0xff] %v507
        %512 = vst [vmem:[#allocation2 + $0x18] sm:$0xff] %v508
        %514 = vset.pattern.permute.xlu0 0
        %515 = vperm.xlu0 %514, %v409
        %v516 = vpop.permute.xlu0 %515
        %519 = vset.pattern.permute.xlu0 0
        %520 = vperm.xlu0 %519, %v410
        %v521 = vpop.permute.xlu0 %520
        %524 = vset.pattern.permute.xlu0 0
        %525 = vperm.xlu0 %524, %v411
        %v526 = vpop.permute.xlu0 %525
        %529 = vset.pattern.permute.xlu0 0
        %530 = vperm.xlu0 %529, %v412
        %v531 = vpop.permute.xlu0 %530
        %534 = vset.pattern.permute.xlu0 0
        %535 = vperm.xlu0 %534, %v413
        %v536 = vpop.permute.xlu0 %535
        %539 = vset.pattern.permute.xlu0 0
        %540 = vperm.xlu0 %539, %v414
        %v541 = vpop.permute.xlu0 %540
        %544 = vset.pattern.permute.xlu0 0
        %545 = vperm.xlu0 %544, %v415
        %v546 = vpop.permute.xlu0 %545
        %549 = vset.pattern.permute.xlu0 0
        %550 = vperm.xlu0 %549, %v416
        %v551 = vpop.permute.xlu0 %550
        %554 = vset.pattern.permute.xlu0 0
        %555 = vperm.xlu0 %554, %v417
        %v556 = vpop.permute.xlu0 %555
        %559 = vset.pattern.permute.xlu0 0
        %560 = vperm.xlu0 %559, %v418
        %v561 = vpop.permute.xlu0 %560
        %564 = vset.pattern.permute.xlu0 0
        %565 = vperm.xlu0 %564, %v419
        %v566 = vpop.permute.xlu0 %565
        %569 = vset.pattern.permute.xlu0 0
        %570 = vperm.xlu0 %569, %v420
        %v571 = vpop.permute.xlu0 %570
        %vm573 = vcmask 261120
        %v575 = vsel %vm573, %v397, 0
        %v578 = vsel %vm573, %v398, 0
        %v581 = vsel %vm573, %v399, 0
        %v584 = vsel %vm573, %v400, 0
        %v587 = vsel %vm573, %v401, 0
        %v590 = vsel %vm573, %v402, 0
        %v593 = vsel %vm573, %v403, 0
        %v596 = vsel %vm573, %v404, 0
        %v599 = vsel %vm573, %v405, 0
        %v602 = vsel %vm573, %v406, 0
        %v605 = vsel %vm573, %v407, 0
        %v608 = vsel %vm573, %v408, 0
        %610 = vmatpush.msra.mxu0 0.0
        %611 = vmatpush.msra.mxu0 0.0
        %612 = vmatpush.msra.mxu0 0.0
        %613 = vmatpush.msra.mxu0 0.0
        %614 = vmatpush.msra.mxu0 0.0
        %615 = vmatpush.msra.mxu0 0.0
        %616 = vmatpush.msra.mxu0 0.0
        %617 = vmatpush.msra.mxu0 0.0
        %618 = vmatpush.msra.mxu0 0.0
        %619 = vmatpush.msra.mxu0 0.0
        %620 = vmatpush.msra.mxu0 0.0
        %621 = vmatpush.msra.mxu0 0.0
        %622 = vmatpush.msra.mxu0 %v500
        %623 = vmatpush.msra.mxu0 %v499
        %624 = vmatpush.msra.mxu0 %v498
        %625 = vmatpush.msra.mxu0 %v497
        %626 = vmatmul.f32.gmra.mxu0 %v575
        %v627 = vpop.f32.mrf.mxu0
        %v628 = vadd.f32 %v516, %v627
        %629 = vmatmul.f32.gmra.mxu0 %v578
        %v630 = vpop.f32.mrf.mxu0
        %v631 = vadd.f32 %v521, %v630
        %632 = vmatmul.f32.gmra.mxu0 %v581
        %v633 = vpop.f32.mrf.mxu0
        %v634 = vadd.f32 %v526, %v633
        %635 = vmatmul.f32.gmra.mxu0 %v584
        %v636 = vpop.f32.mrf.mxu0
        %v637 = vadd.f32 %v531, %v636
        %638 = vmatmul.f32.gmra.mxu0 %v587
        %v639 = vpop.f32.mrf.mxu0
        %v640 = vadd.f32 %v536, %v639
        %641 = vmatmul.f32.gmra.mxu0 %v590
        %v642 = vpop.f32.mrf.mxu0
        %v643 = vadd.f32 %v541, %v642
        %644 = vmatmul.f32.gmra.mxu0 %v593
        %v645 = vpop.f32.mrf.mxu0
        %v646 = vadd.f32 %v546, %v645
        %647 = vmatmul.f32.gmra.mxu0 %v596
        %v648 = vpop.f32.mrf.mxu0
        %v649 = vadd.f32 %v551, %v648
        %650 = vmatmul.f32.gmra.mxu0 %v599
        %v651 = vpop.f32.mrf.mxu0
        %v652 = vadd.f32 %v556, %v651
        %653 = vmatmul.f32.gmra.mxu0 %v602
        %v654 = vpop.f32.mrf.mxu0
        %v655 = vadd.f32 %v561, %v654
        %656 = vmatmul.f32.gmra.mxu0 %v605
        %v657 = vpop.f32.mrf.mxu0
        %v658 = vadd.f32 %v566, %v657
        %659 = vmatmul.f32.gmra.mxu0 %v608
        %v660 = vpop.f32.mrf.mxu0
        %v661 = vadd.f32 %v571, %v660
        %662 = vdwg.mxu0
        %663 = vst [vmem:[%s336] sm:$0xff] %v628
        %664 = vst [vmem:[%s336 + $0x8] sm:$0xff] %v631
        %665 = vst [vmem:[%s336 + $0x10] sm:$0xff] %v634
        %666 = vst [vmem:[%s336 + $0x18] sm:$0xff] %v637
        %667 = vst [vmem:[%s336 + $0x20] sm:$0xff] %v640
        %668 = vst [vmem:[%s336 + $0x28] sm:$0xff] %v643
        %669 = vst [vmem:[%s336 + $0x30] sm:$0xff] %v646
        %670 = vst [vmem:[%s336 + $0x38] sm:$0xff] %v649
        %671 = vst [vmem:[%s336 + $0x40] sm:$0xff] %v652
        %672 = vst [vmem:[%s336 + $0x48] sm:$0xff] %v655
        %673 = vst [vmem:[%s336 + $0x50] sm:$0xff] %v658
        %674 = vst [vmem:[%s336 + $0x58] sm:$0xff] %v661
        %v675 = vld [vmem:[#allocation3] sm:$0xff]
        %v676 = vld [vmem:[#allocation3 + $0x8] sm:$0xff]
        %v677 = vld [vmem:[#allocation3 + $0x10] sm:$0xff]
        %v678 = vld [vmem:[#allocation3 + $0x18] sm:$0xff]
        %v679 = vld [vmem:[#allocation3 + $0x20] sm:$0xff]
        %v680 = vld [vmem:[#allocation3 + $0x28] sm:$0xff]
        %v681 = vld [vmem:[#allocation3 + $0x30] sm:$0xff]
        %v682 = vld [vmem:[#allocation3 + $0x38] sm:$0xff]
        %v683 = vld [vmem:[#allocation3 + $0x40] sm:$0xff]
        %v684 = vld [vmem:[#allocation3 + $0x48] sm:$0xff]
        %v685 = vld [vmem:[#allocation3 + $0x50] sm:$0xff]
        %v686 = vld [vmem:[#allocation3 + $0x58] sm:$0xff]
        %v687 = vadd.f32 %v675, %v628
        %v688 = vadd.f32 %v676, %v631
        %v689 = vadd.f32 %v677, %v634
        %v690 = vadd.f32 %v678, %v637
        %v691 = vadd.f32 %v679, %v640
        %v692 = vadd.f32 %v680, %v643
        %v693 = vadd.f32 %v681, %v646
        %v694 = vadd.f32 %v682, %v649
        %v695 = vadd.f32 %v683, %v652
        %v696 = vadd.f32 %v684, %v655
        %v697 = vadd.f32 %v685, %v658
        %v698 = vadd.f32 %v686, %v661
        %699 = vst [vmem:[#allocation3] sm:$0xff] %v687
        %700 = vst [vmem:[#allocation3 + $0x8] sm:$0xff] %v688
        %701 = vst [vmem:[#allocation3 + $0x10] sm:$0xff] %v689
        %702 = vst [vmem:[#allocation3 + $0x18] sm:$0xff] %v690
        %703 = vst [vmem:[#allocation3 + $0x20] sm:$0xff] %v691
        %704 = vst [vmem:[#allocation3 + $0x28] sm:$0xff] %v692
        %705 = vst [vmem:[#allocation3 + $0x30] sm:$0xff] %v693
        %706 = vst [vmem:[#allocation3 + $0x38] sm:$0xff] %v694
        %707 = vst [vmem:[#allocation3 + $0x40] sm:$0xff] %v695
        %708 = vst [vmem:[#allocation3 + $0x48] sm:$0xff] %v696
        %709 = vst [vmem:[#allocation3 + $0x50] sm:$0xff] %v697
        %710 = vst [vmem:[#allocation3 + $0x58] sm:$0xff] %v698
        %v711 = vld [vmem:[#allocation4] sm:$0xff]
        %v712 = vld [vmem:[#allocation4 + $0x8] sm:$0xff]
        %v713 = vld [vmem:[#allocation4 + $0x10] sm:$0xff]
        %v714 = vld [vmem:[#allocation4 + $0x18] sm:$0xff]
        %v715 = vld [vmem:[#allocation4 + $0x20] sm:$0xff]
        %v716 = vld [vmem:[#allocation4 + $0x28] sm:$0xff]
        %v717 = vld [vmem:[#allocation4 + $0x30] sm:$0xff]
        %v718 = vld [vmem:[#allocation4 + $0x38] sm:$0xff]
        %v719 = vld [vmem:[#allocation4 + $0x40] sm:$0xff]
        %v720 = vld [vmem:[#allocation4 + $0x48] sm:$0xff]
        %v721 = vld [vmem:[#allocation4 + $0x50] sm:$0xff]
        %v722 = vld [vmem:[#allocation4 + $0x58] sm:$0xff]
        %v723 = vmul.f32 %v628, %v628
        %v724 = vmul.f32 %v631, %v631
        %v725 = vmul.f32 %v634, %v634
        %v726 = vmul.f32 %v637, %v637
        %v727 = vmul.f32 %v640, %v640
        %v728 = vmul.f32 %v643, %v643
        %v729 = vmul.f32 %v646, %v646
        %v730 = vmul.f32 %v649, %v649
        %v731 = vmul.f32 %v652, %v652
        %v732 = vmul.f32 %v655, %v655
        %v733 = vmul.f32 %v658, %v658
        %v734 = vmul.f32 %v661, %v661
        %v735 = vadd.f32 %v711, %v723
        %v736 = vadd.f32 %v712, %v724
        %v737 = vadd.f32 %v713, %v725
        %v738 = vadd.f32 %v714, %v726
        %v739 = vadd.f32 %v715, %v727
        %v740 = vadd.f32 %v716, %v728
        %v741 = vadd.f32 %v717, %v729
        %v742 = vadd.f32 %v718, %v730
        %v743 = vadd.f32 %v719, %v731
        %v744 = vadd.f32 %v720, %v732
        %v745 = vadd.f32 %v721, %v733
        %v746 = vadd.f32 %v722, %v734
        %747 = vst [vmem:[#allocation4] sm:$0xff] %v735
        %748 = vst [vmem:[#allocation4 + $0x8] sm:$0xff] %v736
        %749 = vst [vmem:[#allocation4 + $0x10] sm:$0xff] %v737
        %750 = vst [vmem:[#allocation4 + $0x18] sm:$0xff] %v738
        %751 = vst [vmem:[#allocation4 + $0x20] sm:$0xff] %v739
        %752 = vst [vmem:[#allocation4 + $0x28] sm:$0xff] %v740
        %753 = vst [vmem:[#allocation4 + $0x30] sm:$0xff] %v741
        %754 = vst [vmem:[#allocation4 + $0x38] sm:$0xff] %v742
        %755 = vst [vmem:[#allocation4 + $0x40] sm:$0xff] %v743
        %756 = vst [vmem:[#allocation4 + $0x48] sm:$0xff] %v744
        %757 = vst [vmem:[#allocation4 + $0x50] sm:$0xff] %v745
        %758 = vst [vmem:[#allocation4 + $0x58] sm:$0xff] %v746
        %s759 = scalar_lea.vmem %s313, 32 [#allocation5]
        %v760 = vld [vmem:[%s759] sm:$0xff]
        %v761 = vld [vmem:[%s759 + $0x8] sm:$0xff]
        %v762 = vld [vmem:[%s759 + $0x10] sm:$0xff]
        %v763 = vld [vmem:[%s759 + $0x18] sm:$0xff]
        %v764 = vmul.f32 %v760, %v428
        %v765 = vmul.f32 %v761, %v433
        %v766 = vmul.f32 %v762, %v438
        %v767 = vmul.f32 %v763, %v443
        %v768 = vadd.f32 %v764, %v452
        %v769 = vadd.f32 %v765, %v457
        %v770 = vadd.f32 %v766, %v462
        %v771 = vadd.f32 %v767, %v467
        %v772 = vld [vmem:[#allocation2] sm:$0xff]
        %v773 = vld [vmem:[#allocation2 + $0x8] sm:$0xff]
        %v774 = vld [vmem:[#allocation2 + $0x10] sm:$0xff]
        %v775 = vld [vmem:[#allocation2 + $0x18] sm:$0xff]
        %v776 = vsub.f32 %v768, %v772
        %v777 = vsub.f32 %v769, %v773
        %v778 = vsub.f32 %v770, %v774
        %v779 = vsub.f32 %v771, %v775
        %v780 = vmul.f32 %v776, 0.6666667
        %v781 = vmul.f32 %v777, 0.6666667
        %v782 = vmul.f32 %v778, 0.6666667
        %v783 = vmul.f32 %v779, 0.6666667
        %v784 = vadd.f32 %v772, %v780
        %v785 = vadd.f32 %v773, %v781
        %v786 = vadd.f32 %v774, %v782
        %v787 = vadd.f32 %v775, %v783
        %vm788 = vcmp.ge.f32.partialorder %v784, 1.0
        %vm789 = vcmp.ge.f32.partialorder %v785, 1.0
        %vm790 = vcmp.ge.f32.partialorder %v786, 1.0
        %vm791 = vcmp.ge.f32.partialorder %v787, 1.0
        %v792 = vsel %vm788, 1, 0
        %v793 = vsel %vm789, 1, 0
        %v794 = vsel %vm790, 1, 0
        %v795 = vsel %vm791, 1, 0
        %v796 = vcvt.s32.f32 %v792
        %v797 = vcvt.s32.f32 %v793
        %v798 = vcvt.s32.f32 %v794
        %v799 = vcvt.s32.f32 %v795
        %v800 = vsub.f32 1.0, %v796
        %v801 = vsub.f32 1.0, %v797
        %v802 = vsub.f32 1.0, %v798
        %v803 = vsub.f32 1.0, %v799
        %v804 = vmul.f32 %v784, %v800
        %v805 = vmul.f32 %v785, %v801
        %v806 = vmul.f32 %v786, %v802
        %v807 = vmul.f32 %v787, %v803
        %808 = vst [vmem:[#allocation2] sm:$0xff] %v804
        %809 = vst [vmem:[#allocation2 + $0x8] sm:$0xff] %v805
        %810 = vst [vmem:[#allocation2 + $0x10] sm:$0xff] %v806
        %811 = vst [vmem:[#allocation2 + $0x18] sm:$0xff] %v807
        %812 = vmatpush.msra.mxu0 0.0
        %813 = vmatpush.msra.mxu0 0.0
        %814 = vmatpush.msra.mxu0 0.0
        %815 = vmatpush.msra.mxu0 0.0
        %816 = vmatpush.msra.mxu0 0.0
        %817 = vmatpush.msra.mxu0 0.0
        %818 = vmatpush.msra.mxu0 0.0
        %819 = vmatpush.msra.mxu0 0.0
        %820 = vmatpush.msra.mxu0 0.0
        %821 = vmatpush.msra.mxu0 0.0
        %822 = vmatpush.msra.mxu0 0.0
        %823 = vmatpush.msra.mxu0 0.0
        %824 = vmatpush.msra.mxu0 %v799
        %825 = vmatpush.msra.mxu0 %v798
        %826 = vmatpush.msra.mxu0 %v797
        %827 = vmatpush.msra.mxu0 %v796
        %828 = vmatmul.f32.gmra.mxu0 %v575
        %v829 = vpop.f32.mrf.mxu0
        %v830 = vadd.f32 %v516, %v829
        %831 = vmatmul.f32.gmra.mxu0 %v578
        %v832 = vpop.f32.mrf.mxu0
        %v833 = vadd.f32 %v521, %v832
        %834 = vmatmul.f32.gmra.mxu0 %v581
        %v835 = vpop.f32.mrf.mxu0
        %v836 = vadd.f32 %v526, %v835
        %837 = vmatmul.f32.gmra.mxu0 %v584
        %v838 = vpop.f32.mrf.mxu0
        %v839 = vadd.f32 %v531, %v838
        %840 = vmatmul.f32.gmra.mxu0 %v587
        %v841 = vpop.f32.mrf.mxu0
        %v842 = vadd.f32 %v536, %v841
        %843 = vmatmul.f32.gmra.mxu0 %v590
        %v844 = vpop.f32.mrf.mxu0
        %v845 = vadd.f32 %v541, %v844
        %846 = vmatmul.f32.gmra.mxu0 %v593
        %v847 = vpop.f32.mrf.mxu0
        %v848 = vadd.f32 %v546, %v847
        %849 = vmatmul.f32.gmra.mxu0 %v596
        %v850 = vpop.f32.mrf.mxu0
        %v851 = vadd.f32 %v551, %v850
        %852 = vmatmul.f32.gmra.mxu0 %v599
        %v853 = vpop.f32.mrf.mxu0
        %v854 = vadd.f32 %v556, %v853
        %855 = vmatmul.f32.gmra.mxu0 %v602
        %v856 = vpop.f32.mrf.mxu0
        %v857 = vadd.f32 %v561, %v856
        %858 = vmatmul.f32.gmra.mxu0 %v605
        %v859 = vpop.f32.mrf.mxu0
        %v860 = vadd.f32 %v566, %v859
        %861 = vmatmul.f32.gmra.mxu0 %v608
        %v862 = vpop.f32.mrf.mxu0
        %v863 = vadd.f32 %v571, %v862
        %864 = vdwg.mxu0
        %s865 = scalar_lea.vmem %s336, 96 [#allocation6]
        %866 = vst [vmem:[%s865] sm:$0xff] %v830
        %867 = vst [vmem:[%s865 + $0x8] sm:$0xff] %v833
        %868 = vst [vmem:[%s865 + $0x10] sm:$0xff] %v836
        %869 = vst [vmem:[%s865 + $0x18] sm:$0xff] %v839
        %870 = vst [vmem:[%s865 + $0x20] sm:$0xff] %v842
        %871 = vst [vmem:[%s865 + $0x28] sm:$0xff] %v845
        %872 = vst [vmem:[%s865 + $0x30] sm:$0xff] %v848
        %873 = vst [vmem:[%s865 + $0x38] sm:$0xff] %v851
        %874 = vst [vmem:[%s865 + $0x40] sm:$0xff] %v854
        %875 = vst [vmem:[%s865 + $0x48] sm:$0xff] %v857
        %876 = vst [vmem:[%s865 + $0x50] sm:$0xff] %v860
        %877 = vst [vmem:[%s865 + $0x58] sm:$0xff] %v863
        %v878 = vld [vmem:[#allocation3] sm:$0xff]
        %v879 = vld [vmem:[#allocation3 + $0x8] sm:$0xff]
        %v880 = vld [vmem:[#allocation3 + $0x10] sm:$0xff]
        %v881 = vld [vmem:[#allocation3 + $0x18] sm:$0xff]
        %v882 = vld [vmem:[#allocation3 + $0x20] sm:$0xff]
        %v883 = vld [vmem:[#allocation3 + $0x28] sm:$0xff]
        %v884 = vld [vmem:[#allocation3 + $0x30] sm:$0xff]
        %v885 = vld [vmem:[#allocation3 + $0x38] sm:$0xff]
        %v886 = vld [vmem:[#allocation3 + $0x40] sm:$0xff]
        %v887 = vld [vmem:[#allocation3 + $0x48] sm:$0xff]
        %v888 = vld [vmem:[#allocation3 + $0x50] sm:$0xff]
        %v889 = vld [vmem:[#allocation3 + $0x58] sm:$0xff]
        %v890 = vadd.f32 %v878, %v830
        %v891 = vadd.f32 %v879, %v833
        %v892 = vadd.f32 %v880, %v836
        %v893 = vadd.f32 %v881, %v839
        %v894 = vadd.f32 %v882, %v842
        %v895 = vadd.f32 %v883, %v845
        %v896 = vadd.f32 %v884, %v848
        %v897 = vadd.f32 %v885, %v851
        %v898 = vadd.f32 %v886, %v854
        %v899 = vadd.f32 %v887, %v857
        %v900 = vadd.f32 %v888, %v860
        %v901 = vadd.f32 %v889, %v863
        %902 = vst [vmem:[#allocation3] sm:$0xff] %v890
        %903 = vst [vmem:[#allocation3 + $0x8] sm:$0xff] %v891
        %904 = vst [vmem:[#allocation3 + $0x10] sm:$0xff] %v892
        %905 = vst [vmem:[#allocation3 + $0x18] sm:$0xff] %v893
        %906 = vst [vmem:[#allocation3 + $0x20] sm:$0xff] %v894
        %907 = vst [vmem:[#allocation3 + $0x28] sm:$0xff] %v895
        %908 = vst [vmem:[#allocation3 + $0x30] sm:$0xff] %v896
        %909 = vst [vmem:[#allocation3 + $0x38] sm:$0xff] %v897
        %910 = vst [vmem:[#allocation3 + $0x40] sm:$0xff] %v898
        %911 = vst [vmem:[#allocation3 + $0x48] sm:$0xff] %v899
        %912 = vst [vmem:[#allocation3 + $0x50] sm:$0xff] %v900
        %913 = vst [vmem:[#allocation3 + $0x58] sm:$0xff] %v901
        %v914 = vld [vmem:[#allocation4] sm:$0xff]
        %v915 = vld [vmem:[#allocation4 + $0x8] sm:$0xff]
        %v916 = vld [vmem:[#allocation4 + $0x10] sm:$0xff]
        %v917 = vld [vmem:[#allocation4 + $0x18] sm:$0xff]
        %v918 = vld [vmem:[#allocation4 + $0x20] sm:$0xff]
        %v919 = vld [vmem:[#allocation4 + $0x28] sm:$0xff]
        %v920 = vld [vmem:[#allocation4 + $0x30] sm:$0xff]
        %v921 = vld [vmem:[#allocation4 + $0x38] sm:$0xff]
        %v922 = vld [vmem:[#allocation4 + $0x40] sm:$0xff]
        %v923 = vld [vmem:[#allocation4 + $0x48] sm:$0xff]
        %v924 = vld [vmem:[#allocation4 + $0x50] sm:$0xff]
        %v925 = vld [vmem:[#allocation4 + $0x58] sm:$0xff]
        %v926 = vmul.f32 %v830, %v830
        %v927 = vmul.f32 %v833, %v833
        %v928 = vmul.f32 %v836, %v836
        %v929 = vmul.f32 %v839, %v839
        %v930 = vmul.f32 %v842, %v842
        %v931 = vmul.f32 %v845, %v845
        %v932 = vmul.f32 %v848, %v848
        %v933 = vmul.f32 %v851, %v851
        %v934 = vmul.f32 %v854, %v854
        %v935 = vmul.f32 %v857, %v857
        %v936 = vmul.f32 %v860, %v860
        %v937 = vmul.f32 %v863, %v863
        %v938 = vadd.f32 %v914, %v926
        %v939 = vadd.f32 %v915, %v927
        %v940 = vadd.f32 %v916, %v928
        %v941 = vadd.f32 %v917, %v929
        %v942 = vadd.f32 %v918, %v930
        %v943 = vadd.f32 %v919, %v931
        %v944 = vadd.f32 %v920, %v932
        %v945 = vadd.f32 %v921, %v933
        %v946 = vadd.f32 %v922, %v934
        %v947 = vadd.f32 %v923, %v935
        %v948 = vadd.f32 %v924, %v936
        %v949 = vadd.f32 %v925, %v937
        %950 = vst [vmem:[#allocation4] sm:$0xff] %v938
        %951 = vst [vmem:[#allocation4 + $0x8] sm:$0xff] %v939
        %952 = vst [vmem:[#allocation4 + $0x10] sm:$0xff] %v940
        %953 = vst [vmem:[#allocation4 + $0x18] sm:$0xff] %v941
        %954 = vst [vmem:[#allocation4 + $0x20] sm:$0xff] %v942
        %955 = vst [vmem:[#allocation4 + $0x28] sm:$0xff] %v943
        %956 = vst [vmem:[#allocation4 + $0x30] sm:$0xff] %v944
        %957 = vst [vmem:[#allocation4 + $0x38] sm:$0xff] %v945
        %958 = vst [vmem:[#allocation4 + $0x40] sm:$0xff] %v946
        %959 = vst [vmem:[#allocation4 + $0x48] sm:$0xff] %v947
        %960 = vst [vmem:[#allocation4 + $0x50] sm:$0xff] %v948
        %961 = vst [vmem:[#allocation4 + $0x58] sm:$0xff] %v949
        %v962 = vld [vmem:[#allocation3] sm:$0xff]
        %v963 = vld [vmem:[#allocation3 + $0x8] sm:$0xff]
        %v964 = vld [vmem:[#allocation3 + $0x10] sm:$0xff]
        %v965 = vld [vmem:[#allocation3 + $0x18] sm:$0xff]
        %v966 = vld [vmem:[#allocation3 + $0x20] sm:$0xff]
        %v967 = vld [vmem:[#allocation3 + $0x28] sm:$0xff]
        %v968 = vld [vmem:[#allocation3 + $0x30] sm:$0xff]
        %v969 = vld [vmem:[#allocation3 + $0x38] sm:$0xff]
        %v970 = vld [vmem:[#allocation3 + $0x40] sm:$0xff]
        %v971 = vld [vmem:[#allocation3 + $0x48] sm:$0xff]
        %v972 = vld [vmem:[#allocation3 + $0x50] sm:$0xff]
        %v973 = vld [vmem:[#allocation3 + $0x58] sm:$0xff]
        %974 = vadd.xlane.f32.xlu0 %v962
        %v975 = vpop.xlane.xlu0 %974
        %976 = vadd.xlane.f32.xlu0 %v963
        %v977 = vpop.xlane.xlu0 %976
        %978 = vadd.xlane.f32.xlu0 %v964
        %v979 = vpop.xlane.xlu0 %978
        %980 = vadd.xlane.f32.xlu0 %v965
        %v981 = vpop.xlane.xlu0 %980
        %982 = vadd.xlane.f32.xlu0 %v966
        %v983 = vpop.xlane.xlu0 %982
        %984 = vadd.xlane.f32.xlu0 %v967
        %v985 = vpop.xlane.xlu0 %984
        %986 = vadd.xlane.f32.xlu0 %v968
        %v987 = vpop.xlane.xlu0 %986
        %988 = vadd.xlane.f32.xlu0 %v969
        %v989 = vpop.xlane.xlu0 %988
        %990 = vadd.xlane.f32.xlu0 %v970
        %v991 = vpop.xlane.xlu0 %990
        %992 = vadd.xlane.f32.xlu0 %v971
        %v993 = vpop.xlane.xlu0 %992
        %994 = vadd.xlane.f32.xlu0 %v972
        %v995 = vpop.xlane.xlu0 %994
        %996 = vadd.xlane.f32.xlu0 %v973
        %v997 = vpop.xlane.xlu0 %996
        %vm998 = vcmask 7168
        %999 = vst.msk [vmem:[%s355] sm:$0xff] %vm998, %v975
        %1000 = vst.msk [vmem:[%s355 + $0x8] sm:$0xff] %vm998, %v977
        %1001 = vst.msk [vmem:[%s355 + $0x10] sm:$0xff] %vm998, %v979
        %1002 = vst.msk [vmem:[%s355 + $0x18] sm:$0xff] %vm998, %v981
        %1003 = vst.msk [vmem:[%s355 + $0x20] sm:$0xff] %vm998, %v983
        %1004 = vst.msk [vmem:[%s355 + $0x28] sm:$0xff] %vm998, %v985
        %1005 = vst.msk [vmem:[%s355 + $0x30] sm:$0xff] %vm998, %v987
        %1006 = vst.msk [vmem:[%s355 + $0x38] sm:$0xff] %vm998, %v989
        %1007 = vst.msk [vmem:[%s355 + $0x40] sm:$0xff] %vm998, %v991
        %1008 = vst.msk [vmem:[%s355 + $0x48] sm:$0xff] %vm998, %v993
        %1009 = vst.msk [vmem:[%s355 + $0x50] sm:$0xff] %vm998, %v995
        %1010 = vst.msk [vmem:[%s355 + $0x58] sm:$0xff] %vm998, %v997
        %v1011 = vld [vmem:[#allocation4] sm:$0xff]
        %v1012 = vld [vmem:[#allocation4 + $0x8] sm:$0xff]
        %v1013 = vld [vmem:[#allocation4 + $0x10] sm:$0xff]
        %v1014 = vld [vmem:[#allocation4 + $0x18] sm:$0xff]
        %v1015 = vld [vmem:[#allocation4 + $0x20] sm:$0xff]
        %v1016 = vld [vmem:[#allocation4 + $0x28] sm:$0xff]
        %v1017 = vld [vmem:[#allocation4 + $0x30] sm:$0xff]
        %v1018 = vld [vmem:[#allocation4 + $0x38] sm:$0xff]
        %v1019 = vld [vmem:[#allocation4 + $0x40] sm:$0xff]
        %v1020 = vld [vmem:[#allocation4 + $0x48] sm:$0xff]
        %v1021 = vld [vmem:[#allocation4 + $0x50] sm:$0xff]
        %v1022 = vld [vmem:[#allocation4 + $0x58] sm:$0xff]
        %1023 = vadd.xlane.f32.xlu0 %v1011
        %v1024 = vpop.xlane.xlu0 %1023
        %1025 = vadd.xlane.f32.xlu0 %v1012
        %v1026 = vpop.xlane.xlu0 %1025
        %1027 = vadd.xlane.f32.xlu0 %v1013
        %v1028 = vpop.xlane.xlu0 %1027
        %1029 = vadd.xlane.f32.xlu0 %v1014
        %v1030 = vpop.xlane.xlu0 %1029
        %1031 = vadd.xlane.f32.xlu0 %v1015
        %v1032 = vpop.xlane.xlu0 %1031
        %1033 = vadd.xlane.f32.xlu0 %v1016
        %v1034 = vpop.xlane.xlu0 %1033
        %1035 = vadd.xlane.f32.xlu0 %v1017
        %v1036 = vpop.xlane.xlu0 %1035
        %1037 = vadd.xlane.f32.xlu0 %v1018
        %v1038 = vpop.xlane.xlu0 %1037
        %1039 = vadd.xlane.f32.xlu0 %v1019
        %v1040 = vpop.xlane.xlu0 %1039
        %1041 = vadd.xlane.f32.xlu0 %v1020
        %v1042 = vpop.xlane.xlu0 %1041
        %1043 = vadd.xlane.f32.xlu0 %v1021
        %v1044 = vpop.xlane.xlu0 %1043
        %1045 = vadd.xlane.f32.xlu0 %v1022
        %v1046 = vpop.xlane.xlu0 %1045
        %1047 = vst.msk [vmem:[%s360] sm:$0xff] %vm998, %v1024
        %1048 = vst.msk [vmem:[%s360 + $0x8] sm:$0xff] %vm998, %v1026
        %1049 = vst.msk [vmem:[%s360 + $0x10] sm:$0xff] %vm998, %v1028
        %1050 = vst.msk [vmem:[%s360 + $0x18] sm:$0xff] %vm998, %v1030
        %1051 = vst.msk [vmem:[%s360 + $0x20] sm:$0xff] %vm998, %v1032
        %1052 = vst.msk [vmem:[%s360 + $0x28] sm:$0xff] %vm998, %v1034
        %1053 = vst.msk [vmem:[%s360 + $0x30] sm:$0xff] %vm998, %v1036
        %1054 = vst.msk [vmem:[%s360 + $0x38] sm:$0xff] %vm998, %v1038
        %1055 = vst.msk [vmem:[%s360 + $0x40] sm:$0xff] %vm998, %v1040
        %1056 = vst.msk [vmem:[%s360 + $0x48] sm:$0xff] %vm998, %v1042
        %1057 = vst.msk [vmem:[%s360 + $0x50] sm:$0xff] %vm998, %v1044
        %1058 = vst.msk [vmem:[%s360 + $0x58] sm:$0xff] %vm998, %v1046
        %s1059 = sand.u32 %s137, 1
        %s1060 = sand.u32 %s137, 1
        %s1061 = smul.addr %s1060, 192
        %s1062 = scalar_lea.vmem [#allocation6], %s1061
        %p1063 = scmp.lt.s32.totalorder %s19, 1
        %s1064 = scalar_select %p1063, %s19, 1
        %s1065 = smul.addr %s1064, 12
        %s1066 = smul.addr %s1065, 8
        %s1067 = scalar_lea.vmem %s6, %s1066
        %p1068 = scmp.lt.s32.totalorder %s19, 1
        %s1069 = scalar_select %p1068, %s19, 1
        %s1070 = smul.addr %s1069, 12
        %s1071 = smul.addr %s1070, 8
        %s1072 = scalar_lea.vmem %s7, %s1071
        // Predicated region
        $region79: #{vit_snn_forward.10} parent=73 // pred_check
          %p1073 = pneg %p147
        $region80: #{vit_snn_forward.10} parent=73 // pred_check_branch
          %1075 = sbr.rel (%p1073) target = $region82
        $region81: #{vit_snn_forward.10} parent=73 // pred_region
          %s1076 = smul.addr %s19, 8
          %s1077 = scalar_lea.vmem %s5, %s1076
          // Predicated region
          $region83: #{vit_snn_forward.10} parent=81 // pred_check
            _
          $region84: #{vit_snn_forward.10} parent=81 // pred_check_branch
            %1079 = sbr.rel (0) target = $region86
          $region85: #{vit_snn_forward.10} parent=81 // pred_region
            // Predicated region
            $region87: #{vit_snn_forward.10} parent=85 // pred_check
              _
            $region88: #{vit_snn_forward.10} parent=85 // pred_check_branch
              %1081 = sbr.rel (0) target = $region90
            $region89: #{vit_snn_forward.10} parent=85 // pred_region
              // Predicated region
              $region102: #{vit_snn_forward.10} parent=89 // pred_check
                _
              $region103: #{vit_snn_forward.10} parent=89 // pred_check_branch
                %1143 = sbr.rel (0) target = $region105
              $region104: #{vit_snn_forward.10} parent=89 // pred_region
                loop: start=0, step=1, limit=1
                $region106: #{vit_snn_forward.10} parent=104 // loop_pre_header
                  _
                $region107: #{vit_snn_forward.10} parent=104 // loop_header
                  %s1145 = sphi 0, %s1149
                  %p1146 = scmp.ge.s32.totalorder %s1145, 1
                  %s1150 = sphi %s1062, %s1062
                  %s1151 = sphi %s1077, %s1077
                $region108: #{vit_snn_forward.10} parent=104 // loop_header_branch
                  %1148 = sbr.rel (%p1146) target = $region112
                $region109: #{vit_snn_forward.10} parent=104 // loop_body
                  %v1152 = vld [vmem:[%s1150] sm:$0xff]
                  %1153 = vst [vmem:[%s1151] sm:$0xff] %v1152
                  %v1154 = vld [vmem:[%s1150 + $0x8] sm:$0xff]
                  %1155 = vst [vmem:[%s1151 + $0x10] sm:$0xff] %v1154
                  %v1156 = vld [vmem:[%s1150 + $0x10] sm:$0xff]
                  %1157 = vst [vmem:[%s1151 + $0x20] sm:$0xff] %v1156
                  %v1158 = vld [vmem:[%s1150 + $0x18] sm:$0xff]
                  %1159 = vst [vmem:[%s1151 + $0x30] sm:$0xff] %v1158
                  %v1160 = vld [vmem:[%s1150 + $0x20] sm:$0xff]
                  %1161 = vst [vmem:[%s1151 + $0x40] sm:$0xff] %v1160
                  %v1162 = vld [vmem:[%s1150 + $0x28] sm:$0xff]
                  %1163 = vst [vmem:[%s1151 + $0x50] sm:$0xff] %v1162
                  %v1164 = vld [vmem:[%s1150 + $0x30] sm:$0xff]
                  %1165 = vst [vmem:[%s1151 + $0x60] sm:$0xff] %v1164
                  %v1166 = vld [vmem:[%s1150 + $0x38] sm:$0xff]
                  %1167 = vst [vmem:[%s1151 + $0x70] sm:$0xff] %v1166
                  %v1168 = vld [vmem:[%s1150 + $0x40] sm:$0xff]
                  %1169 = vst [vmem:[%s1151 + $0x80] sm:$0xff] %v1168
                  %v1170 = vld [vmem:[%s1150 + $0x48] sm:$0xff]
                  %1171 = vst [vmem:[%s1151 + $0x90] sm:$0xff] %v1170
                  %v1172 = vld [vmem:[%s1150 + $0x50] sm:$0xff]
                  %1173 = vst [vmem:[%s1151 + $0xa0] sm:$0xff] %v1172
                  %v1174 = vld [vmem:[%s1150 + $0x58] sm:$0xff]
                  %1175 = vst [vmem:[%s1151 + $0xb0] sm:$0xff] %v1174
                  %v1176 = vld [vmem:[%s1150 + $0x60] sm:$0xff]
                  %1177 = vst [vmem:[%s1151 + $0xc0] sm:$0xff] %v1176
                  %v1178 = vld [vmem:[%s1150 + $0x68] sm:$0xff]
                  %1179 = vst [vmem:[%s1151 + $0xd0] sm:$0xff] %v1178
                  %v1180 = vld [vmem:[%s1150 + $0x70] sm:$0xff]
                  %1181 = vst [vmem:[%s1151 + $0xe0] sm:$0xff] %v1180
                  %v1182 = vld [vmem:[%s1150 + $0x78] sm:$0xff]
                  %1183 = vst [vmem:[%s1151 + $0xf0] sm:$0xff] %v1182
                  %v1184 = vld [vmem:[%s1150 + $0x80] sm:$0xff]
                  %1185 = vst [vmem:[%s1151 + $0x100] sm:$0xff] %v1184
                  %v1186 = vld [vmem:[%s1150 + $0x88] sm:$0xff]
                  %1187 = vst [vmem:[%s1151 + $0x110] sm:$0xff] %v1186
                  %v1188 = vld [vmem:[%s1150 + $0x90] sm:$0xff]
                  %1189 = vst [vmem:[%s1151 + $0x120] sm:$0xff] %v1188
                  %v1190 = vld [vmem:[%s1150 + $0x98] sm:$0xff]
                  %1191 = vst [vmem:[%s1151 + $0x130] sm:$0xff] %v1190
                  %v1192 = vld [vmem:[%s1150 + $0xa0] sm:$0xff]
                  %1193 = vst [vmem:[%s1151 + $0x140] sm:$0xff] %v1192
                  %v1194 = vld [vmem:[%s1150 + $0xa8] sm:$0xff]
                  %1195 = vst [vmem:[%s1151 + $0x150] sm:$0xff] %v1194
                  %v1196 = vld [vmem:[%s1150 + $0xb0] sm:$0xff]
                  %1197 = vst [vmem:[%s1151 + $0x160] sm:$0xff] %v1196
                  %v1198 = vld [vmem:[%s1150 + $0xb8] sm:$0xff]
                  %1199 = vst [vmem:[%s1151 + $0x170] sm:$0xff] %v1198
                $region110: #{vit_snn_forward.10} parent=104 // loop_footer
                  %s1149 = sadd.s32 1, %s1145
                $region111: #{vit_snn_forward.10} parent=104 // loop_footer_branch
                  %1144 = sbr.rel target = $region107
                $region112: #{vit_snn_forward.10} parent=104 // loop_exit
                  _
              $region105: #{vit_snn_forward.10} parent=89 // pred_fallthru
                _
              // Predicated region
              $region113: #{vit_snn_forward.10} parent=89 // pred_check
                _
              $region114: #{vit_snn_forward.10} parent=89 // pred_check_branch
                %1201 = sbr.rel target = $region116
              $region115: #{vit_snn_forward.10} parent=89 // pred_region
                _
              $region116: #{vit_snn_forward.10} parent=89 // pred_fallthru
                _
            $region90: #{vit_snn_forward.10} parent=85 // pred_fallthru
              _
            // Predicated region
            $region91: #{vit_snn_forward.10} parent=85 // pred_check
              _
            $region92: #{vit_snn_forward.10} parent=85 // pred_check_branch
              %1083 = sbr.rel target = $region94
            $region93: #{vit_snn_forward.10} parent=85 // pred_region
              %s1085 = ssub.s32 256, 1
              loop: start=0, step=1, limit=1
              $region95: #{vit_snn_forward.10} parent=93 // loop_pre_header
                _
              $region96: #{vit_snn_forward.10} parent=93 // loop_header
                %s1087 = sphi 0, %s1091
                %p1088 = scmp.ge.s32.totalorder %s1087, 1
                %s1092 = sphi %s1062, %s1062
                %s1093 = sphi %s1077, %s1077
              $region97: #{vit_snn_forward.10} parent=93 // loop_header_branch
                %1090 = sbr.rel (%p1088) target = $region101
              $region98: #{vit_snn_forward.10} parent=93 // loop_body
                %v1094 = vld [vmem:[%s1092] sm:%s1085]
                %1095 = vst [vmem:[%s1093] sm:%s1085] %v1094
                %v1096 = vld [vmem:[%s1092 + $0x8] sm:%s1085]
                %1097 = vst [vmem:[%s1093 + $0x10] sm:%s1085] %v1096
                %v1098 = vld [vmem:[%s1092 + $0x10] sm:%s1085]
                %1099 = vst [vmem:[%s1093 + $0x20] sm:%s1085] %v1098
                %v1100 = vld [vmem:[%s1092 + $0x18] sm:%s1085]
                %1101 = vst [vmem:[%s1093 + $0x30] sm:%s1085] %v1100
                %v1102 = vld [vmem:[%s1092 + $0x20] sm:%s1085]
                %1103 = vst [vmem:[%s1093 + $0x40] sm:%s1085] %v1102
                %v1104 = vld [vmem:[%s1092 + $0x28] sm:%s1085]
                %1105 = vst [vmem:[%s1093 + $0x50] sm:%s1085] %v1104
                %v1106 = vld [vmem:[%s1092 + $0x30] sm:%s1085]
                %1107 = vst [vmem:[%s1093 + $0x60] sm:%s1085] %v1106
                %v1108 = vld [vmem:[%s1092 + $0x38] sm:%s1085]
                %1109 = vst [vmem:[%s1093 + $0x70] sm:%s1085] %v1108
                %v1110 = vld [vmem:[%s1092 + $0x40] sm:%s1085]
                %1111 = vst [vmem:[%s1093 + $0x80] sm:%s1085] %v1110
                %v1112 = vld [vmem:[%s1092 + $0x48] sm:%s1085]
                %1113 = vst [vmem:[%s1093 + $0x90] sm:%s1085] %v1112
                %v1114 = vld [vmem:[%s1092 + $0x50] sm:%s1085]
                %1115 = vst [vmem:[%s1093 + $0xa0] sm:%s1085] %v1114
                %v1116 = vld [vmem:[%s1092 + $0x58] sm:%s1085]
                %1117 = vst [vmem:[%s1093 + $0xb0] sm:%s1085] %v1116
                %v1118 = vld [vmem:[%s1092 + $0x60] sm:%s1085]
                %1119 = vst [vmem:[%s1093 + $0xc0] sm:%s1085] %v1118
                %v1120 = vld [vmem:[%s1092 + $0x68] sm:%s1085]
                %1121 = vst [vmem:[%s1093 + $0xd0] sm:%s1085] %v1120
                %v1122 = vld [vmem:[%s1092 + $0x70] sm:%s1085]
                %1123 = vst [vmem:[%s1093 + $0xe0] sm:%s1085] %v1122
                %v1124 = vld [vmem:[%s1092 + $0x78] sm:%s1085]
                %1125 = vst [vmem:[%s1093 + $0xf0] sm:%s1085] %v1124
                %v1126 = vld [vmem:[%s1092 + $0x80] sm:%s1085]
                %1127 = vst [vmem:[%s1093 + $0x100] sm:%s1085] %v1126
                %v1128 = vld [vmem:[%s1092 + $0x88] sm:%s1085]
                %1129 = vst [vmem:[%s1093 + $0x110] sm:%s1085] %v1128
                %v1130 = vld [vmem:[%s1092 + $0x90] sm:%s1085]
                %1131 = vst [vmem:[%s1093 + $0x120] sm:%s1085] %v1130
                %v1132 = vld [vmem:[%s1092 + $0x98] sm:%s1085]
                %1133 = vst [vmem:[%s1093 + $0x130] sm:%s1085] %v1132
                %v1134 = vld [vmem:[%s1092 + $0xa0] sm:%s1085]
                %1135 = vst [vmem:[%s1093 + $0x140] sm:%s1085] %v1134
                %v1136 = vld [vmem:[%s1092 + $0xa8] sm:%s1085]
                %1137 = vst [vmem:[%s1093 + $0x150] sm:%s1085] %v1136
                %v1138 = vld [vmem:[%s1092 + $0xb0] sm:%s1085]
                %1139 = vst [vmem:[%s1093 + $0x160] sm:%s1085] %v1138
                %v1140 = vld [vmem:[%s1092 + $0xb8] sm:%s1085]
                %1141 = vst [vmem:[%s1093 + $0x170] sm:%s1085] %v1140
              $region99: #{vit_snn_forward.10} parent=93 // loop_footer
                %s1091 = sadd.s32 1, %s1087
              $region100: #{vit_snn_forward.10} parent=93 // loop_footer_branch
                %1086 = sbr.rel target = $region96
              $region101: #{vit_snn_forward.10} parent=93 // loop_exit
                _
            $region94: #{vit_snn_forward.10} parent=85 // pred_fallthru
              _
          $region86: #{vit_snn_forward.10} parent=81 // pred_fallthru
            _
          %1202 = vnop
        $region82: #{vit_snn_forward.10} parent=73 // pred_fallthru
          _
        // Predicated region
        $region117: #{vit_snn_forward.10} parent=73 // pred_check
          %p1203 = pneg %p173
        $region118: #{vit_snn_forward.10} parent=73 // pred_check_branch
          %1205 = sbr.rel (%p1203) target = $region120
        $region119: #{vit_snn_forward.10} parent=73 // pred_region
          _
        $region120: #{vit_snn_forward.10} parent=73 // pred_fallthru
          _
        // Predicated region
        $region121: #{vit_snn_forward.10} parent=73 // pred_check
          %p1206 = pneg %p199
        $region122: #{vit_snn_forward.10} parent=73 // pred_check_branch
          %1208 = sbr.rel (%p1206) target = $region124
        $region123: #{vit_snn_forward.10} parent=73 // pred_region
          _
        $region124: #{vit_snn_forward.10} parent=73 // pred_fallthru
          _
      $region74: #{vit_snn_forward.10} parent=5 // pred_fallthru
        _
      %p1209 = scmp.le.s32.totalorder 2, %s14
      // Predicated region
      $region125: #{vit_snn_forward.10} parent=5 // pred_check
        %p1210 = pneg %p1209
      $region126: #{vit_snn_forward.10} parent=5 // pred_check_branch
        %1212 = sbr.rel (%p1210) target = $region128
      $region127: #{vit_snn_forward.10} parent=5 // pred_region
        %s1213 = ssub.s32 %s14, 2
        // Predicated region
        $region129: #{vit_snn_forward.10} parent=127 // pred_check
          %p1214 = pneg %p153
        $region130: #{vit_snn_forward.10} parent=127 // pred_check_branch
          %1216 = sbr.rel (%p1214) target = $region132
        $region131: #{vit_snn_forward.10} parent=127 // pred_region
          %s1217 = sand.u32 %s138, 1
          %s1218 = sand.u32 %s138, 1
          %s1219 = smul.addr %s1218, 192
          %s1220 = scalar_lea.vmem [#allocation6], %s1219
        $region132: #{vit_snn_forward.10} parent=127 // pred_fallthru
          _
        // Predicated region
        $region133: #{vit_snn_forward.10} parent=127 // pred_check
          %p1221 = pneg %p179
        $region134: #{vit_snn_forward.10} parent=127 // pred_check_branch
          %1223 = sbr.rel (%p1221) target = $region136
        $region135: #{vit_snn_forward.10} parent=127 // pred_region
          %p1224 = scmp.lt.s32.totalorder %s20, 1
          %s1225 = scalar_select %p1224, %s20, 1
          %s1226 = smul.addr %s1225, 12
          %s1227 = smul.addr %s1226, 8
          %s1228 = scalar_lea.vmem %s6, %s1227
        $region136: #{vit_snn_forward.10} parent=127 // pred_fallthru
          _
        // Predicated region
        $region137: #{vit_snn_forward.10} parent=127 // pred_check
          %p1229 = pneg %p205
        $region138: #{vit_snn_forward.10} parent=127 // pred_check_branch
          %1231 = sbr.rel (%p1229) target = $region140
        $region139: #{vit_snn_forward.10} parent=127 // pred_region
          %p1232 = scmp.lt.s32.totalorder %s20, 1
          %s1233 = scalar_select %p1232, %s20, 1
          %s1234 = smul.addr %s1233, 12
          %s1235 = smul.addr %s1234, 8
          %s1236 = scalar_lea.vmem %s7, %s1235
        $region140: #{vit_snn_forward.10} parent=127 // pred_fallthru
          _
      $region128: #{vit_snn_forward.10} parent=5 // pred_fallthru
        _
    $region6: #{vit_snn_forward.10} parent=1 // loop_footer
      %s18 = sadd.s32 1, %s14
    $region7: #{vit_snn_forward.10} parent=1 // loop_footer_branch
      %13 = sbr.rel target = $region3
    $region8: #{vit_snn_forward.10} parent=1 // loop_exit
      _

// kernel: vit_snn_forward.13
$region0: #{vit_snn_forward.13}
  #allocation0 [shape = 'u32[]', space=smem, size = 0x4, offset = 0x4, fixed_abs, tag = 'smem constant byte address 0x4 - core index']
  #allocation1 [shape = 'u32[72,128]{1,0:T(1,128)}', space=vmem, size = 0x9000, scoped, tag = 'internal scratch']
  #allocation2 [shape = 'f32[128,128]{1,0:T(8,128)}', space=vmem, size = 0x10000, scoped, tag = 'scratch operand']
  #allocation3 [shape = 'f32[32,128]{1,0:T(8,128)}', space=vmem, size = 0x4000, scoped, tag = 'scratch operand']
  #allocation4 [shape = 'f32[32,128]{1,0:T(8,128)}', space=vmem, size = 0x4000, scoped, tag = 'scratch operand']
  %s0 = inlined_call_operand.vmem [shape: f32[2,128,256], index: 0, kind: input, shape index: {}]
  %s1 = inlined_call_operand.vmem [shape: f32[128,1], index: 1, kind: input, shape index: {}]
  %s2 = inlined_call_operand.vmem [shape: f32[128,1], index: 2, kind: input, shape index: {}]
  %s3 = inlined_call_operand.vmem [shape: f32[32,128], index: 3, kind: input, shape index: {}]
  %s4 = inlined_call_operand.vmem [shape: f32[32,1], index: 4, kind: input, shape index: {}]
  %s5 = inlined_call_operand.vmem [shape: f32[2,32,256], index: 5, kind: output, shape index: {0}]
  %s6 = inlined_call_operand.vmem [shape: f32[2,32,1], index: 6, kind: output, shape index: {1}]
  %s7 = inlined_call_operand.vmem [shape: f32[2,32,1], index: 7, kind: output, shape index: {2}]
  %8 = xla_tuple %s5, %s6, %s7
  %s9 = sld [smem:[#allocation0]]
  $region141: #{vit_snn_forward.13} parent=0
    _
  %s11 = ssub.s32 1, %s9
  %s12 = scalar_select 0, %s11, %s9
  $region1: #{vit_snn_forward.13} parent=0
    #allocation5 [shape = 'u8[262144]{0}', space=vmem, size = 0x40000, scoped, tag = 'input window, operand 0']
    #allocation6 [shape = 'u8[65536]{0}', space=vmem, size = 0x10000, scoped, tag = 'output window, operand 0']
    loop: start=0, step=1, limit=4
    $region2: #{vit_snn_forward.13} parent=1 // loop_pre_header
      _
    $region3: #{vit_snn_forward.13} parent=1 // loop_header
      %s14 = sphi 0, %s18
      %p15 = scmp.ge.s32.totalorder %s14, 4
      %s24 = sphi 0, %s26
      %s27 = sphi 0, %s24
      %s28 = sphi 0, %s27
      %s44 = sphi 0, %s28
      %s48 = sphi 0, %s48
      %s50 = sphi 0, %s48
      %s51 = sphi 0, %s50
      %s65 = sphi 0, %s51
      %s69 = sphi 0, %s69
      %s71 = sphi 0, %s69
      %s72 = sphi 0, %s71
      %s86 = sphi 0, %s72
      %s90 = sphi 0, %s90
      %s92 = sphi 0, %s90
      %s93 = sphi 0, %s92
      %s107 = sphi 0, %s93
      %s111 = sphi 0, %s111
      %s113 = sphi 0, %s111
      %s114 = sphi 0, %s113
      %s128 = sphi 0, %s114
      %s134 = sphi 0, %s136
      %s137 = sphi 0, %s134
      %s138 = sphi 0, %s137
      %s154 = sphi 0, %s138
      %s160 = sphi 0, %s162
      %s163 = sphi 0, %s160
      %s164 = sphi 0, %s163
      %s180 = sphi 0, %s164
      %s186 = sphi 0, %s188
      %s189 = sphi 0, %s186
      %s190 = sphi 0, %s189
      %s206 = sphi 0, %s190
    $region4: #{vit_snn_forward.13} parent=1 // loop_header_branch
      %17 = sbr.rel (%p15) target = $region8
    $region5: #{vit_snn_forward.13} parent=1 // loop_body
      %s19 = ssub.s32 %s14, 1
      %s20 = ssub.s32 %s14, 2
      %s21 = sadd.s32 %s14, 1
      %s22 = ssub.s32 %s14, %s21
      %p23 = scmp.eq.s32.totalorder %s22, 0
      %s25 = sadd.s32 %s24, 1
      %s26 = scalar_select %p23, %s24, %s25
      %p29 = pneg %p23
      %p30 = scmp.eq.s32.totalorder %s14, 1
      %p31 = por %p29, %p30
      %p32 = scmp.ne.s32.totalorder %s24, %s27
      %p33 = scmp.eq.s32.totalorder %s14, 0
      %p34 = por %p32, %p33
      %p35 = scmp.ne.s32.totalorder %s24, %s27
      %p36 = scmp.eq.s32.totalorder %s19, 1
      %p37 = por %p35, %p36
      %p38 = scmp.ne.s32.totalorder %s27, %s28
      %p39 = scmp.eq.s32.totalorder %s19, 0
      %p40 = por %p38, %p39
      %p41 = scmp.ne.s32.totalorder %s27, %s28
      %p42 = scmp.eq.s32.totalorder %s20, 1
      %p43 = por %p41, %p42
      %p45 = scmp.ne.s32.totalorder %s28, %s44
      %p46 = scmp.eq.s32.totalorder %s20, 0
      %p47 = por %p45, %p46
      %s49 = sadd.s32 %s48, 1
      %p52 = scmp.eq.s32.totalorder %s14, 1
      %p53 = scmp.ne.s32.totalorder %s48, %s50
      %p54 = scmp.eq.s32.totalorder %s14, 0
      %p55 = por %p53, %p54
      %p56 = scmp.ne.s32.totalorder %s48, %s50
      %p57 = scmp.eq.s32.totalorder %s19, 1
      %p58 = por %p56, %p57
      %p59 = scmp.ne.s32.totalorder %s50, %s51
      %p60 = scmp.eq.s32.totalorder %s19, 0
      %p61 = por %p59, %p60
      %p62 = scmp.ne.s32.totalorder %s50, %s51
      %p63 = scmp.eq.s32.totalorder %s20, 1
      %p64 = por %p62, %p63
      %p66 = scmp.ne.s32.totalorder %s51, %s65
      %p67 = scmp.eq.s32.totalorder %s20, 0
      %p68 = por %p66, %p67
      %s70 = sadd.s32 %s69, 1
      %p73 = scmp.eq.s32.totalorder %s14, 1
      %p74 = scmp.ne.s32.totalorder %s69, %s71
      %p75 = scmp.eq.s32.totalorder %s14, 0
      %p76 = por %p74, %p75
      %p77 = scmp.ne.s32.totalorder %s69, %s71
      %p78 = scmp.eq.s32.totalorder %s19, 1
      %p79 = por %p77, %p78
      %p80 = scmp.ne.s32.totalorder %s71, %s72
      %p81 = scmp.eq.s32.totalorder %s19, 0
      %p82 = por %p80, %p81
      %p83 = scmp.ne.s32.totalorder %s71, %s72
      %p84 = scmp.eq.s32.totalorder %s20, 1
      %p85 = por %p83, %p84
      %p87 = scmp.ne.s32.totalorder %s72, %s86
      %p88 = scmp.eq.s32.totalorder %s20, 0
      %p89 = por %p87, %p88
      %s91 = sadd.s32 %s90, 1
      %p94 = scmp.eq.s32.totalorder %s14, 1
      %p95 = scmp.ne.s32.totalorder %s90, %s92
      %p96 = scmp.eq.s32.totalorder %s14, 0
      %p97 = por %p95, %p96
      %p98 = scmp.ne.s32.totalorder %s90, %s92
      %p99 = scmp.eq.s32.totalorder %s19, 1
      %p100 = por %p98, %p99
      %p101 = scmp.ne.s32.totalorder %s92, %s93
      %p102 = scmp.eq.s32.totalorder %s19, 0
      %p103 = por %p101, %p102
      %p104 = scmp.ne.s32.totalorder %s92, %s93
      %p105 = scmp.eq.s32.totalorder %s20, 1
      %p106 = por %p104, %p105
      %p108 = scmp.ne.s32.totalorder %s93, %s107
      %p109 = scmp.eq.s32.totalorder %s20, 0
      %p110 = por %p108, %p109
      %s112 = sadd.s32 %s111, 1
      %p115 = scmp.eq.s32.totalorder %s14, 1
      %p116 = scmp.ne.s32.totalorder %s111, %s113
      %p117 = scmp.eq.s32.totalorder %s14, 0
      %p118 = por %p116, %p117
      %p119 = scmp.ne.s32.totalorder %s111, %s113
      %p120 = scmp.eq.s32.totalorder %s19, 1
      %p121 = por %p119, %p120
      %p122 = scmp.ne.s32.totalorder %s113, %s114
      %p123 = scmp.eq.s32.totalorder %s19, 0
      %p124 = por %p122, %p123
      %p125 = scmp.ne.s32.totalorder %s113, %s114
      %p126 = scmp.eq.s32.totalorder %s20, 1
      %p127 = por %p125, %p126
      %p129 = scmp.ne.s32.totalorder %s114, %s128
      %p130 = scmp.eq.s32.totalorder %s20, 0
      %p131 = por %p129, %p130
      %s132 = ssub.s32 %s14, %s21
      %p133 = scmp.eq.s32.totalorder %s132, 0
      %s135 = sadd.s32 %s134, 1
      %s136 = scalar_select %p133, %s134, %s135
      %p139 = pneg %p133
      %p140 = scmp.eq.s32.totalorder %s14, 1
      %p141 = por %p139, %p140
      %p142 = scmp.ne.s32.totalorder %s134, %s137
      %p143 = scmp.eq.s32.totalorder %s14, 0
      %p144 = por %p142, %p143
      %p145 = scmp.ne.s32.totalorder %s134, %s137
      %p146 = scmp.eq.s32.totalorder %s19, 1
      %p147 = por %p145, %p146
      %p148 = scmp.ne.s32.totalorder %s137, %s138
      %p149 = scmp.eq.s32.totalorder %s19, 0
      %p150 = por %p148, %p149
      %p151 = scmp.ne.s32.totalorder %s137, %s138
      %p152 = scmp.eq.s32.totalorder %s20, 1
      %p153 = por %p151, %p152
      %p155 = scmp.ne.s32.totalorder %s138, %s154
      %p156 = scmp.eq.s32.totalorder %s20, 0
      %p157 = por %p155, %p156
      %s158 = ssub.s32 %s14, %s21
      %p159 = scmp.eq.s32.totalorder %s158, 0
      %s161 = sadd.s32 %s160, 1
      %s162 = scalar_select %p159, %s160, %s161
      %p165 = pneg %p159
      %p166 = scmp.eq.s32.totalorder %s14, 1
      %p167 = por %p165, %p166
      %p168 = scmp.ne.s32.totalorder %s160, %s163
      %p169 = scmp.eq.s32.totalorder %s14, 0
      %p170 = por %p168, %p169
      %p171 = scmp.ne.s32.totalorder %s160, %s163
      %p172 = scmp.eq.s32.totalorder %s19, 1
      %p173 = por %p171, %p172
      %p174 = scmp.ne.s32.totalorder %s163, %s164
      %p175 = scmp.eq.s32.totalorder %s19, 0
      %p176 = por %p174, %p175
      %p177 = scmp.ne.s32.totalorder %s163, %s164
      %p178 = scmp.eq.s32.totalorder %s20, 1
      %p179 = por %p177, %p178
      %p181 = scmp.ne.s32.totalorder %s164, %s180
      %p182 = scmp.eq.s32.totalorder %s20, 0
      %p183 = por %p181, %p182
      %s184 = ssub.s32 %s14, %s21
      %p185 = scmp.eq.s32.totalorder %s184, 0
      %s187 = sadd.s32 %s186, 1
      %s188 = scalar_select %p185, %s186, %s187
      %p191 = pneg %p185
      %p192 = scmp.eq.s32.totalorder %s14, 1
      %p193 = por %p191, %p192
      %p194 = scmp.ne.s32.totalorder %s186, %s189
      %p195 = scmp.eq.s32.totalorder %s14, 0
      %p196 = por %p194, %p195
      %p197 = scmp.ne.s32.totalorder %s186, %s189
      %p198 = scmp.eq.s32.totalorder %s19, 1
      %p199 = por %p197, %p198
      %p200 = scmp.ne.s32.totalorder %s189, %s190
      %p201 = scmp.eq.s32.totalorder %s19, 0
      %p202 = por %p200, %p201
      %p203 = scmp.ne.s32.totalorder %s189, %s190
      %p204 = scmp.eq.s32.totalorder %s20, 1
      %p205 = por %p203, %p204
      %p207 = scmp.ne.s32.totalorder %s190, %s206
      %p208 = scmp.eq.s32.totalorder %s20, 0
      %p209 = por %p207, %p208
      %p210 = scmp.le.s32.totalorder 1, %s14
      %p211 = scmp.lt.s32.totalorder %s14, 3
      %p212 = pnand %p210, %p211
      %p213 = pneg %p212
      // Predicated region
      $region9: #{vit_snn_forward.13} parent=5 // pred_check
        _
      $region10: #{vit_snn_forward.13} parent=5 // pred_check_branch
        %215 = sbr.rel (%p212) target = $region12
      $region11: #{vit_snn_forward.13} parent=5 // pred_region
        %s216 = ssub.s32 %s14, 1
        // Predicated region
        $region13: #{vit_snn_forward.13} parent=11 // pred_check
          %p217 = pneg %p61
        $region14: #{vit_snn_forward.13} parent=11 // pred_check_branch
          %219 = sbr.rel (%p217) target = $region16
        $region15: #{vit_snn_forward.13} parent=11 // pred_region
          _
        $region16: #{vit_snn_forward.13} parent=11 // pred_fallthru
          _
        // Predicated region
        $region17: #{vit_snn_forward.13} parent=11 // pred_check
          %p220 = pneg %p82
        $region18: #{vit_snn_forward.13} parent=11 // pred_check_branch
          %222 = sbr.rel (%p220) target = $region20
        $region19: #{vit_snn_forward.13} parent=11 // pred_region
          _
        $region20: #{vit_snn_forward.13} parent=11 // pred_fallthru
          _
        // Predicated region
        $region21: #{vit_snn_forward.13} parent=11 // pred_check
          %p223 = pneg %p103
        $region22: #{vit_snn_forward.13} parent=11 // pred_check_branch
          %225 = sbr.rel (%p223) target = $region24
        $region23: #{vit_snn_forward.13} parent=11 // pred_region
          _
        $region24: #{vit_snn_forward.13} parent=11 // pred_fallthru
          _
        // Predicated region
        $region25: #{vit_snn_forward.13} parent=11 // pred_check
          %p226 = pneg %p124
        $region26: #{vit_snn_forward.13} parent=11 // pred_check_branch
          %228 = sbr.rel (%p226) target = $region28
        $region27: #{vit_snn_forward.13} parent=11 // pred_region
          _
        $region28: #{vit_snn_forward.13} parent=11 // pred_fallthru
          _
      $region12: #{vit_snn_forward.13} parent=5 // pred_fallthru
        _
      %p229 = scmp.lt.s32.totalorder %s14, 2
      // Predicated region
      $region29: #{vit_snn_forward.13} parent=5 // pred_check
        %p230 = pneg %p229
      $region30: #{vit_snn_forward.13} parent=5 // pred_check_branch
        %232 = sbr.rel (%p230) target = $region32
      $region31: #{vit_snn_forward.13} parent=5 // pred_region
        // Predicated region
        $region33: #{vit_snn_forward.13} parent=31 // pred_check
          %p233 = pneg %p34
        $region34: #{vit_snn_forward.13} parent=31 // pred_check_branch
          %235 = sbr.rel (%p233) target = $region36
        $region35: #{vit_snn_forward.13} parent=31 // pred_region
          %s236 = sand.u32 %s24, 1
          %s237 = sand.u32 %s24, 1
          %s238 = smul.addr %s237, 256
          %s239 = scalar_lea.vmem [#allocation5], %s238
          %s240 = smul.addr %s14, 8
          %s241 = scalar_lea.vmem %s0, %s240
          // Predicated region
          $region37: #{vit_snn_forward.13} parent=35 // pred_check
            _
          $region38: #{vit_snn_forward.13} parent=35 // pred_check_branch
            %243 = sbr.rel (0) target = $region40
          $region39: #{vit_snn_forward.13} parent=35 // pred_region
            // Predicated region
            $region41: #{vit_snn_forward.13} parent=39 // pred_check
              _
            $region42: #{vit_snn_forward.13} parent=39 // pred_check_branch
              %245 = sbr.rel (0) target = $region44
            $region43: #{vit_snn_forward.13} parent=39 // pred_region
              // Predicated region
              $region56: #{vit_snn_forward.13} parent=43 // pred_check
                _
              $region57: #{vit_snn_forward.13} parent=43 // pred_check_branch
                %323 = sbr.rel (0) target = $region59
              $region58: #{vit_snn_forward.13} parent=43 // pred_region
                loop: start=0, step=1, limit=1
                $region60: #{vit_snn_forward.13} parent=58 // loop_pre_header
                  _
                $region61: #{vit_snn_forward.13} parent=58 // loop_header
                  %s325 = sphi 0, %s329
                  %p326 = scmp.ge.s32.totalorder %s325, 1
                  %s330 = sphi %s241, %s241
                  %s331 = sphi %s239, %s239
                $region62: #{vit_snn_forward.13} parent=58 // loop_header_branch
                  %328 = sbr.rel (%p326) target = $region66
                $region63: #{vit_snn_forward.13} parent=58 // loop_body
                  %v332 = vld [vmem:[%s330] sm:$0xff]
                  %333 = vst [vmem:[%s331] sm:$0xff] %v332
                  %v334 = vld [vmem:[%s330 + $0x10] sm:$0xff]
                  %335 = vst [vmem:[%s331 + $0x8] sm:$0xff] %v334
                  %v336 = vld [vmem:[%s330 + $0x20] sm:$0xff]
                  %337 = vst [vmem:[%s331 + $0x10] sm:$0xff] %v336
                  %v338 = vld [vmem:[%s330 + $0x30] sm:$0xff]
                  %339 = vst [vmem:[%s331 + $0x18] sm:$0xff] %v338
                  %v340 = vld [vmem:[%s330 + $0x40] sm:$0xff]
                  %341 = vst [vmem:[%s331 + $0x20] sm:$0xff] %v340
                  %v342 = vld [vmem:[%s330 + $0x50] sm:$0xff]
                  %343 = vst [vmem:[%s331 + $0x28] sm:$0xff] %v342
                  %v344 = vld [vmem:[%s330 + $0x60] sm:$0xff]
                  %345 = vst [vmem:[%s331 + $0x30] sm:$0xff] %v344
                  %v346 = vld [vmem:[%s330 + $0x70] sm:$0xff]
                  %347 = vst [vmem:[%s331 + $0x38] sm:$0xff] %v346
                  %v348 = vld [vmem:[%s330 + $0x80] sm:$0xff]
                  %349 = vst [vmem:[%s331 + $0x40] sm:$0xff] %v348
                  %v350 = vld [vmem:[%s330 + $0x90] sm:$0xff]
                  %351 = vst [vmem:[%s331 + $0x48] sm:$0xff] %v350
                  %v352 = vld [vmem:[%s330 + $0xa0] sm:$0xff]
                  %353 = vst [vmem:[%s331 + $0x50] sm:$0xff] %v352
                  %v354 = vld [vmem:[%s330 + $0xb0] sm:$0xff]
                  %355 = vst [vmem:[%s331 + $0x58] sm:$0xff] %v354
                  %v356 = vld [vmem:[%s330 + $0xc0] sm:$0xff]
                  %357 = vst [vmem:[%s331 + $0x60] sm:$0xff] %v356
                  %v358 = vld [vmem:[%s330 + $0xd0] sm:$0xff]
                  %359 = vst [vmem:[%s331 + $0x68] sm:$0xff] %v358
                  %v360 = vld [vmem:[%s330 + $0xe0] sm:$0xff]
                  %361 = vst [vmem:[%s331 + $0x70] sm:$0xff] %v360
                  %v362 = vld [vmem:[%s330 + $0xf0] sm:$0xff]
                  %363 = vst [vmem:[%s331 + $0x78] sm:$0xff] %v362
                  %v364 = vld [vmem:[%s330 + $0x100] sm:$0xff]
                  %365 = vst [vmem:[%s331 + $0x80] sm:$0xff] %v364
                  %v366 = vld [vmem:[%s330 + $0x110] sm:$0xff]
                  %367 = vst [vmem:[%s331 + $0x88] sm:$0xff] %v366
                  %v368 = vld [vmem:[%s330 + $0x120] sm:$0xff]
                  %369 = vst [vmem:[%s331 + $0x90] sm:$0xff] %v368
                  %v370 = vld [vmem:[%s330 + $0x130] sm:$0xff]
                  %371 = vst [vmem:[%s331 + $0x98] sm:$0xff] %v370
                  %v372 = vld [vmem:[%s330 + $0x140] sm:$0xff]
                  %373 = vst [vmem:[%s331 + $0xa0] sm:$0xff] %v372
                  %v374 = vld [vmem:[%s330 + $0x150] sm:$0xff]
                  %375 = vst [vmem:[%s331 + $0xa8] sm:$0xff] %v374
                  %v376 = vld [vmem:[%s330 + $0x160] sm:$0xff]
                  %377 = vst [vmem:[%s331 + $0xb0] sm:$0xff] %v376
                  %v378 = vld [vmem:[%s330 + $0x170] sm:$0xff]
                  %379 = vst [vmem:[%s331 + $0xb8] sm:$0xff] %v378
                  %v380 = vld [vmem:[%s330 + $0x180] sm:$0xff]
                  %381 = vst [vmem:[%s331 + $0xc0] sm:$0xff] %v380
                  %v382 = vld [vmem:[%s330 + $0x190] sm:$0xff]
                  %383 = vst [vmem:[%s331 + $0xc8] sm:$0xff] %v382
                  %v384 = vld [vmem:[%s330 + $0x1a0] sm:$0xff]
                  %385 = vst [vmem:[%s331 + $0xd0] sm:$0xff] %v384
                  %v386 = vld [vmem:[%s330 + $0x1b0] sm:$0xff]
                  %387 = vst [vmem:[%s331 + $0xd8] sm:$0xff] %v386
                  %v388 = vld [vmem:[%s330 + $0x1c0] sm:$0xff]
                  %389 = vst [vmem:[%s331 + $0xe0] sm:$0xff] %v388
                  %v390 = vld [vmem:[%s330 + $0x1d0] sm:$0xff]
                  %391 = vst [vmem:[%s331 + $0xe8] sm:$0xff] %v390
                  %v392 = vld [vmem:[%s330 + $0x1e0] sm:$0xff]
                  %393 = vst [vmem:[%s331 + $0xf0] sm:$0xff] %v392
                  %v394 = vld [vmem:[%s330 + $0x1f0] sm:$0xff]
                  %395 = vst [vmem:[%s331 + $0xf8] sm:$0xff] %v394
                $region64: #{vit_snn_forward.13} parent=58 // loop_footer
                  %s329 = sadd.s32 1, %s325
                $region65: #{vit_snn_forward.13} parent=58 // loop_footer_branch
                  %324 = sbr.rel target = $region61
                $region66: #{vit_snn_forward.13} parent=58 // loop_exit
                  _
              $region59: #{vit_snn_forward.13} parent=43 // pred_fallthru
                _
              // Predicated region
              $region67: #{vit_snn_forward.13} parent=43 // pred_check
                _
              $region68: #{vit_snn_forward.13} parent=43 // pred_check_branch
                %397 = sbr.rel target = $region70
              $region69: #{vit_snn_forward.13} parent=43 // pred_region
                _
              $region70: #{vit_snn_forward.13} parent=43 // pred_fallthru
                _
            $region44: #{vit_snn_forward.13} parent=39 // pred_fallthru
              _
            // Predicated region
            $region45: #{vit_snn_forward.13} parent=39 // pred_check
              _
            $region46: #{vit_snn_forward.13} parent=39 // pred_check_branch
              %247 = sbr.rel target = $region48
            $region47: #{vit_snn_forward.13} parent=39 // pred_region
              %s249 = ssub.s32 256, 1
              loop: start=0, step=1, limit=1
              $region49: #{vit_snn_forward.13} parent=47 // loop_pre_header
                _
              $region50: #{vit_snn_forward.13} parent=47 // loop_header
                %s251 = sphi 0, %s255
                %p252 = scmp.ge.s32.totalorder %s251, 1
                %s256 = sphi %s241, %s241
                %s257 = sphi %s239, %s239
              $region51: #{vit_snn_forward.13} parent=47 // loop_header_branch
                %254 = sbr.rel (%p252) target = $region55
              $region52: #{vit_snn_forward.13} parent=47 // loop_body
                %v258 = vld [vmem:[%s256] sm:%s249]
                %259 = vst [vmem:[%s257] sm:%s249] %v258
                %v260 = vld [vmem:[%s256 + $0x10] sm:%s249]
                %261 = vst [vmem:[%s257 + $0x8] sm:%s249] %v260
                %v262 = vld [vmem:[%s256 + $0x20] sm:%s249]
                %263 = vst [vmem:[%s257 + $0x10] sm:%s249] %v262
                %v264 = vld [vmem:[%s256 + $0x30] sm:%s249]
                %265 = vst [vmem:[%s257 + $0x18] sm:%s249] %v264
                %v266 = vld [vmem:[%s256 + $0x40] sm:%s249]
                %267 = vst [vmem:[%s257 + $0x20] sm:%s249] %v266
                %v268 = vld [vmem:[%s256 + $0x50] sm:%s249]
                %269 = vst [vmem:[%s257 + $0x28] sm:%s249] %v268
                %v270 = vld [vmem:[%s256 + $0x60] sm:%s249]
                %271 = vst [vmem:[%s257 + $0x30] sm:%s249] %v270
                %v272 = vld [vmem:[%s256 + $0x70] sm:%s249]
                %273 = vst [vmem:[%s257 + $0x38] sm:%s249] %v272
                %v274 = vld [vmem:[%s256 + $0x80] sm:%s249]
                %275 = vst [vmem:[%s257 + $0x40] sm:%s249] %v274
                %v276 = vld [vmem:[%s256 + $0x90] sm:%s249]
                %277 = vst [vmem:[%s257 + $0x48] sm:%s249] %v276
                %v278 = vld [vmem:[%s256 + $0xa0] sm:%s249]
                %279 = vst [vmem:[%s257 + $0x50] sm:%s249] %v278
                %v280 = vld [vmem:[%s256 + $0xb0] sm:%s249]
                %281 = vst [vmem:[%s257 + $0x58] sm:%s249] %v280
                %v282 = vld [vmem:[%s256 + $0xc0] sm:%s249]
                %283 = vst [vmem:[%s257 + $0x60] sm:%s249] %v282
                %v284 = vld [vmem:[%s256 + $0xd0] sm:%s249]
                %285 = vst [vmem:[%s257 + $0x68] sm:%s249] %v284
                %v286 = vld [vmem:[%s256 + $0xe0] sm:%s249]
                %287 = vst [vmem:[%s257 + $0x70] sm:%s249] %v286
                %v288 = vld [vmem:[%s256 + $0xf0] sm:%s249]
                %289 = vst [vmem:[%s257 + $0x78] sm:%s249] %v288
                %v290 = vld [vmem:[%s256 + $0x100] sm:%s249]
                %291 = vst [vmem:[%s257 + $0x80] sm:%s249] %v290
                %v292 = vld [vmem:[%s256 + $0x110] sm:%s249]
                %293 = vst [vmem:[%s257 + $0x88] sm:%s249] %v292
                %v294 = vld [vmem:[%s256 + $0x120] sm:%s249]
                %295 = vst [vmem:[%s257 + $0x90] sm:%s249] %v294
                %v296 = vld [vmem:[%s256 + $0x130] sm:%s249]
                %297 = vst [vmem:[%s257 + $0x98] sm:%s249] %v296
                %v298 = vld [vmem:[%s256 + $0x140] sm:%s249]
                %299 = vst [vmem:[%s257 + $0xa0] sm:%s249] %v298
                %v300 = vld [vmem:[%s256 + $0x150] sm:%s249]
                %301 = vst [vmem:[%s257 + $0xa8] sm:%s249] %v300
                %v302 = vld [vmem:[%s256 + $0x160] sm:%s249]
                %303 = vst [vmem:[%s257 + $0xb0] sm:%s249] %v302
                %v304 = vld [vmem:[%s256 + $0x170] sm:%s249]
                %305 = vst [vmem:[%s257 + $0xb8] sm:%s249] %v304
                %v306 = vld [vmem:[%s256 + $0x180] sm:%s249]
                %307 = vst [vmem:[%s257 + $0xc0] sm:%s249] %v306
                %v308 = vld [vmem:[%s256 + $0x190] sm:%s249]
                %309 = vst [vmem:[%s257 + $0xc8] sm:%s249] %v308
                %v310 = vld [vmem:[%s256 + $0x1a0] sm:%s249]
                %311 = vst [vmem:[%s257 + $0xd0] sm:%s249] %v310
                %v312 = vld [vmem:[%s256 + $0x1b0] sm:%s249]
                %313 = vst [vmem:[%s257 + $0xd8] sm:%s249] %v312
                %v314 = vld [vmem:[%s256 + $0x1c0] sm:%s249]
                %315 = vst [vmem:[%s257 + $0xe0] sm:%s249] %v314
                %v316 = vld [vmem:[%s256 + $0x1d0] sm:%s249]
                %317 = vst [vmem:[%s257 + $0xe8] sm:%s249] %v316
                %v318 = vld [vmem:[%s256 + $0x1e0] sm:%s249]
                %319 = vst [vmem:[%s257 + $0xf0] sm:%s249] %v318
                %v320 = vld [vmem:[%s256 + $0x1f0] sm:%s249]
                %321 = vst [vmem:[%s257 + $0xf8] sm:%s249] %v320
              $region53: #{vit_snn_forward.13} parent=47 // loop_footer
                %s255 = sadd.s32 1, %s251
              $region54: #{vit_snn_forward.13} parent=47 // loop_footer_branch
                %250 = sbr.rel target = $region50
              $region55: #{vit_snn_forward.13} parent=47 // loop_exit
                _
            $region48: #{vit_snn_forward.13} parent=39 // pred_fallthru
              _
          $region40: #{vit_snn_forward.13} parent=35 // pred_fallthru
            _
          %398 = vnop
        $region36: #{vit_snn_forward.13} parent=31 // pred_fallthru
          _
      $region32: #{vit_snn_forward.13} parent=5 // pred_fallthru
        _
      %p399 = scmp.le.s32.totalorder 1, %s14
      %p400 = scmp.lt.s32.totalorder %s14, 3
      %p401 = pnand %p399, %p400
      %p402 = pneg %p401
      // Predicated region
      $region71: #{vit_snn_forward.13} parent=5 // pred_check
        _
      $region72: #{vit_snn_forward.13} parent=5 // pred_check_branch
        %404 = sbr.rel (%p401) target = $region74
      $region73: #{vit_snn_forward.13} parent=5 // pred_region
        %s405 = ssub.s32 %s14, 1
        %s406 = sand.u32 %s27, 1
        %s407 = sand.u32 %s27, 1
        %s408 = smul.addr %s407, 256
        %s409 = scalar_lea.vmem [#allocation5], %s408
        // Predicated region
        $region75: #{vit_snn_forward.13} parent=73 // pred_check
          %p410 = pneg %p40
        $region76: #{vit_snn_forward.13} parent=73 // pred_check_branch
          %412 = sbr.rel (%p410) target = $region78
        $region77: #{vit_snn_forward.13} parent=73 // pred_region
          _
        $region78: #{vit_snn_forward.13} parent=73 // pred_fallthru
          _
        %s413 = sand.u32 %s27, 1
        %s414 = sand.u32 %s27, 1
        %s415 = smul.addr %s414, 256
        %s416 = scalar_lea.vmem [#allocation5], %s415
        %p417 = pneg %p40
        %p418 = pneg %p37
        %p419 = pneg %p61
        %p420 = pneg %p58
        %p421 = pneg %p82
        %p422 = pneg %p79
        %p423 = pneg %p103
        %p424 = pneg %p100
        %p425 = pneg %p124
        %p426 = pneg %p121
        %p427 = pneg %p150
        %p428 = pneg %p147
        %s429 = sand.u32 %s137, 1
        %s430 = sand.u32 %s137, 1
        %s431 = smul.addr %s430, 64
        %s432 = scalar_lea.vmem [#allocation6], %s431
        %p433 = pneg %p176
        %p434 = pneg %p173
        %p435 = scmp.lt.s32.totalorder %s19, 1
        %s436 = scalar_select %p435, %s19, 1
        %s437 = smul.addr %s436, 4
        %s438 = smul.addr %s437, 8
        %s439 = scalar_lea.vmem %s6, %s438
        %p440 = pneg %p202
        %p441 = pneg %p199
        %p442 = scmp.lt.s32.totalorder %s19, 1
        %s443 = scalar_select %p442, %s19, 1
        %s444 = smul.addr %s443, 4
        %s445 = smul.addr %s444, 8
        %s446 = scalar_lea.vmem %s7, %s445
        %p447 = scmp.lt.s32.totalorder %s19, 1
        %s448 = scalar_select %p447, %s19, 1
        %s449 = smul.addr %s448, 4
        %s450 = smul.addr %s449, 8
        %s451 = scalar_lea.vmem %s6, %s450
        %p452 = scmp.lt.s32.totalorder %s19, 1
        %s453 = scalar_select %p452, %s19, 1
        %s454 = smul.addr %s453, 4
        %s455 = smul.addr %s454, 8
        %s456 = scalar_lea.vmem %s7, %s455
        %457 = vst [vmem:[#allocation2] sm:$0xff] 0.0
        %458 = vst [vmem:[#allocation2 + $0x8] sm:$0xff] 0.0
        %459 = vst [vmem:[#allocation2 + $0x10] sm:$0xff] 0.0
        %460 = vst [vmem:[#allocation2 + $0x18] sm:$0xff] 0.0
        %461 = vst [vmem:[#allocation2 + $0x20] sm:$0xff] 0.0
        %462 = vst [vmem:[#allocation2 + $0x28] sm:$0xff] 0.0
        %463 = vst [vmem:[#allocation2 + $0x30] sm:$0xff] 0.0
        %464 = vst [vmem:[#allocation2 + $0x38] sm:$0xff] 0.0
        %465 = vst [vmem:[#allocation2 + $0x40] sm:$0xff] 0.0
        %466 = vst [vmem:[#allocation2 + $0x48] sm:$0xff] 0.0
        %467 = vst [vmem:[#allocation2 + $0x50] sm:$0xff] 0.0
        %468 = vst [vmem:[#allocation2 + $0x58] sm:$0xff] 0.0
        %469 = vst [vmem:[#allocation2 + $0x60] sm:$0xff] 0.0
        %470 = vst [vmem:[#allocation2 + $0x68] sm:$0xff] 0.0
        %471 = vst [vmem:[#allocation2 + $0x70] sm:$0xff] 0.0
        %472 = vst [vmem:[#allocation2 + $0x78] sm:$0xff] 0.0
        %473 = vst [vmem:[#allocation3] sm:$0xff] 0.0
        %474 = vst [vmem:[#allocation3 + $0x8] sm:$0xff] 0.0
        %475 = vst [vmem:[#allocation3 + $0x10] sm:$0xff] 0.0
        %476 = vst [vmem:[#allocation3 + $0x18] sm:$0xff] 0.0
        %477 = vst [vmem:[#allocation4] sm:$0xff] 0.0
        %478 = vst [vmem:[#allocation4 + $0x8] sm:$0xff] 0.0
        %479 = vst [vmem:[#allocation4 + $0x10] sm:$0xff] 0.0
        %480 = vst [vmem:[#allocation4 + $0x18] sm:$0xff] 0.0
        %v481 = vld [vmem:[%s1] sm:$0xff]
        %v482 = vld [vmem:[%s1 + $0x8] sm:$0xff]
        %v483 = vld [vmem:[%s1 + $0x10] sm:$0xff]
        %v484 = vld [vmem:[%s1 + $0x18] sm:$0xff]
        %v485 = vld [vmem:[%s1 + $0x20] sm:$0xff]
        %v486 = vld [vmem:[%s1 + $0x28] sm:$0xff]
        %v487 = vld [vmem:[%s1 + $0x30] sm:$0xff]
        %v488 = vld [vmem:[%s1 + $0x38] sm:$0xff]
        %v489 = vld [vmem:[%s1 + $0x40] sm:$0xff]
        %v490 = vld [vmem:[%s1 + $0x48] sm:$0xff]
        %v491 = vld [vmem:[%s1 + $0x50] sm:$0xff]
        %v492 = vld [vmem:[%s1 + $0x58] sm:$0xff]
        %v493 = vld [vmem:[%s1 + $0x60] sm:$0xff]
        %v494 = vld [vmem:[%s1 + $0x68] sm:$0xff]
        %v495 = vld [vmem:[%s1 + $0x70] sm:$0xff]
        %v496 = vld [vmem:[%s1 + $0x78] sm:$0xff]
        %v497 = vld [vmem:[%s2] sm:$0xff]
        %v498 = vld [vmem:[%s2 + $0x8] sm:$0xff]
        %v499 = vld [vmem:[%s2 + $0x10] sm:$0xff]
        %v500 = vld [vmem:[%s2 + $0x18] sm:$0xff]
        %v501 = vld [vmem:[%s2 + $0x20] sm:$0xff]
        %v502 = vld [vmem:[%s2 + $0x28] sm:$0xff]
        %v503 = vld [vmem:[%s2 + $0x30] sm:$0xff]
        %v504 = vld [vmem:[%s2 + $0x38] sm:$0xff]
        %v505 = vld [vmem:[%s2 + $0x40] sm:$0xff]
        %v506 = vld [vmem:[%s2 + $0x48] sm:$0xff]
        %v507 = vld [vmem:[%s2 + $0x50] sm:$0xff]
        %v508 = vld [vmem:[%s2 + $0x58] sm:$0xff]
        %v509 = vld [vmem:[%s2 + $0x60] sm:$0xff]
        %v510 = vld [vmem:[%s2 + $0x68] sm:$0xff]
        %v511 = vld [vmem:[%s2 + $0x70] sm:$0xff]
        %v512 = vld [vmem:[%s2 + $0x78] sm:$0xff]
        %v513 = vld [vmem:[%s3] sm:$0xff]
        %v514 = vld [vmem:[%s3 + $0x8] sm:$0xff]
        %v515 = vld [vmem:[%s3 + $0x10] sm:$0xff]
        %v516 = vld [vmem:[%s3 + $0x18] sm:$0xff]
        %v517 = vld [vmem:[%s4] sm:$0xff]
        %v518 = vld [vmem:[%s4 + $0x8] sm:$0xff]
        %v519 = vld [vmem:[%s4 + $0x10] sm:$0xff]
        %v520 = vld [vmem:[%s4 + $0x18] sm:$0xff]
        %v521 = vld [vmem:[%s409] sm:$0xff]
        %v522 = vld [vmem:[%s409 + $0x8] sm:$0xff]
        %v523 = vld [vmem:[%s409 + $0x10] sm:$0xff]
        %v524 = vld [vmem:[%s409 + $0x18] sm:$0xff]
        %v525 = vld [vmem:[%s409 + $0x20] sm:$0xff]
        %v526 = vld [vmem:[%s409 + $0x28] sm:$0xff]
        %v527 = vld [vmem:[%s409 + $0x30] sm:$0xff]
        %v528 = vld [vmem:[%s409 + $0x38] sm:$0xff]
        %v529 = vld [vmem:[%s409 + $0x40] sm:$0xff]
        %v530 = vld [vmem:[%s409 + $0x48] sm:$0xff]
        %v531 = vld [vmem:[%s409 + $0x50] sm:$0xff]
        %v532 = vld [vmem:[%s409 + $0x58] sm:$0xff]
        %v533 = vld [vmem:[%s409 + $0x60] sm:$0xff]
        %v534 = vld [vmem:[%s409 + $0x68] sm:$0xff]
        %v535 = vld [vmem:[%s409 + $0x70] sm:$0xff]
        %v536 = vld [vmem:[%s409 + $0x78] sm:$0xff]
        %538 = vset.pattern.permute.xlu0 0
        %539 = vperm.xlu0 %538, %v481
        %v540 = vpop.permute.xlu0 %539
        %543 = vset.pattern.permute.xlu0 0
        %544 = vperm.xlu0 %543, %v482
        %v545 = vpop.permute.xlu0 %544
        %548 = vset.pattern.permute.xlu0 0
        %549 = vperm.xlu0 %548, %v483
        %v550 = vpop.permute.xlu0 %549
        %553 = vset.pattern.permute.xlu0 0
        %554 = vperm.xlu0 %553, %v484
        %v555 = vpop.permute.xlu0 %554
        %558 = vset.pattern.permute.xlu0 0
        %559 = vperm.xlu0 %558, %v485
        %v560 = vpop.permute.xlu0 %559
        %563 = vset.pattern.permute.xlu0 0
        %564 = vperm.xlu0 %563, %v486
        %v565 = vpop.permute.xlu0 %564
        %568 = vset.pattern.permute.xlu0 0
        %569 = vperm.xlu0 %568, %v487
        %v570 = vpop.permute.xlu0 %569
        %573 = vset.pattern.permute.xlu0 0
        %574 = vperm.xlu0 %573, %v488
        %v575 = vpop.permute.xlu0 %574
        %578 = vset.pattern.permute.xlu0 0
        %579 = vperm.xlu0 %578, %v489
        %v580 = vpop.permute.xlu0 %579
        %583 = vset.pattern.permute.xlu0 0
        %584 = vperm.xlu0 %583, %v490
        %v585 = vpop.permute.xlu0 %584
        %588 = vset.pattern.permute.xlu0 0
        %589 = vperm.xlu0 %588, %v491
        %v590 = vpop.permute.xlu0 %589
        %593 = vset.pattern.permute.xlu0 0
        %594 = vperm.xlu0 %593, %v492
        %v595 = vpop.permute.xlu0 %594
        %598 = vset.pattern.permute.xlu0 0
        %599 = vperm.xlu0 %598, %v493
        %v600 = vpop.permute.xlu0 %599
        %603 = vset.pattern.permute.xlu0 0
        %604 = vperm.xlu0 %603, %v494
        %v605 = vpop.permute.xlu0 %604
        %608 = vset.pattern.permute.xlu0 0
        %609 = vperm.xlu0 %608, %v495
        %v610 = vpop.permute.xlu0 %609
        %613 = vset.pattern.permute.xlu0 0
        %614 = vperm.xlu0 %613, %v496
        %v615 = vpop.permute.xlu0 %614
        %v617 = vmul.f32 %v521, %v540
        %v618 = vmul.f32 %v522, %v545
        %v619 = vmul.f32 %v523, %v550
        %v620 = vmul.f32 %v524, %v555
        %v621 = vmul.f32 %v525, %v560
        %v622 = vmul.f32 %v526, %v565
        %v623 = vmul.f32 %v527, %v570
        %v624 = vmul.f32 %v528, %v575
        %v625 = vmul.f32 %v529, %v580
        %v626 = vmul.f32 %v530, %v585
        %v627 = vmul.f32 %v531, %v590
        %v628 = vmul.f32 %v532, %v595
        %v629 = vmul.f32 %v533, %v600
        %v630 = vmul.f32 %v534, %v605
        %v631 = vmul.f32 %v535, %v610
        %v632 = vmul.f32 %v536, %v615
        %634 = vset.pattern.permute.xlu0 0
        %635 = vperm.xlu0 %634, %v497
        %v636 = vpop.permute.xlu0 %635
        %639 = vset.pattern.permute.xlu0 0
        %640 = vperm.xlu0 %639, %v498
        %v641 = vpop.permute.xlu0 %640
        %644 = vset.pattern.permute.xlu0 0
        %645 = vperm.xlu0 %644, %v499
        %v646 = vpop.permute.xlu0 %645
        %649 = vset.pattern.permute.xlu0 0
        %650 = vperm.xlu0 %649, %v500
        %v651 = vpop.permute.xlu0 %650
        %654 = vset.pattern.permute.xlu0 0
        %655 = vperm.xlu0 %654, %v501
        %v656 = vpop.permute.xlu0 %655
        %659 = vset.pattern.permute.xlu0 0
        %660 = vperm.xlu0 %659, %v502
        %v661 = vpop.permute.xlu0 %660
        %664 = vset.pattern.permute.xlu0 0
        %665 = vperm.xlu0 %664, %v503
        %v666 = vpop.permute.xlu0 %665
        %669 = vset.pattern.permute.xlu0 0
        %670 = vperm.xlu0 %669, %v504
        %v671 = vpop.permute.xlu0 %670
        %674 = vset.pattern.permute.xlu0 0
        %675 = vperm.xlu0 %674, %v505
        %v676 = vpop.permute.xlu0 %675
        %679 = vset.pattern.permute.xlu0 0
        %680 = vperm.xlu0 %679, %v506
        %v681 = vpop.permute.xlu0 %680
        %684 = vset.pattern.permute.xlu0 0
        %685 = vperm.xlu0 %684, %v507
        %v686 = vpop.permute.xlu0 %685
        %689 = vset.pattern.permute.xlu0 0
        %690 = vperm.xlu0 %689, %v508
        %v691 = vpop.permute.xlu0 %690
        %694 = vset.pattern.permute.xlu0 0
        %695 = vperm.xlu0 %694, %v509
        %v696 = vpop.permute.xlu0 %695
        %699 = vset.pattern.permute.xlu0 0
        %700 = vperm.xlu0 %699, %v510
        %v701 = vpop.permute.xlu0 %700
        %704 = vset.pattern.permute.xlu0 0
        %705 = vperm.xlu0 %704, %v511
        %v706 = vpop.permute.xlu0 %705
        %709 = vset.pattern.permute.xlu0 0
        %710 = vperm.xlu0 %709, %v512
        %v711 = vpop.permute.xlu0 %710
        %v713 = vadd.f32 %v617, %v636
        %v714 = vadd.f32 %v618, %v641
        %v715 = vadd.f32 %v619, %v646
        %v716 = vadd.f32 %v620, %v651
        %v717 = vadd.f32 %v621, %v656
        %v718 = vadd.f32 %v622, %v661
        %v719 = vadd.f32 %v623, %v666
        %v720 = vadd.f32 %v624, %v671
        %v721 = vadd.f32 %v625, %v676
        %v722 = vadd.f32 %v626, %v681
        %v723 = vadd.f32 %v627, %v686
        %v724 = vadd.f32 %v628, %v691
        %v725 = vadd.f32 %v629, %v696
        %v726 = vadd.f32 %v630, %v701
        %v727 = vadd.f32 %v631, %v706
        %v728 = vadd.f32 %v632, %v711
        %v729 = vld [vmem:[#allocation2] sm:$0xff]
        %v730 = vld [vmem:[#allocation2 + $0x8] sm:$0xff]
        %v731 = vld [vmem:[#allocation2 + $0x10] sm:$0xff]
        %v732 = vld [vmem:[#allocation2 + $0x18] sm:$0xff]
        %v733 = vld [vmem:[#allocation2 + $0x20] sm:$0xff]
        %v734 = vld [vmem:[#allocation2 + $0x28] sm:$0xff]
        %v735 = vld [vmem:[#allocation2 + $0x30] sm:$0xff]
        %v736 = vld [vmem:[#allocation2 + $0x38] sm:$0xff]
        %v737 = vld [vmem:[#allocation2 + $0x40] sm:$0xff]
        %v738 = vld [vmem:[#allocation2 + $0x48] sm:$0xff]
        %v739 = vld [vmem:[#allocation2 + $0x50] sm:$0xff]
        %v740 = vld [vmem:[#allocation2 + $0x58] sm:$0xff]
        %v741 = vld [vmem:[#allocation2 + $0x60] sm:$0xff]
        %v742 = vld [vmem:[#allocation2 + $0x68] sm:$0xff]
        %v743 = vld [vmem:[#allocation2 + $0x70] sm:$0xff]
        %v744 = vld [vmem:[#allocation2 + $0x78] sm:$0xff]
        %v745 = vsub.f32 %v713, %v729
        %v746 = vsub.f32 %v714, %v730
        %v747 = vsub.f32 %v715, %v731
        %v748 = vsub.f32 %v716, %v732
        %v749 = vsub.f32 %v717, %v733
        %v750 = vsub.f32 %v718, %v734
        %v751 = vsub.f32 %v719, %v735
        %v752 = vsub.f32 %v720, %v736
        %v753 = vsub.f32 %v721, %v737
        %v754 = vsub.f32 %v722, %v738
        %v755 = vsub.f32 %v723, %v739
        %v756 = vsub.f32 %v724, %v740
        %v757 = vsub.f32 %v725, %v741
        %v758 = vsub.f32 %v726, %v742
        %v759 = vsub.f32 %v727, %v743
        %v760 = vsub.f32 %v728, %v744
        %v761 = vmul.f32 %v745, 0.6666667
        %v762 = vmul.f32 %v746, 0.6666667
        %v763 = vmul.f32 %v747, 0.6666667
        %v764 = vmul.f32 %v748, 0.6666667
        %v765 = vmul.f32 %v749, 0.6666667
        %v766 = vmul.f32 %v750, 0.6666667
        %v767 = vmul.f32 %v751, 0.6666667
        %v768 = vmul.f32 %v752, 0.6666667
        %v769 = vmul.f32 %v753, 0.6666667
        %v770 = vmul.f32 %v754, 0.6666667
        %v771 = vmul.f32 %v755, 0.6666667
        %v772 = vmul.f32 %v756, 0.6666667
        %v773 = vmul.f32 %v757, 0.6666667
        %v774 = vmul.f32 %v758, 0.6666667
        %v775 = vmul.f32 %v759, 0.6666667
        %v776 = vmul.f32 %v760, 0.6666667
        %v777 = vadd.f32 %v729, %v761
        %v778 = vadd.f32 %v730, %v762
        %v779 = vadd.f32 %v731, %v763
        %v780 = vadd.f32 %v732, %v764
        %v781 = vadd.f32 %v733, %v765
        %v782 = vadd.f32 %v734, %v766
        %v783 = vadd.f32 %v735, %v767
        %v784 = vadd.f32 %v736, %v768
        %v785 = vadd.f32 %v737, %v769
        %v786 = vadd.f32 %v738, %v770
        %v787 = vadd.f32 %v739, %v771
        %v788 = vadd.f32 %v740, %v772
        %v789 = vadd.f32 %v741, %v773
        %v790 = vadd.f32 %v742, %v774
        %v791 = vadd.f32 %v743, %v775
        %v792 = vadd.f32 %v744, %v776
        %vm793 = vcmp.ge.f32.partialorder %v777, 1.0
        %vm794 = vcmp.ge.f32.partialorder %v778, 1.0
        %vm795 = vcmp.ge.f32.partialorder %v779, 1.0
        %vm796 = vcmp.ge.f32.partialorder %v780, 1.0
        %vm797 = vcmp.ge.f32.partialorder %v781, 1.0
        %vm798 = vcmp.ge.f32.partialorder %v782, 1.0
        %vm799 = vcmp.ge.f32.partialorder %v783, 1.0
        %vm800 = vcmp.ge.f32.partialorder %v784, 1.0
        %vm801 = vcmp.ge.f32.partialorder %v785, 1.0
        %vm802 = vcmp.ge.f32.partialorder %v786, 1.0
        %vm803 = vcmp.ge.f32.partialorder %v787, 1.0
        %vm804 = vcmp.ge.f32.partialorder %v788, 1.0
        %vm805 = vcmp.ge.f32.partialorder %v789, 1.0
        %vm806 = vcmp.ge.f32.partialorder %v790, 1.0
        %vm807 = vcmp.ge.f32.partialorder %v791, 1.0
        %vm808 = vcmp.ge.f32.partialorder %v792, 1.0
        %v809 = vsel %vm793, 1, 0
        %v810 = vsel %vm794, 1, 0
        %v811 = vsel %vm795, 1, 0
        %v812 = vsel %vm796, 1, 0
        %v813 = vsel %vm797, 1, 0
        %v814 = vsel %vm798, 1, 0
        %v815 = vsel %vm799, 1, 0
        %v816 = vsel %vm800, 1, 0
        %v817 = vsel %vm801, 1, 0
        %v818 = vsel %vm802, 1, 0
        %v819 = vsel %vm803, 1, 0
        %v820 = vsel %vm804, 1, 0
        %v821 = vsel %vm805, 1, 0
        %v822 = vsel %vm806, 1, 0
        %v823 = vsel %vm807, 1, 0
        %v824 = vsel %vm808, 1, 0
        %v825 = vcvt.s32.f32 %v809
        %v826 = vcvt.s32.f32 %v810
        %v827 = vcvt.s32.f32 %v811
        %v828 = vcvt.s32.f32 %v812
        %v829 = vcvt.s32.f32 %v813
        %v830 = vcvt.s32.f32 %v814
        %v831 = vcvt.s32.f32 %v815
        %v832 = vcvt.s32.f32 %v816
        %v833 = vcvt.s32.f32 %v817
        %v834 = vcvt.s32.f32 %v818
        %v835 = vcvt.s32.f32 %v819
        %v836 = vcvt.s32.f32 %v820
        %v837 = vcvt.s32.f32 %v821
        %v838 = vcvt.s32.f32 %v822
        %v839 = vcvt.s32.f32 %v823
        %v840 = vcvt.s32.f32 %v824
        %v841 = vsub.f32 1.0, %v825
        %v842 = vsub.f32 1.0, %v826
        %v843 = vsub.f32 1.0, %v827
        %v844 = vsub.f32 1.0, %v828
        %v845 = vsub.f32 1.0, %v829
        %v846 = vsub.f32 1.0, %v830
        %v847 = vsub.f32 1.0, %v831
        %v848 = vsub.f32 1.0, %v832
        %v849 = vsub.f32 1.0, %v833
        %v850 = vsub.f32 1.0, %v834
        %v851 = vsub.f32 1.0, %v835
        %v852 = vsub.f32 1.0, %v836
        %v853 = vsub.f32 1.0, %v837
        %v854 = vsub.f32 1.0, %v838
        %v855 = vsub.f32 1.0, %v839
        %v856 = vsub.f32 1.0, %v840
        %v857 = vmul.f32 %v777, %v841
        %v858 = vmul.f32 %v778, %v842
        %v859 = vmul.f32 %v779, %v843
        %v860 = vmul.f32 %v780, %v844
        %v861 = vmul.f32 %v781, %v845
        %v862 = vmul.f32 %v782, %v846
        %v863 = vmul.f32 %v783, %v847
        %v864 = vmul.f32 %v784, %v848
        %v865 = vmul.f32 %v785, %v849
        %v866 = vmul.f32 %v786, %v850
        %v867 = vmul.f32 %v787, %v851
        %v868 = vmul.f32 %v788, %v852
        %v869 = vmul.f32 %v789, %v853
        %v870 = vmul.f32 %v790, %v854
        %v871 = vmul.f32 %v791, %v855
        %v872 = vmul.f32 %v792, %v856
        %873 = vst [vmem:[#allocation2] sm:$0xff] %v857
        %874 = vst [vmem:[#allocation2 + $0x8] sm:$0xff] %v858
        %875 = vst [vmem:[#allocation2 + $0x10] sm:$0xff] %v859
        %876 = vst [vmem:[#allocation2 + $0x18] sm:$0xff] %v860
        %877 = vst [vmem:[#allocation2 + $0x20] sm:$0xff] %v861
        %878 = vst [vmem:[#allocation2 + $0x28] sm:$0xff] %v862
        %879 = vst [vmem:[#allocation2 + $0x30] sm:$0xff] %v863
        %880 = vst [vmem:[#allocation2 + $0x38] sm:$0xff] %v864
        %881 = vst [vmem:[#allocation2 + $0x40] sm:$0xff] %v865
        %882 = vst [vmem:[#allocation2 + $0x48] sm:$0xff] %v866
        %883 = vst [vmem:[#allocation2 + $0x50] sm:$0xff] %v867
        %884 = vst [vmem:[#allocation2 + $0x58] sm:$0xff] %v868
        %885 = vst [vmem:[#allocation2 + $0x60] sm:$0xff] %v869
        %886 = vst [vmem:[#allocation2 + $0x68] sm:$0xff] %v870
        %887 = vst [vmem:[#allocation2 + $0x70] sm:$0xff] %v871
        %888 = vst [vmem:[#allocation2 + $0x78] sm:$0xff] %v872
        %890 = vset.pattern.permute.xlu0 0
        %891 = vperm.xlu0 %890, %v517
        %v892 = vpop.permute.xlu0 %891
        %895 = vset.pattern.permute.xlu0 0
        %896 = vperm.xlu0 %895, %v518
        %v897 = vpop.permute.xlu0 %896
        %900 = vset.pattern.permute.xlu0 0
        %901 = vperm.xlu0 %900, %v519
        %v902 = vpop.permute.xlu0 %901
        %905 = vset.pattern.permute.xlu0 0
        %906 = vperm.xlu0 %905, %v520
        %v907 = vpop.permute.xlu0 %906
        %909 = vmatpush.msra.mxu0 %v840
        %910 = vmatpush.msra.mxu0 %v839
        %911 = vmatpush.msra.mxu0 %v838
        %912 = vmatpush.msra.mxu0 %v837
        %913 = vmatpush.msra.mxu0 %v836
        %914 = vmatpush.msra.mxu0 %v835
        %915 = vmatpush.msra.mxu0 %v834
        %916 = vmatpush.msra.mxu0 %v833
        %917 = vmatpush.msra.mxu0 %v832
        %918 = vmatpush.msra.mxu0 %v831
        %919 = vmatpush.msra.mxu0 %v830
        %920 = vmatpush.msra.mxu0 %v829
        %921 = vmatpush.msra.mxu0 %v828
        %922 = vmatpush.msra.mxu0 %v827
        %923 = vmatpush.msra.mxu0 %v826
        %924 = vmatpush.msra.mxu0 %v825
        %925 = vmatmul.f32.gmra.mxu0 %v513
        %v926 = vpop.f32.mrf.mxu0
        %v927 = vadd.f32 %v892, %v926
        %928 = vmatmul.f32.gmra.mxu0 %v514
        %v929 = vpop.f32.mrf.mxu0
        %v930 = vadd.f32 %v897, %v929
        %931 = vmatmul.f32.gmra.mxu0 %v515
        %v932 = vpop.f32.mrf.mxu0
        %v933 = vadd.f32 %v902, %v932
        %934 = vmatmul.f32.gmra.mxu0 %v516
        %v935 = vpop.f32.mrf.mxu0
        %v936 = vadd.f32 %v907, %v935
        %937 = vdwg.mxu0
        %938 = vst [vmem:[%s432] sm:$0xff] %v927
        %939 = vst [vmem:[%s432 + $0x8] sm:$0xff] %v930
        %940 = vst [vmem:[%s432 + $0x10] sm:$0xff] %v933
        %941 = vst [vmem:[%s432 + $0x18] sm:$0xff] %v936
        %v942 = vld [vmem:[#allocation3] sm:$0xff]
        %v943 = vld [vmem:[#allocation3 + $0x8] sm:$0xff]
        %v944 = vld [vmem:[#allocation3 + $0x10] sm:$0xff]
        %v945 = vld [vmem:[#allocation3 + $0x18] sm:$0xff]
        %v946 = vadd.f32 %v942, %v927
        %v947 = vadd.f32 %v943, %v930
        %v948 = vadd.f32 %v944, %v933
        %v949 = vadd.f32 %v945, %v936
        %950 = vst [vmem:[#allocation3] sm:$0xff] %v946
        %951 = vst [vmem:[#allocation3 + $0x8] sm:$0xff] %v947
        %952 = vst [vmem:[#allocation3 + $0x10] sm:$0xff] %v948
        %953 = vst [vmem:[#allocation3 + $0x18] sm:$0xff] %v949
        %v954 = vld [vmem:[#allocation4] sm:$0xff]
        %v955 = vld [vmem:[#allocation4 + $0x8] sm:$0xff]
        %v956 = vld [vmem:[#allocation4 + $0x10] sm:$0xff]
        %v957 = vld [vmem:[#allocation4 + $0x18] sm:$0xff]
        %v958 = vmul.f32 %v927, %v927
        %v959 = vmul.f32 %v930, %v930
        %v960 = vmul.f32 %v933, %v933
        %v961 = vmul.f32 %v936, %v936
        %v962 = vadd.f32 %v954, %v958
        %v963 = vadd.f32 %v955, %v959
        %v964 = vadd.f32 %v956, %v960
        %v965 = vadd.f32 %v957, %v961
        %966 = vst [vmem:[#allocation4] sm:$0xff] %v962
        %967 = vst [vmem:[#allocation4 + $0x8] sm:$0xff] %v963
        %968 = vst [vmem:[#allocation4 + $0x10] sm:$0xff] %v964
        %969 = vst [vmem:[#allocation4 + $0x18] sm:$0xff] %v965
        %s970 = scalar_lea.vmem %s409, 128 [#allocation5]
        %v971 = vld [vmem:[%s970] sm:$0xff]
        %v972 = vld [vmem:[%s970 + $0x8] sm:$0xff]
        %v973 = vld [vmem:[%s970 + $0x10] sm:$0xff]
        %v974 = vld [vmem:[%s970 + $0x18] sm:$0xff]
        %v975 = vld [vmem:[%s970 + $0x20] sm:$0xff]
        %v976 = vld [vmem:[%s970 + $0x28] sm:$0xff]
        %v977 = vld [vmem:[%s970 + $0x30] sm:$0xff]
        %v978 = vld [vmem:[%s970 + $0x38] sm:$0xff]
        %v979 = vld [vmem:[%s970 + $0x40] sm:$0xff]
        %v980 = vld [vmem:[%s970 + $0x48] sm:$0xff]
        %v981 = vld [vmem:[%s970 + $0x50] sm:$0xff]
        %v982 = vld [vmem:[%s970 + $0x58] sm:$0xff]
        %v983 = vld [vmem:[%s970 + $0x60] sm:$0xff]
        %v984 = vld [vmem:[%s970 + $0x68] sm:$0xff]
        %v985 = vld [vmem:[%s970 + $0x70] sm:$0xff]
        %v986 = vld [vmem:[%s970 + $0x78] sm:$0xff]
        %v987 = vmul.f32 %v971, %v540
        %v988 = vmul.f32 %v972, %v545
        %v989 = vmul.f32 %v973, %v550
        %v990 = vmul.f32 %v974, %v555
        %v991 = vmul.f32 %v975, %v560
        %v992 = vmul.f32 %v976, %v565
        %v993 = vmul.f32 %v977, %v570
        %v994 = vmul.f32 %v978, %v575
        %v995 = vmul.f32 %v979, %v580
        %v996 = vmul.f32 %v980, %v585
        %v997 = vmul.f32 %v981, %v590
        %v998 = vmul.f32 %v982, %v595
        %v999 = vmul.f32 %v983, %v600
        %v1000 = vmul.f32 %v984, %v605
        %v1001 = vmul.f32 %v985, %v610
        %v1002 = vmul.f32 %v986, %v615
        %v1003 = vadd.f32 %v987, %v636
        %v1004 = vadd.f32 %v988, %v641
        %v1005 = vadd.f32 %v989, %v646
        %v1006 = vadd.f32 %v990, %v651
        %v1007 = vadd.f32 %v991, %v656
        %v1008 = vadd.f32 %v992, %v661
        %v1009 = vadd.f32 %v993, %v666
        %v1010 = vadd.f32 %v994, %v671
        %v1011 = vadd.f32 %v995, %v676
        %v1012 = vadd.f32 %v996, %v681
        %v1013 = vadd.f32 %v997, %v686
        %v1014 = vadd.f32 %v998, %v691
        %v1015 = vadd.f32 %v999, %v696
        %v1016 = vadd.f32 %v1000, %v701
        %v1017 = vadd.f32 %v1001, %v706
        %v1018 = vadd.f32 %v1002, %v711
        %v1019 = vld [vmem:[#allocation2] sm:$0xff]
        %v1020 = vld [vmem:[#allocation2 + $0x8] sm:$0xff]
        %v1021 = vld [vmem:[#allocation2 + $0x10] sm:$0xff]
        %v1022 = vld [vmem:[#allocation2 + $0x18] sm:$0xff]
        %v1023 = vld [vmem:[#allocation2 + $0x20] sm:$0xff]
        %v1024 = vld [vmem:[#allocation2 + $0x28] sm:$0xff]
        %v1025 = vld [vmem:[#allocation2 + $0x30] sm:$0xff]
        %v1026 = vld [vmem:[#allocation2 + $0x38] sm:$0xff]
        %v1027 = vld [vmem:[#allocation2 + $0x40] sm:$0xff]
        %v1028 = vld [vmem:[#allocation2 + $0x48] sm:$0xff]
        %v1029 = vld [vmem:[#allocation2 + $0x50] sm:$0xff]
        %v1030 = vld [vmem:[#allocation2 + $0x58] sm:$0xff]
        %v1031 = vld [vmem:[#allocation2 + $0x60] sm:$0xff]
        %v1032 = vld [vmem:[#allocation2 + $0x68] sm:$0xff]
        %v1033 = vld [vmem:[#allocation2 + $0x70] sm:$0xff]
        %v1034 = vld [vmem:[#allocation2 + $0x78] sm:$0xff]
        %v1035 = vsub.f32 %v1003, %v1019
        %v1036 = vsub.f32 %v1004, %v1020
        %v1037 = vsub.f32 %v1005, %v1021
        %v1038 = vsub.f32 %v1006, %v1022
        %v1039 = vsub.f32 %v1007, %v1023
        %v1040 = vsub.f32 %v1008, %v1024
        %v1041 = vsub.f32 %v1009, %v1025
        %v1042 = vsub.f32 %v1010, %v1026
        %v1043 = vsub.f32 %v1011, %v1027
        %v1044 = vsub.f32 %v1012, %v1028
        %v1045 = vsub.f32 %v1013, %v1029
        %v1046 = vsub.f32 %v1014, %v1030
        %v1047 = vsub.f32 %v1015, %v1031
        %v1048 = vsub.f32 %v1016, %v1032
        %v1049 = vsub.f32 %v1017, %v1033
        %v1050 = vsub.f32 %v1018, %v1034
        %v1051 = vmul.f32 %v1035, 0.6666667
        %v1052 = vmul.f32 %v1036, 0.6666667
        %v1053 = vmul.f32 %v1037, 0.6666667
        %v1054 = vmul.f32 %v1038, 0.6666667
        %v1055 = vmul.f32 %v1039, 0.6666667
        %v1056 = vmul.f32 %v1040, 0.6666667
        %v1057 = vmul.f32 %v1041, 0.6666667
        %v1058 = vmul.f32 %v1042, 0.6666667
        %v1059 = vmul.f32 %v1043, 0.6666667
        %v1060 = vmul.f32 %v1044, 0.6666667
        %v1061 = vmul.f32 %v1045, 0.6666667
        %v1062 = vmul.f32 %v1046, 0.6666667
        %v1063 = vmul.f32 %v1047, 0.6666667
        %v1064 = vmul.f32 %v1048, 0.6666667
        %v1065 = vmul.f32 %v1049, 0.6666667
        %v1066 = vmul.f32 %v1050, 0.6666667
        %v1067 = vadd.f32 %v1019, %v1051
        %v1068 = vadd.f32 %v1020, %v1052
        %v1069 = vadd.f32 %v1021, %v1053
        %v1070 = vadd.f32 %v1022, %v1054
        %v1071 = vadd.f32 %v1023, %v1055
        %v1072 = vadd.f32 %v1024, %v1056
        %v1073 = vadd.f32 %v1025, %v1057
        %v1074 = vadd.f32 %v1026, %v1058
        %v1075 = vadd.f32 %v1027, %v1059
        %v1076 = vadd.f32 %v1028, %v1060
        %v1077 = vadd.f32 %v1029, %v1061
        %v1078 = vadd.f32 %v1030, %v1062
        %v1079 = vadd.f32 %v1031, %v1063
        %v1080 = vadd.f32 %v1032, %v1064
        %v1081 = vadd.f32 %v1033, %v1065
        %v1082 = vadd.f32 %v1034, %v1066
        %vm1083 = vcmp.ge.f32.partialorder %v1067, 1.0
        %vm1084 = vcmp.ge.f32.partialorder %v1068, 1.0
        %vm1085 = vcmp.ge.f32.partialorder %v1069, 1.0
        %vm1086 = vcmp.ge.f32.partialorder %v1070, 1.0
        %vm1087 = vcmp.ge.f32.partialorder %v1071, 1.0
        %vm1088 = vcmp.ge.f32.partialorder %v1072, 1.0
        %vm1089 = vcmp.ge.f32.partialorder %v1073, 1.0
        %vm1090 = vcmp.ge.f32.partialorder %v1074, 1.0
        %vm1091 = vcmp.ge.f32.partialorder %v1075, 1.0
        %vm1092 = vcmp.ge.f32.partialorder %v1076, 1.0
        %vm1093 = vcmp.ge.f32.partialorder %v1077, 1.0
        %vm1094 = vcmp.ge.f32.partialorder %v1078, 1.0
        %vm1095 = vcmp.ge.f32.partialorder %v1079, 1.0
        %vm1096 = vcmp.ge.f32.partialorder %v1080, 1.0
        %vm1097 = vcmp.ge.f32.partialorder %v1081, 1.0
        %vm1098 = vcmp.ge.f32.partialorder %v1082, 1.0
        %v1099 = vsel %vm1083, 1, 0
        %v1100 = vsel %vm1084, 1, 0
        %v1101 = vsel %vm1085, 1, 0
        %v1102 = vsel %vm1086, 1, 0
        %v1103 = vsel %vm1087, 1, 0
        %v1104 = vsel %vm1088, 1, 0
        %v1105 = vsel %vm1089, 1, 0
        %v1106 = vsel %vm1090, 1, 0
        %v1107 = vsel %vm1091, 1, 0
        %v1108 = vsel %vm1092, 1, 0
        %v1109 = vsel %vm1093, 1, 0
        %v1110 = vsel %vm1094, 1, 0
        %v1111 = vsel %vm1095, 1, 0
        %v1112 = vsel %vm1096, 1, 0
        %v1113 = vsel %vm1097, 1, 0
        %v1114 = vsel %vm1098, 1, 0
        %v1115 = vcvt.s32.f32 %v1099
        %v1116 = vcvt.s32.f32 %v1100
        %v1117 = vcvt.s32.f32 %v1101
        %v1118 = vcvt.s32.f32 %v1102
        %v1119 = vcvt.s32.f32 %v1103
        %v1120 = vcvt.s32.f32 %v1104
        %v1121 = vcvt.s32.f32 %v1105
        %v1122 = vcvt.s32.f32 %v1106
        %v1123 = vcvt.s32.f32 %v1107
        %v1124 = vcvt.s32.f32 %v1108
        %v1125 = vcvt.s32.f32 %v1109
        %v1126 = vcvt.s32.f32 %v1110
        %v1127 = vcvt.s32.f32 %v1111
        %v1128 = vcvt.s32.f32 %v1112
        %v1129 = vcvt.s32.f32 %v1113
        %v1130 = vcvt.s32.f32 %v1114
        %v1131 = vsub.f32 1.0, %v1115
        %v1132 = vsub.f32 1.0, %v1116
        %v1133 = vsub.f32 1.0, %v1117
        %v1134 = vsub.f32 1.0, %v1118
        %v1135 = vsub.f32 1.0, %v1119
        %v1136 = vsub.f32 1.0, %v1120
        %v1137 = vsub.f32 1.0, %v1121
        %v1138 = vsub.f32 1.0, %v1122
        %v1139 = vsub.f32 1.0, %v1123
        %v1140 = vsub.f32 1.0, %v1124
        %v1141 = vsub.f32 1.0, %v1125
        %v1142 = vsub.f32 1.0, %v1126
        %v1143 = vsub.f32 1.0, %v1127
        %v1144 = vsub.f32 1.0, %v1128
        %v1145 = vsub.f32 1.0, %v1129
        %v1146 = vsub.f32 1.0, %v1130
        %v1147 = vmul.f32 %v1067, %v1131
        %v1148 = vmul.f32 %v1068, %v1132
        %v1149 = vmul.f32 %v1069, %v1133
        %v1150 = vmul.f32 %v1070, %v1134
        %v1151 = vmul.f32 %v1071, %v1135
        %v1152 = vmul.f32 %v1072, %v1136
        %v1153 = vmul.f32 %v1073, %v1137
        %v1154 = vmul.f32 %v1074, %v1138
        %v1155 = vmul.f32 %v1075, %v1139
        %v1156 = vmul.f32 %v1076, %v1140
        %v1157 = vmul.f32 %v1077, %v1141
        %v1158 = vmul.f32 %v1078, %v1142
        %v1159 = vmul.f32 %v1079, %v1143
        %v1160 = vmul.f32 %v1080, %v1144
        %v1161 = vmul.f32 %v1081, %v1145
        %v1162 = vmul.f32 %v1082, %v1146
        %1163 = vst [vmem:[#allocation2] sm:$0xff] %v1147
        %1164 = vst [vmem:[#allocation2 + $0x8] sm:$0xff] %v1148
        %1165 = vst [vmem:[#allocation2 + $0x10] sm:$0xff] %v1149
        %1166 = vst [vmem:[#allocation2 + $0x18] sm:$0xff] %v1150
        %1167 = vst [vmem:[#allocation2 + $0x20] sm:$0xff] %v1151
        %1168 = vst [vmem:[#allocation2 + $0x28] sm:$0xff] %v1152
        %1169 = vst [vmem:[#allocation2 + $0x30] sm:$0xff] %v1153
        %1170 = vst [vmem:[#allocation2 + $0x38] sm:$0xff] %v1154
        %1171 = vst [vmem:[#allocation2 + $0x40] sm:$0xff] %v1155
        %1172 = vst [vmem:[#allocation2 + $0x48] sm:$0xff] %v1156
        %1173 = vst [vmem:[#allocation2 + $0x50] sm:$0xff] %v1157
        %1174 = vst [vmem:[#allocation2 + $0x58] sm:$0xff] %v1158
        %1175 = vst [vmem:[#allocation2 + $0x60] sm:$0xff] %v1159
        %1176 = vst [vmem:[#allocation2 + $0x68] sm:$0xff] %v1160
        %1177 = vst [vmem:[#allocation2 + $0x70] sm:$0xff] %v1161
        %1178 = vst [vmem:[#allocation2 + $0x78] sm:$0xff] %v1162
        %1179 = vmatpush.msra.mxu0 %v1130
        %1180 = vmatpush.msra.mxu0 %v1129
        %1181 = vmatpush.msra.mxu0 %v1128
        %1182 = vmatpush.msra.mxu0 %v1127
        %1183 = vmatpush.msra.mxu0 %v1126
        %1184 = vmatpush.msra.mxu0 %v1125
        %1185 = vmatpush.msra.mxu0 %v1124
        %1186 = vmatpush.msra.mxu0 %v1123
        %1187 = vmatpush.msra.mxu0 %v1122
        %1188 = vmatpush.msra.mxu0 %v1121
        %1189 = vmatpush.msra.mxu0 %v1120
        %1190 = vmatpush.msra.mxu0 %v1119
        %1191 = vmatpush.msra.mxu0 %v1118
        %1192 = vmatpush.msra.mxu0 %v1117
        %1193 = vmatpush.msra.mxu0 %v1116
        %1194 = vmatpush.msra.mxu0 %v1115
        %1195 = vmatmul.f32.gmra.mxu0 %v513
        %v1196 = vpop.f32.mrf.mxu0
        %v1197 = vadd.f32 %v892, %v1196
        %1198 = vmatmul.f32.gmra.mxu0 %v514
        %v1199 = vpop.f32.mrf.mxu0
        %v1200 = vadd.f32 %v897, %v1199
        %1201 = vmatmul.f32.gmra.mxu0 %v515
        %v1202 = vpop.f32.mrf.mxu0
        %v1203 = vadd.f32 %v902, %v1202
        %1204 = vmatmul.f32.gmra.mxu0 %v516
        %v1205 = vpop.f32.mrf.mxu0
        %v1206 = vadd.f32 %v907, %v1205
        %1207 = vdwg.mxu0
        %s1208 = scalar_lea.vmem %s432, 32 [#allocation6]
        %1209 = vst [vmem:[%s1208] sm:$0xff] %v1197
        %1210 = vst [vmem:[%s1208 + $0x8] sm:$0xff] %v1200
        %1211 = vst [vmem:[%s1208 + $0x10] sm:$0xff] %v1203
        %1212 = vst [vmem:[%s1208 + $0x18] sm:$0xff] %v1206
        %v1213 = vld [vmem:[#allocation3] sm:$0xff]
        %v1214 = vld [vmem:[#allocation3 + $0x8] sm:$0xff]
        %v1215 = vld [vmem:[#allocation3 + $0x10] sm:$0xff]
        %v1216 = vld [vmem:[#allocation3 + $0x18] sm:$0xff]
        %v1217 = vadd.f32 %v1213, %v1197
        %v1218 = vadd.f32 %v1214, %v1200
        %v1219 = vadd.f32 %v1215, %v1203
        %v1220 = vadd.f32 %v1216, %v1206
        %1221 = vst [vmem:[#allocation3] sm:$0xff] %v1217
        %1222 = vst [vmem:[#allocation3 + $0x8] sm:$0xff] %v1218
        %1223 = vst [vmem:[#allocation3 + $0x10] sm:$0xff] %v1219
        %1224 = vst [vmem:[#allocation3 + $0x18] sm:$0xff] %v1220
        %v1225 = vld [vmem:[#allocation4] sm:$0xff]
        %v1226 = vld [vmem:[#allocation4 + $0x8] sm:$0xff]
        %v1227 = vld [vmem:[#allocation4 + $0x10] sm:$0xff]
        %v1228 = vld [vmem:[#allocation4 + $0x18] sm:$0xff]
        %v1229 = vmul.f32 %v1197, %v1197
        %v1230 = vmul.f32 %v1200, %v1200
        %v1231 = vmul.f32 %v1203, %v1203
        %v1232 = vmul.f32 %v1206, %v1206
        %v1233 = vadd.f32 %v1225, %v1229
        %v1234 = vadd.f32 %v1226, %v1230
        %v1235 = vadd.f32 %v1227, %v1231
        %v1236 = vadd.f32 %v1228, %v1232
        %1237 = vst [vmem:[#allocation4] sm:$0xff] %v1233
        %1238 = vst [vmem:[#allocation4 + $0x8] sm:$0xff] %v1234
        %1239 = vst [vmem:[#allocation4 + $0x10] sm:$0xff] %v1235
        %1240 = vst [vmem:[#allocation4 + $0x18] sm:$0xff] %v1236
        %v1241 = vld [vmem:[#allocation3] sm:$0xff]
        %v1242 = vld [vmem:[#allocation3 + $0x8] sm:$0xff]
        %v1243 = vld [vmem:[#allocation3 + $0x10] sm:$0xff]
        %v1244 = vld [vmem:[#allocation3 + $0x18] sm:$0xff]
        %1245 = vadd.xlane.f32.xlu0 %v1241
        %v1246 = vpop.xlane.xlu0 %1245
        %1247 = vadd.xlane.f32.xlu0 %v1242
        %v1248 = vpop.xlane.xlu0 %1247
        %1249 = vadd.xlane.f32.xlu0 %v1243
        %v1250 = vpop.xlane.xlu0 %1249
        %1251 = vadd.xlane.f32.xlu0 %v1244
        %v1252 = vpop.xlane.xlu0 %1251
        %vm1253 = vcmask 7168
        %1254 = vst.msk [vmem:[%s451] sm:$0xff] %vm1253, %v1246
        %1255 = vst.msk [vmem:[%s451 + $0x8] sm:$0xff] %vm1253, %v1248
        %1256 = vst.msk [vmem:[%s451 + $0x10] sm:$0xff] %vm1253, %v1250
        %1257 = vst.msk [vmem:[%s451 + $0x18] sm:$0xff] %vm1253, %v1252
        %v1258 = vld [vmem:[#allocation4] sm:$0xff]
        %v1259 = vld [vmem:[#allocation4 + $0x8] sm:$0xff]
        %v1260 = vld [vmem:[#allocation4 + $0x10] sm:$0xff]
        %v1261 = vld [vmem:[#allocation4 + $0x18] sm:$0xff]
        %1262 = vadd.xlane.f32.xlu0 %v1258
        %v1263 = vpop.xlane.xlu0 %1262
        %1264 = vadd.xlane.f32.xlu0 %v1259
        %v1265 = vpop.xlane.xlu0 %1264
        %1266 = vadd.xlane.f32.xlu0 %v1260
        %v1267 = vpop.xlane.xlu0 %1266
        %1268 = vadd.xlane.f32.xlu0 %v1261
        %v1269 = vpop.xlane.xlu0 %1268
        %1270 = vst.msk [vmem:[%s456] sm:$0xff] %vm1253, %v1263
        %1271 = vst.msk [vmem:[%s456 + $0x8] sm:$0xff] %vm1253, %v1265
        %1272 = vst.msk [vmem:[%s456 + $0x10] sm:$0xff] %vm1253, %v1267
        %1273 = vst.msk [vmem:[%s456 + $0x18] sm:$0xff] %vm1253, %v1269
        %s1274 = sand.u32 %s137, 1
        %s1275 = sand.u32 %s137, 1
        %s1276 = smul.addr %s1275, 64
        %s1277 = scalar_lea.vmem [#allocation6], %s1276
        %p1278 = scmp.lt.s32.totalorder %s19, 1
        %s1279 = scalar_select %p1278, %s19, 1
        %s1280 = smul.addr %s1279, 4
        %s1281 = smul.addr %s1280, 8
        %s1282 = scalar_lea.vmem %s6, %s1281
        %p1283 = scmp.lt.s32.totalorder %s19, 1
        %s1284 = scalar_select %p1283, %s19, 1
        %s1285 = smul.addr %s1284, 4
        %s1286 = smul.addr %s1285, 8
        %s1287 = scalar_lea.vmem %s7, %s1286
        // Predicated region
        $region79: #{vit_snn_forward.13} parent=73 // pred_check
          %p1288 = pneg %p147
        $region80: #{vit_snn_forward.13} parent=73 // pred_check_branch
          %1290 = sbr.rel (%p1288) target = $region82
        $region81: #{vit_snn_forward.13} parent=73 // pred_region
          %s1291 = smul.addr %s19, 8
          %s1292 = scalar_lea.vmem %s5, %s1291
          // Predicated region
          $region83: #{vit_snn_forward.13} parent=81 // pred_check
            _
          $region84: #{vit_snn_forward.13} parent=81 // pred_check_branch
            %1294 = sbr.rel (0) target = $region86
          $region85: #{vit_snn_forward.13} parent=81 // pred_region
            // Predicated region
            $region87: #{vit_snn_forward.13} parent=85 // pred_check
              _
            $region88: #{vit_snn_forward.13} parent=85 // pred_check_branch
              %1296 = sbr.rel (0) target = $region90
            $region89: #{vit_snn_forward.13} parent=85 // pred_region
              // Predicated region
              $region102: #{vit_snn_forward.13} parent=89 // pred_check
                _
              $region103: #{vit_snn_forward.13} parent=89 // pred_check_branch
                %1326 = sbr.rel (0) target = $region105
              $region104: #{vit_snn_forward.13} parent=89 // pred_region
                loop: start=0, step=1, limit=1
                $region106: #{vit_snn_forward.13} parent=104 // loop_pre_header
                  _
                $region107: #{vit_snn_forward.13} parent=104 // loop_header
                  %s1328 = sphi 0, %s1332
                  %p1329 = scmp.ge.s32.totalorder %s1328, 1
                  %s1333 = sphi %s1277, %s1277
                  %s1334 = sphi %s1292, %s1292
                $region108: #{vit_snn_forward.13} parent=104 // loop_header_branch
                  %1331 = sbr.rel (%p1329) target = $region112
                $region109: #{vit_snn_forward.13} parent=104 // loop_body
                  %v1335 = vld [vmem:[%s1333] sm:$0xff]
                  %1336 = vst [vmem:[%s1334] sm:$0xff] %v1335
                  %v1337 = vld [vmem:[%s1333 + $0x8] sm:$0xff]
                  %1338 = vst [vmem:[%s1334 + $0x10] sm:$0xff] %v1337
                  %v1339 = vld [vmem:[%s1333 + $0x10] sm:$0xff]
                  %1340 = vst [vmem:[%s1334 + $0x20] sm:$0xff] %v1339
                  %v1341 = vld [vmem:[%s1333 + $0x18] sm:$0xff]
                  %1342 = vst [vmem:[%s1334 + $0x30] sm:$0xff] %v1341
                  %v1343 = vld [vmem:[%s1333 + $0x20] sm:$0xff]
                  %1344 = vst [vmem:[%s1334 + $0x40] sm:$0xff] %v1343
                  %v1345 = vld [vmem:[%s1333 + $0x28] sm:$0xff]
                  %1346 = vst [vmem:[%s1334 + $0x50] sm:$0xff] %v1345
                  %v1347 = vld [vmem:[%s1333 + $0x30] sm:$0xff]
                  %1348 = vst [vmem:[%s1334 + $0x60] sm:$0xff] %v1347
                  %v1349 = vld [vmem:[%s1333 + $0x38] sm:$0xff]
                  %1350 = vst [vmem:[%s1334 + $0x70] sm:$0xff] %v1349
                $region110: #{vit_snn_forward.13} parent=104 // loop_footer
                  %s1332 = sadd.s32 1, %s1328
                $region111: #{vit_snn_forward.13} parent=104 // loop_footer_branch
                  %1327 = sbr.rel target = $region107
                $region112: #{vit_snn_forward.13} parent=104 // loop_exit
                  _
              $region105: #{vit_snn_forward.13} parent=89 // pred_fallthru
                _
              // Predicated region
              $region113: #{vit_snn_forward.13} parent=89 // pred_check
                _
              $region114: #{vit_snn_forward.13} parent=89 // pred_check_branch
                %1352 = sbr.rel target = $region116
              $region115: #{vit_snn_forward.13} parent=89 // pred_region
                _
              $region116: #{vit_snn_forward.13} parent=89 // pred_fallthru
                _
            $region90: #{vit_snn_forward.13} parent=85 // pred_fallthru
              _
            // Predicated region
            $region91: #{vit_snn_forward.13} parent=85 // pred_check
              _
            $region92: #{vit_snn_forward.13} parent=85 // pred_check_branch
              %1298 = sbr.rel target = $region94
            $region93: #{vit_snn_forward.13} parent=85 // pred_region
              %s1300 = ssub.s32 256, 1
              loop: start=0, step=1, limit=1
              $region95: #{vit_snn_forward.13} parent=93 // loop_pre_header
                _
              $region96: #{vit_snn_forward.13} parent=93 // loop_header
                %s1302 = sphi 0, %s1306
                %p1303 = scmp.ge.s32.totalorder %s1302, 1
                %s1307 = sphi %s1277, %s1277
                %s1308 = sphi %s1292, %s1292
              $region97: #{vit_snn_forward.13} parent=93 // loop_header_branch
                %1305 = sbr.rel (%p1303) target = $region101
              $region98: #{vit_snn_forward.13} parent=93 // loop_body
                %v1309 = vld [vmem:[%s1307] sm:%s1300]
                %1310 = vst [vmem:[%s1308] sm:%s1300] %v1309
                %v1311 = vld [vmem:[%s1307 + $0x8] sm:%s1300]
                %1312 = vst [vmem:[%s1308 + $0x10] sm:%s1300] %v1311
                %v1313 = vld [vmem:[%s1307 + $0x10] sm:%s1300]
                %1314 = vst [vmem:[%s1308 + $0x20] sm:%s1300] %v1313
                %v1315 = vld [vmem:[%s1307 + $0x18] sm:%s1300]
                %1316 = vst [vmem:[%s1308 + $0x30] sm:%s1300] %v1315
                %v1317 = vld [vmem:[%s1307 + $0x20] sm:%s1300]
                %1318 = vst [vmem:[%s1308 + $0x40] sm:%s1300] %v1317
                %v1319 = vld [vmem:[%s1307 + $0x28] sm:%s1300]
                %1320 = vst [vmem:[%s1308 + $0x50] sm:%s1300] %v1319
                %v1321 = vld [vmem:[%s1307 + $0x30] sm:%s1300]
                %1322 = vst [vmem:[%s1308 + $0x60] sm:%s1300] %v1321
                %v1323 = vld [vmem:[%s1307 + $0x38] sm:%s1300]
                %1324 = vst [vmem:[%s1308 + $0x70] sm:%s1300] %v1323
              $region99: #{vit_snn_forward.13} parent=93 // loop_footer
                %s1306 = sadd.s32 1, %s1302
              $region100: #{vit_snn_forward.13} parent=93 // loop_footer_branch
                %1301 = sbr.rel target = $region96
              $region101: #{vit_snn_forward.13} parent=93 // loop_exit
                _
            $region94: #{vit_snn_forward.13} parent=85 // pred_fallthru
              _
          $region86: #{vit_snn_forward.13} parent=81 // pred_fallthru
            _
          %1353 = vnop
        $region82: #{vit_snn_forward.13} parent=73 // pred_fallthru
          _
        // Predicated region
        $region117: #{vit_snn_forward.13} parent=73 // pred_check
          %p1354 = pneg %p173
        $region118: #{vit_snn_forward.13} parent=73 // pred_check_branch
          %1356 = sbr.rel (%p1354) target = $region120
        $region119: #{vit_snn_forward.13} parent=73 // pred_region
          _
        $region120: #{vit_snn_forward.13} parent=73 // pred_fallthru
          _
        // Predicated region
        $region121: #{vit_snn_forward.13} parent=73 // pred_check
          %p1357 = pneg %p199
        $region122: #{vit_snn_forward.13} parent=73 // pred_check_branch
          %1359 = sbr.rel (%p1357) target = $region124
        $region123: #{vit_snn_forward.13} parent=73 // pred_region
          _
        $region124: #{vit_snn_forward.13} parent=73 // pred_fallthru
          _
      $region74: #{vit_snn_forward.13} parent=5 // pred_fallthru
        _
      %p1360 = scmp.le.s32.totalorder 2, %s14
      // Predicated region
      $region125: #{vit_snn_forward.13} parent=5 // pred_check
        %p1361 = pneg %p1360
      $region126: #{vit_snn_forward.13} parent=5 // pred_check_branch
        %1363 = sbr.rel (%p1361) target = $region128
      $region127: #{vit_snn_forward.13} parent=5 // pred_region
        %s1364 = ssub.s32 %s14, 2
        // Predicated region
        $region129: #{vit_snn_forward.13} parent=127 // pred_check
          %p1365 = pneg %p153
        $region130: #{vit_snn_forward.13} parent=127 // pred_check_branch
          %1367 = sbr.rel (%p1365) target = $region132
        $region131: #{vit_snn_forward.13} parent=127 // pred_region
          %s1368 = sand.u32 %s138, 1
          %s1369 = sand.u32 %s138, 1
          %s1370 = smul.addr %s1369, 64
          %s1371 = scalar_lea.vmem [#allocation6], %s1370
        $region132: #{vit_snn_forward.13} parent=127 // pred_fallthru
          _
        // Predicated region
        $region133: #{vit_snn_forward.13} parent=127 // pred_check
          %p1372 = pneg %p179
        $region134: #{vit_snn_forward.13} parent=127 // pred_check_branch
          %1374 = sbr.rel (%p1372) target = $region136
        $region135: #{vit_snn_forward.13} parent=127 // pred_region
          %p1375 = scmp.lt.s32.totalorder %s20, 1
          %s1376 = scalar_select %p1375, %s20, 1
          %s1377 = smul.addr %s1376, 4
          %s1378 = smul.addr %s1377, 8
          %s1379 = scalar_lea.vmem %s6, %s1378
        $region136: #{vit_snn_forward.13} parent=127 // pred_fallthru
          _
        // Predicated region
        $region137: #{vit_snn_forward.13} parent=127 // pred_check
          %p1380 = pneg %p205
        $region138: #{vit_snn_forward.13} parent=127 // pred_check_branch
          %1382 = sbr.rel (%p1380) target = $region140
        $region139: #{vit_snn_forward.13} parent=127 // pred_region
          %p1383 = scmp.lt.s32.totalorder %s20, 1
          %s1384 = scalar_select %p1383, %s20, 1
          %s1385 = smul.addr %s1384, 4
          %s1386 = smul.addr %s1385, 8
          %s1387 = scalar_lea.vmem %s7, %s1386
        $region140: #{vit_snn_forward.13} parent=127 // pred_fallthru
          _
      $region128: #{vit_snn_forward.13} parent=5 // pred_fallthru
        _
    $region6: #{vit_snn_forward.13} parent=1 // loop_footer
      %s18 = sadd.s32 1, %s14
    $region7: #{vit_snn_forward.13} parent=1 // loop_footer_branch
      %13 = sbr.rel target = $region3
    $region8: #{vit_snn_forward.13} parent=1 // loop_exit
      _

// kernel: vit_snn_forward.12
$region0: #{vit_snn_forward.12}
  #allocation0 [shape = 'u32[]', space=smem, size = 0x4, offset = 0x4, fixed_abs, tag = 'smem constant byte address 0x4 - core index']
  #allocation1 [shape = 'u32[72,128]{1,0:T(1,128)}', space=vmem, size = 0x9000, scoped, tag = 'internal scratch']
  #allocation2 [shape = 'f32[32,128]{1,0:T(8,128)}', space=vmem, size = 0x4000, scoped, tag = 'scratch operand']
  #allocation3 [shape = 'f32[128,128]{1,0:T(8,128)}', space=vmem, size = 0x10000, scoped, tag = 'scratch operand']
  #allocation4 [shape = 'f32[128,128]{1,0:T(8,128)}', space=vmem, size = 0x10000, scoped, tag = 'scratch operand']
  %s0 = inlined_call_operand.vmem [shape: f32[2,32,256], index: 0, kind: input, shape index: {}]
  %s1 = inlined_call_operand.vmem [shape: f32[32,1], index: 1, kind: input, shape index: {}]
  %s2 = inlined_call_operand.vmem [shape: f32[32,1], index: 2, kind: input, shape index: {}]
  %s3 = inlined_call_operand.vmem [shape: f32[2,32,256], index: 3, kind: input, shape index: {}]
  %s4 = inlined_call_operand.vmem [shape: f32[128,32], index: 4, kind: input, shape index: {}]
  %s5 = inlined_call_operand.vmem [shape: f32[128,1], index: 5, kind: input, shape index: {}]
  %s6 = inlined_call_operand.vmem [shape: f32[2,128,256], index: 6, kind: output, shape index: {0}]
  %s7 = inlined_call_operand.vmem [shape: f32[2,128,1], index: 7, kind: output, shape index: {1}]
  %s8 = inlined_call_operand.vmem [shape: f32[2,128,1], index: 8, kind: output, shape index: {2}]
  %9 = xla_tuple %s6, %s7, %s8
  %s10 = sld [smem:[#allocation0]]
  $region183: #{vit_snn_forward.12} parent=0
    _
  %s12 = ssub.s32 1, %s10
  %s13 = scalar_select 0, %s12, %s10
  $region1: #{vit_snn_forward.12} parent=0
    #allocation5 [shape = 'u8[65536]{0}', space=vmem, size = 0x10000, scoped, tag = 'input window, operand 0']
    #allocation6 [shape = 'u8[65536]{0}', space=vmem, size = 0x10000, scoped, tag = 'input window, operand 3']
    #allocation7 [shape = 'u8[262144]{0}', space=vmem, size = 0x40000, scoped, tag = 'output window, operand 0']
    loop: start=0, step=1, limit=4
    $region2: #{vit_snn_forward.12} parent=1 // loop_pre_header
      _
    $region3: #{vit_snn_forward.12} parent=1 // loop_header
      %s15 = sphi 0, %s19
      %p16 = scmp.ge.s32.totalorder %s15, 4
      %s25 = sphi 0, %s27
      %s28 = sphi 0, %s25
      %s29 = sphi 0, %s28
      %s45 = sphi 0, %s29
      %s49 = sphi 0, %s49
      %s51 = sphi 0, %s49
      %s52 = sphi 0, %s51
      %s66 = sphi 0, %s52
      %s70 = sphi 0, %s70
      %s72 = sphi 0, %s70
      %s73 = sphi 0, %s72
      %s87 = sphi 0, %s73
      %s93 = sphi 0, %s95
      %s96 = sphi 0, %s93
      %s97 = sphi 0, %s96
      %s113 = sphi 0, %s97
      %s117 = sphi 0, %s117
      %s119 = sphi 0, %s117
      %s120 = sphi 0, %s119
      %s134 = sphi 0, %s120
      %s138 = sphi 0, %s138
      %s140 = sphi 0, %s138
      %s141 = sphi 0, %s140
      %s155 = sphi 0, %s141
      %s161 = sphi 0, %s163
      %s164 = sphi 0, %s161
      %s165 = sphi 0, %s164
      %s181 = sphi 0, %s165
      %s187 = sphi 0, %s189
      %s190 = sphi 0, %s187
      %s191 = sphi 0, %s190
      %s207 = sphi 0, %s191
      %s213 = sphi 0, %s215
      %s216 = sphi 0, %s213
      %s217 = sphi 0, %s216
      %s233 = sphi 0, %s217
    $region4: #{vit_snn_forward.12} parent=1 // loop_header_branch
      %18 = sbr.rel (%p16) target = $region8
    $region5: #{vit_snn_forward.12} parent=1 // loop_body
      %s20 = ssub.s32 %s15, 1
      %s21 = ssub.s32 %s15, 2
      %s22 = sadd.s32 %s15, 1
      %s23 = ssub.s32 %s15, %s22
      %p24 = scmp.eq.s32.totalorder %s23, 0
      %s26 = sadd.s32 %s25, 1
      %s27 = scalar_select %p24, %s25, %s26
      %p30 = pneg %p24
      %p31 = scmp.eq.s32.totalorder %s15, 1
      %p32 = por %p30, %p31
      %p33 = scmp.ne.s32.totalorder %s25, %s28
      %p34 = scmp.eq.s32.totalorder %s15, 0
      %p35 = por %p33, %p34
      %p36 = scmp.ne.s32.totalorder %s25, %s28
      %p37 = scmp.eq.s32.totalorder %s20, 1
      %p38 = por %p36, %p37
      %p39 = scmp.ne.s32.totalorder %s28, %s29
      %p40 = scmp.eq.s32.totalorder %s20, 0
      %p41 = por %p39, %p40
      %p42 = scmp.ne.s32.totalorder %s28, %s29
      %p43 = scmp.eq.s32.totalorder %s21, 1
      %p44 = por %p42, %p43
      %p46 = scmp.ne.s32.totalorder %s29, %s45
      %p47 = scmp.eq.s32.totalorder %s21, 0
      %p48 = por %p46, %p47
      %s50 = sadd.s32 %s49, 1
      %p53 = scmp.eq.s32.totalorder %s15, 1
      %p54 = scmp.ne.s32.totalorder %s49, %s51
      %p55 = scmp.eq.s32.totalorder %s15, 0
      %p56 = por %p54, %p55
      %p57 = scmp.ne.s32.totalorder %s49, %s51
      %p58 = scmp.eq.s32.totalorder %s20, 1
      %p59 = por %p57, %p58
      %p60 = scmp.ne.s32.totalorder %s51, %s52
      %p61 = scmp.eq.s32.totalorder %s20, 0
      %p62 = por %p60, %p61
      %p63 = scmp.ne.s32.totalorder %s51, %s52
      %p64 = scmp.eq.s32.totalorder %s21, 1
      %p65 = por %p63, %p64
      %p67 = scmp.ne.s32.totalorder %s52, %s66
      %p68 = scmp.eq.s32.totalorder %s21, 0
      %p69 = por %p67, %p68
      %s71 = sadd.s32 %s70, 1
      %p74 = scmp.eq.s32.totalorder %s15, 1
      %p75 = scmp.ne.s32.totalorder %s70, %s72
      %p76 = scmp.eq.s32.totalorder %s15, 0
      %p77 = por %p75, %p76
      %p78 = scmp.ne.s32.totalorder %s70, %s72
      %p79 = scmp.eq.s32.totalorder %s20, 1
      %p80 = por %p78, %p79
      %p81 = scmp.ne.s32.totalorder %s72, %s73
      %p82 = scmp.eq.s32.totalorder %s20, 0
      %p83 = por %p81, %p82
      %p84 = scmp.ne.s32.totalorder %s72, %s73
      %p85 = scmp.eq.s32.totalorder %s21, 1
      %p86 = por %p84, %p85
      %p88 = scmp.ne.s32.totalorder %s73, %s87
      %p89 = scmp.eq.s32.totalorder %s21, 0
      %p90 = por %p88, %p89
      %s91 = ssub.s32 %s15, %s22
      %p92 = scmp.eq.s32.totalorder %s91, 0
      %s94 = sadd.s32 %s93, 1
      %s95 = scalar_select %p92, %s93, %s94
      %p98 = pneg %p92
      %p99 = scmp.eq.s32.totalorder %s15, 1
      %p100 = por %p98, %p99
      %p101 = scmp.ne.s32.totalorder %s93, %s96
      %p102 = scmp.eq.s32.totalorder %s15, 0
      %p103 = por %p101, %p102
      %p104 = scmp.ne.s32.totalorder %s93, %s96
      %p105 = scmp.eq.s32.totalorder %s20, 1
      %p106 = por %p104, %p105
      %p107 = scmp.ne.s32.totalorder %s96, %s97
      %p108 = scmp.eq.s32.totalorder %s20, 0
      %p109 = por %p107, %p108
      %p110 = scmp.ne.s32.totalorder %s96, %s97
      %p111 = scmp.eq.s32.totalorder %s21, 1
      %p112 = por %p110, %p111
      %p114 = scmp.ne.s32.totalorder %s97, %s113
      %p115 = scmp.eq.s32.totalorder %s21, 0
      %p116 = por %p114, %p115
      %s118 = sadd.s32 %s117, 1
      %p121 = scmp.eq.s32.totalorder %s15, 1
      %p122 = scmp.ne.s32.totalorder %s117, %s119
      %p123 = scmp.eq.s32.totalorder %s15, 0
      %p124 = por %p122, %p123
      %p125 = scmp.ne.s32.totalorder %s117, %s119
      %p126 = scmp.eq.s32.totalorder %s20, 1
      %p127 = por %p125, %p126
      %p128 = scmp.ne.s32.totalorder %s119, %s120
      %p129 = scmp.eq.s32.totalorder %s20, 0
      %p130 = por %p128, %p129
      %p131 = scmp.ne.s32.totalorder %s119, %s120
      %p132 = scmp.eq.s32.totalorder %s21, 1
      %p133 = por %p131, %p132
      %p135 = scmp.ne.s32.totalorder %s120, %s134
      %p136 = scmp.eq.s32.totalorder %s21, 0
      %p137 = por %p135, %p136
      %s139 = sadd.s32 %s138, 1
      %p142 = scmp.eq.s32.totalorder %s15, 1
      %p143 = scmp.ne.s32.totalorder %s138, %s140
      %p144 = scmp.eq.s32.totalorder %s15, 0
      %p145 = por %p143, %p144
      %p146 = scmp.ne.s32.totalorder %s138, %s140
      %p147 = scmp.eq.s32.totalorder %s20, 1
      %p148 = por %p146, %p147
      %p149 = scmp.ne.s32.totalorder %s140, %s141
      %p150 = scmp.eq.s32.totalorder %s20, 0
      %p151 = por %p149, %p150
      %p152 = scmp.ne.s32.totalorder %s140, %s141
      %p153 = scmp.eq.s32.totalorder %s21, 1
      %p154 = por %p152, %p153
      %p156 = scmp.ne.s32.totalorder %s141, %s155
      %p157 = scmp.eq.s32.totalorder %s21, 0
      %p158 = por %p156, %p157
      %s159 = ssub.s32 %s15, %s22
      %p160 = scmp.eq.s32.totalorder %s159, 0
      %s162 = sadd.s32 %s161, 1
      %s163 = scalar_select %p160, %s161, %s162
      %p166 = pneg %p160
      %p167 = scmp.eq.s32.totalorder %s15, 1
      %p168 = por %p166, %p167
      %p169 = scmp.ne.s32.totalorder %s161, %s164
      %p170 = scmp.eq.s32.totalorder %s15, 0
      %p171 = por %p169, %p170
      %p172 = scmp.ne.s32.totalorder %s161, %s164
      %p173 = scmp.eq.s32.totalorder %s20, 1
      %p174 = por %p172, %p173
      %p175 = scmp.ne.s32.totalorder %s164, %s165
      %p176 = scmp.eq.s32.totalorder %s20, 0
      %p177 = por %p175, %p176
      %p178 = scmp.ne.s32.totalorder %s164, %s165
      %p179 = scmp.eq.s32.totalorder %s21, 1
      %p180 = por %p178, %p179
      %p182 = scmp.ne.s32.totalorder %s165, %s181
      %p183 = scmp.eq.s32.totalorder %s21, 0
      %p184 = por %p182, %p183
      %s185 = ssub.s32 %s15, %s22
      %p186 = scmp.eq.s32.totalorder %s185, 0
      %s188 = sadd.s32 %s187, 1
      %s189 = scalar_select %p186, %s187, %s188
      %p192 = pneg %p186
      %p193 = scmp.eq.s32.totalorder %s15, 1
      %p194 = por %p192, %p193
      %p195 = scmp.ne.s32.totalorder %s187, %s190
      %p196 = scmp.eq.s32.totalorder %s15, 0
      %p197 = por %p195, %p196
      %p198 = scmp.ne.s32.totalorder %s187, %s190
      %p199 = scmp.eq.s32.totalorder %s20, 1
      %p200 = por %p198, %p199
      %p201 = scmp.ne.s32.totalorder %s190, %s191
      %p202 = scmp.eq.s32.totalorder %s20, 0
      %p203 = por %p201, %p202
      %p204 = scmp.ne.s32.totalorder %s190, %s191
      %p205 = scmp.eq.s32.totalorder %s21, 1
      %p206 = por %p204, %p205
      %p208 = scmp.ne.s32.totalorder %s191, %s207
      %p209 = scmp.eq.s32.totalorder %s21, 0
      %p210 = por %p208, %p209
      %s211 = ssub.s32 %s15, %s22
      %p212 = scmp.eq.s32.totalorder %s211, 0
      %s214 = sadd.s32 %s213, 1
      %s215 = scalar_select %p212, %s213, %s214
      %p218 = pneg %p212
      %p219 = scmp.eq.s32.totalorder %s15, 1
      %p220 = por %p218, %p219
      %p221 = scmp.ne.s32.totalorder %s213, %s216
      %p222 = scmp.eq.s32.totalorder %s15, 0
      %p223 = por %p221, %p222
      %p224 = scmp.ne.s32.totalorder %s213, %s216
      %p225 = scmp.eq.s32.totalorder %s20, 1
      %p226 = por %p224, %p225
      %p227 = scmp.ne.s32.totalorder %s216, %s217
      %p228 = scmp.eq.s32.totalorder %s20, 0
      %p229 = por %p227, %p228
      %p230 = scmp.ne.s32.totalorder %s216, %s217
      %p231 = scmp.eq.s32.totalorder %s21, 1
      %p232 = por %p230, %p231
      %p234 = scmp.ne.s32.totalorder %s217, %s233
      %p235 = scmp.eq.s32.totalorder %s21, 0
      %p236 = por %p234, %p235
      %p237 = scmp.le.s32.totalorder 1, %s15
      %p238 = scmp.lt.s32.totalorder %s15, 3
      %p239 = pnand %p237, %p238
      %p240 = pneg %p239
      // Predicated region
      $region9: #{vit_snn_forward.12} parent=5 // pred_check
        _
      $region10: #{vit_snn_forward.12} parent=5 // pred_check_branch
        %242 = sbr.rel (%p239) target = $region12
      $region11: #{vit_snn_forward.12} parent=5 // pred_region
        %s243 = ssub.s32 %s15, 1
        // Predicated region
        $region13: #{vit_snn_forward.12} parent=11 // pred_check
          %p244 = pneg %p62
        $region14: #{vit_snn_forward.12} parent=11 // pred_check_branch
          %246 = sbr.rel (%p244) target = $region16
        $region15: #{vit_snn_forward.12} parent=11 // pred_region
          _
        $region16: #{vit_snn_forward.12} parent=11 // pred_fallthru
          _
        // Predicated region
        $region17: #{vit_snn_forward.12} parent=11 // pred_check
          %p247 = pneg %p83
        $region18: #{vit_snn_forward.12} parent=11 // pred_check_branch
          %249 = sbr.rel (%p247) target = $region20
        $region19: #{vit_snn_forward.12} parent=11 // pred_region
          _
        $region20: #{vit_snn_forward.12} parent=11 // pred_fallthru
          _
        // Predicated region
        $region21: #{vit_snn_forward.12} parent=11 // pred_check
          %p250 = pneg %p130
        $region22: #{vit_snn_forward.12} parent=11 // pred_check_branch
          %252 = sbr.rel (%p250) target = $region24
        $region23: #{vit_snn_forward.12} parent=11 // pred_region
          _
        $region24: #{vit_snn_forward.12} parent=11 // pred_fallthru
          _
        // Predicated region
        $region25: #{vit_snn_forward.12} parent=11 // pred_check
          %p253 = pneg %p151
        $region26: #{vit_snn_forward.12} parent=11 // pred_check_branch
          %255 = sbr.rel (%p253) target = $region28
        $region27: #{vit_snn_forward.12} parent=11 // pred_region
          _
        $region28: #{vit_snn_forward.12} parent=11 // pred_fallthru
          _
      $region12: #{vit_snn_forward.12} parent=5 // pred_fallthru
        _
      %p256 = scmp.lt.s32.totalorder %s15, 2
      // Predicated region
      $region29: #{vit_snn_forward.12} parent=5 // pred_check
        %p257 = pneg %p256
      $region30: #{vit_snn_forward.12} parent=5 // pred_check_branch
        %259 = sbr.rel (%p257) target = $region32
      $region31: #{vit_snn_forward.12} parent=5 // pred_region
        // Predicated region
        $region33: #{vit_snn_forward.12} parent=31 // pred_check
          %p260 = pneg %p35
        $region34: #{vit_snn_forward.12} parent=31 // pred_check_branch
          %262 = sbr.rel (%p260) target = $region36
        $region35: #{vit_snn_forward.12} parent=31 // pred_region
          %s263 = sand.u32 %s25, 1
          %s264 = sand.u32 %s25, 1
          %s265 = smul.addr %s264, 64
          %s266 = scalar_lea.vmem [#allocation5], %s265
          %s267 = smul.addr %s15, 8
          %s268 = scalar_lea.vmem %s0, %s267
          // Predicated region
          $region37: #{vit_snn_forward.12} parent=35 // pred_check
            _
          $region38: #{vit_snn_forward.12} parent=35 // pred_check_branch
            %270 = sbr.rel (0) target = $region40
          $region39: #{vit_snn_forward.12} parent=35 // pred_region
            // Predicated region
            $region41: #{vit_snn_forward.12} parent=39 // pred_check
              _
            $region42: #{vit_snn_forward.12} parent=39 // pred_check_branch
              %272 = sbr.rel (0) target = $region44
            $region43: #{vit_snn_forward.12} parent=39 // pred_region
              // Predicated region
              $region56: #{vit_snn_forward.12} parent=43 // pred_check
                _
              $region57: #{vit_snn_forward.12} parent=43 // pred_check_branch
                %302 = sbr.rel (0) target = $region59
              $region58: #{vit_snn_forward.12} parent=43 // pred_region
                loop: start=0, step=1, limit=1
                $region60: #{vit_snn_forward.12} parent=58 // loop_pre_header
                  _
                $region61: #{vit_snn_forward.12} parent=58 // loop_header
                  %s304 = sphi 0, %s308
                  %p305 = scmp.ge.s32.totalorder %s304, 1
                  %s309 = sphi %s268, %s268
                  %s310 = sphi %s266, %s266
                $region62: #{vit_snn_forward.12} parent=58 // loop_header_branch
                  %307 = sbr.rel (%p305) target = $region66
                $region63: #{vit_snn_forward.12} parent=58 // loop_body
                  %v311 = vld [vmem:[%s309] sm:$0xff]
                  %312 = vst [vmem:[%s310] sm:$0xff] %v311
                  %v313 = vld [vmem:[%s309 + $0x10] sm:$0xff]
                  %314 = vst [vmem:[%s310 + $0x8] sm:$0xff] %v313
                  %v315 = vld [vmem:[%s309 + $0x20] sm:$0xff]
                  %316 = vst [vmem:[%s310 + $0x10] sm:$0xff] %v315
                  %v317 = vld [vmem:[%s309 + $0x30] sm:$0xff]
                  %318 = vst [vmem:[%s310 + $0x18] sm:$0xff] %v317
                  %v319 = vld [vmem:[%s309 + $0x40] sm:$0xff]
                  %320 = vst [vmem:[%s310 + $0x20] sm:$0xff] %v319
                  %v321 = vld [vmem:[%s309 + $0x50] sm:$0xff]
                  %322 = vst [vmem:[%s310 + $0x28] sm:$0xff] %v321
                  %v323 = vld [vmem:[%s309 + $0x60] sm:$0xff]
                  %324 = vst [vmem:[%s310 + $0x30] sm:$0xff] %v323
                  %v325 = vld [vmem:[%s309 + $0x70] sm:$0xff]
                  %326 = vst [vmem:[%s310 + $0x38] sm:$0xff] %v325
                $region64: #{vit_snn_forward.12} parent=58 // loop_footer
                  %s308 = sadd.s32 1, %s304
                $region65: #{vit_snn_forward.12} parent=58 // loop_footer_branch
                  %303 = sbr.rel target = $region61
                $region66: #{vit_snn_forward.12} parent=58 // loop_exit
                  _
              $region59: #{vit_snn_forward.12} parent=43 // pred_fallthru
                _
              // Predicated region
              $region67: #{vit_snn_forward.12} parent=43 // pred_check
                _
              $region68: #{vit_snn_forward.12} parent=43 // pred_check_branch
                %328 = sbr.rel target = $region70
              $region69: #{vit_snn_forward.12} parent=43 // pred_region
                _
              $region70: #{vit_snn_forward.12} parent=43 // pred_fallthru
                _
            $region44: #{vit_snn_forward.12} parent=39 // pred_fallthru
              _
            // Predicated region
            $region45: #{vit_snn_forward.12} parent=39 // pred_check
              _
            $region46: #{vit_snn_forward.12} parent=39 // pred_check_branch
              %274 = sbr.rel target = $region48
            $region47: #{vit_snn_forward.12} parent=39 // pred_region
              %s276 = ssub.s32 256, 1
              loop: start=0, step=1, limit=1
              $region49: #{vit_snn_forward.12} parent=47 // loop_pre_header
                _
              $region50: #{vit_snn_forward.12} parent=47 // loop_header
                %s278 = sphi 0, %s282
                %p279 = scmp.ge.s32.totalorder %s278, 1
                %s283 = sphi %s268, %s268
                %s284 = sphi %s266, %s266
              $region51: #{vit_snn_forward.12} parent=47 // loop_header_branch
                %281 = sbr.rel (%p279) target = $region55
              $region52: #{vit_snn_forward.12} parent=47 // loop_body
                %v285 = vld [vmem:[%s283] sm:%s276]
                %286 = vst [vmem:[%s284] sm:%s276] %v285
                %v287 = vld [vmem:[%s283 + $0x10] sm:%s276]
                %288 = vst [vmem:[%s284 + $0x8] sm:%s276] %v287
                %v289 = vld [vmem:[%s283 + $0x20] sm:%s276]
                %290 = vst [vmem:[%s284 + $0x10] sm:%s276] %v289
                %v291 = vld [vmem:[%s283 + $0x30] sm:%s276]
                %292 = vst [vmem:[%s284 + $0x18] sm:%s276] %v291
                %v293 = vld [vmem:[%s283 + $0x40] sm:%s276]
                %294 = vst [vmem:[%s284 + $0x20] sm:%s276] %v293
                %v295 = vld [vmem:[%s283 + $0x50] sm:%s276]
                %296 = vst [vmem:[%s284 + $0x28] sm:%s276] %v295
                %v297 = vld [vmem:[%s283 + $0x60] sm:%s276]
                %298 = vst [vmem:[%s284 + $0x30] sm:%s276] %v297
                %v299 = vld [vmem:[%s283 + $0x70] sm:%s276]
                %300 = vst [vmem:[%s284 + $0x38] sm:%s276] %v299
              $region53: #{vit_snn_forward.12} parent=47 // loop_footer
                %s282 = sadd.s32 1, %s278
              $region54: #{vit_snn_forward.12} parent=47 // loop_footer_branch
                %277 = sbr.rel target = $region50
              $region55: #{vit_snn_forward.12} parent=47 // loop_exit
                _
            $region48: #{vit_snn_forward.12} parent=39 // pred_fallthru
              _
          $region40: #{vit_snn_forward.12} parent=35 // pred_fallthru
            _
          %329 = vnop
        $region36: #{vit_snn_forward.12} parent=31 // pred_fallthru
          _
        // Predicated region
        $region71: #{vit_snn_forward.12} parent=31 // pred_check
          %p330 = pneg %p103
        $region72: #{vit_snn_forward.12} parent=31 // pred_check_branch
          %332 = sbr.rel (%p330) target = $region74
        $region73: #{vit_snn_forward.12} parent=31 // pred_region
          %s333 = sand.u32 %s93, 1
          %s334 = sand.u32 %s93, 1
          %s335 = smul.addr %s334, 64
          %s336 = scalar_lea.vmem [#allocation6], %s335
          %s337 = smul.addr %s15, 8
          %s338 = scalar_lea.vmem %s3, %s337
          // Predicated region
          $region75: #{vit_snn_forward.12} parent=73 // pred_check
            _
          $region76: #{vit_snn_forward.12} parent=73 // pred_check_branch
            %340 = sbr.rel (0) target = $region78
          $region77: #{vit_snn_forward.12} parent=73 // pred_region
            // Predicated region
            $region79: #{vit_snn_forward.12} parent=77 // pred_check
              _
            $region80: #{vit_snn_forward.12} parent=77 // pred_check_branch
              %342 = sbr.rel (0) target = $region82
            $region81: #{vit_snn_forward.12} parent=77 // pred_region
              // Predicated region
              $region94: #{vit_snn_forward.12} parent=81 // pred_check
                _
              $region95: #{vit_snn_forward.12} parent=81 // pred_check_branch
                %372 = sbr.rel (0) target = $region97
              $region96: #{vit_snn_forward.12} parent=81 // pred_region
                loop: start=0, step=1, limit=1
                $region98: #{vit_snn_forward.12} parent=96 // loop_pre_header
                  _
                $region99: #{vit_snn_forward.12} parent=96 // loop_header
                  %s374 = sphi 0, %s378
                  %p375 = scmp.ge.s32.totalorder %s374, 1
                  %s379 = sphi %s338, %s338
                  %s380 = sphi %s336, %s336
                $region100: #{vit_snn_forward.12} parent=96 // loop_header_branch
                  %377 = sbr.rel (%p375) target = $region104
                $region101: #{vit_snn_forward.12} parent=96 // loop_body
                  %v381 = vld [vmem:[%s379] sm:$0xff]
                  %382 = vst [vmem:[%s380] sm:$0xff] %v381
                  %v383 = vld [vmem:[%s379 + $0x10] sm:$0xff]
                  %384 = vst [vmem:[%s380 + $0x8] sm:$0xff] %v383
                  %v385 = vld [vmem:[%s379 + $0x20] sm:$0xff]
                  %386 = vst [vmem:[%s380 + $0x10] sm:$0xff] %v385
                  %v387 = vld [vmem:[%s379 + $0x30] sm:$0xff]
                  %388 = vst [vmem:[%s380 + $0x18] sm:$0xff] %v387
                  %v389 = vld [vmem:[%s379 + $0x40] sm:$0xff]
                  %390 = vst [vmem:[%s380 + $0x20] sm:$0xff] %v389
                  %v391 = vld [vmem:[%s379 + $0x50] sm:$0xff]
                  %392 = vst [vmem:[%s380 + $0x28] sm:$0xff] %v391
                  %v393 = vld [vmem:[%s379 + $0x60] sm:$0xff]
                  %394 = vst [vmem:[%s380 + $0x30] sm:$0xff] %v393
                  %v395 = vld [vmem:[%s379 + $0x70] sm:$0xff]
                  %396 = vst [vmem:[%s380 + $0x38] sm:$0xff] %v395
                $region102: #{vit_snn_forward.12} parent=96 // loop_footer
                  %s378 = sadd.s32 1, %s374
                $region103: #{vit_snn_forward.12} parent=96 // loop_footer_branch
                  %373 = sbr.rel target = $region99
                $region104: #{vit_snn_forward.12} parent=96 // loop_exit
                  _
              $region97: #{vit_snn_forward.12} parent=81 // pred_fallthru
                _
              // Predicated region
              $region105: #{vit_snn_forward.12} parent=81 // pred_check
                _
              $region106: #{vit_snn_forward.12} parent=81 // pred_check_branch
                %398 = sbr.rel target = $region108
              $region107: #{vit_snn_forward.12} parent=81 // pred_region
                _
              $region108: #{vit_snn_forward.12} parent=81 // pred_fallthru
                _
            $region82: #{vit_snn_forward.12} parent=77 // pred_fallthru
              _
            // Predicated region
            $region83: #{vit_snn_forward.12} parent=77 // pred_check
              _
            $region84: #{vit_snn_forward.12} parent=77 // pred_check_branch
              %344 = sbr.rel target = $region86
            $region85: #{vit_snn_forward.12} parent=77 // pred_region
              %s346 = ssub.s32 256, 1
              loop: start=0, step=1, limit=1
              $region87: #{vit_snn_forward.12} parent=85 // loop_pre_header
                _
              $region88: #{vit_snn_forward.12} parent=85 // loop_header
                %s348 = sphi 0, %s352
                %p349 = scmp.ge.s32.totalorder %s348, 1
                %s353 = sphi %s338, %s338
                %s354 = sphi %s336, %s336
              $region89: #{vit_snn_forward.12} parent=85 // loop_header_branch
                %351 = sbr.rel (%p349) target = $region93
              $region90: #{vit_snn_forward.12} parent=85 // loop_body
                %v355 = vld [vmem:[%s353] sm:%s346]
                %356 = vst [vmem:[%s354] sm:%s346] %v355
                %v357 = vld [vmem:[%s353 + $0x10] sm:%s346]
                %358 = vst [vmem:[%s354 + $0x8] sm:%s346] %v357
                %v359 = vld [vmem:[%s353 + $0x20] sm:%s346]
                %360 = vst [vmem:[%s354 + $0x10] sm:%s346] %v359
                %v361 = vld [vmem:[%s353 + $0x30] sm:%s346]
                %362 = vst [vmem:[%s354 + $0x18] sm:%s346] %v361
                %v363 = vld [vmem:[%s353 + $0x40] sm:%s346]
                %364 = vst [vmem:[%s354 + $0x20] sm:%s346] %v363
                %v365 = vld [vmem:[%s353 + $0x50] sm:%s346]
                %366 = vst [vmem:[%s354 + $0x28] sm:%s346] %v365
                %v367 = vld [vmem:[%s353 + $0x60] sm:%s346]
                %368 = vst [vmem:[%s354 + $0x30] sm:%s346] %v367
                %v369 = vld [vmem:[%s353 + $0x70] sm:%s346]
                %370 = vst [vmem:[%s354 + $0x38] sm:%s346] %v369
              $region91: #{vit_snn_forward.12} parent=85 // loop_footer
                %s352 = sadd.s32 1, %s348
              $region92: #{vit_snn_forward.12} parent=85 // loop_footer_branch
                %347 = sbr.rel target = $region88
              $region93: #{vit_snn_forward.12} parent=85 // loop_exit
                _
            $region86: #{vit_snn_forward.12} parent=77 // pred_fallthru
              _
          $region78: #{vit_snn_forward.12} parent=73 // pred_fallthru
            _
          %399 = vnop
        $region74: #{vit_snn_forward.12} parent=31 // pred_fallthru
          _
      $region32: #{vit_snn_forward.12} parent=5 // pred_fallthru
        _
      %p400 = scmp.le.s32.totalorder 1, %s15
      %p401 = scmp.lt.s32.totalorder %s15, 3
      %p402 = pnand %p400, %p401
      %p403 = pneg %p402
      // Predicated region
      $region109: #{vit_snn_forward.12} parent=5 // pred_check
        _
      $region110: #{vit_snn_forward.12} parent=5 // pred_check_branch
        %405 = sbr.rel (%p402) target = $region112
      $region111: #{vit_snn_forward.12} parent=5 // pred_region
        %s406 = ssub.s32 %s15, 1
        %s407 = sand.u32 %s28, 1
        %s408 = sand.u32 %s28, 1
        %s409 = smul.addr %s408, 64
        %s410 = scalar_lea.vmem [#allocation5], %s409
        // Predicated region
        $region113: #{vit_snn_forward.12} parent=111 // pred_check
          %p411 = pneg %p41
        $region114: #{vit_snn_forward.12} parent=111 // pred_check_branch
          %413 = sbr.rel (%p411) target = $region116
        $region115: #{vit_snn_forward.12} parent=111 // pred_region
          _
        $region116: #{vit_snn_forward.12} parent=111 // pred_fallthru
          _
        %s414 = sand.u32 %s96, 1
        %s415 = sand.u32 %s96, 1
        %s416 = smul.addr %s415, 64
        %s417 = scalar_lea.vmem [#allocation6], %s416
        // Predicated region
        $region117: #{vit_snn_forward.12} parent=111 // pred_check
          %p418 = pneg %p109
        $region118: #{vit_snn_forward.12} parent=111 // pred_check_branch
          %420 = sbr.rel (%p418) target = $region120
        $region119: #{vit_snn_forward.12} parent=111 // pred_region
          _
        $region120: #{vit_snn_forward.12} parent=111 // pred_fallthru
          _
        %s421 = sand.u32 %s28, 1
        %s422 = sand.u32 %s28, 1
        %s423 = smul.addr %s422, 64
        %s424 = scalar_lea.vmem [#allocation5], %s423
        %p425 = pneg %p41
        %p426 = pneg %p38
        %p427 = pneg %p62
        %p428 = pneg %p59
        %p429 = pneg %p83
        %p430 = pneg %p80
        %s431 = sand.u32 %s96, 1
        %s432 = sand.u32 %s96, 1
        %s433 = smul.addr %s432, 64
        %s434 = scalar_lea.vmem [#allocation6], %s433
        %p435 = pneg %p109
        %p436 = pneg %p106
        %p437 = pneg %p130
        %p438 = pneg %p127
        %p439 = pneg %p151
        %p440 = pneg %p148
        %p441 = pneg %p177
        %p442 = pneg %p174
        %s443 = sand.u32 %s164, 1
        %s444 = sand.u32 %s164, 1
        %s445 = smul.addr %s444, 256
        %s446 = scalar_lea.vmem [#allocation7], %s445
        %p447 = pneg %p203
        %p448 = pneg %p200
        %p449 = scmp.lt.s32.totalorder %s20, 1
        %s450 = scalar_select %p449, %s20, 1
        %s451 = smul.addr %s450, 16
        %s452 = smul.addr %s451, 8
        %s453 = scalar_lea.vmem %s7, %s452
        %p454 = pneg %p229
        %p455 = pneg %p226
        %p456 = scmp.lt.s32.totalorder %s20, 1
        %s457 = scalar_select %p456, %s20, 1
        %s458 = smul.addr %s457, 16
        %s459 = smul.addr %s458, 8
        %s460 = scalar_lea.vmem %s8, %s459
        %p461 = scmp.lt.s32.totalorder %s20, 1
        %s462 = scalar_select %p461, %s20, 1
        %s463 = smul.addr %s462, 16
        %s464 = smul.addr %s463, 8
        %s465 = scalar_lea.vmem %s7, %s464
        %p466 = scmp.lt.s32.totalorder %s20, 1
        %s467 = scalar_select %p466, %s20, 1
        %s468 = smul.addr %s467, 16
        %s469 = smul.addr %s468, 8
        %s470 = scalar_lea.vmem %s8, %s469
        %471 = vst [vmem:[#allocation2] sm:$0xff] 0.0
        %472 = vst [vmem:[#allocation2 + $0x8] sm:$0xff] 0.0
        %473 = vst [vmem:[#allocation2 + $0x10] sm:$0xff] 0.0
        %474 = vst [vmem:[#allocation2 + $0x18] sm:$0xff] 0.0
        %475 = vst [vmem:[#allocation3] sm:$0xff] 0.0
        %476 = vst [vmem:[#allocation3 + $0x8] sm:$0xff] 0.0
        %477 = vst [vmem:[#allocation3 + $0x10] sm:$0xff] 0.0
        %478 = vst [vmem:[#allocation3 + $0x18] sm:$0xff] 0.0
        %479 = vst [vmem:[#allocation3 + $0x20] sm:$0xff] 0.0
        %480 = vst [vmem:[#allocation3 + $0x28] sm:$0xff] 0.0
        %481 = vst [vmem:[#allocation3 + $0x30] sm:$0xff] 0.0
        %482 = vst [vmem:[#allocation3 + $0x38] sm:$0xff] 0.0
        %483 = vst [vmem:[#allocation3 + $0x40] sm:$0xff] 0.0
        %484 = vst [vmem:[#allocation3 + $0x48] sm:$0xff] 0.0
        %485 = vst [vmem:[#allocation3 + $0x50] sm:$0xff] 0.0
        %486 = vst [vmem:[#allocation3 + $0x58] sm:$0xff] 0.0
        %487 = vst [vmem:[#allocation3 + $0x60] sm:$0xff] 0.0
        %488 = vst [vmem:[#allocation3 + $0x68] sm:$0xff] 0.0
        %489 = vst [vmem:[#allocation3 + $0x70] sm:$0xff] 0.0
        %490 = vst [vmem:[#allocation3 + $0x78] sm:$0xff] 0.0
        %491 = vst [vmem:[#allocation4] sm:$0xff] 0.0
        %492 = vst [vmem:[#allocation4 + $0x8] sm:$0xff] 0.0
        %493 = vst [vmem:[#allocation4 + $0x10] sm:$0xff] 0.0
        %494 = vst [vmem:[#allocation4 + $0x18] sm:$0xff] 0.0
        %495 = vst [vmem:[#allocation4 + $0x20] sm:$0xff] 0.0
        %496 = vst [vmem:[#allocation4 + $0x28] sm:$0xff] 0.0
        %497 = vst [vmem:[#allocation4 + $0x30] sm:$0xff] 0.0
        %498 = vst [vmem:[#allocation4 + $0x38] sm:$0xff] 0.0
        %499 = vst [vmem:[#allocation4 + $0x40] sm:$0xff] 0.0
        %500 = vst [vmem:[#allocation4 + $0x48] sm:$0xff] 0.0
        %501 = vst [vmem:[#allocation4 + $0x50] sm:$0xff] 0.0
        %502 = vst [vmem:[#allocation4 + $0x58] sm:$0xff] 0.0
        %503 = vst [vmem:[#allocation4 + $0x60] sm:$0xff] 0.0
        %504 = vst [vmem:[#allocation4 + $0x68] sm:$0xff] 0.0
        %505 = vst [vmem:[#allocation4 + $0x70] sm:$0xff] 0.0
        %506 = vst [vmem:[#allocation4 + $0x78] sm:$0xff] 0.0
        %v507 = vld [vmem:[%s1] sm:$0xff]
        %v508 = vld [vmem:[%s1 + $0x8] sm:$0xff]
        %v509 = vld [vmem:[%s1 + $0x10] sm:$0xff]
        %v510 = vld [vmem:[%s1 + $0x18] sm:$0xff]
        %v511 = vld [vmem:[%s2] sm:$0xff]
        %v512 = vld [vmem:[%s2 + $0x8] sm:$0xff]
        %v513 = vld [vmem:[%s2 + $0x10] sm:$0xff]
        %v514 = vld [vmem:[%s2 + $0x18] sm:$0xff]
        %v515 = vld [vmem:[%s4] sm:$0xff]
        %v516 = vld [vmem:[%s4 + $0x8] sm:$0xff]
        %v517 = vld [vmem:[%s4 + $0x10] sm:$0xff]
        %v518 = vld [vmem:[%s4 + $0x18] sm:$0xff]
        %v519 = vld [vmem:[%s4 + $0x20] sm:$0xff]
        %v520 = vld [vmem:[%s4 + $0x28] sm:$0xff]
        %v521 = vld [vmem:[%s4 + $0x30] sm:$0xff]
        %v522 = vld [vmem:[%s4 + $0x38] sm:$0xff]
        %v523 = vld [vmem:[%s4 + $0x40] sm:$0xff]
        %v524 = vld [vmem:[%s4 + $0x48] sm:$0xff]
        %v525 = vld [vmem:[%s4 + $0x50] sm:$0xff]
        %v526 = vld [vmem:[%s4 + $0x58] sm:$0xff]
        %v527 = vld [vmem:[%s4 + $0x60] sm:$0xff]
        %v528 = vld [vmem:[%s4 + $0x68] sm:$0xff]
        %v529 = vld [vmem:[%s4 + $0x70] sm:$0xff]
        %v530 = vld [vmem:[%s4 + $0x78] sm:$0xff]
        %v531 = vld [vmem:[%s5] sm:$0xff]
        %v532 = vld [vmem:[%s5 + $0x8] sm:$0xff]
        %v533 = vld [vmem:[%s5 + $0x10] sm:$0xff]
        %v534 = vld [vmem:[%s5 + $0x18] sm:$0xff]
        %v535 = vld [vmem:[%s5 + $0x20] sm:$0xff]
        %v536 = vld [vmem:[%s5 + $0x28] sm:$0xff]
        %v537 = vld [vmem:[%s5 + $0x30] sm:$0xff]
        %v538 = vld [vmem:[%s5 + $0x38] sm:$0xff]
        %v539 = vld [vmem:[%s5 + $0x40] sm:$0xff]
        %v540 = vld [vmem:[%s5 + $0x48] sm:$0xff]
        %v541 = vld [vmem:[%s5 + $0x50] sm:$0xff]
        %v542 = vld [vmem:[%s5 + $0x58] sm:$0xff]
        %v543 = vld [vmem:[%s5 + $0x60] sm:$0xff]
        %v544 = vld [vmem:[%s5 + $0x68] sm:$0xff]
        %v545 = vld [vmem:[%s5 + $0x70] sm:$0xff]
        %v546 = vld [vmem:[%s5 + $0x78] sm:$0xff]
        %v547 = vld [vmem:[%s410] sm:$0xff]
        %v548 = vld [vmem:[%s410 + $0x8] sm:$0xff]
        %v549 = vld [vmem:[%s410 + $0x10] sm:$0xff]
        %v550 = vld [vmem:[%s410 + $0x18] sm:$0xff]
        %552 = vset.pattern.permute.xlu0 0
        %553 = vperm.xlu0 %552, %v507
        %v554 = vpop.permute.xlu0 %553
        %557 = vset.pattern.permute.xlu0 0
        %558 = vperm.xlu0 %557, %v508
        %v559 = vpop.permute.xlu0 %558
        %562 = vset.pattern.permute.xlu0 0
        %563 = vperm.xlu0 %562, %v509
        %v564 = vpop.permute.xlu0 %563
        %567 = vset.pattern.permute.xlu0 0
        %568 = vperm.xlu0 %567, %v510
        %v569 = vpop.permute.xlu0 %568
        %v571 = vmul.f32 %v547, %v554
        %v572 = vmul.f32 %v548, %v559
        %v573 = vmul.f32 %v549, %v564
        %v574 = vmul.f32 %v550, %v569
        %576 = vset.pattern.permute.xlu0 0
        %577 = vperm.xlu0 %576, %v511
        %v578 = vpop.permute.xlu0 %577
        %581 = vset.pattern.permute.xlu0 0
        %582 = vperm.xlu0 %581, %v512
        %v583 = vpop.permute.xlu0 %582
        %586 = vset.pattern.permute.xlu0 0
        %587 = vperm.xlu0 %586, %v513
        %v588 = vpop.permute.xlu0 %587
        %591 = vset.pattern.permute.xlu0 0
        %592 = vperm.xlu0 %591, %v514
        %v593 = vpop.permute.xlu0 %592
        %v595 = vadd.f32 %v571, %v578
        %v596 = vadd.f32 %v572, %v583
        %v597 = vadd.f32 %v573, %v588
        %v598 = vadd.f32 %v574, %v593
        %v599 = vld [vmem:[%s417] sm:$0xff]
        %v600 = vld [vmem:[%s417 + $0x8] sm:$0xff]
        %v601 = vld [vmem:[%s417 + $0x10] sm:$0xff]
        %v602 = vld [vmem:[%s417 + $0x18] sm:$0xff]
        %v603 = vadd.f32 %v595, %v599
        %v604 = vadd.f32 %v596, %v600
        %v605 = vadd.f32 %v597, %v601
        %v606 = vadd.f32 %v598, %v602
        %v607 = vld [vmem:[#allocation2] sm:$0xff]
        %v608 = vld [vmem:[#allocation2 + $0x8] sm:$0xff]
        %v609 = vld [vmem:[#allocation2 + $0x10] sm:$0xff]
        %v610 = vld [vmem:[#allocation2 + $0x18] sm:$0xff]
        %v611 = vsub.f32 %v603, %v607
        %v612 = vsub.f32 %v604, %v608
        %v613 = vsub.f32 %v605, %v609
        %v614 = vsub.f32 %v606, %v610
        %v615 = vmul.f32 %v611, 0.6666667
        %v616 = vmul.f32 %v612, 0.6666667
        %v617 = vmul.f32 %v613, 0.6666667
        %v618 = vmul.f32 %v614, 0.6666667
        %v619 = vadd.f32 %v607, %v615
        %v620 = vadd.f32 %v608, %v616
        %v621 = vadd.f32 %v609, %v617
        %v622 = vadd.f32 %v610, %v618
        %vm623 = vcmp.ge.f32.partialorder %v619, 1.0
        %vm624 = vcmp.ge.f32.partialorder %v620, 1.0
        %vm625 = vcmp.ge.f32.partialorder %v621, 1.0
        %vm626 = vcmp.ge.f32.partialorder %v622, 1.0
        %v627 = vsel %vm623, 1, 0
        %v628 = vsel %vm624, 1, 0
        %v629 = vsel %vm625, 1, 0
        %v630 = vsel %vm626, 1, 0
        %v631 = vcvt.s32.f32 %v627
        %v632 = vcvt.s32.f32 %v628
        %v633 = vcvt.s32.f32 %v629
        %v634 = vcvt.s32.f32 %v630
        %v635 = vsub.f32 1.0, %v631
        %v636 = vsub.f32 1.0, %v632
        %v637 = vsub.f32 1.0, %v633
        %v638 = vsub.f32 1.0, %v634
        %v639 = vmul.f32 %v619, %v635
        %v640 = vmul.f32 %v620, %v636
        %v641 = vmul.f32 %v621, %v637
        %v642 = vmul.f32 %v622, %v638
        %643 = vst [vmem:[#allocation2] sm:$0xff] %v639
        %644 = vst [vmem:[#allocation2 + $0x8] sm:$0xff] %v640
        %645 = vst [vmem:[#allocation2 + $0x10] sm:$0xff] %v641
        %646 = vst [vmem:[#allocation2 + $0x18] sm:$0xff] %v642
        %648 = vset.pattern.permute.xlu0 0
        %649 = vperm.xlu0 %648, %v531
        %v650 = vpop.permute.xlu0 %649
        %653 = vset.pattern.permute.xlu0 0
        %654 = vperm.xlu0 %653, %v532
        %v655 = vpop.permute.xlu0 %654
        %658 = vset.pattern.permute.xlu0 0
        %659 = vperm.xlu0 %658, %v533
        %v660 = vpop.permute.xlu0 %659
        %663 = vset.pattern.permute.xlu0 0
        %664 = vperm.xlu0 %663, %v534
        %v665 = vpop.permute.xlu0 %664
        %668 = vset.pattern.permute.xlu0 0
        %669 = vperm.xlu0 %668, %v535
        %v670 = vpop.permute.xlu0 %669
        %673 = vset.pattern.permute.xlu0 0
        %674 = vperm.xlu0 %673, %v536
        %v675 = vpop.permute.xlu0 %674
        %678 = vset.pattern.permute.xlu0 0
        %679 = vperm.xlu0 %678, %v537
        %v680 = vpop.permute.xlu0 %679
        %683 = vset.pattern.permute.xlu0 0
        %684 = vperm.xlu0 %683, %v538
        %v685 = vpop.permute.xlu0 %684
        %688 = vset.pattern.permute.xlu0 0
        %689 = vperm.xlu0 %688, %v539
        %v690 = vpop.permute.xlu0 %689
        %693 = vset.pattern.permute.xlu0 0
        %694 = vperm.xlu0 %693, %v540
        %v695 = vpop.permute.xlu0 %694
        %698 = vset.pattern.permute.xlu0 0
        %699 = vperm.xlu0 %698, %v541
        %v700 = vpop.permute.xlu0 %699
        %703 = vset.pattern.permute.xlu0 0
        %704 = vperm.xlu0 %703, %v542
        %v705 = vpop.permute.xlu0 %704
        %708 = vset.pattern.permute.xlu0 0
        %709 = vperm.xlu0 %708, %v543
        %v710 = vpop.permute.xlu0 %709
        %713 = vset.pattern.permute.xlu0 0
        %714 = vperm.xlu0 %713, %v544
        %v715 = vpop.permute.xlu0 %714
        %718 = vset.pattern.permute.xlu0 0
        %719 = vperm.xlu0 %718, %v545
        %v720 = vpop.permute.xlu0 %719
        %723 = vset.pattern.permute.xlu0 0
        %724 = vperm.xlu0 %723, %v546
        %v725 = vpop.permute.xlu0 %724
        %vm727 = vcmask 261120
        %v729 = vsel %vm727, %v515, 0
        %v732 = vsel %vm727, %v516, 0
        %v735 = vsel %vm727, %v517, 0
        %v738 = vsel %vm727, %v518, 0
        %v741 = vsel %vm727, %v519, 0
        %v744 = vsel %vm727, %v520, 0
        %v747 = vsel %vm727, %v521, 0
        %v750 = vsel %vm727, %v522, 0
        %v753 = vsel %vm727, %v523, 0
        %v756 = vsel %vm727, %v524, 0
        %v759 = vsel %vm727, %v525, 0
        %v762 = vsel %vm727, %v526, 0
        %v765 = vsel %vm727, %v527, 0
        %v768 = vsel %vm727, %v528, 0
        %v771 = vsel %vm727, %v529, 0
        %v774 = vsel %vm727, %v530, 0
        %776 = vmatpush.msra.mxu0 0.0
        %777 = vmatpush.msra.mxu0 0.0
        %778 = vmatpush.msra.mxu0 0.0
        %779 = vmatpush.msra.mxu0 0.0
        %780 = vmatpush.msra.mxu0 0.0
        %781 = vmatpush.msra.mxu0 0.0
        %782 = vmatpush.msra.mxu0 0.0
        %783 = vmatpush.msra.mxu0 0.0
        %784 = vmatpush.msra.mxu0 0.0
        %785 = vmatpush.msra.mxu0 0.0
        %786 = vmatpush.msra.mxu0 0.0
        %787 = vmatpush.msra.mxu0 0.0
        %788 = vmatpush.msra.mxu0 %v634
        %789 = vmatpush.msra.mxu0 %v633
        %790 = vmatpush.msra.mxu0 %v632
        %791 = vmatpush.msra.mxu0 %v631
        %792 = vmatmul.f32.gmra.mxu0 %v729
        %v793 = vpop.f32.mrf.mxu0
        %v794 = vadd.f32 %v650, %v793
        %795 = vmatmul.f32.gmra.mxu0 %v732
        %v796 = vpop.f32.mrf.mxu0
        %v797 = vadd.f32 %v655, %v796
        %798 = vmatmul.f32.gmra.mxu0 %v735
        %v799 = vpop.f32.mrf.mxu0
        %v800 = vadd.f32 %v660, %v799
        %801 = vmatmul.f32.gmra.mxu0 %v738
        %v802 = vpop.f32.mrf.mxu0
        %v803 = vadd.f32 %v665, %v802
        %804 = vmatmul.f32.gmra.mxu0 %v741
        %v805 = vpop.f32.mrf.mxu0
        %v806 = vadd.f32 %v670, %v805
        %807 = vmatmul.f32.gmra.mxu0 %v744
        %v808 = vpop.f32.mrf.mxu0
        %v809 = vadd.f32 %v675, %v808
        %810 = vmatmul.f32.gmra.mxu0 %v747
        %v811 = vpop.f32.mrf.mxu0
        %v812 = vadd.f32 %v680, %v811
        %813 = vmatmul.f32.gmra.mxu0 %v750
        %v814 = vpop.f32.mrf.mxu0
        %v815 = vadd.f32 %v685, %v814
        %816 = vmatmul.f32.gmra.mxu0 %v753
        %v817 = vpop.f32.mrf.mxu0
        %v818 = vadd.f32 %v690, %v817
        %819 = vmatmul.f32.gmra.mxu0 %v756
        %v820 = vpop.f32.mrf.mxu0
        %v821 = vadd.f32 %v695, %v820
        %822 = vmatmul.f32.gmra.mxu0 %v759
        %v823 = vpop.f32.mrf.mxu0
        %v824 = vadd.f32 %v700, %v823
        %825 = vmatmul.f32.gmra.mxu0 %v762
        %v826 = vpop.f32.mrf.mxu0
        %v827 = vadd.f32 %v705, %v826
        %828 = vmatmul.f32.gmra.mxu0 %v765
        %v829 = vpop.f32.mrf.mxu0
        %v830 = vadd.f32 %v710, %v829
        %831 = vmatmul.f32.gmra.mxu0 %v768
        %v832 = vpop.f32.mrf.mxu0
        %v833 = vadd.f32 %v715, %v832
        %834 = vmatmul.f32.gmra.mxu0 %v771
        %v835 = vpop.f32.mrf.mxu0
        %v836 = vadd.f32 %v720, %v835
        %837 = vmatmul.f32.gmra.mxu0 %v774
        %v838 = vpop.f32.mrf.mxu0
        %v839 = vadd.f32 %v725, %v838
        %840 = vdwg.mxu0
        %841 = vst [vmem:[%s446] sm:$0xff] %v794
        %842 = vst [vmem:[%s446 + $0x8] sm:$0xff] %v797
        %843 = vst [vmem:[%s446 + $0x10] sm:$0xff] %v800
        %844 = vst [vmem:[%s446 + $0x18] sm:$0xff] %v803
        %845 = vst [vmem:[%s446 + $0x20] sm:$0xff] %v806
        %846 = vst [vmem:[%s446 + $0x28] sm:$0xff] %v809
        %847 = vst [vmem:[%s446 + $0x30] sm:$0xff] %v812
        %848 = vst [vmem:[%s446 + $0x38] sm:$0xff] %v815
        %849 = vst [vmem:[%s446 + $0x40] sm:$0xff] %v818
        %850 = vst [vmem:[%s446 + $0x48] sm:$0xff] %v821
        %851 = vst [vmem:[%s446 + $0x50] sm:$0xff] %v824
        %852 = vst [vmem:[%s446 + $0x58] sm:$0xff] %v827
        %853 = vst [vmem:[%s446 + $0x60] sm:$0xff] %v830
        %854 = vst [vmem:[%s446 + $0x68] sm:$0xff] %v833
        %855 = vst [vmem:[%s446 + $0x70] sm:$0xff] %v836
        %856 = vst [vmem:[%s446 + $0x78] sm:$0xff] %v839
        %v857 = vld [vmem:[#allocation3] sm:$0xff]
        %v858 = vld [vmem:[#allocation3 + $0x8] sm:$0xff]
        %v859 = vld [vmem:[#allocation3 + $0x10] sm:$0xff]
        %v860 = vld [vmem:[#allocation3 + $0x18] sm:$0xff]
        %v861 = vld [vmem:[#allocation3 + $0x20] sm:$0xff]
        %v862 = vld [vmem:[#allocation3 + $0x28] sm:$0xff]
        %v863 = vld [vmem:[#allocation3 + $0x30] sm:$0xff]
        %v864 = vld [vmem:[#allocation3 + $0x38] sm:$0xff]
        %v865 = vld [vmem:[#allocation3 + $0x40] sm:$0xff]
        %v866 = vld [vmem:[#allocation3 + $0x48] sm:$0xff]
        %v867 = vld [vmem:[#allocation3 + $0x50] sm:$0xff]
        %v868 = vld [vmem:[#allocation3 + $0x58] sm:$0xff]
        %v869 = vld [vmem:[#allocation3 + $0x60] sm:$0xff]
        %v870 = vld [vmem:[#allocation3 + $0x68] sm:$0xff]
        %v871 = vld [vmem:[#allocation3 + $0x70] sm:$0xff]
        %v872 = vld [vmem:[#allocation3 + $0x78] sm:$0xff]
        %v873 = vadd.f32 %v857, %v794
        %v874 = vadd.f32 %v858, %v797
        %v875 = vadd.f32 %v859, %v800
        %v876 = vadd.f32 %v860, %v803
        %v877 = vadd.f32 %v861, %v806
        %v878 = vadd.f32 %v862, %v809
        %v879 = vadd.f32 %v863, %v812
        %v880 = vadd.f32 %v864, %v815
        %v881 = vadd.f32 %v865, %v818
        %v882 = vadd.f32 %v866, %v821
        %v883 = vadd.f32 %v867, %v824
        %v884 = vadd.f32 %v868, %v827
        %v885 = vadd.f32 %v869, %v830
        %v886 = vadd.f32 %v870, %v833
        %v887 = vadd.f32 %v871, %v836
        %v888 = vadd.f32 %v872, %v839
        %889 = vst [vmem:[#allocation3] sm:$0xff] %v873
        %890 = vst [vmem:[#allocation3 + $0x8] sm:$0xff] %v874
        %891 = vst [vmem:[#allocation3 + $0x10] sm:$0xff] %v875
        %892 = vst [vmem:[#allocation3 + $0x18] sm:$0xff] %v876
        %893 = vst [vmem:[#allocation3 + $0x20] sm:$0xff] %v877
        %894 = vst [vmem:[#allocation3 + $0x28] sm:$0xff] %v878
        %895 = vst [vmem:[#allocation3 + $0x30] sm:$0xff] %v879
        %896 = vst [vmem:[#allocation3 + $0x38] sm:$0xff] %v880
        %897 = vst [vmem:[#allocation3 + $0x40] sm:$0xff] %v881
        %898 = vst [vmem:[#allocation3 + $0x48] sm:$0xff] %v882
        %899 = vst [vmem:[#allocation3 + $0x50] sm:$0xff] %v883
        %900 = vst [vmem:[#allocation3 + $0x58] sm:$0xff] %v884
        %901 = vst [vmem:[#allocation3 + $0x60] sm:$0xff] %v885
        %902 = vst [vmem:[#allocation3 + $0x68] sm:$0xff] %v886
        %903 = vst [vmem:[#allocation3 + $0x70] sm:$0xff] %v887
        %904 = vst [vmem:[#allocation3 + $0x78] sm:$0xff] %v888
        %v905 = vld [vmem:[#allocation4] sm:$0xff]
        %v906 = vld [vmem:[#allocation4 + $0x8] sm:$0xff]
        %v907 = vld [vmem:[#allocation4 + $0x10] sm:$0xff]
        %v908 = vld [vmem:[#allocation4 + $0x18] sm:$0xff]
        %v909 = vld [vmem:[#allocation4 + $0x20] sm:$0xff]
        %v910 = vld [vmem:[#allocation4 + $0x28] sm:$0xff]
        %v911 = vld [vmem:[#allocation4 + $0x30] sm:$0xff]
        %v912 = vld [vmem:[#allocation4 + $0x38] sm:$0xff]
        %v913 = vld [vmem:[#allocation4 + $0x40] sm:$0xff]
        %v914 = vld [vmem:[#allocation4 + $0x48] sm:$0xff]
        %v915 = vld [vmem:[#allocation4 + $0x50] sm:$0xff]
        %v916 = vld [vmem:[#allocation4 + $0x58] sm:$0xff]
        %v917 = vld [vmem:[#allocation4 + $0x60] sm:$0xff]
        %v918 = vld [vmem:[#allocation4 + $0x68] sm:$0xff]
        %v919 = vld [vmem:[#allocation4 + $0x70] sm:$0xff]
        %v920 = vld [vmem:[#allocation4 + $0x78] sm:$0xff]
        %v921 = vmul.f32 %v794, %v794
        %v922 = vmul.f32 %v797, %v797
        %v923 = vmul.f32 %v800, %v800
        %v924 = vmul.f32 %v803, %v803
        %v925 = vmul.f32 %v806, %v806
        %v926 = vmul.f32 %v809, %v809
        %v927 = vmul.f32 %v812, %v812
        %v928 = vmul.f32 %v815, %v815
        %v929 = vmul.f32 %v818, %v818
        %v930 = vmul.f32 %v821, %v821
        %v931 = vmul.f32 %v824, %v824
        %v932 = vmul.f32 %v827, %v827
        %v933 = vmul.f32 %v830, %v830
        %v934 = vmul.f32 %v833, %v833
        %v935 = vmul.f32 %v836, %v836
        %v936 = vmul.f32 %v839, %v839
        %v937 = vadd.f32 %v905, %v921
        %v938 = vadd.f32 %v906, %v922
        %v939 = vadd.f32 %v907, %v923
        %v940 = vadd.f32 %v908, %v924
        %v941 = vadd.f32 %v909, %v925
        %v942 = vadd.f32 %v910, %v926
        %v943 = vadd.f32 %v911, %v927
        %v944 = vadd.f32 %v912, %v928
        %v945 = vadd.f32 %v913, %v929
        %v946 = vadd.f32 %v914, %v930
        %v947 = vadd.f32 %v915, %v931
        %v948 = vadd.f32 %v916, %v932
        %v949 = vadd.f32 %v917, %v933
        %v950 = vadd.f32 %v918, %v934
        %v951 = vadd.f32 %v919, %v935
        %v952 = vadd.f32 %v920, %v936
        %953 = vst [vmem:[#allocation4] sm:$0xff] %v937
        %954 = vst [vmem:[#allocation4 + $0x8] sm:$0xff] %v938
        %955 = vst [vmem:[#allocation4 + $0x10] sm:$0xff] %v939
        %956 = vst [vmem:[#allocation4 + $0x18] sm:$0xff] %v940
        %957 = vst [vmem:[#allocation4 + $0x20] sm:$0xff] %v941
        %958 = vst [vmem:[#allocation4 + $0x28] sm:$0xff] %v942
        %959 = vst [vmem:[#allocation4 + $0x30] sm:$0xff] %v943
        %960 = vst [vmem:[#allocation4 + $0x38] sm:$0xff] %v944
        %961 = vst [vmem:[#allocation4 + $0x40] sm:$0xff] %v945
        %962 = vst [vmem:[#allocation4 + $0x48] sm:$0xff] %v946
        %963 = vst [vmem:[#allocation4 + $0x50] sm:$0xff] %v947
        %964 = vst [vmem:[#allocation4 + $0x58] sm:$0xff] %v948
        %965 = vst [vmem:[#allocation4 + $0x60] sm:$0xff] %v949
        %966 = vst [vmem:[#allocation4 + $0x68] sm:$0xff] %v950
        %967 = vst [vmem:[#allocation4 + $0x70] sm:$0xff] %v951
        %968 = vst [vmem:[#allocation4 + $0x78] sm:$0xff] %v952
        %s969 = scalar_lea.vmem %s410, 32 [#allocation5]
        %v970 = vld [vmem:[%s969] sm:$0xff]
        %v971 = vld [vmem:[%s969 + $0x8] sm:$0xff]
        %v972 = vld [vmem:[%s969 + $0x10] sm:$0xff]
        %v973 = vld [vmem:[%s969 + $0x18] sm:$0xff]
        %v974 = vmul.f32 %v970, %v554
        %v975 = vmul.f32 %v971, %v559
        %v976 = vmul.f32 %v972, %v564
        %v977 = vmul.f32 %v973, %v569
        %v978 = vadd.f32 %v974, %v578
        %v979 = vadd.f32 %v975, %v583
        %v980 = vadd.f32 %v976, %v588
        %v981 = vadd.f32 %v977, %v593
        %s982 = scalar_lea.vmem %s417, 32 [#allocation6]
        %v983 = vld [vmem:[%s982] sm:$0xff]
        %v984 = vld [vmem:[%s982 + $0x8] sm:$0xff]
        %v985 = vld [vmem:[%s982 + $0x10] sm:$0xff]
        %v986 = vld [vmem:[%s982 + $0x18] sm:$0xff]
        %v987 = vadd.f32 %v978, %v983
        %v988 = vadd.f32 %v979, %v984
        %v989 = vadd.f32 %v980, %v985
        %v990 = vadd.f32 %v981, %v986
        %v991 = vld [vmem:[#allocation2] sm:$0xff]
        %v992 = vld [vmem:[#allocation2 + $0x8] sm:$0xff]
        %v993 = vld [vmem:[#allocation2 + $0x10] sm:$0xff]
        %v994 = vld [vmem:[#allocation2 + $0x18] sm:$0xff]
        %v995 = vsub.f32 %v987, %v991
        %v996 = vsub.f32 %v988, %v992
        %v997 = vsub.f32 %v989, %v993
        %v998 = vsub.f32 %v990, %v994
        %v999 = vmul.f32 %v995, 0.6666667
        %v1000 = vmul.f32 %v996, 0.6666667
        %v1001 = vmul.f32 %v997, 0.6666667
        %v1002 = vmul.f32 %v998, 0.6666667
        %v1003 = vadd.f32 %v991, %v999
        %v1004 = vadd.f32 %v992, %v1000
        %v1005 = vadd.f32 %v993, %v1001
        %v1006 = vadd.f32 %v994, %v1002
        %vm1007 = vcmp.ge.f32.partialorder %v1003, 1.0
        %vm1008 = vcmp.ge.f32.partialorder %v1004, 1.0
        %vm1009 = vcmp.ge.f32.partialorder %v1005, 1.0
        %vm1010 = vcmp.ge.f32.partialorder %v1006, 1.0
        %v1011 = vsel %vm1007, 1, 0
        %v1012 = vsel %vm1008, 1, 0
        %v1013 = vsel %vm1009, 1, 0
        %v1014 = vsel %vm1010, 1, 0
        %v1015 = vcvt.s32.f32 %v1011
        %v1016 = vcvt.s32.f32 %v1012
        %v1017 = vcvt.s32.f32 %v1013
        %v1018 = vcvt.s32.f32 %v1014
        %v1019 = vsub.f32 1.0, %v1015
        %v1020 = vsub.f32 1.0, %v1016
        %v1021 = vsub.f32 1.0, %v1017
        %v1022 = vsub.f32 1.0, %v1018
        %v1023 = vmul.f32 %v1003, %v1019
        %v1024 = vmul.f32 %v1004, %v1020
        %v1025 = vmul.f32 %v1005, %v1021
        %v1026 = vmul.f32 %v1006, %v1022
        %1027 = vst [vmem:[#allocation2] sm:$0xff] %v1023
        %1028 = vst [vmem:[#allocation2 + $0x8] sm:$0xff] %v1024
        %1029 = vst [vmem:[#allocation2 + $0x10] sm:$0xff] %v1025
        %1030 = vst [vmem:[#allocation2 + $0x18] sm:$0xff] %v1026
        %1031 = vmatpush.msra.mxu0 0.0
        %1032 = vmatpush.msra.mxu0 0.0
        %1033 = vmatpush.msra.mxu0 0.0
        %1034 = vmatpush.msra.mxu0 0.0
        %1035 = vmatpush.msra.mxu0 0.0
        %1036 = vmatpush.msra.mxu0 0.0
        %1037 = vmatpush.msra.mxu0 0.0
        %1038 = vmatpush.msra.mxu0 0.0
        %1039 = vmatpush.msra.mxu0 0.0
        %1040 = vmatpush.msra.mxu0 0.0
        %1041 = vmatpush.msra.mxu0 0.0
        %1042 = vmatpush.msra.mxu0 0.0
        %1043 = vmatpush.msra.mxu0 %v1018
        %1044 = vmatpush.msra.mxu0 %v1017
        %1045 = vmatpush.msra.mxu0 %v1016
        %1046 = vmatpush.msra.mxu0 %v1015
        %1047 = vmatmul.f32.gmra.mxu0 %v729
        %v1048 = vpop.f32.mrf.mxu0
        %v1049 = vadd.f32 %v650, %v1048
        %1050 = vmatmul.f32.gmra.mxu0 %v732
        %v1051 = vpop.f32.mrf.mxu0
        %v1052 = vadd.f32 %v655, %v1051
        %1053 = vmatmul.f32.gmra.mxu0 %v735
        %v1054 = vpop.f32.mrf.mxu0
        %v1055 = vadd.f32 %v660, %v1054
        %1056 = vmatmul.f32.gmra.mxu0 %v738
        %v1057 = vpop.f32.mrf.mxu0
        %v1058 = vadd.f32 %v665, %v1057
        %1059 = vmatmul.f32.gmra.mxu0 %v741
        %v1060 = vpop.f32.mrf.mxu0
        %v1061 = vadd.f32 %v670, %v1060
        %1062 = vmatmul.f32.gmra.mxu0 %v744
        %v1063 = vpop.f32.mrf.mxu0
        %v1064 = vadd.f32 %v675, %v1063
        %1065 = vmatmul.f32.gmra.mxu0 %v747
        %v1066 = vpop.f32.mrf.mxu0
        %v1067 = vadd.f32 %v680, %v1066
        %1068 = vmatmul.f32.gmra.mxu0 %v750
        %v1069 = vpop.f32.mrf.mxu0
        %v1070 = vadd.f32 %v685, %v1069
        %1071 = vmatmul.f32.gmra.mxu0 %v753
        %v1072 = vpop.f32.mrf.mxu0
        %v1073 = vadd.f32 %v690, %v1072
        %1074 = vmatmul.f32.gmra.mxu0 %v756
        %v1075 = vpop.f32.mrf.mxu0
        %v1076 = vadd.f32 %v695, %v1075
        %1077 = vmatmul.f32.gmra.mxu0 %v759
        %v1078 = vpop.f32.mrf.mxu0
        %v1079 = vadd.f32 %v700, %v1078
        %1080 = vmatmul.f32.gmra.mxu0 %v762
        %v1081 = vpop.f32.mrf.mxu0
        %v1082 = vadd.f32 %v705, %v1081
        %1083 = vmatmul.f32.gmra.mxu0 %v765
        %v1084 = vpop.f32.mrf.mxu0
        %v1085 = vadd.f32 %v710, %v1084
        %1086 = vmatmul.f32.gmra.mxu0 %v768
        %v1087 = vpop.f32.mrf.mxu0
        %v1088 = vadd.f32 %v715, %v1087
        %1089 = vmatmul.f32.gmra.mxu0 %v771
        %v1090 = vpop.f32.mrf.mxu0
        %v1091 = vadd.f32 %v720, %v1090
        %1092 = vmatmul.f32.gmra.mxu0 %v774
        %v1093 = vpop.f32.mrf.mxu0
        %v1094 = vadd.f32 %v725, %v1093
        %1095 = vdwg.mxu0
        %s1096 = scalar_lea.vmem %s446, 128 [#allocation7]
        %1097 = vst [vmem:[%s1096] sm:$0xff] %v1049
        %1098 = vst [vmem:[%s1096 + $0x8] sm:$0xff] %v1052
        %1099 = vst [vmem:[%s1096 + $0x10] sm:$0xff] %v1055
        %1100 = vst [vmem:[%s1096 + $0x18] sm:$0xff] %v1058
        %1101 = vst [vmem:[%s1096 + $0x20] sm:$0xff] %v1061
        %1102 = vst [vmem:[%s1096 + $0x28] sm:$0xff] %v1064
        %1103 = vst [vmem:[%s1096 + $0x30] sm:$0xff] %v1067
        %1104 = vst [vmem:[%s1096 + $0x38] sm:$0xff] %v1070
        %1105 = vst [vmem:[%s1096 + $0x40] sm:$0xff] %v1073
        %1106 = vst [vmem:[%s1096 + $0x48] sm:$0xff] %v1076
        %1107 = vst [vmem:[%s1096 + $0x50] sm:$0xff] %v1079
        %1108 = vst [vmem:[%s1096 + $0x58] sm:$0xff] %v1082
        %1109 = vst [vmem:[%s1096 + $0x60] sm:$0xff] %v1085
        %1110 = vst [vmem:[%s1096 + $0x68] sm:$0xff] %v1088
        %1111 = vst [vmem:[%s1096 + $0x70] sm:$0xff] %v1091
        %1112 = vst [vmem:[%s1096 + $0x78] sm:$0xff] %v1094
        %v1113 = vld [vmem:[#allocation3] sm:$0xff]
        %v1114 = vld [vmem:[#allocation3 + $0x8] sm:$0xff]
        %v1115 = vld [vmem:[#allocation3 + $0x10] sm:$0xff]
        %v1116 = vld [vmem:[#allocation3 + $0x18] sm:$0xff]
        %v1117 = vld [vmem:[#allocation3 + $0x20] sm:$0xff]
        %v1118 = vld [vmem:[#allocation3 + $0x28] sm:$0xff]
        %v1119 = vld [vmem:[#allocation3 + $0x30] sm:$0xff]
        %v1120 = vld [vmem:[#allocation3 + $0x38] sm:$0xff]
        %v1121 = vld [vmem:[#allocation3 + $0x40] sm:$0xff]
        %v1122 = vld [vmem:[#allocation3 + $0x48] sm:$0xff]
        %v1123 = vld [vmem:[#allocation3 + $0x50] sm:$0xff]
        %v1124 = vld [vmem:[#allocation3 + $0x58] sm:$0xff]
        %v1125 = vld [vmem:[#allocation3 + $0x60] sm:$0xff]
        %v1126 = vld [vmem:[#allocation3 + $0x68] sm:$0xff]
        %v1127 = vld [vmem:[#allocation3 + $0x70] sm:$0xff]
        %v1128 = vld [vmem:[#allocation3 + $0x78] sm:$0xff]
        %v1129 = vadd.f32 %v1113, %v1049
        %v1130 = vadd.f32 %v1114, %v1052
        %v1131 = vadd.f32 %v1115, %v1055
        %v1132 = vadd.f32 %v1116, %v1058
        %v1133 = vadd.f32 %v1117, %v1061
        %v1134 = vadd.f32 %v1118, %v1064
        %v1135 = vadd.f32 %v1119, %v1067
        %v1136 = vadd.f32 %v1120, %v1070
        %v1137 = vadd.f32 %v1121, %v1073
        %v1138 = vadd.f32 %v1122, %v1076
        %v1139 = vadd.f32 %v1123, %v1079
        %v1140 = vadd.f32 %v1124, %v1082
        %v1141 = vadd.f32 %v1125, %v1085
        %v1142 = vadd.f32 %v1126, %v1088
        %v1143 = vadd.f32 %v1127, %v1091
        %v1144 = vadd.f32 %v1128, %v1094
        %1145 = vst [vmem:[#allocation3] sm:$0xff] %v1129
        %1146 = vst [vmem:[#allocation3 + $0x8] sm:$0xff] %v1130
        %1147 = vst [vmem:[#allocation3 + $0x10] sm:$0xff] %v1131
        %1148 = vst [vmem:[#allocation3 + $0x18] sm:$0xff] %v1132
        %1149 = vst [vmem:[#allocation3 + $0x20] sm:$0xff] %v1133
        %1150 = vst [vmem:[#allocation3 + $0x28] sm:$0xff] %v1134
        %1151 = vst [vmem:[#allocation3 + $0x30] sm:$0xff] %v1135
        %1152 = vst [vmem:[#allocation3 + $0x38] sm:$0xff] %v1136
        %1153 = vst [vmem:[#allocation3 + $0x40] sm:$0xff] %v1137
        %1154 = vst [vmem:[#allocation3 + $0x48] sm:$0xff] %v1138
        %1155 = vst [vmem:[#allocation3 + $0x50] sm:$0xff] %v1139
        %1156 = vst [vmem:[#allocation3 + $0x58] sm:$0xff] %v1140
        %1157 = vst [vmem:[#allocation3 + $0x60] sm:$0xff] %v1141
        %1158 = vst [vmem:[#allocation3 + $0x68] sm:$0xff] %v1142
        %1159 = vst [vmem:[#allocation3 + $0x70] sm:$0xff] %v1143
        %1160 = vst [vmem:[#allocation3 + $0x78] sm:$0xff] %v1144
        %v1161 = vld [vmem:[#allocation4] sm:$0xff]
        %v1162 = vld [vmem:[#allocation4 + $0x8] sm:$0xff]
        %v1163 = vld [vmem:[#allocation4 + $0x10] sm:$0xff]
        %v1164 = vld [vmem:[#allocation4 + $0x18] sm:$0xff]
        %v1165 = vld [vmem:[#allocation4 + $0x20] sm:$0xff]
        %v1166 = vld [vmem:[#allocation4 + $0x28] sm:$0xff]
        %v1167 = vld [vmem:[#allocation4 + $0x30] sm:$0xff]
        %v1168 = vld [vmem:[#allocation4 + $0x38] sm:$0xff]
        %v1169 = vld [vmem:[#allocation4 + $0x40] sm:$0xff]
        %v1170 = vld [vmem:[#allocation4 + $0x48] sm:$0xff]
        %v1171 = vld [vmem:[#allocation4 + $0x50] sm:$0xff]
        %v1172 = vld [vmem:[#allocation4 + $0x58] sm:$0xff]
        %v1173 = vld [vmem:[#allocation4 + $0x60] sm:$0xff]
        %v1174 = vld [vmem:[#allocation4 + $0x68] sm:$0xff]
        %v1175 = vld [vmem:[#allocation4 + $0x70] sm:$0xff]
        %v1176 = vld [vmem:[#allocation4 + $0x78] sm:$0xff]
        %v1177 = vmul.f32 %v1049, %v1049
        %v1178 = vmul.f32 %v1052, %v1052
        %v1179 = vmul.f32 %v1055, %v1055
        %v1180 = vmul.f32 %v1058, %v1058
        %v1181 = vmul.f32 %v1061, %v1061
        %v1182 = vmul.f32 %v1064, %v1064
        %v1183 = vmul.f32 %v1067, %v1067
        %v1184 = vmul.f32 %v1070, %v1070
        %v1185 = vmul.f32 %v1073, %v1073
        %v1186 = vmul.f32 %v1076, %v1076
        %v1187 = vmul.f32 %v1079, %v1079
        %v1188 = vmul.f32 %v1082, %v1082
        %v1189 = vmul.f32 %v1085, %v1085
        %v1190 = vmul.f32 %v1088, %v1088
        %v1191 = vmul.f32 %v1091, %v1091
        %v1192 = vmul.f32 %v1094, %v1094
        %v1193 = vadd.f32 %v1161, %v1177
        %v1194 = vadd.f32 %v1162, %v1178
        %v1195 = vadd.f32 %v1163, %v1179
        %v1196 = vadd.f32 %v1164, %v1180
        %v1197 = vadd.f32 %v1165, %v1181
        %v1198 = vadd.f32 %v1166, %v1182
        %v1199 = vadd.f32 %v1167, %v1183
        %v1200 = vadd.f32 %v1168, %v1184
        %v1201 = vadd.f32 %v1169, %v1185
        %v1202 = vadd.f32 %v1170, %v1186
        %v1203 = vadd.f32 %v1171, %v1187
        %v1204 = vadd.f32 %v1172, %v1188
        %v1205 = vadd.f32 %v1173, %v1189
        %v1206 = vadd.f32 %v1174, %v1190
        %v1207 = vadd.f32 %v1175, %v1191
        %v1208 = vadd.f32 %v1176, %v1192
        %1209 = vst [vmem:[#allocation4] sm:$0xff] %v1193
        %1210 = vst [vmem:[#allocation4 + $0x8] sm:$0xff] %v1194
        %1211 = vst [vmem:[#allocation4 + $0x10] sm:$0xff] %v1195
        %1212 = vst [vmem:[#allocation4 + $0x18] sm:$0xff] %v1196
        %1213 = vst [vmem:[#allocation4 + $0x20] sm:$0xff] %v1197
        %1214 = vst [vmem:[#allocation4 + $0x28] sm:$0xff] %v1198
        %1215 = vst [vmem:[#allocation4 + $0x30] sm:$0xff] %v1199
        %1216 = vst [vmem:[#allocation4 + $0x38] sm:$0xff] %v1200
        %1217 = vst [vmem:[#allocation4 + $0x40] sm:$0xff] %v1201
        %1218 = vst [vmem:[#allocation4 + $0x48] sm:$0xff] %v1202
        %1219 = vst [vmem:[#allocation4 + $0x50] sm:$0xff] %v1203
        %1220 = vst [vmem:[#allocation4 + $0x58] sm:$0xff] %v1204
        %1221 = vst [vmem:[#allocation4 + $0x60] sm:$0xff] %v1205
        %1222 = vst [vmem:[#allocation4 + $0x68] sm:$0xff] %v1206
        %1223 = vst [vmem:[#allocation4 + $0x70] sm:$0xff] %v1207
        %1224 = vst [vmem:[#allocation4 + $0x78] sm:$0xff] %v1208
        %v1225 = vld [vmem:[#allocation3] sm:$0xff]
        %v1226 = vld [vmem:[#allocation3 + $0x8] sm:$0xff]
        %v1227 = vld [vmem:[#allocation3 + $0x10] sm:$0xff]
        %v1228 = vld [vmem:[#allocation3 + $0x18] sm:$0xff]
        %v1229 = vld [vmem:[#allocation3 + $0x20] sm:$0xff]
        %v1230 = vld [vmem:[#allocation3 + $0x28] sm:$0xff]
        %v1231 = vld [vmem:[#allocation3 + $0x30] sm:$0xff]
        %v1232 = vld [vmem:[#allocation3 + $0x38] sm:$0xff]
        %v1233 = vld [vmem:[#allocation3 + $0x40] sm:$0xff]
        %v1234 = vld [vmem:[#allocation3 + $0x48] sm:$0xff]
        %v1235 = vld [vmem:[#allocation3 + $0x50] sm:$0xff]
        %v1236 = vld [vmem:[#allocation3 + $0x58] sm:$0xff]
        %v1237 = vld [vmem:[#allocation3 + $0x60] sm:$0xff]
        %v1238 = vld [vmem:[#allocation3 + $0x68] sm:$0xff]
        %v1239 = vld [vmem:[#allocation3 + $0x70] sm:$0xff]
        %v1240 = vld [vmem:[#allocation3 + $0x78] sm:$0xff]
        %1241 = vadd.xlane.f32.xlu0 %v1225
        %v1242 = vpop.xlane.xlu0 %1241
        %1243 = vadd.xlane.f32.xlu0 %v1226
        %v1244 = vpop.xlane.xlu0 %1243
        %1245 = vadd.xlane.f32.xlu0 %v1227
        %v1246 = vpop.xlane.xlu0 %1245
        %1247 = vadd.xlane.f32.xlu0 %v1228
        %v1248 = vpop.xlane.xlu0 %1247
        %1249 = vadd.xlane.f32.xlu0 %v1229
        %v1250 = vpop.xlane.xlu0 %1249
        %1251 = vadd.xlane.f32.xlu0 %v1230
        %v1252 = vpop.xlane.xlu0 %1251
        %1253 = vadd.xlane.f32.xlu0 %v1231
        %v1254 = vpop.xlane.xlu0 %1253
        %1255 = vadd.xlane.f32.xlu0 %v1232
        %v1256 = vpop.xlane.xlu0 %1255
        %1257 = vadd.xlane.f32.xlu0 %v1233
        %v1258 = vpop.xlane.xlu0 %1257
        %1259 = vadd.xlane.f32.xlu0 %v1234
        %v1260 = vpop.xlane.xlu0 %1259
        %1261 = vadd.xlane.f32.xlu0 %v1235
        %v1262 = vpop.xlane.xlu0 %1261
        %1263 = vadd.xlane.f32.xlu0 %v1236
        %v1264 = vpop.xlane.xlu0 %1263
        %1265 = vadd.xlane.f32.xlu0 %v1237
        %v1266 = vpop.xlane.xlu0 %1265
        %1267 = vadd.xlane.f32.xlu0 %v1238
        %v1268 = vpop.xlane.xlu0 %1267
        %1269 = vadd.xlane.f32.xlu0 %v1239
        %v1270 = vpop.xlane.xlu0 %1269
        %1271 = vadd.xlane.f32.xlu0 %v1240
        %v1272 = vpop.xlane.xlu0 %1271
        %vm1273 = vcmask 7168
        %1274 = vst.msk [vmem:[%s465] sm:$0xff] %vm1273, %v1242
        %1275 = vst.msk [vmem:[%s465 + $0x8] sm:$0xff] %vm1273, %v1244
        %1276 = vst.msk [vmem:[%s465 + $0x10] sm:$0xff] %vm1273, %v1246
        %1277 = vst.msk [vmem:[%s465 + $0x18] sm:$0xff] %vm1273, %v1248
        %1278 = vst.msk [vmem:[%s465 + $0x20] sm:$0xff] %vm1273, %v1250
        %1279 = vst.msk [vmem:[%s465 + $0x28] sm:$0xff] %vm1273, %v1252
        %1280 = vst.msk [vmem:[%s465 + $0x30] sm:$0xff] %vm1273, %v1254
        %1281 = vst.msk [vmem:[%s465 + $0x38] sm:$0xff] %vm1273, %v1256
        %1282 = vst.msk [vmem:[%s465 + $0x40] sm:$0xff] %vm1273, %v1258
        %1283 = vst.msk [vmem:[%s465 + $0x48] sm:$0xff] %vm1273, %v1260
        %1284 = vst.msk [vmem:[%s465 + $0x50] sm:$0xff] %vm1273, %v1262
        %1285 = vst.msk [vmem:[%s465 + $0x58] sm:$0xff] %vm1273, %v1264
        %1286 = vst.msk [vmem:[%s465 + $0x60] sm:$0xff] %vm1273, %v1266
        %1287 = vst.msk [vmem:[%s465 + $0x68] sm:$0xff] %vm1273, %v1268
        %1288 = vst.msk [vmem:[%s465 + $0x70] sm:$0xff] %vm1273, %v1270
        %1289 = vst.msk [vmem:[%s465 + $0x78] sm:$0xff] %vm1273, %v1272
        %v1290 = vld [vmem:[#allocation4] sm:$0xff]
        %v1291 = vld [vmem:[#allocation4 + $0x8] sm:$0xff]
        %v1292 = vld [vmem:[#allocation4 + $0x10] sm:$0xff]
        %v1293 = vld [vmem:[#allocation4 + $0x18] sm:$0xff]
        %v1294 = vld [vmem:[#allocation4 + $0x20] sm:$0xff]
        %v1295 = vld [vmem:[#allocation4 + $0x28] sm:$0xff]
        %v1296 = vld [vmem:[#allocation4 + $0x30] sm:$0xff]
        %v1297 = vld [vmem:[#allocation4 + $0x38] sm:$0xff]
        %v1298 = vld [vmem:[#allocation4 + $0x40] sm:$0xff]
        %v1299 = vld [vmem:[#allocation4 + $0x48] sm:$0xff]
        %v1300 = vld [vmem:[#allocation4 + $0x50] sm:$0xff]
        %v1301 = vld [vmem:[#allocation4 + $0x58] sm:$0xff]
        %v1302 = vld [vmem:[#allocation4 + $0x60] sm:$0xff]
        %v1303 = vld [vmem:[#allocation4 + $0x68] sm:$0xff]
        %v1304 = vld [vmem:[#allocation4 + $0x70] sm:$0xff]
        %v1305 = vld [vmem:[#allocation4 + $0x78] sm:$0xff]
        %1306 = vadd.xlane.f32.xlu0 %v1290
        %v1307 = vpop.xlane.xlu0 %1306
        %1308 = vadd.xlane.f32.xlu0 %v1291
        %v1309 = vpop.xlane.xlu0 %1308
        %1310 = vadd.xlane.f32.xlu0 %v1292
        %v1311 = vpop.xlane.xlu0 %1310
        %1312 = vadd.xlane.f32.xlu0 %v1293
        %v1313 = vpop.xlane.xlu0 %1312
        %1314 = vadd.xlane.f32.xlu0 %v1294
        %v1315 = vpop.xlane.xlu0 %1314
        %1316 = vadd.xlane.f32.xlu0 %v1295
        %v1317 = vpop.xlane.xlu0 %1316
        %1318 = vadd.xlane.f32.xlu0 %v1296
        %v1319 = vpop.xlane.xlu0 %1318
        %1320 = vadd.xlane.f32.xlu0 %v1297
        %v1321 = vpop.xlane.xlu0 %1320
        %1322 = vadd.xlane.f32.xlu0 %v1298
        %v1323 = vpop.xlane.xlu0 %1322
        %1324 = vadd.xlane.f32.xlu0 %v1299
        %v1325 = vpop.xlane.xlu0 %1324
        %1326 = vadd.xlane.f32.xlu0 %v1300
        %v1327 = vpop.xlane.xlu0 %1326
        %1328 = vadd.xlane.f32.xlu0 %v1301
        %v1329 = vpop.xlane.xlu0 %1328
        %1330 = vadd.xlane.f32.xlu0 %v1302
        %v1331 = vpop.xlane.xlu0 %1330
        %1332 = vadd.xlane.f32.xlu0 %v1303
        %v1333 = vpop.xlane.xlu0 %1332
        %1334 = vadd.xlane.f32.xlu0 %v1304
        %v1335 = vpop.xlane.xlu0 %1334
        %1336 = vadd.xlane.f32.xlu0 %v1305
        %v1337 = vpop.xlane.xlu0 %1336
        %1338 = vst.msk [vmem:[%s470] sm:$0xff] %vm1273, %v1307
        %1339 = vst.msk [vmem:[%s470 + $0x8] sm:$0xff] %vm1273, %v1309
        %1340 = vst.msk [vmem:[%s470 + $0x10] sm:$0xff] %vm1273, %v1311
        %1341 = vst.msk [vmem:[%s470 + $0x18] sm:$0xff] %vm1273, %v1313
        %1342 = vst.msk [vmem:[%s470 + $0x20] sm:$0xff] %vm1273, %v1315
        %1343 = vst.msk [vmem:[%s470 + $0x28] sm:$0xff] %vm1273, %v1317
        %1344 = vst.msk [vmem:[%s470 + $0x30] sm:$0xff] %vm1273, %v1319
        %1345 = vst.msk [vmem:[%s470 + $0x38] sm:$0xff] %vm1273, %v1321
        %1346 = vst.msk [vmem:[%s470 + $0x40] sm:$0xff] %vm1273, %v1323
        %1347 = vst.msk [vmem:[%s470 + $0x48] sm:$0xff] %vm1273, %v1325
        %1348 = vst.msk [vmem:[%s470 + $0x50] sm:$0xff] %vm1273, %v1327
        %1349 = vst.msk [vmem:[%s470 + $0x58] sm:$0xff] %vm1273, %v1329
        %1350 = vst.msk [vmem:[%s470 + $0x60] sm:$0xff] %vm1273, %v1331
        %1351 = vst.msk [vmem:[%s470 + $0x68] sm:$0xff] %vm1273, %v1333
        %1352 = vst.msk [vmem:[%s470 + $0x70] sm:$0xff] %vm1273, %v1335
        %1353 = vst.msk [vmem:[%s470 + $0x78] sm:$0xff] %vm1273, %v1337
        %s1354 = sand.u32 %s164, 1
        %s1355 = sand.u32 %s164, 1
        %s1356 = smul.addr %s1355, 256
        %s1357 = scalar_lea.vmem [#allocation7], %s1356
        %p1358 = scmp.lt.s32.totalorder %s20, 1
        %s1359 = scalar_select %p1358, %s20, 1
        %s1360 = smul.addr %s1359, 16
        %s1361 = smul.addr %s1360, 8
        %s1362 = scalar_lea.vmem %s7, %s1361
        %p1363 = scmp.lt.s32.totalorder %s20, 1
        %s1364 = scalar_select %p1363, %s20, 1
        %s1365 = smul.addr %s1364, 16
        %s1366 = smul.addr %s1365, 8
        %s1367 = scalar_lea.vmem %s8, %s1366
        // Predicated region
        $region121: #{vit_snn_forward.12} parent=111 // pred_check
          %p1368 = pneg %p174
        $region122: #{vit_snn_forward.12} parent=111 // pred_check_branch
          %1370 = sbr.rel (%p1368) target = $region124
        $region123: #{vit_snn_forward.12} parent=111 // pred_region
          %s1371 = smul.addr %s20, 8
          %s1372 = scalar_lea.vmem %s6, %s1371
          // Predicated region
          $region125: #{vit_snn_forward.12} parent=123 // pred_check
            _
          $region126: #{vit_snn_forward.12} parent=123 // pred_check_branch
            %1374 = sbr.rel (0) target = $region128
          $region127: #{vit_snn_forward.12} parent=123 // pred_region
            // Predicated region
            $region129: #{vit_snn_forward.12} parent=127 // pred_check
              _
            $region130: #{vit_snn_forward.12} parent=127 // pred_check_branch
              %1376 = sbr.rel (0) target = $region132
            $region131: #{vit_snn_forward.12} parent=127 // pred_region
              // Predicated region
              $region144: #{vit_snn_forward.12} parent=131 // pred_check
                _
              $region145: #{vit_snn_forward.12} parent=131 // pred_check_branch
                %1454 = sbr.rel (0) target = $region147
              $region146: #{vit_snn_forward.12} parent=131 // pred_region
                loop: start=0, step=1, limit=1
                $region148: #{vit_snn_forward.12} parent=146 // loop_pre_header
                  _
                $region149: #{vit_snn_forward.12} parent=146 // loop_header
                  %s1456 = sphi 0, %s1460
                  %p1457 = scmp.ge.s32.totalorder %s1456, 1
                  %s1461 = sphi %s1357, %s1357
                  %s1462 = sphi %s1372, %s1372
                $region150: #{vit_snn_forward.12} parent=146 // loop_header_branch
                  %1459 = sbr.rel (%p1457) target = $region154
                $region151: #{vit_snn_forward.12} parent=146 // loop_body
                  %v1463 = vld [vmem:[%s1461] sm:$0xff]
                  %1464 = vst [vmem:[%s1462] sm:$0xff] %v1463
                  %v1465 = vld [vmem:[%s1461 + $0x8] sm:$0xff]
                  %1466 = vst [vmem:[%s1462 + $0x10] sm:$0xff] %v1465
                  %v1467 = vld [vmem:[%s1461 + $0x10] sm:$0xff]
                  %1468 = vst [vmem:[%s1462 + $0x20] sm:$0xff] %v1467
                  %v1469 = vld [vmem:[%s1461 + $0x18] sm:$0xff]
                  %1470 = vst [vmem:[%s1462 + $0x30] sm:$0xff] %v1469
                  %v1471 = vld [vmem:[%s1461 + $0x20] sm:$0xff]
                  %1472 = vst [vmem:[%s1462 + $0x40] sm:$0xff] %v1471
                  %v1473 = vld [vmem:[%s1461 + $0x28] sm:$0xff]
                  %1474 = vst [vmem:[%s1462 + $0x50] sm:$0xff] %v1473
                  %v1475 = vld [vmem:[%s1461 + $0x30] sm:$0xff]
                  %1476 = vst [vmem:[%s1462 + $0x60] sm:$0xff] %v1475
                  %v1477 = vld [vmem:[%s1461 + $0x38] sm:$0xff]
                  %1478 = vst [vmem:[%s1462 + $0x70] sm:$0xff] %v1477
                  %v1479 = vld [vmem:[%s1461 + $0x40] sm:$0xff]
                  %1480 = vst [vmem:[%s1462 + $0x80] sm:$0xff] %v1479
                  %v1481 = vld [vmem:[%s1461 + $0x48] sm:$0xff]
                  %1482 = vst [vmem:[%s1462 + $0x90] sm:$0xff] %v1481
                  %v1483 = vld [vmem:[%s1461 + $0x50] sm:$0xff]
                  %1484 = vst [vmem:[%s1462 + $0xa0] sm:$0xff] %v1483
                  %v1485 = vld [vmem:[%s1461 + $0x58] sm:$0xff]
                  %1486 = vst [vmem:[%s1462 + $0xb0] sm:$0xff] %v1485
                  %v1487 = vld [vmem:[%s1461 + $0x60] sm:$0xff]
                  %1488 = vst [vmem:[%s1462 + $0xc0] sm:$0xff] %v1487
                  %v1489 = vld [vmem:[%s1461 + $0x68] sm:$0xff]
                  %1490 = vst [vmem:[%s1462 + $0xd0] sm:$0xff] %v1489
                  %v1491 = vld [vmem:[%s1461 + $0x70] sm:$0xff]
                  %1492 = vst [vmem:[%s1462 + $0xe0] sm:$0xff] %v1491
                  %v1493 = vld [vmem:[%s1461 + $0x78] sm:$0xff]
                  %1494 = vst [vmem:[%s1462 + $0xf0] sm:$0xff] %v1493
                  %v1495 = vld [vmem:[%s1461 + $0x80] sm:$0xff]
                  %1496 = vst [vmem:[%s1462 + $0x100] sm:$0xff] %v1495
                  %v1497 = vld [vmem:[%s1461 + $0x88] sm:$0xff]
                  %1498 = vst [vmem:[%s1462 + $0x110] sm:$0xff] %v1497
                  %v1499 = vld [vmem:[%s1461 + $0x90] sm:$0xff]
                  %1500 = vst [vmem:[%s1462 + $0x120] sm:$0xff] %v1499
                  %v1501 = vld [vmem:[%s1461 + $0x98] sm:$0xff]
                  %1502 = vst [vmem:[%s1462 + $0x130] sm:$0xff] %v1501
                  %v1503 = vld [vmem:[%s1461 + $0xa0] sm:$0xff]
                  %1504 = vst [vmem:[%s1462 + $0x140] sm:$0xff] %v1503
                  %v1505 = vld [vmem:[%s1461 + $0xa8] sm:$0xff]
                  %1506 = vst [vmem:[%s1462 + $0x150] sm:$0xff] %v1505
                  %v1507 = vld [vmem:[%s1461 + $0xb0] sm:$0xff]
                  %1508 = vst [vmem:[%s1462 + $0x160] sm:$0xff] %v1507
                  %v1509 = vld [vmem:[%s1461 + $0xb8] sm:$0xff]
                  %1510 = vst [vmem:[%s1462 + $0x170] sm:$0xff] %v1509
                  %v1511 = vld [vmem:[%s1461 + $0xc0] sm:$0xff]
                  %1512 = vst [vmem:[%s1462 + $0x180] sm:$0xff] %v1511
                  %v1513 = vld [vmem:[%s1461 + $0xc8] sm:$0xff]
                  %1514 = vst [vmem:[%s1462 + $0x190] sm:$0xff] %v1513
                  %v1515 = vld [vmem:[%s1461 + $0xd0] sm:$0xff]
                  %1516 = vst [vmem:[%s1462 + $0x1a0] sm:$0xff] %v1515
                  %v1517 = vld [vmem:[%s1461 + $0xd8] sm:$0xff]
                  %1518 = vst [vmem:[%s1462 + $0x1b0] sm:$0xff] %v1517
                  %v1519 = vld [vmem:[%s1461 + $0xe0] sm:$0xff]
                  %1520 = vst [vmem:[%s1462 + $0x1c0] sm:$0xff] %v1519
                  %v1521 = vld [vmem:[%s1461 + $0xe8] sm:$0xff]
                  %1522 = vst [vmem:[%s1462 + $0x1d0] sm:$0xff] %v1521
                  %v1523 = vld [vmem:[%s1461 + $0xf0] sm:$0xff]
                  %1524 = vst [vmem:[%s1462 + $0x1e0] sm:$0xff] %v1523
                  %v1525 = vld [vmem:[%s1461 + $0xf8] sm:$0xff]
                  %1526 = vst [vmem:[%s1462 + $0x1f0] sm:$0xff] %v1525
                $region152: #{vit_snn_forward.12} parent=146 // loop_footer
                  %s1460 = sadd.s32 1, %s1456
                $region153: #{vit_snn_forward.12} parent=146 // loop_footer_branch
                  %1455 = sbr.rel target = $region149
                $region154: #{vit_snn_forward.12} parent=146 // loop_exit
                  _
              $region147: #{vit_snn_forward.12} parent=131 // pred_fallthru
                _
              // Predicated region
              $region155: #{vit_snn_forward.12} parent=131 // pred_check
                _
              $region156: #{vit_snn_forward.12} parent=131 // pred_check_branch
                %1528 = sbr.rel target = $region158
              $region157: #{vit_snn_forward.12} parent=131 // pred_region
                _
              $region158: #{vit_snn_forward.12} parent=131 // pred_fallthru
                _
            $region132: #{vit_snn_forward.12} parent=127 // pred_fallthru
              _
            // Predicated region
            $region133: #{vit_snn_forward.12} parent=127 // pred_check
              _
            $region134: #{vit_snn_forward.12} parent=127 // pred_check_branch
              %1378 = sbr.rel target = $region136
            $region135: #{vit_snn_forward.12} parent=127 // pred_region
              %s1380 = ssub.s32 256, 1
              loop: start=0, step=1, limit=1
              $region137: #{vit_snn_forward.12} parent=135 // loop_pre_header
                _
              $region138: #{vit_snn_forward.12} parent=135 // loop_header
                %s1382 = sphi 0, %s1386
                %p1383 = scmp.ge.s32.totalorder %s1382, 1
                %s1387 = sphi %s1357, %s1357
                %s1388 = sphi %s1372, %s1372
              $region139: #{vit_snn_forward.12} parent=135 // loop_header_branch
                %1385 = sbr.rel (%p1383) target = $region143
              $region140: #{vit_snn_forward.12} parent=135 // loop_body
                %v1389 = vld [vmem:[%s1387] sm:%s1380]
                %1390 = vst [vmem:[%s1388] sm:%s1380] %v1389
                %v1391 = vld [vmem:[%s1387 + $0x8] sm:%s1380]
                %1392 = vst [vmem:[%s1388 + $0x10] sm:%s1380] %v1391
                %v1393 = vld [vmem:[%s1387 + $0x10] sm:%s1380]
                %1394 = vst [vmem:[%s1388 + $0x20] sm:%s1380] %v1393
                %v1395 = vld [vmem:[%s1387 + $0x18] sm:%s1380]
                %1396 = vst [vmem:[%s1388 + $0x30] sm:%s1380] %v1395
                %v1397 = vld [vmem:[%s1387 + $0x20] sm:%s1380]
                %1398 = vst [vmem:[%s1388 + $0x40] sm:%s1380] %v1397
                %v1399 = vld [vmem:[%s1387 + $0x28] sm:%s1380]
                %1400 = vst [vmem:[%s1388 + $0x50] sm:%s1380] %v1399
                %v1401 = vld [vmem:[%s1387 + $0x30] sm:%s1380]
                %1402 = vst [vmem:[%s1388 + $0x60] sm:%s1380] %v1401
                %v1403 = vld [vmem:[%s1387 + $0x38] sm:%s1380]
                %1404 = vst [vmem:[%s1388 + $0x70] sm:%s1380] %v1403
                %v1405 = vld [vmem:[%s1387 + $0x40] sm:%s1380]
                %1406 = vst [vmem:[%s1388 + $0x80] sm:%s1380] %v1405
                %v1407 = vld [vmem:[%s1387 + $0x48] sm:%s1380]
                %1408 = vst [vmem:[%s1388 + $0x90] sm:%s1380] %v1407
                %v1409 = vld [vmem:[%s1387 + $0x50] sm:%s1380]
                %1410 = vst [vmem:[%s1388 + $0xa0] sm:%s1380] %v1409
                %v1411 = vld [vmem:[%s1387 + $0x58] sm:%s1380]
                %1412 = vst [vmem:[%s1388 + $0xb0] sm:%s1380] %v1411
                %v1413 = vld [vmem:[%s1387 + $0x60] sm:%s1380]
                %1414 = vst [vmem:[%s1388 + $0xc0] sm:%s1380] %v1413
                %v1415 = vld [vmem:[%s1387 + $0x68] sm:%s1380]
                %1416 = vst [vmem:[%s1388 + $0xd0] sm:%s1380] %v1415
                %v1417 = vld [vmem:[%s1387 + $0x70] sm:%s1380]
                %1418 = vst [vmem:[%s1388 + $0xe0] sm:%s1380] %v1417
                %v1419 = vld [vmem:[%s1387 + $0x78] sm:%s1380]
                %1420 = vst [vmem:[%s1388 + $0xf0] sm:%s1380] %v1419
                %v1421 = vld [vmem:[%s1387 + $0x80] sm:%s1380]
                %1422 = vst [vmem:[%s1388 + $0x100] sm:%s1380] %v1421
                %v1423 = vld [vmem:[%s1387 + $0x88] sm:%s1380]
                %1424 = vst [vmem:[%s1388 + $0x110] sm:%s1380] %v1423
                %v1425 = vld [vmem:[%s1387 + $0x90] sm:%s1380]
                %1426 = vst [vmem:[%s1388 + $0x120] sm:%s1380] %v1425
                %v1427 = vld [vmem:[%s1387 + $0x98] sm:%s1380]
                %1428 = vst [vmem:[%s1388 + $0x130] sm:%s1380] %v1427
                %v1429 = vld [vmem:[%s1387 + $0xa0] sm:%s1380]
                %1430 = vst [vmem:[%s1388 + $0x140] sm:%s1380] %v1429
                %v1431 = vld [vmem:[%s1387 + $0xa8] sm:%s1380]
                %1432 = vst [vmem:[%s1388 + $0x150] sm:%s1380] %v1431
                %v1433 = vld [vmem:[%s1387 + $0xb0] sm:%s1380]
                %1434 = vst [vmem:[%s1388 + $0x160] sm:%s1380] %v1433
                %v1435 = vld [vmem:[%s1387 + $0xb8] sm:%s1380]
                %1436 = vst [vmem:[%s1388 + $0x170] sm:%s1380] %v1435
                %v1437 = vld [vmem:[%s1387 + $0xc0] sm:%s1380]
                %1438 = vst [vmem:[%s1388 + $0x180] sm:%s1380] %v1437
                %v1439 = vld [vmem:[%s1387 + $0xc8] sm:%s1380]
                %1440 = vst [vmem:[%s1388 + $0x190] sm:%s1380] %v1439
                %v1441 = vld [vmem:[%s1387 + $0xd0] sm:%s1380]
                %1442 = vst [vmem:[%s1388 + $0x1a0] sm:%s1380] %v1441
                %v1443 = vld [vmem:[%s1387 + $0xd8] sm:%s1380]
                %1444 = vst [vmem:[%s1388 + $0x1b0] sm:%s1380] %v1443
                %v1445 = vld [vmem:[%s1387 + $0xe0] sm:%s1380]
                %1446 = vst [vmem:[%s1388 + $0x1c0] sm:%s1380] %v1445
                %v1447 = vld [vmem:[%s1387 + $0xe8] sm:%s1380]
                %1448 = vst [vmem:[%s1388 + $0x1d0] sm:%s1380] %v1447
                %v1449 = vld [vmem:[%s1387 + $0xf0] sm:%s1380]
                %1450 = vst [vmem:[%s1388 + $0x1e0] sm:%s1380] %v1449
                %v1451 = vld [vmem:[%s1387 + $0xf8] sm:%s1380]
                %1452 = vst [vmem:[%s1388 + $0x1f0] sm:%s1380] %v1451
              $region141: #{vit_snn_forward.12} parent=135 // loop_footer
                %s1386 = sadd.s32 1, %s1382
              $region142: #{vit_snn_forward.12} parent=135 // loop_footer_branch
                %1381 = sbr.rel target = $region138
              $region143: #{vit_snn_forward.12} parent=135 // loop_exit
                _
            $region136: #{vit_snn_forward.12} parent=127 // pred_fallthru
              _
          $region128: #{vit_snn_forward.12} parent=123 // pred_fallthru
            _
          %1529 = vnop
        $region124: #{vit_snn_forward.12} parent=111 // pred_fallthru
          _
        // Predicated region
        $region159: #{vit_snn_forward.12} parent=111 // pred_check
          %p1530 = pneg %p200
        $region160: #{vit_snn_forward.12} parent=111 // pred_check_branch
          %1532 = sbr.rel (%p1530) target = $region162
        $region161: #{vit_snn_forward.12} parent=111 // pred_region
          _
        $region162: #{vit_snn_forward.12} parent=111 // pred_fallthru
          _
        // Predicated region
        $region163: #{vit_snn_forward.12} parent=111 // pred_check
          %p1533 = pneg %p226
        $region164: #{vit_snn_forward.12} parent=111 // pred_check_branch
          %1535 = sbr.rel (%p1533) target = $region166
        $region165: #{vit_snn_forward.12} parent=111 // pred_region
          _
        $region166: #{vit_snn_forward.12} parent=111 // pred_fallthru
          _
      $region112: #{vit_snn_forward.12} parent=5 // pred_fallthru
        _
      %p1536 = scmp.le.s32.totalorder 2, %s15
      // Predicated region
      $region167: #{vit_snn_forward.12} parent=5 // pred_check
        %p1537 = pneg %p1536
      $region168: #{vit_snn_forward.12} parent=5 // pred_check_branch
        %1539 = sbr.rel (%p1537) target = $region170
      $region169: #{vit_snn_forward.12} parent=5 // pred_region
        %s1540 = ssub.s32 %s15, 2
        // Predicated region
        $region171: #{vit_snn_forward.12} parent=169 // pred_check
          %p1541 = pneg %p180
        $region172: #{vit_snn_forward.12} parent=169 // pred_check_branch
          %1543 = sbr.rel (%p1541) target = $region174
        $region173: #{vit_snn_forward.12} parent=169 // pred_region
          %s1544 = sand.u32 %s165, 1
          %s1545 = sand.u32 %s165, 1
          %s1546 = smul.addr %s1545, 256
          %s1547 = scalar_lea.vmem [#allocation7], %s1546
        $region174: #{vit_snn_forward.12} parent=169 // pred_fallthru
          _
        // Predicated region
        $region175: #{vit_snn_forward.12} parent=169 // pred_check
          %p1548 = pneg %p206
        $region176: #{vit_snn_forward.12} parent=169 // pred_check_branch
          %1550 = sbr.rel (%p1548) target = $region178
        $region177: #{vit_snn_forward.12} parent=169 // pred_region
          %p1551 = scmp.lt.s32.totalorder %s21, 1
          %s1552 = scalar_select %p1551, %s21, 1
          %s1553 = smul.addr %s1552, 16
          %s1554 = smul.addr %s1553, 8
          %s1555 = scalar_lea.vmem %s7, %s1554
        $region178: #{vit_snn_forward.12} parent=169 // pred_fallthru
          _
        // Predicated region
        $region179: #{vit_snn_forward.12} parent=169 // pred_check
          %p1556 = pneg %p232
        $region180: #{vit_snn_forward.12} parent=169 // pred_check_branch
          %1558 = sbr.rel (%p1556) target = $region182
        $region181: #{vit_snn_forward.12} parent=169 // pred_region
          %p1559 = scmp.lt.s32.totalorder %s21, 1
          %s1560 = scalar_select %p1559, %s21, 1
          %s1561 = smul.addr %s1560, 16
          %s1562 = smul.addr %s1561, 8
          %s1563 = scalar_lea.vmem %s8, %s1562
        $region182: #{vit_snn_forward.12} parent=169 // pred_fallthru
          _
      $region170: #{vit_snn_forward.12} parent=5 // pred_fallthru
        _
    $region6: #{vit_snn_forward.12} parent=1 // loop_footer
      %s19 = sadd.s32 1, %s15
    $region7: #{vit_snn_forward.12} parent=1 // loop_footer_branch
      %14 = sbr.rel target = $region3
    $region8: #{vit_snn_forward.12} parent=1 // loop_exit
      _

// kernel: vit_snn_forward.11
$region0: #{vit_snn_forward.11}
  #allocation0 [shape = 'u32[]', space=smem, size = 0x4, offset = 0x4, fixed_abs, tag = 'smem constant byte address 0x4 - core index']
  #allocation1 [shape = 'u32[72,128]{1,0:T(1,128)}', space=vmem, size = 0x9000, scoped, tag = 'internal scratch']
  #allocation2 [shape = 'f32[96,128]{1,0:T(8,128)}', space=vmem, size = 0xc000, scoped, tag = 'scratch operand']
  #allocation3 [shape = 'f32[32,128]{1,0:T(8,128)}', space=vmem, size = 0x4000, scoped, tag = 'scratch operand']
  #allocation4 [shape = 'f32[32,128]{1,0:T(8,128)}', space=vmem, size = 0x4000, scoped, tag = 'scratch operand']
  #allocation5 [shape = 'f32[32,128]{1,0:T(8,128)}', space=vmem, size = 0x4000, scoped, tag = 'scratch operand']
  %s0 = inlined_call_operand.vmem [shape: f32[2,96,256], index: 0, kind: input, shape index: {}]
  %s1 = inlined_call_operand.vmem [shape: f32[96,1], index: 1, kind: input, shape index: {}]
  %s2 = inlined_call_operand.vmem [shape: f32[96,1], index: 2, kind: input, shape index: {}]
  %s3 = inlined_call_operand.vmem [shape: f32[32,32], index: 3, kind: input, shape index: {}]
  %s4 = inlined_call_operand.vmem [shape: f32[32,1], index: 4, kind: input, shape index: {}]
  %s5 = inlined_call_operand.vmem [shape: f32[2,32,256], index: 5, kind: output, shape index: {0}]
  %s6 = inlined_call_operand.vmem [shape: f32[2,32,1], index: 6, kind: output, shape index: {1}]
  %s7 = inlined_call_operand.vmem [shape: f32[2,32,1], index: 7, kind: output, shape index: {2}]
  %8 = xla_tuple %s5, %s6, %s7
  %s9 = sld [smem:[#allocation0]]
  $region141: #{vit_snn_forward.11} parent=0
    _
  %s11 = ssub.s32 1, %s9
  %s12 = scalar_select 0, %s11, %s9
  $region1: #{vit_snn_forward.11} parent=0
    #allocation6 [shape = 'u8[196608]{0}', space=vmem, size = 0x30000, scoped, tag = 'input window, operand 0']
    #allocation7 [shape = 'u8[65536]{0}', space=vmem, size = 0x10000, scoped, tag = 'output window, operand 0']
    loop: start=0, step=1, limit=4
    $region2: #{vit_snn_forward.11} parent=1 // loop_pre_header
      _
    $region3: #{vit_snn_forward.11} parent=1 // loop_header
      %s14 = sphi 0, %s18
      %p15 = scmp.ge.s32.totalorder %s14, 4
      %s24 = sphi 0, %s26
      %s27 = sphi 0, %s24
      %s28 = sphi 0, %s27
      %s44 = sphi 0, %s28
      %s48 = sphi 0, %s48
      %s50 = sphi 0, %s48
      %s51 = sphi 0, %s50
      %s65 = sphi 0, %s51
      %s69 = sphi 0, %s69
      %s71 = sphi 0, %s69
      %s72 = sphi 0, %s71
      %s86 = sphi 0, %s72
      %s90 = sphi 0, %s90
      %s92 = sphi 0, %s90
      %s93 = sphi 0, %s92
      %s107 = sphi 0, %s93
      %s111 = sphi 0, %s111
      %s113 = sphi 0, %s111
      %s114 = sphi 0, %s113
      %s128 = sphi 0, %s114
      %s134 = sphi 0, %s136
      %s137 = sphi 0, %s134
      %s138 = sphi 0, %s137
      %s154 = sphi 0, %s138
      %s160 = sphi 0, %s162
      %s163 = sphi 0, %s160
      %s164 = sphi 0, %s163
      %s180 = sphi 0, %s164
      %s186 = sphi 0, %s188
      %s189 = sphi 0, %s186
      %s190 = sphi 0, %s189
      %s206 = sphi 0, %s190
    $region4: #{vit_snn_forward.11} parent=1 // loop_header_branch
      %17 = sbr.rel (%p15) target = $region8
    $region5: #{vit_snn_forward.11} parent=1 // loop_body
      %s19 = ssub.s32 %s14, 1
      %s20 = ssub.s32 %s14, 2
      %s21 = sadd.s32 %s14, 1
      %s22 = ssub.s32 %s14, %s21
      %p23 = scmp.eq.s32.totalorder %s22, 0
      %s25 = sadd.s32 %s24, 1
      %s26 = scalar_select %p23, %s24, %s25
      %p29 = pneg %p23
      %p30 = scmp.eq.s32.totalorder %s14, 1
      %p31 = por %p29, %p30
      %p32 = scmp.ne.s32.totalorder %s24, %s27
      %p33 = scmp.eq.s32.totalorder %s14, 0
      %p34 = por %p32, %p33
      %p35 = scmp.ne.s32.totalorder %s24, %s27
      %p36 = scmp.eq.s32.totalorder %s19, 1
      %p37 = por %p35, %p36
      %p38 = scmp.ne.s32.totalorder %s27, %s28
      %p39 = scmp.eq.s32.totalorder %s19, 0
      %p40 = por %p38, %p39
      %p41 = scmp.ne.s32.totalorder %s27, %s28
      %p42 = scmp.eq.s32.totalorder %s20, 1
      %p43 = por %p41, %p42
      %p45 = scmp.ne.s32.totalorder %s28, %s44
      %p46 = scmp.eq.s32.totalorder %s20, 0
      %p47 = por %p45, %p46
      %s49 = sadd.s32 %s48, 1
      %p52 = scmp.eq.s32.totalorder %s14, 1
      %p53 = scmp.ne.s32.totalorder %s48, %s50
      %p54 = scmp.eq.s32.totalorder %s14, 0
      %p55 = por %p53, %p54
      %p56 = scmp.ne.s32.totalorder %s48, %s50
      %p57 = scmp.eq.s32.totalorder %s19, 1
      %p58 = por %p56, %p57
      %p59 = scmp.ne.s32.totalorder %s50, %s51
      %p60 = scmp.eq.s32.totalorder %s19, 0
      %p61 = por %p59, %p60
      %p62 = scmp.ne.s32.totalorder %s50, %s51
      %p63 = scmp.eq.s32.totalorder %s20, 1
      %p64 = por %p62, %p63
      %p66 = scmp.ne.s32.totalorder %s51, %s65
      %p67 = scmp.eq.s32.totalorder %s20, 0
      %p68 = por %p66, %p67
      %s70 = sadd.s32 %s69, 1
      %p73 = scmp.eq.s32.totalorder %s14, 1
      %p74 = scmp.ne.s32.totalorder %s69, %s71
      %p75 = scmp.eq.s32.totalorder %s14, 0
      %p76 = por %p74, %p75
      %p77 = scmp.ne.s32.totalorder %s69, %s71
      %p78 = scmp.eq.s32.totalorder %s19, 1
      %p79 = por %p77, %p78
      %p80 = scmp.ne.s32.totalorder %s71, %s72
      %p81 = scmp.eq.s32.totalorder %s19, 0
      %p82 = por %p80, %p81
      %p83 = scmp.ne.s32.totalorder %s71, %s72
      %p84 = scmp.eq.s32.totalorder %s20, 1
      %p85 = por %p83, %p84
      %p87 = scmp.ne.s32.totalorder %s72, %s86
      %p88 = scmp.eq.s32.totalorder %s20, 0
      %p89 = por %p87, %p88
      %s91 = sadd.s32 %s90, 1
      %p94 = scmp.eq.s32.totalorder %s14, 1
      %p95 = scmp.ne.s32.totalorder %s90, %s92
      %p96 = scmp.eq.s32.totalorder %s14, 0
      %p97 = por %p95, %p96
      %p98 = scmp.ne.s32.totalorder %s90, %s92
      %p99 = scmp.eq.s32.totalorder %s19, 1
      %p100 = por %p98, %p99
      %p101 = scmp.ne.s32.totalorder %s92, %s93
      %p102 = scmp.eq.s32.totalorder %s19, 0
      %p103 = por %p101, %p102
      %p104 = scmp.ne.s32.totalorder %s92, %s93
      %p105 = scmp.eq.s32.totalorder %s20, 1
      %p106 = por %p104, %p105
      %p108 = scmp.ne.s32.totalorder %s93, %s107
      %p109 = scmp.eq.s32.totalorder %s20, 0
      %p110 = por %p108, %p109
      %s112 = sadd.s32 %s111, 1
      %p115 = scmp.eq.s32.totalorder %s14, 1
      %p116 = scmp.ne.s32.totalorder %s111, %s113
      %p117 = scmp.eq.s32.totalorder %s14, 0
      %p118 = por %p116, %p117
      %p119 = scmp.ne.s32.totalorder %s111, %s113
      %p120 = scmp.eq.s32.totalorder %s19, 1
      %p121 = por %p119, %p120
      %p122 = scmp.ne.s32.totalorder %s113, %s114
      %p123 = scmp.eq.s32.totalorder %s19, 0
      %p124 = por %p122, %p123
      %p125 = scmp.ne.s32.totalorder %s113, %s114
      %p126 = scmp.eq.s32.totalorder %s20, 1
      %p127 = por %p125, %p126
      %p129 = scmp.ne.s32.totalorder %s114, %s128
      %p130 = scmp.eq.s32.totalorder %s20, 0
      %p131 = por %p129, %p130
      %s132 = ssub.s32 %s14, %s21
      %p133 = scmp.eq.s32.totalorder %s132, 0
      %s135 = sadd.s32 %s134, 1
      %s136 = scalar_select %p133, %s134, %s135
      %p139 = pneg %p133
      %p140 = scmp.eq.s32.totalorder %s14, 1
      %p141 = por %p139, %p140
      %p142 = scmp.ne.s32.totalorder %s134, %s137
      %p143 = scmp.eq.s32.totalorder %s14, 0
      %p144 = por %p142, %p143
      %p145 = scmp.ne.s32.totalorder %s134, %s137
      %p146 = scmp.eq.s32.totalorder %s19, 1
      %p147 = por %p145, %p146
      %p148 = scmp.ne.s32.totalorder %s137, %s138
      %p149 = scmp.eq.s32.totalorder %s19, 0
      %p150 = por %p148, %p149
      %p151 = scmp.ne.s32.totalorder %s137, %s138
      %p152 = scmp.eq.s32.totalorder %s20, 1
      %p153 = por %p151, %p152
      %p155 = scmp.ne.s32.totalorder %s138, %s154
      %p156 = scmp.eq.s32.totalorder %s20, 0
      %p157 = por %p155, %p156
      %s158 = ssub.s32 %s14, %s21
      %p159 = scmp.eq.s32.totalorder %s158, 0
      %s161 = sadd.s32 %s160, 1
      %s162 = scalar_select %p159, %s160, %s161
      %p165 = pneg %p159
      %p166 = scmp.eq.s32.totalorder %s14, 1
      %p167 = por %p165, %p166
      %p168 = scmp.ne.s32.totalorder %s160, %s163
      %p169 = scmp.eq.s32.totalorder %s14, 0
      %p170 = por %p168, %p169
      %p171 = scmp.ne.s32.totalorder %s160, %s163
      %p172 = scmp.eq.s32.totalorder %s19, 1
      %p173 = por %p171, %p172
      %p174 = scmp.ne.s32.totalorder %s163, %s164
      %p175 = scmp.eq.s32.totalorder %s19, 0
      %p176 = por %p174, %p175
      %p177 = scmp.ne.s32.totalorder %s163, %s164
      %p178 = scmp.eq.s32.totalorder %s20, 1
      %p179 = por %p177, %p178
      %p181 = scmp.ne.s32.totalorder %s164, %s180
      %p182 = scmp.eq.s32.totalorder %s20, 0
      %p183 = por %p181, %p182
      %s184 = ssub.s32 %s14, %s21
      %p185 = scmp.eq.s32.totalorder %s184, 0
      %s187 = sadd.s32 %s186, 1
      %s188 = scalar_select %p185, %s186, %s187
      %p191 = pneg %p185
      %p192 = scmp.eq.s32.totalorder %s14, 1
      %p193 = por %p191, %p192
      %p194 = scmp.ne.s32.totalorder %s186, %s189
      %p195 = scmp.eq.s32.totalorder %s14, 0
      %p196 = por %p194, %p195
      %p197 = scmp.ne.s32.totalorder %s186, %s189
      %p198 = scmp.eq.s32.totalorder %s19, 1
      %p199 = por %p197, %p198
      %p200 = scmp.ne.s32.totalorder %s189, %s190
      %p201 = scmp.eq.s32.totalorder %s19, 0
      %p202 = por %p200, %p201
      %p203 = scmp.ne.s32.totalorder %s189, %s190
      %p204 = scmp.eq.s32.totalorder %s20, 1
      %p205 = por %p203, %p204
      %p207 = scmp.ne.s32.totalorder %s190, %s206
      %p208 = scmp.eq.s32.totalorder %s20, 0
      %p209 = por %p207, %p208
      %p210 = scmp.le.s32.totalorder 1, %s14
      %p211 = scmp.lt.s32.totalorder %s14, 3
      %p212 = pnand %p210, %p211
      %p213 = pneg %p212
      // Predicated region
      $region9: #{vit_snn_forward.11} parent=5 // pred_check
        _
      $region10: #{vit_snn_forward.11} parent=5 // pred_check_branch
        %215 = sbr.rel (%p212) target = $region12
      $region11: #{vit_snn_forward.11} parent=5 // pred_region
        %s216 = ssub.s32 %s14, 1
        // Predicated region
        $region13: #{vit_snn_forward.11} parent=11 // pred_check
          %p217 = pneg %p61
        $region14: #{vit_snn_forward.11} parent=11 // pred_check_branch
          %219 = sbr.rel (%p217) target = $region16
        $region15: #{vit_snn_forward.11} parent=11 // pred_region
          _
        $region16: #{vit_snn_forward.11} parent=11 // pred_fallthru
          _
        // Predicated region
        $region17: #{vit_snn_forward.11} parent=11 // pred_check
          %p220 = pneg %p82
        $region18: #{vit_snn_forward.11} parent=11 // pred_check_branch
          %222 = sbr.rel (%p220) target = $region20
        $region19: #{vit_snn_forward.11} parent=11 // pred_region
          _
        $region20: #{vit_snn_forward.11} parent=11 // pred_fallthru
          _
        // Predicated region
        $region21: #{vit_snn_forward.11} parent=11 // pred_check
          %p223 = pneg %p103
        $region22: #{vit_snn_forward.11} parent=11 // pred_check_branch
          %225 = sbr.rel (%p223) target = $region24
        $region23: #{vit_snn_forward.11} parent=11 // pred_region
          _
        $region24: #{vit_snn_forward.11} parent=11 // pred_fallthru
          _
        // Predicated region
        $region25: #{vit_snn_forward.11} parent=11 // pred_check
          %p226 = pneg %p124
        $region26: #{vit_snn_forward.11} parent=11 // pred_check_branch
          %228 = sbr.rel (%p226) target = $region28
        $region27: #{vit_snn_forward.11} parent=11 // pred_region
          _
        $region28: #{vit_snn_forward.11} parent=11 // pred_fallthru
          _
      $region12: #{vit_snn_forward.11} parent=5 // pred_fallthru
        _
      %p229 = scmp.lt.s32.totalorder %s14, 2
      // Predicated region
      $region29: #{vit_snn_forward.11} parent=5 // pred_check
        %p230 = pneg %p229
      $region30: #{vit_snn_forward.11} parent=5 // pred_check_branch
        %232 = sbr.rel (%p230) target = $region32
      $region31: #{vit_snn_forward.11} parent=5 // pred_region
        // Predicated region
        $region33: #{vit_snn_forward.11} parent=31 // pred_check
          %p233 = pneg %p34
        $region34: #{vit_snn_forward.11} parent=31 // pred_check_branch
          %235 = sbr.rel (%p233) target = $region36
        $region35: #{vit_snn_forward.11} parent=31 // pred_region
          %s236 = sand.u32 %s24, 1
          %s237 = sand.u32 %s24, 1
          %s238 = smul.addr %s237, 192
          %s239 = scalar_lea.vmem [#allocation6], %s238
          %s240 = smul.addr %s14, 8
          %s241 = scalar_lea.vmem %s0, %s240
          // Predicated region
          $region37: #{vit_snn_forward.11} parent=35 // pred_check
            _
          $region38: #{vit_snn_forward.11} parent=35 // pred_check_branch
            %243 = sbr.rel (0) target = $region40
          $region39: #{vit_snn_forward.11} parent=35 // pred_region
            // Predicated region
            $region41: #{vit_snn_forward.11} parent=39 // pred_check
              _
            $region42: #{vit_snn_forward.11} parent=39 // pred_check_branch
              %245 = sbr.rel (0) target = $region44
            $region43: #{vit_snn_forward.11} parent=39 // pred_region
              // Predicated region
              $region56: #{vit_snn_forward.11} parent=43 // pred_check
                _
              $region57: #{vit_snn_forward.11} parent=43 // pred_check_branch
                %307 = sbr.rel (0) target = $region59
              $region58: #{vit_snn_forward.11} parent=43 // pred_region
                loop: start=0, step=1, limit=1
                $region60: #{vit_snn_forward.11} parent=58 // loop_pre_header
                  _
                $region61: #{vit_snn_forward.11} parent=58 // loop_header
                  %s309 = sphi 0, %s313
                  %p310 = scmp.ge.s32.totalorder %s309, 1
                  %s314 = sphi %s241, %s241
                  %s315 = sphi %s239, %s239
                $region62: #{vit_snn_forward.11} parent=58 // loop_header_branch
                  %312 = sbr.rel (%p310) target = $region66
                $region63: #{vit_snn_forward.11} parent=58 // loop_body
                  %v316 = vld [vmem:[%s314] sm:$0xff]
                  %317 = vst [vmem:[%s315] sm:$0xff] %v316
                  %v318 = vld [vmem:[%s314 + $0x10] sm:$0xff]
                  %319 = vst [vmem:[%s315 + $0x8] sm:$0xff] %v318
                  %v320 = vld [vmem:[%s314 + $0x20] sm:$0xff]
                  %321 = vst [vmem:[%s315 + $0x10] sm:$0xff] %v320
                  %v322 = vld [vmem:[%s314 + $0x30] sm:$0xff]
                  %323 = vst [vmem:[%s315 + $0x18] sm:$0xff] %v322
                  %v324 = vld [vmem:[%s314 + $0x40] sm:$0xff]
                  %325 = vst [vmem:[%s315 + $0x20] sm:$0xff] %v324
                  %v326 = vld [vmem:[%s314 + $0x50] sm:$0xff]
                  %327 = vst [vmem:[%s315 + $0x28] sm:$0xff] %v326
                  %v328 = vld [vmem:[%s314 + $0x60] sm:$0xff]
                  %329 = vst [vmem:[%s315 + $0x30] sm:$0xff] %v328
                  %v330 = vld [vmem:[%s314 + $0x70] sm:$0xff]
                  %331 = vst [vmem:[%s315 + $0x38] sm:$0xff] %v330
                  %v332 = vld [vmem:[%s314 + $0x80] sm:$0xff]
                  %333 = vst [vmem:[%s315 + $0x40] sm:$0xff] %v332
                  %v334 = vld [vmem:[%s314 + $0x90] sm:$0xff]
                  %335 = vst [vmem:[%s315 + $0x48] sm:$0xff] %v334
                  %v336 = vld [vmem:[%s314 + $0xa0] sm:$0xff]
                  %337 = vst [vmem:[%s315 + $0x50] sm:$0xff] %v336
                  %v338 = vld [vmem:[%s314 + $0xb0] sm:$0xff]
                  %339 = vst [vmem:[%s315 + $0x58] sm:$0xff] %v338
                  %v340 = vld [vmem:[%s314 + $0xc0] sm:$0xff]
                  %341 = vst [vmem:[%s315 + $0x60] sm:$0xff] %v340
                  %v342 = vld [vmem:[%s314 + $0xd0] sm:$0xff]
                  %343 = vst [vmem:[%s315 + $0x68] sm:$0xff] %v342
                  %v344 = vld [vmem:[%s314 + $0xe0] sm:$0xff]
                  %345 = vst [vmem:[%s315 + $0x70] sm:$0xff] %v344
                  %v346 = vld [vmem:[%s314 + $0xf0] sm:$0xff]
                  %347 = vst [vmem:[%s315 + $0x78] sm:$0xff] %v346
                  %v348 = vld [vmem:[%s314 + $0x100] sm:$0xff]
                  %349 = vst [vmem:[%s315 + $0x80] sm:$0xff] %v348
                  %v350 = vld [vmem:[%s314 + $0x110] sm:$0xff]
                  %351 = vst [vmem:[%s315 + $0x88] sm:$0xff] %v350
                  %v352 = vld [vmem:[%s314 + $0x120] sm:$0xff]
                  %353 = vst [vmem:[%s315 + $0x90] sm:$0xff] %v352
                  %v354 = vld [vmem:[%s314 + $0x130] sm:$0xff]
                  %355 = vst [vmem:[%s315 + $0x98] sm:$0xff] %v354
                  %v356 = vld [vmem:[%s314 + $0x140] sm:$0xff]
                  %357 = vst [vmem:[%s315 + $0xa0] sm:$0xff] %v356
                  %v358 = vld [vmem:[%s314 + $0x150] sm:$0xff]
                  %359 = vst [vmem:[%s315 + $0xa8] sm:$0xff] %v358
                  %v360 = vld [vmem:[%s314 + $0x160] sm:$0xff]
                  %361 = vst [vmem:[%s315 + $0xb0] sm:$0xff] %v360
                  %v362 = vld [vmem:[%s314 + $0x170] sm:$0xff]
                  %363 = vst [vmem:[%s315 + $0xb8] sm:$0xff] %v362
                $region64: #{vit_snn_forward.11} parent=58 // loop_footer
                  %s313 = sadd.s32 1, %s309
                $region65: #{vit_snn_forward.11} parent=58 // loop_footer_branch
                  %308 = sbr.rel target = $region61
                $region66: #{vit_snn_forward.11} parent=58 // loop_exit
                  _
              $region59: #{vit_snn_forward.11} parent=43 // pred_fallthru
                _
              // Predicated region
              $region67: #{vit_snn_forward.11} parent=43 // pred_check
                _
              $region68: #{vit_snn_forward.11} parent=43 // pred_check_branch
                %365 = sbr.rel target = $region70
              $region69: #{vit_snn_forward.11} parent=43 // pred_region
                _
              $region70: #{vit_snn_forward.11} parent=43 // pred_fallthru
                _
            $region44: #{vit_snn_forward.11} parent=39 // pred_fallthru
              _
            // Predicated region
            $region45: #{vit_snn_forward.11} parent=39 // pred_check
              _
            $region46: #{vit_snn_forward.11} parent=39 // pred_check_branch
              %247 = sbr.rel target = $region48
            $region47: #{vit_snn_forward.11} parent=39 // pred_region
              %s249 = ssub.s32 256, 1
              loop: start=0, step=1, limit=1
              $region49: #{vit_snn_forward.11} parent=47 // loop_pre_header
                _
              $region50: #{vit_snn_forward.11} parent=47 // loop_header
                %s251 = sphi 0, %s255
                %p252 = scmp.ge.s32.totalorder %s251, 1
                %s256 = sphi %s241, %s241
                %s257 = sphi %s239, %s239
              $region51: #{vit_snn_forward.11} parent=47 // loop_header_branch
                %254 = sbr.rel (%p252) target = $region55
              $region52: #{vit_snn_forward.11} parent=47 // loop_body
                %v258 = vld [vmem:[%s256] sm:%s249]
                %259 = vst [vmem:[%s257] sm:%s249] %v258
                %v260 = vld [vmem:[%s256 + $0x10] sm:%s249]
                %261 = vst [vmem:[%s257 + $0x8] sm:%s249] %v260
                %v262 = vld [vmem:[%s256 + $0x20] sm:%s249]
                %263 = vst [vmem:[%s257 + $0x10] sm:%s249] %v262
                %v264 = vld [vmem:[%s256 + $0x30] sm:%s249]
                %265 = vst [vmem:[%s257 + $0x18] sm:%s249] %v264
                %v266 = vld [vmem:[%s256 + $0x40] sm:%s249]
                %267 = vst [vmem:[%s257 + $0x20] sm:%s249] %v266
                %v268 = vld [vmem:[%s256 + $0x50] sm:%s249]
                %269 = vst [vmem:[%s257 + $0x28] sm:%s249] %v268
                %v270 = vld [vmem:[%s256 + $0x60] sm:%s249]
                %271 = vst [vmem:[%s257 + $0x30] sm:%s249] %v270
                %v272 = vld [vmem:[%s256 + $0x70] sm:%s249]
                %273 = vst [vmem:[%s257 + $0x38] sm:%s249] %v272
                %v274 = vld [vmem:[%s256 + $0x80] sm:%s249]
                %275 = vst [vmem:[%s257 + $0x40] sm:%s249] %v274
                %v276 = vld [vmem:[%s256 + $0x90] sm:%s249]
                %277 = vst [vmem:[%s257 + $0x48] sm:%s249] %v276
                %v278 = vld [vmem:[%s256 + $0xa0] sm:%s249]
                %279 = vst [vmem:[%s257 + $0x50] sm:%s249] %v278
                %v280 = vld [vmem:[%s256 + $0xb0] sm:%s249]
                %281 = vst [vmem:[%s257 + $0x58] sm:%s249] %v280
                %v282 = vld [vmem:[%s256 + $0xc0] sm:%s249]
                %283 = vst [vmem:[%s257 + $0x60] sm:%s249] %v282
                %v284 = vld [vmem:[%s256 + $0xd0] sm:%s249]
                %285 = vst [vmem:[%s257 + $0x68] sm:%s249] %v284
                %v286 = vld [vmem:[%s256 + $0xe0] sm:%s249]
                %287 = vst [vmem:[%s257 + $0x70] sm:%s249] %v286
                %v288 = vld [vmem:[%s256 + $0xf0] sm:%s249]
                %289 = vst [vmem:[%s257 + $0x78] sm:%s249] %v288
                %v290 = vld [vmem:[%s256 + $0x100] sm:%s249]
                %291 = vst [vmem:[%s257 + $0x80] sm:%s249] %v290
                %v292 = vld [vmem:[%s256 + $0x110] sm:%s249]
                %293 = vst [vmem:[%s257 + $0x88] sm:%s249] %v292
                %v294 = vld [vmem:[%s256 + $0x120] sm:%s249]
                %295 = vst [vmem:[%s257 + $0x90] sm:%s249] %v294
                %v296 = vld [vmem:[%s256 + $0x130] sm:%s249]
                %297 = vst [vmem:[%s257 + $0x98] sm:%s249] %v296
                %v298 = vld [vmem:[%s256 + $0x140] sm:%s249]
                %299 = vst [vmem:[%s257 + $0xa0] sm:%s249] %v298
                %v300 = vld [vmem:[%s256 + $0x150] sm:%s249]
                %301 = vst [vmem:[%s257 + $0xa8] sm:%s249] %v300
                %v302 = vld [vmem:[%s256 + $0x160] sm:%s249]
                %303 = vst [vmem:[%s257 + $0xb0] sm:%s249] %v302
                %v304 = vld [vmem:[%s256 + $0x170] sm:%s249]
                %305 = vst [vmem:[%s257 + $0xb8] sm:%s249] %v304
              $region53: #{vit_snn_forward.11} parent=47 // loop_footer
                %s255 = sadd.s32 1, %s251
              $region54: #{vit_snn_forward.11} parent=47 // loop_footer_branch
                %250 = sbr.rel target = $region50
              $region55: #{vit_snn_forward.11} parent=47 // loop_exit
                _
            $region48: #{vit_snn_forward.11} parent=39 // pred_fallthru
              _
          $region40: #{vit_snn_forward.11} parent=35 // pred_fallthru
            _
          %366 = vnop
        $region36: #{vit_snn_forward.11} parent=31 // pred_fallthru
          _
      $region32: #{vit_snn_forward.11} parent=5 // pred_fallthru
        _
      %p367 = scmp.le.s32.totalorder 1, %s14
      %p368 = scmp.lt.s32.totalorder %s14, 3
      %p369 = pnand %p367, %p368
      %p370 = pneg %p369
      // Predicated region
      $region71: #{vit_snn_forward.11} parent=5 // pred_check
        _
      $region72: #{vit_snn_forward.11} parent=5 // pred_check_branch
        %372 = sbr.rel (%p369) target = $region74
      $region73: #{vit_snn_forward.11} parent=5 // pred_region
        %s373 = ssub.s32 %s14, 1
        %s374 = sand.u32 %s27, 1
        %s375 = sand.u32 %s27, 1
        %s376 = smul.addr %s375, 192
        %s377 = scalar_lea.vmem [#allocation6], %s376
        // Predicated region
        $region75: #{vit_snn_forward.11} parent=73 // pred_check
          %p378 = pneg %p40
        $region76: #{vit_snn_forward.11} parent=73 // pred_check_branch
          %380 = sbr.rel (%p378) target = $region78
        $region77: #{vit_snn_forward.11} parent=73 // pred_region
          _
        $region78: #{vit_snn_forward.11} parent=73 // pred_fallthru
          _
        %s381 = sand.u32 %s27, 1
        %s382 = sand.u32 %s27, 1
        %s383 = smul.addr %s382, 192
        %s384 = scalar_lea.vmem [#allocation6], %s383
        %p385 = pneg %p40
        %p386 = pneg %p37
        %p387 = pneg %p61
        %p388 = pneg %p58
        %p389 = pneg %p82
        %p390 = pneg %p79
        %p391 = pneg %p103
        %p392 = pneg %p100
        %p393 = pneg %p124
        %p394 = pneg %p121
        %p395 = pneg %p150
        %p396 = pneg %p147
        %s397 = sand.u32 %s137, 1
        %s398 = sand.u32 %s137, 1
        %s399 = smul.addr %s398, 64
        %s400 = scalar_lea.vmem [#allocation7], %s399
        %p401 = pneg %p176
        %p402 = pneg %p173
        %p403 = scmp.lt.s32.totalorder %s19, 1
        %s404 = scalar_select %p403, %s19, 1
        %s405 = smul.addr %s404, 4
        %s406 = smul.addr %s405, 8
        %s407 = scalar_lea.vmem %s6, %s406
        %p408 = pneg %p202
        %p409 = pneg %p199
        %p410 = scmp.lt.s32.totalorder %s19, 1
        %s411 = scalar_select %p410, %s19, 1
        %s412 = smul.addr %s411, 4
        %s413 = smul.addr %s412, 8
        %s414 = scalar_lea.vmem %s7, %s413
        %p415 = scmp.lt.s32.totalorder %s19, 1
        %s416 = scalar_select %p415, %s19, 1
        %s417 = smul.addr %s416, 4
        %s418 = smul.addr %s417, 8
        %s419 = scalar_lea.vmem %s6, %s418
        %p420 = scmp.lt.s32.totalorder %s19, 1
        %s421 = scalar_select %p420, %s19, 1
        %s422 = smul.addr %s421, 4
        %s423 = smul.addr %s422, 8
        %s424 = scalar_lea.vmem %s7, %s423
        %426 = vst [vmem:[#allocation2] sm:$0xff] 0.0
        %427 = vst [vmem:[#allocation2 + $0x8] sm:$0xff] 0.0
        %428 = vst [vmem:[#allocation2 + $0x10] sm:$0xff] 0.0
        %429 = vst [vmem:[#allocation2 + $0x18] sm:$0xff] 0.0
        %430 = vst [vmem:[#allocation2 + $0x20] sm:$0xff] 0.0
        %431 = vst [vmem:[#allocation2 + $0x28] sm:$0xff] 0.0
        %432 = vst [vmem:[#allocation2 + $0x30] sm:$0xff] 0.0
        %433 = vst [vmem:[#allocation2 + $0x38] sm:$0xff] 0.0
        %434 = vst [vmem:[#allocation2 + $0x40] sm:$0xff] 0.0
        %435 = vst [vmem:[#allocation2 + $0x48] sm:$0xff] 0.0
        %436 = vst [vmem:[#allocation2 + $0x50] sm:$0xff] 0.0
        %437 = vst [vmem:[#allocation2 + $0x58] sm:$0xff] 0.0
        %438 = vst [vmem:[#allocation3] sm:$0xff] 0.0
        %439 = vst [vmem:[#allocation3 + $0x8] sm:$0xff] 0.0
        %440 = vst [vmem:[#allocation3 + $0x10] sm:$0xff] 0.0
        %441 = vst [vmem:[#allocation3 + $0x18] sm:$0xff] 0.0
        %442 = vst [vmem:[#allocation4] sm:$0xff] 0.0
        %443 = vst [vmem:[#allocation4 + $0x8] sm:$0xff] 0.0
        %444 = vst [vmem:[#allocation4 + $0x10] sm:$0xff] 0.0
        %445 = vst [vmem:[#allocation4 + $0x18] sm:$0xff] 0.0
        %446 = vst [vmem:[#allocation5] sm:$0xff] 0.0
        %447 = vst [vmem:[#allocation5 + $0x8] sm:$0xff] 0.0
        %448 = vst [vmem:[#allocation5 + $0x10] sm:$0xff] 0.0
        %449 = vst [vmem:[#allocation5 + $0x18] sm:$0xff] 0.0
        %v450 = vld [vmem:[%s1] sm:$0xff]
        %v451 = vld [vmem:[%s1 + $0x8] sm:$0xff]
        %v452 = vld [vmem:[%s1 + $0x10] sm:$0xff]
        %v453 = vld [vmem:[%s1 + $0x18] sm:$0xff]
        %v454 = vld [vmem:[%s1 + $0x20] sm:$0xff]
        %v455 = vld [vmem:[%s1 + $0x28] sm:$0xff]
        %v456 = vld [vmem:[%s1 + $0x30] sm:$0xff]
        %v457 = vld [vmem:[%s1 + $0x38] sm:$0xff]
        %v458 = vld [vmem:[%s1 + $0x40] sm:$0xff]
        %v459 = vld [vmem:[%s1 + $0x48] sm:$0xff]
        %v460 = vld [vmem:[%s1 + $0x50] sm:$0xff]
        %v461 = vld [vmem:[%s1 + $0x58] sm:$0xff]
        %v462 = vld [vmem:[%s2] sm:$0xff]
        %v463 = vld [vmem:[%s2 + $0x8] sm:$0xff]
        %v464 = vld [vmem:[%s2 + $0x10] sm:$0xff]
        %v465 = vld [vmem:[%s2 + $0x18] sm:$0xff]
        %v466 = vld [vmem:[%s2 + $0x20] sm:$0xff]
        %v467 = vld [vmem:[%s2 + $0x28] sm:$0xff]
        %v468 = vld [vmem:[%s2 + $0x30] sm:$0xff]
        %v469 = vld [vmem:[%s2 + $0x38] sm:$0xff]
        %v470 = vld [vmem:[%s2 + $0x40] sm:$0xff]
        %v471 = vld [vmem:[%s2 + $0x48] sm:$0xff]
        %v472 = vld [vmem:[%s2 + $0x50] sm:$0xff]
        %v473 = vld [vmem:[%s2 + $0x58] sm:$0xff]
        %v474 = vld [vmem:[%s3] sm:$0xff]
        %v475 = vld [vmem:[%s3 + $0x8] sm:$0xff]
        %v476 = vld [vmem:[%s3 + $0x10] sm:$0xff]
        %v477 = vld [vmem:[%s3 + $0x18] sm:$0xff]
        %v478 = vld [vmem:[%s4] sm:$0xff]
        %v479 = vld [vmem:[%s4 + $0x8] sm:$0xff]
        %v480 = vld [vmem:[%s4 + $0x10] sm:$0xff]
        %v481 = vld [vmem:[%s4 + $0x18] sm:$0xff]
        %v482 = vld [vmem:[%s377] sm:$0xff]
        %v483 = vld [vmem:[%s377 + $0x8] sm:$0xff]
        %v484 = vld [vmem:[%s377 + $0x10] sm:$0xff]
        %v485 = vld [vmem:[%s377 + $0x18] sm:$0xff]
        %v486 = vld [vmem:[%s377 + $0x20] sm:$0xff]
        %v487 = vld [vmem:[%s377 + $0x28] sm:$0xff]
        %v488 = vld [vmem:[%s377 + $0x30] sm:$0xff]
        %v489 = vld [vmem:[%s377 + $0x38] sm:$0xff]
        %v490 = vld [vmem:[%s377 + $0x40] sm:$0xff]
        %v491 = vld [vmem:[%s377 + $0x48] sm:$0xff]
        %v492 = vld [vmem:[%s377 + $0x50] sm:$0xff]
        %v493 = vld [vmem:[%s377 + $0x58] sm:$0xff]
        %495 = vset.pattern.permute.xlu0 0
        %496 = vperm.xlu0 %495, %v450
        %v497 = vpop.permute.xlu0 %496
        %500 = vset.pattern.permute.xlu0 0
        %501 = vperm.xlu0 %500, %v451
        %v502 = vpop.permute.xlu0 %501
        %505 = vset.pattern.permute.xlu0 0
        %506 = vperm.xlu0 %505, %v452
        %v507 = vpop.permute.xlu0 %506
        %510 = vset.pattern.permute.xlu0 0
        %511 = vperm.xlu0 %510, %v453
        %v512 = vpop.permute.xlu0 %511
        %515 = vset.pattern.permute.xlu0 0
        %516 = vperm.xlu0 %515, %v454
        %v517 = vpop.permute.xlu0 %516
        %520 = vset.pattern.permute.xlu0 0
        %521 = vperm.xlu0 %520, %v455
        %v522 = vpop.permute.xlu0 %521
        %525 = vset.pattern.permute.xlu0 0
        %526 = vperm.xlu0 %525, %v456
        %v527 = vpop.permute.xlu0 %526
        %530 = vset.pattern.permute.xlu0 0
        %531 = vperm.xlu0 %530, %v457
        %v532 = vpop.permute.xlu0 %531
        %535 = vset.pattern.permute.xlu0 0
        %536 = vperm.xlu0 %535, %v458
        %v537 = vpop.permute.xlu0 %536
        %540 = vset.pattern.permute.xlu0 0
        %541 = vperm.xlu0 %540, %v459
        %v542 = vpop.permute.xlu0 %541
        %545 = vset.pattern.permute.xlu0 0
        %546 = vperm.xlu0 %545, %v460
        %v547 = vpop.permute.xlu0 %546
        %550 = vset.pattern.permute.xlu0 0
        %551 = vperm.xlu0 %550, %v461
        %v552 = vpop.permute.xlu0 %551
        %v554 = vmul.f32 %v482, %v497
        %v555 = vmul.f32 %v483, %v502
        %v556 = vmul.f32 %v484, %v507
        %v557 = vmul.f32 %v485, %v512
        %v558 = vmul.f32 %v486, %v517
        %v559 = vmul.f32 %v487, %v522
        %v560 = vmul.f32 %v488, %v527
        %v561 = vmul.f32 %v489, %v532
        %v562 = vmul.f32 %v490, %v537
        %v563 = vmul.f32 %v491, %v542
        %v564 = vmul.f32 %v492, %v547
        %v565 = vmul.f32 %v493, %v552
        %567 = vset.pattern.permute.xlu0 0
        %568 = vperm.xlu0 %567, %v462
        %v569 = vpop.permute.xlu0 %568
        %572 = vset.pattern.permute.xlu0 0
        %573 = vperm.xlu0 %572, %v463
        %v574 = vpop.permute.xlu0 %573
        %577 = vset.pattern.permute.xlu0 0
        %578 = vperm.xlu0 %577, %v464
        %v579 = vpop.permute.xlu0 %578
        %582 = vset.pattern.permute.xlu0 0
        %583 = vperm.xlu0 %582, %v465
        %v584 = vpop.permute.xlu0 %583
        %587 = vset.pattern.permute.xlu0 0
        %588 = vperm.xlu0 %587, %v466
        %v589 = vpop.permute.xlu0 %588
        %592 = vset.pattern.permute.xlu0 0
        %593 = vperm.xlu0 %592, %v467
        %v594 = vpop.permute.xlu0 %593
        %597 = vset.pattern.permute.xlu0 0
        %598 = vperm.xlu0 %597, %v468
        %v599 = vpop.permute.xlu0 %598
        %602 = vset.pattern.permute.xlu0 0
        %603 = vperm.xlu0 %602, %v469
        %v604 = vpop.permute.xlu0 %603
        %607 = vset.pattern.permute.xlu0 0
        %608 = vperm.xlu0 %607, %v470
        %v609 = vpop.permute.xlu0 %608
        %612 = vset.pattern.permute.xlu0 0
        %613 = vperm.xlu0 %612, %v471
        %v614 = vpop.permute.xlu0 %613
        %617 = vset.pattern.permute.xlu0 0
        %618 = vperm.xlu0 %617, %v472
        %v619 = vpop.permute.xlu0 %618
        %622 = vset.pattern.permute.xlu0 0
        %623 = vperm.xlu0 %622, %v473
        %v624 = vpop.permute.xlu0 %623
        %v626 = vadd.f32 %v554, %v569
        %v627 = vadd.f32 %v555, %v574
        %v628 = vadd.f32 %v556, %v579
        %v629 = vadd.f32 %v557, %v584
        %v630 = vadd.f32 %v558, %v589
        %v631 = vadd.f32 %v559, %v594
        %v632 = vadd.f32 %v560, %v599
        %v633 = vadd.f32 %v561, %v604
        %v634 = vadd.f32 %v562, %v609
        %v635 = vadd.f32 %v563, %v614
        %v636 = vadd.f32 %v564, %v619
        %v637 = vadd.f32 %v565, %v624
        %v638 = vld [vmem:[#allocation2] sm:$0xff]
        %v639 = vld [vmem:[#allocation2 + $0x8] sm:$0xff]
        %v640 = vld [vmem:[#allocation2 + $0x10] sm:$0xff]
        %v641 = vld [vmem:[#allocation2 + $0x18] sm:$0xff]
        %v642 = vld [vmem:[#allocation2 + $0x20] sm:$0xff]
        %v643 = vld [vmem:[#allocation2 + $0x28] sm:$0xff]
        %v644 = vld [vmem:[#allocation2 + $0x30] sm:$0xff]
        %v645 = vld [vmem:[#allocation2 + $0x38] sm:$0xff]
        %v646 = vld [vmem:[#allocation2 + $0x40] sm:$0xff]
        %v647 = vld [vmem:[#allocation2 + $0x48] sm:$0xff]
        %v648 = vld [vmem:[#allocation2 + $0x50] sm:$0xff]
        %v649 = vld [vmem:[#allocation2 + $0x58] sm:$0xff]
        %v650 = vsub.f32 %v626, %v638
        %v651 = vsub.f32 %v627, %v639
        %v652 = vsub.f32 %v628, %v640
        %v653 = vsub.f32 %v629, %v641
        %v654 = vsub.f32 %v630, %v642
        %v655 = vsub.f32 %v631, %v643
        %v656 = vsub.f32 %v632, %v644
        %v657 = vsub.f32 %v633, %v645
        %v658 = vsub.f32 %v634, %v646
        %v659 = vsub.f32 %v635, %v647
        %v660 = vsub.f32 %v636, %v648
        %v661 = vsub.f32 %v637, %v649
        %v662 = vmul.f32 %v650, 0.6666667
        %v663 = vmul.f32 %v651, 0.6666667
        %v664 = vmul.f32 %v652, 0.6666667
        %v665 = vmul.f32 %v653, 0.6666667
        %v666 = vmul.f32 %v654, 0.6666667
        %v667 = vmul.f32 %v655, 0.6666667
        %v668 = vmul.f32 %v656, 0.6666667
        %v669 = vmul.f32 %v657, 0.6666667
        %v670 = vmul.f32 %v658, 0.6666667
        %v671 = vmul.f32 %v659, 0.6666667
        %v672 = vmul.f32 %v660, 0.6666667
        %v673 = vmul.f32 %v661, 0.6666667
        %v674 = vadd.f32 %v638, %v662
        %v675 = vadd.f32 %v639, %v663
        %v676 = vadd.f32 %v640, %v664
        %v677 = vadd.f32 %v641, %v665
        %v678 = vadd.f32 %v642, %v666
        %v679 = vadd.f32 %v643, %v667
        %v680 = vadd.f32 %v644, %v668
        %v681 = vadd.f32 %v645, %v669
        %v682 = vadd.f32 %v646, %v670
        %v683 = vadd.f32 %v647, %v671
        %v684 = vadd.f32 %v648, %v672
        %v685 = vadd.f32 %v649, %v673
        %vm686 = vcmp.ge.f32.partialorder %v674, 1.0
        %vm687 = vcmp.ge.f32.partialorder %v675, 1.0
        %vm688 = vcmp.ge.f32.partialorder %v676, 1.0
        %vm689 = vcmp.ge.f32.partialorder %v677, 1.0
        %vm690 = vcmp.ge.f32.partialorder %v678, 1.0
        %vm691 = vcmp.ge.f32.partialorder %v679, 1.0
        %vm692 = vcmp.ge.f32.partialorder %v680, 1.0
        %vm693 = vcmp.ge.f32.partialorder %v681, 1.0
        %vm694 = vcmp.ge.f32.partialorder %v682, 1.0
        %vm695 = vcmp.ge.f32.partialorder %v683, 1.0
        %vm696 = vcmp.ge.f32.partialorder %v684, 1.0
        %vm697 = vcmp.ge.f32.partialorder %v685, 1.0
        %v698 = vsel %vm686, 1, 0
        %v699 = vsel %vm687, 1, 0
        %v700 = vsel %vm688, 1, 0
        %v701 = vsel %vm689, 1, 0
        %v702 = vsel %vm690, 1, 0
        %v703 = vsel %vm691, 1, 0
        %v704 = vsel %vm692, 1, 0
        %v705 = vsel %vm693, 1, 0
        %v706 = vsel %vm694, 1, 0
        %v707 = vsel %vm695, 1, 0
        %v708 = vsel %vm696, 1, 0
        %v709 = vsel %vm697, 1, 0
        %v710 = vcvt.s32.f32 %v698
        %v711 = vcvt.s32.f32 %v699
        %v712 = vcvt.s32.f32 %v700
        %v713 = vcvt.s32.f32 %v701
        %v714 = vcvt.s32.f32 %v702
        %v715 = vcvt.s32.f32 %v703
        %v716 = vcvt.s32.f32 %v704
        %v717 = vcvt.s32.f32 %v705
        %v718 = vcvt.s32.f32 %v706
        %v719 = vcvt.s32.f32 %v707
        %v720 = vcvt.s32.f32 %v708
        %v721 = vcvt.s32.f32 %v709
        %v722 = vsub.f32 1.0, %v710
        %v723 = vsub.f32 1.0, %v711
        %v724 = vsub.f32 1.0, %v712
        %v725 = vsub.f32 1.0, %v713
        %v726 = vsub.f32 1.0, %v714
        %v727 = vsub.f32 1.0, %v715
        %v728 = vsub.f32 1.0, %v716
        %v729 = vsub.f32 1.0, %v717
        %v730 = vsub.f32 1.0, %v718
        %v731 = vsub.f32 1.0, %v719
        %v732 = vsub.f32 1.0, %v720
        %v733 = vsub.f32 1.0, %v721
        %v734 = vmul.f32 %v674, %v722
        %v735 = vmul.f32 %v675, %v723
        %v736 = vmul.f32 %v676, %v724
        %v737 = vmul.f32 %v677, %v725
        %v738 = vmul.f32 %v678, %v726
        %v739 = vmul.f32 %v679, %v727
        %v740 = vmul.f32 %v680, %v728
        %v741 = vmul.f32 %v681, %v729
        %v742 = vmul.f32 %v682, %v730
        %v743 = vmul.f32 %v683, %v731
        %v744 = vmul.f32 %v684, %v732
        %v745 = vmul.f32 %v685, %v733
        %746 = vst [vmem:[#allocation2] sm:$0xff] %v734
        %747 = vst [vmem:[#allocation2 + $0x8] sm:$0xff] %v735
        %748 = vst [vmem:[#allocation2 + $0x10] sm:$0xff] %v736
        %749 = vst [vmem:[#allocation2 + $0x18] sm:$0xff] %v737
        %750 = vst [vmem:[#allocation2 + $0x20] sm:$0xff] %v738
        %751 = vst [vmem:[#allocation2 + $0x28] sm:$0xff] %v739
        %752 = vst [vmem:[#allocation2 + $0x30] sm:$0xff] %v740
        %753 = vst [vmem:[#allocation2 + $0x38] sm:$0xff] %v741
        %754 = vst [vmem:[#allocation2 + $0x40] sm:$0xff] %v742
        %755 = vst [vmem:[#allocation2 + $0x48] sm:$0xff] %v743
        %756 = vst [vmem:[#allocation2 + $0x50] sm:$0xff] %v744
        %757 = vst [vmem:[#allocation2 + $0x58] sm:$0xff] %v745
        %v758 = vpack.c.bf16 %v710, %v710
        %v759 = vpack.c.bf16 %v711, %v711
        %v760 = vpack.c.bf16 %v712, %v712
        %v761 = vpack.c.bf16 %v713, %v713
        %v762 = vpack.c.bf16 %v714, %v714
        %v763 = vpack.c.bf16 %v715, %v715
        %v764 = vpack.c.bf16 %v716, %v716
        %v765 = vpack.c.bf16 %v717, %v717
        %v766 = vpack.c.bf16 %v718, %v718
        %v767 = vpack.c.bf16 %v719, %v719
        %v768 = vpack.c.bf16 %v720, %v720
        %v769 = vpack.c.bf16 %v721, %v721
        %770 = vxpose.xlu0.c.b16.start [1/8] %v762, 128
        %771 = vxpose.xlu0.c.b16.cont [2/8] 0, 128
        %772 = vxpose.xlu0.c.b16.cont [3/8] 0, 128
        %773 = vxpose.xlu0.c.b16.cont [4/8] 0, 128
        %774 = vxpose.xlu0.c.b16.cont [5/8] 0, 128
        %775 = vxpose.xlu0.c.b16.cont [6/8] 0, 128
        %776 = vxpose.xlu0.c.b16.cont [7/8] 0, 128
        %777 = vxpose.xlu0.c.b16.end [8/8] 0, 128
        %v778 = vpop.trf.xlu0
        %v779 = vpop.trf.xlu0
        %v780 = vpop.trf.xlu0
        %v781 = vpop.trf.xlu0
        %v782 = vpop.trf.xlu0
        %v783 = vpop.trf.xlu0
        %v784 = vpop.trf.xlu0
        %v785 = vpop.trf.xlu0
        %vm786 = vcmask 64512
        %v788 = vsel %vm786, %v778, 0
        %v791 = vsel %vm786, %v779, 0
        %v794 = vsel %vm786, %v780, 0
        %v797 = vsel %vm786, %v781, 0
        %v800 = vsel %vm786, %v782, 0
        %v803 = vsel %vm786, %v783, 0
        %v806 = vsel %vm786, %v784, 0
        %v809 = vsel %vm786, %v785, 0
        %vm811 = vcmask 1043456
        %v813 = vsel %vm811, %v758, 0
        %815 = vmatpush.bf16.msra.mxu0 0
        %816 = vmatpush.bf16.msra.mxu0 0
        %817 = vmatpush.bf16.msra.mxu0 0
        %818 = vmatpush.bf16.msra.mxu0 0
        %819 = vmatpush.bf16.msra.mxu0 0
        %820 = vmatpush.bf16.msra.mxu0 0
        %821 = vmatpush.bf16.msra.mxu0 0
        %822 = vmatpush.bf16.msra.mxu0 %v813
        %823 = vmatmul.bf16.gmra.mxu0 %v788
        %v824 = vpop.f32.mrf.mxu0
        %v825 = vadd.f32 0.0, %v824
        %v826 = vpop.f32.mrf.mxu0
        %v827 = vadd.f32 0.0, %v826
        %828 = vmatmul.bf16.gmra.mxu0 %v791
        %v829 = vpop.f32.mrf.mxu0
        %v830 = vadd.f32 0.0, %v829
        %v831 = vpop.f32.mrf.mxu0
        %v832 = vadd.f32 0.0, %v831
        %833 = vmatmul.bf16.gmra.mxu0 %v794
        %v834 = vpop.f32.mrf.mxu0
        %v835 = vadd.f32 0.0, %v834
        %v836 = vpop.f32.mrf.mxu0
        %v837 = vadd.f32 0.0, %v836
        %838 = vmatmul.bf16.gmra.mxu0 %v797
        %v839 = vpop.f32.mrf.mxu0
        %v840 = vadd.f32 0.0, %v839
        %v841 = vpop.f32.mrf.mxu0
        %v842 = vadd.f32 0.0, %v841
        %843 = vmatmul.bf16.gmra.mxu0 %v800
        %v844 = vpop.f32.mrf.mxu0
        %v845 = vadd.f32 0.0, %v844
        %v846 = vpop.f32.mrf.mxu0
        %v847 = vadd.f32 0.0, %v846
        %848 = vmatmul.bf16.gmra.mxu0 %v803
        %v849 = vpop.f32.mrf.mxu0
        %v850 = vadd.f32 0.0, %v849
        %v851 = vpop.f32.mrf.mxu0
        %v852 = vadd.f32 0.0, %v851
        %853 = vmatmul.bf16.gmra.mxu0 %v806
        %v854 = vpop.f32.mrf.mxu0
        %v855 = vadd.f32 0.0, %v854
        %v856 = vpop.f32.mrf.mxu0
        %v857 = vadd.f32 0.0, %v856
        %858 = vmatmul.bf16.gmra.mxu0 %v809
        %v859 = vpop.f32.mrf.mxu0
        %v860 = vadd.f32 0.0, %v859
        %v861 = vpop.f32.mrf.mxu0
        %v862 = vadd.f32 0.0, %v861
        %863 = vdwg.mxu0
        %864 = vxpose.xlu0.c.b16.start [1/8] %v763, 128
        %865 = vxpose.xlu0.c.b16.cont [2/8] 0, 128
        %866 = vxpose.xlu0.c.b16.cont [3/8] 0, 128
        %867 = vxpose.xlu0.c.b16.cont [4/8] 0, 128
        %868 = vxpose.xlu0.c.b16.cont [5/8] 0, 128
        %869 = vxpose.xlu0.c.b16.cont [6/8] 0, 128
        %870 = vxpose.xlu0.c.b16.cont [7/8] 0, 128
        %871 = vxpose.xlu0.c.b16.end [8/8] 0, 128
        %v872 = vpop.trf.xlu0
        %v873 = vpop.trf.xlu0
        %v874 = vpop.trf.xlu0
        %v875 = vpop.trf.xlu0
        %v876 = vpop.trf.xlu0
        %v877 = vpop.trf.xlu0
        %v878 = vpop.trf.xlu0
        %v879 = vpop.trf.xlu0
        %v881 = vsel %vm786, %v872, 0
        %v884 = vsel %vm786, %v873, 0
        %v887 = vsel %vm786, %v874, 0
        %v890 = vsel %vm786, %v875, 0
        %v893 = vsel %vm786, %v876, 0
        %v896 = vsel %vm786, %v877, 0
        %v899 = vsel %vm786, %v878, 0
        %v902 = vsel %vm786, %v879, 0
        %v905 = vsel %vm811, %v759, 0
        %907 = vmatpush.bf16.msra.mxu0 0
        %908 = vmatpush.bf16.msra.mxu0 0
        %909 = vmatpush.bf16.msra.mxu0 0
        %910 = vmatpush.bf16.msra.mxu0 0
        %911 = vmatpush.bf16.msra.mxu0 0
        %912 = vmatpush.bf16.msra.mxu0 0
        %913 = vmatpush.bf16.msra.mxu0 0
        %914 = vmatpush.bf16.msra.mxu0 %v905
        %915 = vmatmul.bf16.gmra.mxu0 %v881
        %v916 = vpop.f32.mrf.mxu0
        %v917 = vadd.f32 0.0, %v916
        %v918 = vpop.f32.mrf.mxu0
        %v919 = vadd.f32 0.0, %v918
        %920 = vmatmul.bf16.gmra.mxu0 %v884
        %v921 = vpop.f32.mrf.mxu0
        %v922 = vadd.f32 0.0, %v921
        %v923 = vpop.f32.mrf.mxu0
        %v924 = vadd.f32 0.0, %v923
        %925 = vmatmul.bf16.gmra.mxu0 %v887
        %v926 = vpop.f32.mrf.mxu0
        %v927 = vadd.f32 0.0, %v926
        %v928 = vpop.f32.mrf.mxu0
        %v929 = vadd.f32 0.0, %v928
        %930 = vmatmul.bf16.gmra.mxu0 %v890
        %v931 = vpop.f32.mrf.mxu0
        %v932 = vadd.f32 0.0, %v931
        %v933 = vpop.f32.mrf.mxu0
        %v934 = vadd.f32 0.0, %v933
        %935 = vmatmul.bf16.gmra.mxu0 %v893
        %v936 = vpop.f32.mrf.mxu0
        %v937 = vadd.f32 0.0, %v936
        %v938 = vpop.f32.mrf.mxu0
        %v939 = vadd.f32 0.0, %v938
        %940 = vmatmul.bf16.gmra.mxu0 %v896
        %v941 = vpop.f32.mrf.mxu0
        %v942 = vadd.f32 0.0, %v941
        %v943 = vpop.f32.mrf.mxu0
        %v944 = vadd.f32 0.0, %v943
        %945 = vmatmul.bf16.gmra.mxu0 %v899
        %v946 = vpop.f32.mrf.mxu0
        %v947 = vadd.f32 0.0, %v946
        %v948 = vpop.f32.mrf.mxu0
        %v949 = vadd.f32 0.0, %v948
        %950 = vmatmul.bf16.gmra.mxu0 %v902
        %v951 = vpop.f32.mrf.mxu0
        %v952 = vadd.f32 0.0, %v951
        %v953 = vpop.f32.mrf.mxu0
        %v954 = vadd.f32 0.0, %v953
        %955 = vdwg.mxu0
        %956 = vxpose.xlu0.c.b16.start [1/8] %v764, 128
        %957 = vxpose.xlu0.c.b16.cont [2/8] 0, 128
        %958 = vxpose.xlu0.c.b16.cont [3/8] 0, 128
        %959 = vxpose.xlu0.c.b16.cont [4/8] 0, 128
        %960 = vxpose.xlu0.c.b16.cont [5/8] 0, 128
        %961 = vxpose.xlu0.c.b16.cont [6/8] 0, 128
        %962 = vxpose.xlu0.c.b16.cont [7/8] 0, 128
        %963 = vxpose.xlu0.c.b16.end [8/8] 0, 128
        %v964 = vpop.trf.xlu0
        %v965 = vpop.trf.xlu0
        %v966 = vpop.trf.xlu0
        %v967 = vpop.trf.xlu0
        %v968 = vpop.trf.xlu0
        %v969 = vpop.trf.xlu0
        %v970 = vpop.trf.xlu0
        %v971 = vpop.trf.xlu0
        %v973 = vsel %vm786, %v964, 0
        %v976 = vsel %vm786, %v965, 0
        %v979 = vsel %vm786, %v966, 0
        %v982 = vsel %vm786, %v967, 0
        %v985 = vsel %vm786, %v968, 0
        %v988 = vsel %vm786, %v969, 0
        %v991 = vsel %vm786, %v970, 0
        %v994 = vsel %vm786, %v971, 0
        %v997 = vsel %vm811, %v760, 0
        %999 = vmatpush.bf16.msra.mxu0 0
        %1000 = vmatpush.bf16.msra.mxu0 0
        %1001 = vmatpush.bf16.msra.mxu0 0
        %1002 = vmatpush.bf16.msra.mxu0 0
        %1003 = vmatpush.bf16.msra.mxu0 0
        %1004 = vmatpush.bf16.msra.mxu0 0
        %1005 = vmatpush.bf16.msra.mxu0 0
        %1006 = vmatpush.bf16.msra.mxu0 %v997
        %1007 = vmatmul.bf16.gmra.mxu0 %v973
        %v1008 = vpop.f32.mrf.mxu0
        %v1009 = vadd.f32 0.0, %v1008
        %v1010 = vpop.f32.mrf.mxu0
        %v1011 = vadd.f32 0.0, %v1010
        %1012 = vmatmul.bf16.gmra.mxu0 %v976
        %v1013 = vpop.f32.mrf.mxu0
        %v1014 = vadd.f32 0.0, %v1013
        %v1015 = vpop.f32.mrf.mxu0
        %v1016 = vadd.f32 0.0, %v1015
        %1017 = vmatmul.bf16.gmra.mxu0 %v979
        %v1018 = vpop.f32.mrf.mxu0
        %v1019 = vadd.f32 0.0, %v1018
        %v1020 = vpop.f32.mrf.mxu0
        %v1021 = vadd.f32 0.0, %v1020
        %1022 = vmatmul.bf16.gmra.mxu0 %v982
        %v1023 = vpop.f32.mrf.mxu0
        %v1024 = vadd.f32 0.0, %v1023
        %v1025 = vpop.f32.mrf.mxu0
        %v1026 = vadd.f32 0.0, %v1025
        %1027 = vmatmul.bf16.gmra.mxu0 %v985
        %v1028 = vpop.f32.mrf.mxu0
        %v1029 = vadd.f32 0.0, %v1028
        %v1030 = vpop.f32.mrf.mxu0
        %v1031 = vadd.f32 0.0, %v1030
        %1032 = vmatmul.bf16.gmra.mxu0 %v988
        %v1033 = vpop.f32.mrf.mxu0
        %v1034 = vadd.f32 0.0, %v1033
        %v1035 = vpop.f32.mrf.mxu0
        %v1036 = vadd.f32 0.0, %v1035
        %1037 = vmatmul.bf16.gmra.mxu0 %v991
        %v1038 = vpop.f32.mrf.mxu0
        %v1039 = vadd.f32 0.0, %v1038
        %v1040 = vpop.f32.mrf.mxu0
        %v1041 = vadd.f32 0.0, %v1040
        %1042 = vmatmul.bf16.gmra.mxu0 %v994
        %v1043 = vpop.f32.mrf.mxu0
        %v1044 = vadd.f32 0.0, %v1043
        %v1045 = vpop.f32.mrf.mxu0
        %v1046 = vadd.f32 0.0, %v1045
        %1047 = vdwg.mxu0
        %1048 = vxpose.xlu0.c.b16.start [1/8] %v765, 128
        %1049 = vxpose.xlu0.c.b16.cont [2/8] 0, 128
        %1050 = vxpose.xlu0.c.b16.cont [3/8] 0, 128
        %1051 = vxpose.xlu0.c.b16.cont [4/8] 0, 128
        %1052 = vxpose.xlu0.c.b16.cont [5/8] 0, 128
        %1053 = vxpose.xlu0.c.b16.cont [6/8] 0, 128
        %1054 = vxpose.xlu0.c.b16.cont [7/8] 0, 128
        %1055 = vxpose.xlu0.c.b16.end [8/8] 0, 128
        %v1056 = vpop.trf.xlu0
        %v1057 = vpop.trf.xlu0
        %v1058 = vpop.trf.xlu0
        %v1059 = vpop.trf.xlu0
        %v1060 = vpop.trf.xlu0
        %v1061 = vpop.trf.xlu0
        %v1062 = vpop.trf.xlu0
        %v1063 = vpop.trf.xlu0
        %v1065 = vsel %vm786, %v1056, 0
        %v1068 = vsel %vm786, %v1057, 0
        %v1071 = vsel %vm786, %v1058, 0
        %v1074 = vsel %vm786, %v1059, 0
        %v1077 = vsel %vm786, %v1060, 0
        %v1080 = vsel %vm786, %v1061, 0
        %v1083 = vsel %vm786, %v1062, 0
        %v1086 = vsel %vm786, %v1063, 0
        %v1089 = vsel %vm811, %v761, 0
        %1091 = vmatpush.bf16.msra.mxu0 0
        %1092 = vmatpush.bf16.msra.mxu0 0
        %1093 = vmatpush.bf16.msra.mxu0 0
        %1094 = vmatpush.bf16.msra.mxu0 0
        %1095 = vmatpush.bf16.msra.mxu0 0
        %1096 = vmatpush.bf16.msra.mxu0 0
        %1097 = vmatpush.bf16.msra.mxu0 0
        %1098 = vmatpush.bf16.msra.mxu0 %v1089
        %1099 = vmatmul.bf16.gmra.mxu0 %v1065
        %v1100 = vpop.f32.mrf.mxu0
        %v1101 = vadd.f32 0.0, %v1100
        %v1102 = vpop.f32.mrf.mxu0
        %v1103 = vadd.f32 0.0, %v1102
        %1104 = vmatmul.bf16.gmra.mxu0 %v1068
        %v1105 = vpop.f32.mrf.mxu0
        %v1106 = vadd.f32 0.0, %v1105
        %v1107 = vpop.f32.mrf.mxu0
        %v1108 = vadd.f32 0.0, %v1107
        %1109 = vmatmul.bf16.gmra.mxu0 %v1071
        %v1110 = vpop.f32.mrf.mxu0
        %v1111 = vadd.f32 0.0, %v1110
        %v1112 = vpop.f32.mrf.mxu0
        %v1113 = vadd.f32 0.0, %v1112
        %1114 = vmatmul.bf16.gmra.mxu0 %v1074
        %v1115 = vpop.f32.mrf.mxu0
        %v1116 = vadd.f32 0.0, %v1115
        %v1117 = vpop.f32.mrf.mxu0
        %v1118 = vadd.f32 0.0, %v1117
        %1119 = vmatmul.bf16.gmra.mxu0 %v1077
        %v1120 = vpop.f32.mrf.mxu0
        %v1121 = vadd.f32 0.0, %v1120
        %v1122 = vpop.f32.mrf.mxu0
        %v1123 = vadd.f32 0.0, %v1122
        %1124 = vmatmul.bf16.gmra.mxu0 %v1080
        %v1125 = vpop.f32.mrf.mxu0
        %v1126 = vadd.f32 0.0, %v1125
        %v1127 = vpop.f32.mrf.mxu0
        %v1128 = vadd.f32 0.0, %v1127
        %1129 = vmatmul.bf16.gmra.mxu0 %v1083
        %v1130 = vpop.f32.mrf.mxu0
        %v1131 = vadd.f32 0.0, %v1130
        %v1132 = vpop.f32.mrf.mxu0
        %v1133 = vadd.f32 0.0, %v1132
        %1134 = vmatmul.bf16.gmra.mxu0 %v1086
        %v1135 = vpop.f32.mrf.mxu0
        %v1136 = vadd.f32 0.0, %v1135
        %v1137 = vpop.f32.mrf.mxu0
        %v1138 = vadd.f32 0.0, %v1137
        %1139 = vdwg.mxu0
        %v1140 = vpack.c.bf16 %v825, %v825
        %v1141 = vpack.c.bf16 %v827, %v827
        %v1142 = vpack.c.bf16 %v830, %v830
        %v1143 = vpack.c.bf16 %v832, %v832
        %v1144 = vpack.c.bf16 %v835, %v835
        %v1145 = vpack.c.bf16 %v837, %v837
        %v1146 = vpack.c.bf16 %v840, %v840
        %v1147 = vpack.c.bf16 %v842, %v842
        %v1148 = vpack.c.bf16 %v845, %v845
        %v1149 = vpack.c.bf16 %v847, %v847
        %v1150 = vpack.c.bf16 %v850, %v850
        %v1151 = vpack.c.bf16 %v852, %v852
        %v1152 = vpack.c.bf16 %v855, %v855
        %v1153 = vpack.c.bf16 %v857, %v857
        %v1154 = vpack.c.bf16 %v860, %v860
        %v1155 = vpack.c.bf16 %v862, %v862
        %v1156 = vpack.c.bf16 %v917, %v917
        %v1157 = vpack.c.bf16 %v919, %v919
        %v1158 = vpack.c.bf16 %v922, %v922
        %v1159 = vpack.c.bf16 %v924, %v924
        %v1160 = vpack.c.bf16 %v927, %v927
        %v1161 = vpack.c.bf16 %v929, %v929
        %v1162 = vpack.c.bf16 %v932, %v932
        %v1163 = vpack.c.bf16 %v934, %v934
        %v1164 = vpack.c.bf16 %v937, %v937
        %v1165 = vpack.c.bf16 %v939, %v939
        %v1166 = vpack.c.bf16 %v942, %v942
        %v1167 = vpack.c.bf16 %v944, %v944
        %v1168 = vpack.c.bf16 %v947, %v947
        %v1169 = vpack.c.bf16 %v949, %v949
        %v1170 = vpack.c.bf16 %v952, %v952
        %v1171 = vpack.c.bf16 %v954, %v954
        %v1172 = vpack.c.bf16 %v1009, %v1009
        %v1173 = vpack.c.bf16 %v1011, %v1011
        %v1174 = vpack.c.bf16 %v1014, %v1014
        %v1175 = vpack.c.bf16 %v1016, %v1016
        %v1176 = vpack.c.bf16 %v1019, %v1019
        %v1177 = vpack.c.bf16 %v1021, %v1021
        %v1178 = vpack.c.bf16 %v1024, %v1024
        %v1179 = vpack.c.bf16 %v1026, %v1026
        %v1180 = vpack.c.bf16 %v1029, %v1029
        %v1181 = vpack.c.bf16 %v1031, %v1031
        %v1182 = vpack.c.bf16 %v1034, %v1034
        %v1183 = vpack.c.bf16 %v1036, %v1036
        %v1184 = vpack.c.bf16 %v1039, %v1039
        %v1185 = vpack.c.bf16 %v1041, %v1041
        %v1186 = vpack.c.bf16 %v1044, %v1044
        %v1187 = vpack.c.bf16 %v1046, %v1046
        %v1188 = vpack.c.bf16 %v1101, %v1101
        %v1189 = vpack.c.bf16 %v1103, %v1103
        %v1190 = vpack.c.bf16 %v1106, %v1106
        %v1191 = vpack.c.bf16 %v1108, %v1108
        %v1192 = vpack.c.bf16 %v1111, %v1111
        %v1193 = vpack.c.bf16 %v1113, %v1113
        %v1194 = vpack.c.bf16 %v1116, %v1116
        %v1195 = vpack.c.bf16 %v1118, %v1118
        %v1196 = vpack.c.bf16 %v1121, %v1121
        %v1197 = vpack.c.bf16 %v1123, %v1123
        %v1198 = vpack.c.bf16 %v1126, %v1126
        %v1199 = vpack.c.bf16 %v1128, %v1128
        %v1200 = vpack.c.bf16 %v1131, %v1131
        %v1201 = vpack.c.bf16 %v1133, %v1133
        %v1202 = vpack.c.bf16 %v1136, %v1136
        %v1203 = vpack.c.bf16 %v1138, %v1138
        %v1220 = vunpack.c.l.b16 %v1140
        %v1221 = vunpack.c.l.b16 %v1141
        %v1222 = vunpack.c.l.b16 %v1142
        %v1223 = vunpack.c.l.b16 %v1143
        %v1224 = vunpack.c.l.b16 %v1144
        %v1225 = vunpack.c.l.b16 %v1145
        %v1226 = vunpack.c.l.b16 %v1146
        %v1227 = vunpack.c.l.b16 %v1147
        %v1228 = vunpack.c.l.b16 %v1148
        %v1229 = vunpack.c.l.b16 %v1149
        %v1230 = vunpack.c.l.b16 %v1150
        %v1231 = vunpack.c.l.b16 %v1151
        %v1232 = vunpack.c.l.b16 %v1152
        %v1233 = vunpack.c.l.b16 %v1153
        %v1234 = vunpack.c.l.b16 %v1154
        %v1235 = vunpack.c.l.b16 %v1155
        %v1236 = vpack.c.b16 %v1221, %v1220
        %v1237 = vpack.c.b16 %v1223, %v1222
        %v1238 = vpack.c.b16 %v1225, %v1224
        %v1239 = vpack.c.b16 %v1227, %v1226
        %v1240 = vpack.c.b16 %v1229, %v1228
        %v1241 = vpack.c.b16 %v1231, %v1230
        %v1242 = vpack.c.b16 %v1233, %v1232
        %v1243 = vpack.c.b16 %v1235, %v1234
        %1252 = vmatpush.bf16.msra.mxu0 %v1243
        %1253 = vmatpush.bf16.msra.mxu0 %v1242
        %1254 = vmatpush.bf16.msra.mxu0 %v1241
        %1255 = vmatpush.bf16.msra.mxu0 %v1240
        %1256 = vmatpush.bf16.msra.mxu0 %v1239
        %1257 = vmatpush.bf16.msra.mxu0 %v1238
        %1258 = vmatpush.bf16.msra.mxu0 %v1237
        %1259 = vmatpush.bf16.msra.mxu0 %v1236
        %1260 = vmatmul.bf16.gmra.mxu0 %v766
        %v1261 = vpop.f32.mrf.mxu0
        %v1262 = vadd.f32 0.0, %v1261
        %v1263 = vpop.f32.mrf.mxu0
        %1264 = vdwg.mxu0
        %v1281 = vunpack.c.l.b16 %v1156
        %v1282 = vunpack.c.l.b16 %v1157
        %v1283 = vunpack.c.l.b16 %v1158
        %v1284 = vunpack.c.l.b16 %v1159
        %v1285 = vunpack.c.l.b16 %v1160
        %v1286 = vunpack.c.l.b16 %v1161
        %v1287 = vunpack.c.l.b16 %v1162
        %v1288 = vunpack.c.l.b16 %v1163
        %v1289 = vunpack.c.l.b16 %v1164
        %v1290 = vunpack.c.l.b16 %v1165
        %v1291 = vunpack.c.l.b16 %v1166
        %v1292 = vunpack.c.l.b16 %v1167
        %v1293 = vunpack.c.l.b16 %v1168
        %v1294 = vunpack.c.l.b16 %v1169
        %v1295 = vunpack.c.l.b16 %v1170
        %v1296 = vunpack.c.l.b16 %v1171
        %v1297 = vpack.c.b16 %v1282, %v1281
        %v1298 = vpack.c.b16 %v1284, %v1283
        %v1299 = vpack.c.b16 %v1286, %v1285
        %v1300 = vpack.c.b16 %v1288, %v1287
        %v1301 = vpack.c.b16 %v1290, %v1289
        %v1302 = vpack.c.b16 %v1292, %v1291
        %v1303 = vpack.c.b16 %v1294, %v1293
        %v1304 = vpack.c.b16 %v1296, %v1295
        %1313 = vmatpush.bf16.msra.mxu0 %v1304
        %1314 = vmatpush.bf16.msra.mxu0 %v1303
        %1315 = vmatpush.bf16.msra.mxu0 %v1302
        %1316 = vmatpush.bf16.msra.mxu0 %v1301
        %1317 = vmatpush.bf16.msra.mxu0 %v1300
        %1318 = vmatpush.bf16.msra.mxu0 %v1299
        %1319 = vmatpush.bf16.msra.mxu0 %v1298
        %1320 = vmatpush.bf16.msra.mxu0 %v1297
        %1321 = vmatmul.bf16.gmra.mxu0 %v767
        %v1322 = vpop.f32.mrf.mxu0
        %v1323 = vadd.f32 0.0, %v1322
        %v1324 = vpop.f32.mrf.mxu0
        %1325 = vdwg.mxu0
        %v1342 = vunpack.c.l.b16 %v1172
        %v1343 = vunpack.c.l.b16 %v1173
        %v1344 = vunpack.c.l.b16 %v1174
        %v1345 = vunpack.c.l.b16 %v1175
        %v1346 = vunpack.c.l.b16 %v1176
        %v1347 = vunpack.c.l.b16 %v1177
        %v1348 = vunpack.c.l.b16 %v1178
        %v1349 = vunpack.c.l.b16 %v1179
        %v1350 = vunpack.c.l.b16 %v1180
        %v1351 = vunpack.c.l.b16 %v1181
        %v1352 = vunpack.c.l.b16 %v1182
        %v1353 = vunpack.c.l.b16 %v1183
        %v1354 = vunpack.c.l.b16 %v1184
        %v1355 = vunpack.c.l.b16 %v1185
        %v1356 = vunpack.c.l.b16 %v1186
        %v1357 = vunpack.c.l.b16 %v1187
        %v1358 = vpack.c.b16 %v1343, %v1342
        %v1359 = vpack.c.b16 %v1345, %v1344
        %v1360 = vpack.c.b16 %v1347, %v1346
        %v1361 = vpack.c.b16 %v1349, %v1348
        %v1362 = vpack.c.b16 %v1351, %v1350
        %v1363 = vpack.c.b16 %v1353, %v1352
        %v1364 = vpack.c.b16 %v1355, %v1354
        %v1365 = vpack.c.b16 %v1357, %v1356
        %1374 = vmatpush.bf16.msra.mxu0 %v1365
        %1375 = vmatpush.bf16.msra.mxu0 %v1364
        %1376 = vmatpush.bf16.msra.mxu0 %v1363
        %1377 = vmatpush.bf16.msra.mxu0 %v1362
        %1378 = vmatpush.bf16.msra.mxu0 %v1361
        %1379 = vmatpush.bf16.msra.mxu0 %v1360
        %1380 = vmatpush.bf16.msra.mxu0 %v1359
        %1381 = vmatpush.bf16.msra.mxu0 %v1358
        %1382 = vmatmul.bf16.gmra.mxu0 %v768
        %v1383 = vpop.f32.mrf.mxu0
        %v1384 = vadd.f32 0.0, %v1383
        %v1385 = vpop.f32.mrf.mxu0
        %1386 = vdwg.mxu0
        %v1403 = vunpack.c.l.b16 %v1188
        %v1404 = vunpack.c.l.b16 %v1189
        %v1405 = vunpack.c.l.b16 %v1190
        %v1406 = vunpack.c.l.b16 %v1191
        %v1407 = vunpack.c.l.b16 %v1192
        %v1408 = vunpack.c.l.b16 %v1193
        %v1409 = vunpack.c.l.b16 %v1194
        %v1410 = vunpack.c.l.b16 %v1195
        %v1411 = vunpack.c.l.b16 %v1196
        %v1412 = vunpack.c.l.b16 %v1197
        %v1413 = vunpack.c.l.b16 %v1198
        %v1414 = vunpack.c.l.b16 %v1199
        %v1415 = vunpack.c.l.b16 %v1200
        %v1416 = vunpack.c.l.b16 %v1201
        %v1417 = vunpack.c.l.b16 %v1202
        %v1418 = vunpack.c.l.b16 %v1203
        %v1419 = vpack.c.b16 %v1404, %v1403
        %v1420 = vpack.c.b16 %v1406, %v1405
        %v1421 = vpack.c.b16 %v1408, %v1407
        %v1422 = vpack.c.b16 %v1410, %v1409
        %v1423 = vpack.c.b16 %v1412, %v1411
        %v1424 = vpack.c.b16 %v1414, %v1413
        %v1425 = vpack.c.b16 %v1416, %v1415
        %v1426 = vpack.c.b16 %v1418, %v1417
        %1435 = vmatpush.bf16.msra.mxu0 %v1426
        %1436 = vmatpush.bf16.msra.mxu0 %v1425
        %1437 = vmatpush.bf16.msra.mxu0 %v1424
        %1438 = vmatpush.bf16.msra.mxu0 %v1423
        %1439 = vmatpush.bf16.msra.mxu0 %v1422
        %1440 = vmatpush.bf16.msra.mxu0 %v1421
        %1441 = vmatpush.bf16.msra.mxu0 %v1420
        %1442 = vmatpush.bf16.msra.mxu0 %v1419
        %1443 = vmatmul.bf16.gmra.mxu0 %v769
        %v1444 = vpop.f32.mrf.mxu0
        %v1445 = vadd.f32 0.0, %v1444
        %v1446 = vpop.f32.mrf.mxu0
        %1447 = vdwg.mxu0
        %v1448 = vmul.f32 %v1262, 0.125
        %v1449 = vmul.f32 %v1323, 0.125
        %v1450 = vmul.f32 %v1384, 0.125
        %v1451 = vmul.f32 %v1445, 0.125
        %v1452 = vld [vmem:[#allocation3] sm:$0xff]
        %v1453 = vld [vmem:[#allocation3 + $0x8] sm:$0xff]
        %v1454 = vld [vmem:[#allocation3 + $0x10] sm:$0xff]
        %v1455 = vld [vmem:[#allocation3 + $0x18] sm:$0xff]
        %v1456 = vsub.f32 %v1448, %v1452
        %v1457 = vsub.f32 %v1449, %v1453
        %v1458 = vsub.f32 %v1450, %v1454
        %v1459 = vsub.f32 %v1451, %v1455
        %v1460 = vmul.f32 %v1456, 0.6666667
        %v1461 = vmul.f32 %v1457, 0.6666667
        %v1462 = vmul.f32 %v1458, 0.6666667
        %v1463 = vmul.f32 %v1459, 0.6666667
        %v1464 = vadd.f32 %v1452, %v1460
        %v1465 = vadd.f32 %v1453, %v1461
        %v1466 = vadd.f32 %v1454, %v1462
        %v1467 = vadd.f32 %v1455, %v1463
        %vm1468 = vcmp.ge.f32.partialorder %v1464, 0.5
        %vm1469 = vcmp.ge.f32.partialorder %v1465, 0.5
        %vm1470 = vcmp.ge.f32.partialorder %v1466, 0.5
        %vm1471 = vcmp.ge.f32.partialorder %v1467, 0.5
        %v1472 = vsel %vm1468, 1, 0
        %v1473 = vsel %vm1469, 1, 0
        %v1474 = vsel %vm1470, 1, 0
        %v1475 = vsel %vm1471, 1, 0
        %v1476 = vcvt.s32.f32 %v1472
        %v1477 = vcvt.s32.f32 %v1473
        %v1478 = vcvt.s32.f32 %v1474
        %v1479 = vcvt.s32.f32 %v1475
        %v1480 = vsub.f32 1.0, %v1476
        %v1481 = vsub.f32 1.0, %v1477
        %v1482 = vsub.f32 1.0, %v1478
        %v1483 = vsub.f32 1.0, %v1479
        %v1484 = vmul.f32 %v1464, %v1480
        %v1485 = vmul.f32 %v1465, %v1481
        %v1486 = vmul.f32 %v1466, %v1482
        %v1487 = vmul.f32 %v1467, %v1483
        %1488 = vst [vmem:[#allocation3] sm:$0xff] %v1484
        %1489 = vst [vmem:[#allocation3 + $0x8] sm:$0xff] %v1485
        %1490 = vst [vmem:[#allocation3 + $0x10] sm:$0xff] %v1486
        %1491 = vst [vmem:[#allocation3 + $0x18] sm:$0xff] %v1487
        %1493 = vset.pattern.permute.xlu0 0
        %1494 = vperm.xlu0 %1493, %v478
        %v1495 = vpop.permute.xlu0 %1494
        %1498 = vset.pattern.permute.xlu0 0
        %1499 = vperm.xlu0 %1498, %v479
        %v1500 = vpop.permute.xlu0 %1499
        %1503 = vset.pattern.permute.xlu0 0
        %1504 = vperm.xlu0 %1503, %v480
        %v1505 = vpop.permute.xlu0 %1504
        %1508 = vset.pattern.permute.xlu0 0
        %1509 = vperm.xlu0 %1508, %v481
        %v1510 = vpop.permute.xlu0 %1509
        %vm1512 = vcmask 261120
        %v1514 = vsel %vm1512, %v474, 0
        %v1517 = vsel %vm1512, %v475, 0
        %v1520 = vsel %vm1512, %v476, 0
        %v1523 = vsel %vm1512, %v477, 0
        %1525 = vmatpush.msra.mxu0 0.0
        %1526 = vmatpush.msra.mxu0 0.0
        %1527 = vmatpush.msra.mxu0 0.0
        %1528 = vmatpush.msra.mxu0 0.0
        %1529 = vmatpush.msra.mxu0 0.0
        %1530 = vmatpush.msra.mxu0 0.0
        %1531 = vmatpush.msra.mxu0 0.0
        %1532 = vmatpush.msra.mxu0 0.0
        %1533 = vmatpush.msra.mxu0 0.0
        %1534 = vmatpush.msra.mxu0 0.0
        %1535 = vmatpush.msra.mxu0 0.0
        %1536 = vmatpush.msra.mxu0 0.0
        %1537 = vmatpush.msra.mxu0 %v1479
        %1538 = vmatpush.msra.mxu0 %v1478
        %1539 = vmatpush.msra.mxu0 %v1477
        %1540 = vmatpush.msra.mxu0 %v1476
        %1541 = vmatmul.f32.gmra.mxu0 %v1514
        %v1542 = vpop.f32.mrf.mxu0
        %v1543 = vadd.f32 %v1495, %v1542
        %1544 = vmatmul.f32.gmra.mxu0 %v1517
        %v1545 = vpop.f32.mrf.mxu0
        %v1546 = vadd.f32 %v1500, %v1545
        %1547 = vmatmul.f32.gmra.mxu0 %v1520
        %v1548 = vpop.f32.mrf.mxu0
        %v1549 = vadd.f32 %v1505, %v1548
        %1550 = vmatmul.f32.gmra.mxu0 %v1523
        %v1551 = vpop.f32.mrf.mxu0
        %v1552 = vadd.f32 %v1510, %v1551
        %1553 = vdwg.mxu0
        %1554 = vst [vmem:[%s400] sm:$0xff] %v1543
        %1555 = vst [vmem:[%s400 + $0x8] sm:$0xff] %v1546
        %1556 = vst [vmem:[%s400 + $0x10] sm:$0xff] %v1549
        %1557 = vst [vmem:[%s400 + $0x18] sm:$0xff] %v1552
        %v1558 = vld [vmem:[#allocation4] sm:$0xff]
        %v1559 = vld [vmem:[#allocation4 + $0x8] sm:$0xff]
        %v1560 = vld [vmem:[#allocation4 + $0x10] sm:$0xff]
        %v1561 = vld [vmem:[#allocation4 + $0x18] sm:$0xff]
        %v1562 = vadd.f32 %v1558, %v1543
        %v1563 = vadd.f32 %v1559, %v1546
        %v1564 = vadd.f32 %v1560, %v1549
        %v1565 = vadd.f32 %v1561, %v1552
        %1566 = vst [vmem:[#allocation4] sm:$0xff] %v1562
        %1567 = vst [vmem:[#allocation4 + $0x8] sm:$0xff] %v1563
        %1568 = vst [vmem:[#allocation4 + $0x10] sm:$0xff] %v1564
        %1569 = vst [vmem:[#allocation4 + $0x18] sm:$0xff] %v1565
        %v1570 = vld [vmem:[#allocation5] sm:$0xff]
        %v1571 = vld [vmem:[#allocation5 + $0x8] sm:$0xff]
        %v1572 = vld [vmem:[#allocation5 + $0x10] sm:$0xff]
        %v1573 = vld [vmem:[#allocation5 + $0x18] sm:$0xff]
        %v1574 = vmul.f32 %v1543, %v1543
        %v1575 = vmul.f32 %v1546, %v1546
        %v1576 = vmul.f32 %v1549, %v1549
        %v1577 = vmul.f32 %v1552, %v1552
        %v1578 = vadd.f32 %v1570, %v1574
        %v1579 = vadd.f32 %v1571, %v1575
        %v1580 = vadd.f32 %v1572, %v1576
        %v1581 = vadd.f32 %v1573, %v1577
        %1582 = vst [vmem:[#allocation5] sm:$0xff] %v1578
        %1583 = vst [vmem:[#allocation5 + $0x8] sm:$0xff] %v1579
        %1584 = vst [vmem:[#allocation5 + $0x10] sm:$0xff] %v1580
        %1585 = vst [vmem:[#allocation5 + $0x18] sm:$0xff] %v1581
        %s1586 = scalar_lea.vmem %s377, 96 [#allocation6]
        %v1587 = vld [vmem:[%s1586] sm:$0xff]
        %v1588 = vld [vmem:[%s1586 + $0x8] sm:$0xff]
        %v1589 = vld [vmem:[%s1586 + $0x10] sm:$0xff]
        %v1590 = vld [vmem:[%s1586 + $0x18] sm:$0xff]
        %v1591 = vld [vmem:[%s1586 + $0x20] sm:$0xff]
        %v1592 = vld [vmem:[%s1586 + $0x28] sm:$0xff]
        %v1593 = vld [vmem:[%s1586 + $0x30] sm:$0xff]
        %v1594 = vld [vmem:[%s1586 + $0x38] sm:$0xff]
        %v1595 = vld [vmem:[%s1586 + $0x40] sm:$0xff]
        %v1596 = vld [vmem:[%s1586 + $0x48] sm:$0xff]
        %v1597 = vld [vmem:[%s1586 + $0x50] sm:$0xff]
        %v1598 = vld [vmem:[%s1586 + $0x58] sm:$0xff]
        %v1599 = vmul.f32 %v1587, %v497
        %v1600 = vmul.f32 %v1588, %v502
        %v1601 = vmul.f32 %v1589, %v507
        %v1602 = vmul.f32 %v1590, %v512
        %v1603 = vmul.f32 %v1591, %v517
        %v1604 = vmul.f32 %v1592, %v522
        %v1605 = vmul.f32 %v1593, %v527
        %v1606 = vmul.f32 %v1594, %v532
        %v1607 = vmul.f32 %v1595, %v537
        %v1608 = vmul.f32 %v1596, %v542
        %v1609 = vmul.f32 %v1597, %v547
        %v1610 = vmul.f32 %v1598, %v552
        %v1611 = vadd.f32 %v1599, %v569
        %v1612 = vadd.f32 %v1600, %v574
        %v1613 = vadd.f32 %v1601, %v579
        %v1614 = vadd.f32 %v1602, %v584
        %v1615 = vadd.f32 %v1603, %v589
        %v1616 = vadd.f32 %v1604, %v594
        %v1617 = vadd.f32 %v1605, %v599
        %v1618 = vadd.f32 %v1606, %v604
        %v1619 = vadd.f32 %v1607, %v609
        %v1620 = vadd.f32 %v1608, %v614
        %v1621 = vadd.f32 %v1609, %v619
        %v1622 = vadd.f32 %v1610, %v624
        %v1623 = vld [vmem:[#allocation2] sm:$0xff]
        %v1624 = vld [vmem:[#allocation2 + $0x8] sm:$0xff]
        %v1625 = vld [vmem:[#allocation2 + $0x10] sm:$0xff]
        %v1626 = vld [vmem:[#allocation2 + $0x18] sm:$0xff]
        %v1627 = vld [vmem:[#allocation2 + $0x20] sm:$0xff]
        %v1628 = vld [vmem:[#allocation2 + $0x28] sm:$0xff]
        %v1629 = vld [vmem:[#allocation2 + $0x30] sm:$0xff]
        %v1630 = vld [vmem:[#allocation2 + $0x38] sm:$0xff]
        %v1631 = vld [vmem:[#allocation2 + $0x40] sm:$0xff]
        %v1632 = vld [vmem:[#allocation2 + $0x48] sm:$0xff]
        %v1633 = vld [vmem:[#allocation2 + $0x50] sm:$0xff]
        %v1634 = vld [vmem:[#allocation2 + $0x58] sm:$0xff]
        %v1635 = vsub.f32 %v1611, %v1623
        %v1636 = vsub.f32 %v1612, %v1624
        %v1637 = vsub.f32 %v1613, %v1625
        %v1638 = vsub.f32 %v1614, %v1626
        %v1639 = vsub.f32 %v1615, %v1627
        %v1640 = vsub.f32 %v1616, %v1628
        %v1641 = vsub.f32 %v1617, %v1629
        %v1642 = vsub.f32 %v1618, %v1630
        %v1643 = vsub.f32 %v1619, %v1631
        %v1644 = vsub.f32 %v1620, %v1632
        %v1645 = vsub.f32 %v1621, %v1633
        %v1646 = vsub.f32 %v1622, %v1634
        %v1647 = vmul.f32 %v1635, 0.6666667
        %v1648 = vmul.f32 %v1636, 0.6666667
        %v1649 = vmul.f32 %v1637, 0.6666667
        %v1650 = vmul.f32 %v1638, 0.6666667
        %v1651 = vmul.f32 %v1639, 0.6666667
        %v1652 = vmul.f32 %v1640, 0.6666667
        %v1653 = vmul.f32 %v1641, 0.6666667
        %v1654 = vmul.f32 %v1642, 0.6666667
        %v1655 = vmul.f32 %v1643, 0.6666667
        %v1656 = vmul.f32 %v1644, 0.6666667
        %v1657 = vmul.f32 %v1645, 0.6666667
        %v1658 = vmul.f32 %v1646, 0.6666667
        %v1659 = vadd.f32 %v1623, %v1647
        %v1660 = vadd.f32 %v1624, %v1648
        %v1661 = vadd.f32 %v1625, %v1649
        %v1662 = vadd.f32 %v1626, %v1650
        %v1663 = vadd.f32 %v1627, %v1651
        %v1664 = vadd.f32 %v1628, %v1652
        %v1665 = vadd.f32 %v1629, %v1653
        %v1666 = vadd.f32 %v1630, %v1654
        %v1667 = vadd.f32 %v1631, %v1655
        %v1668 = vadd.f32 %v1632, %v1656
        %v1669 = vadd.f32 %v1633, %v1657
        %v1670 = vadd.f32 %v1634, %v1658
        %vm1671 = vcmp.ge.f32.partialorder %v1659, 1.0
        %vm1672 = vcmp.ge.f32.partialorder %v1660, 1.0
        %vm1673 = vcmp.ge.f32.partialorder %v1661, 1.0
        %vm1674 = vcmp.ge.f32.partialorder %v1662, 1.0
        %vm1675 = vcmp.ge.f32.partialorder %v1663, 1.0
        %vm1676 = vcmp.ge.f32.partialorder %v1664, 1.0
        %vm1677 = vcmp.ge.f32.partialorder %v1665, 1.0
        %vm1678 = vcmp.ge.f32.partialorder %v1666, 1.0
        %vm1679 = vcmp.ge.f32.partialorder %v1667, 1.0
        %vm1680 = vcmp.ge.f32.partialorder %v1668, 1.0
        %vm1681 = vcmp.ge.f32.partialorder %v1669, 1.0
        %vm1682 = vcmp.ge.f32.partialorder %v1670, 1.0
        %v1683 = vsel %vm1671, 1, 0
        %v1684 = vsel %vm1672, 1, 0
        %v1685 = vsel %vm1673, 1, 0
        %v1686 = vsel %vm1674, 1, 0
        %v1687 = vsel %vm1675, 1, 0
        %v1688 = vsel %vm1676, 1, 0
        %v1689 = vsel %vm1677, 1, 0
        %v1690 = vsel %vm1678, 1, 0
        %v1691 = vsel %vm1679, 1, 0
        %v1692 = vsel %vm1680, 1, 0
        %v1693 = vsel %vm1681, 1, 0
        %v1694 = vsel %vm1682, 1, 0
        %v1695 = vcvt.s32.f32 %v1683
        %v1696 = vcvt.s32.f32 %v1684
        %v1697 = vcvt.s32.f32 %v1685
        %v1698 = vcvt.s32.f32 %v1686
        %v1699 = vcvt.s32.f32 %v1687
        %v1700 = vcvt.s32.f32 %v1688
        %v1701 = vcvt.s32.f32 %v1689
        %v1702 = vcvt.s32.f32 %v1690
        %v1703 = vcvt.s32.f32 %v1691
        %v1704 = vcvt.s32.f32 %v1692
        %v1705 = vcvt.s32.f32 %v1693
        %v1706 = vcvt.s32.f32 %v1694
        %v1707 = vsub.f32 1.0, %v1695
        %v1708 = vsub.f32 1.0, %v1696
        %v1709 = vsub.f32 1.0, %v1697
        %v1710 = vsub.f32 1.0, %v1698
        %v1711 = vsub.f32 1.0, %v1699
        %v1712 = vsub.f32 1.0, %v1700
        %v1713 = vsub.f32 1.0, %v1701
        %v1714 = vsub.f32 1.0, %v1702
        %v1715 = vsub.f32 1.0, %v1703
        %v1716 = vsub.f32 1.0, %v1704
        %v1717 = vsub.f32 1.0, %v1705
        %v1718 = vsub.f32 1.0, %v1706
        %v1719 = vmul.f32 %v1659, %v1707
        %v1720 = vmul.f32 %v1660, %v1708
        %v1721 = vmul.f32 %v1661, %v1709
        %v1722 = vmul.f32 %v1662, %v1710
        %v1723 = vmul.f32 %v1663, %v1711
        %v1724 = vmul.f32 %v1664, %v1712
        %v1725 = vmul.f32 %v1665, %v1713
        %v1726 = vmul.f32 %v1666, %v1714
        %v1727 = vmul.f32 %v1667, %v1715
        %v1728 = vmul.f32 %v1668, %v1716
        %v1729 = vmul.f32 %v1669, %v1717
        %v1730 = vmul.f32 %v1670, %v1718
        %1731 = vst [vmem:[#allocation2] sm:$0xff] %v1719
        %1732 = vst [vmem:[#allocation2 + $0x8] sm:$0xff] %v1720
        %1733 = vst [vmem:[#allocation2 + $0x10] sm:$0xff] %v1721
        %1734 = vst [vmem:[#allocation2 + $0x18] sm:$0xff] %v1722
        %1735 = vst [vmem:[#allocation2 + $0x20] sm:$0xff] %v1723
        %1736 = vst [vmem:[#allocation2 + $0x28] sm:$0xff] %v1724
        %1737 = vst [vmem:[#allocation2 + $0x30] sm:$0xff] %v1725
        %1738 = vst [vmem:[#allocation2 + $0x38] sm:$0xff] %v1726
        %1739 = vst [vmem:[#allocation2 + $0x40] sm:$0xff] %v1727
        %1740 = vst [vmem:[#allocation2 + $0x48] sm:$0xff] %v1728
        %1741 = vst [vmem:[#allocation2 + $0x50] sm:$0xff] %v1729
        %1742 = vst [vmem:[#allocation2 + $0x58] sm:$0xff] %v1730
        %v1743 = vpack.c.bf16 %v1695, %v1695
        %v1744 = vpack.c.bf16 %v1696, %v1696
        %v1745 = vpack.c.bf16 %v1697, %v1697
        %v1746 = vpack.c.bf16 %v1698, %v1698
        %v1747 = vpack.c.bf16 %v1699, %v1699
        %v1748 = vpack.c.bf16 %v1700, %v1700
        %v1749 = vpack.c.bf16 %v1701, %v1701
        %v1750 = vpack.c.bf16 %v1702, %v1702
        %v1751 = vpack.c.bf16 %v1703, %v1703
        %v1752 = vpack.c.bf16 %v1704, %v1704
        %v1753 = vpack.c.bf16 %v1705, %v1705
        %v1754 = vpack.c.bf16 %v1706, %v1706
        %1755 = vxpose.xlu0.c.b16.start [1/8] %v1747, 128
        %1756 = vxpose.xlu0.c.b16.cont [2/8] 0, 128
        %1757 = vxpose.xlu0.c.b16.cont [3/8] 0, 128
        %1758 = vxpose.xlu0.c.b16.cont [4/8] 0, 128
        %1759 = vxpose.xlu0.c.b16.cont [5/8] 0, 128
        %1760 = vxpose.xlu0.c.b16.cont [6/8] 0, 128
        %1761 = vxpose.xlu0.c.b16.cont [7/8] 0, 128
        %1762 = vxpose.xlu0.c.b16.end [8/8] 0, 128
        %v1763 = vpop.trf.xlu0
        %v1764 = vpop.trf.xlu0
        %v1765 = vpop.trf.xlu0
        %v1766 = vpop.trf.xlu0
        %v1767 = vpop.trf.xlu0
        %v1768 = vpop.trf.xlu0
        %v1769 = vpop.trf.xlu0
        %v1770 = vpop.trf.xlu0
        %v1772 = vsel %vm786, %v1763, 0
        %v1775 = vsel %vm786, %v1764, 0
        %v1778 = vsel %vm786, %v1765, 0
        %v1781 = vsel %vm786, %v1766, 0
        %v1784 = vsel %vm786, %v1767, 0
        %v1787 = vsel %vm786, %v1768, 0
        %v1790 = vsel %vm786, %v1769, 0
        %v1793 = vsel %vm786, %v1770, 0
        %v1796 = vsel %vm811, %v1743, 0
        %1798 = vmatpush.bf16.msra.mxu0 0
        %1799 = vmatpush.bf16.msra.mxu0 0
        %1800 = vmatpush.bf16.msra.mxu0 0
        %1801 = vmatpush.bf16.msra.mxu0 0
        %1802 = vmatpush.bf16.msra.mxu0 0
        %1803 = vmatpush.bf16.msra.mxu0 0
        %1804 = vmatpush.bf16.msra.mxu0 0
        %1805 = vmatpush.bf16.msra.mxu0 %v1796
        %1806 = vmatmul.bf16.gmra.mxu0 %v1772
        %v1807 = vpop.f32.mrf.mxu0
        %v1808 = vadd.f32 0.0, %v1807
        %v1809 = vpop.f32.mrf.mxu0
        %v1810 = vadd.f32 0.0, %v1809
        %1811 = vmatmul.bf16.gmra.mxu0 %v1775
        %v1812 = vpop.f32.mrf.mxu0
        %v1813 = vadd.f32 0.0, %v1812
        %v1814 = vpop.f32.mrf.mxu0
        %v1815 = vadd.f32 0.0, %v1814
        %1816 = vmatmul.bf16.gmra.mxu0 %v1778
        %v1817 = vpop.f32.mrf.mxu0
        %v1818 = vadd.f32 0.0, %v1817
        %v1819 = vpop.f32.mrf.mxu0
        %v1820 = vadd.f32 0.0, %v1819
        %1821 = vmatmul.bf16.gmra.mxu0 %v1781
        %v1822 = vpop.f32.mrf.mxu0
        %v1823 = vadd.f32 0.0, %v1822
        %v1824 = vpop.f32.mrf.mxu0
        %v1825 = vadd.f32 0.0, %v1824
        %1826 = vmatmul.bf16.gmra.mxu0 %v1784
        %v1827 = vpop.f32.mrf.mxu0
        %v1828 = vadd.f32 0.0, %v1827
        %v1829 = vpop.f32.mrf.mxu0
        %v1830 = vadd.f32 0.0, %v1829
        %1831 = vmatmul.bf16.gmra.mxu0 %v1787
        %v1832 = vpop.f32.mrf.mxu0
        %v1833 = vadd.f32 0.0, %v1832
        %v1834 = vpop.f32.mrf.mxu0
        %v1835 = vadd.f32 0.0, %v1834
        %1836 = vmatmul.bf16.gmra.mxu0 %v1790
        %v1837 = vpop.f32.mrf.mxu0
        %v1838 = vadd.f32 0.0, %v1837
        %v1839 = vpop.f32.mrf.mxu0
        %v1840 = vadd.f32 0.0, %v1839
        %1841 = vmatmul.bf16.gmra.mxu0 %v1793
        %v1842 = vpop.f32.mrf.mxu0
        %v1843 = vadd.f32 0.0, %v1842
        %v1844 = vpop.f32.mrf.mxu0
        %v1845 = vadd.f32 0.0, %v1844
        %1846 = vdwg.mxu0
        %1847 = vxpose.xlu0.c.b16.start [1/8] %v1748, 128
        %1848 = vxpose.xlu0.c.b16.cont [2/8] 0, 128
        %1849 = vxpose.xlu0.c.b16.cont [3/8] 0, 128
        %1850 = vxpose.xlu0.c.b16.cont [4/8] 0, 128
        %1851 = vxpose.xlu0.c.b16.cont [5/8] 0, 128
        %1852 = vxpose.xlu0.c.b16.cont [6/8] 0, 128
        %1853 = vxpose.xlu0.c.b16.cont [7/8] 0, 128
        %1854 = vxpose.xlu0.c.b16.end [8/8] 0, 128
        %v1855 = vpop.trf.xlu0
        %v1856 = vpop.trf.xlu0
        %v1857 = vpop.trf.xlu0
        %v1858 = vpop.trf.xlu0
        %v1859 = vpop.trf.xlu0
        %v1860 = vpop.trf.xlu0
        %v1861 = vpop.trf.xlu0
        %v1862 = vpop.trf.xlu0
        %v1864 = vsel %vm786, %v1855, 0
        %v1867 = vsel %vm786, %v1856, 0
        %v1870 = vsel %vm786, %v1857, 0
        %v1873 = vsel %vm786, %v1858, 0
        %v1876 = vsel %vm786, %v1859, 0
        %v1879 = vsel %vm786, %v1860, 0
        %v1882 = vsel %vm786, %v1861, 0
        %v1885 = vsel %vm786, %v1862, 0
        %v1888 = vsel %vm811, %v1744, 0
        %1890 = vmatpush.bf16.msra.mxu0 0
        %1891 = vmatpush.bf16.msra.mxu0 0
        %1892 = vmatpush.bf16.msra.mxu0 0
        %1893 = vmatpush.bf16.msra.mxu0 0
        %1894 = vmatpush.bf16.msra.mxu0 0
        %1895 = vmatpush.bf16.msra.mxu0 0
        %1896 = vmatpush.bf16.msra.mxu0 0
        %1897 = vmatpush.bf16.msra.mxu0 %v1888
        %1898 = vmatmul.bf16.gmra.mxu0 %v1864
        %v1899 = vpop.f32.mrf.mxu0
        %v1900 = vadd.f32 0.0, %v1899
        %v1901 = vpop.f32.mrf.mxu0
        %v1902 = vadd.f32 0.0, %v1901
        %1903 = vmatmul.bf16.gmra.mxu0 %v1867
        %v1904 = vpop.f32.mrf.mxu0
        %v1905 = vadd.f32 0.0, %v1904
        %v1906 = vpop.f32.mrf.mxu0
        %v1907 = vadd.f32 0.0, %v1906
        %1908 = vmatmul.bf16.gmra.mxu0 %v1870
        %v1909 = vpop.f32.mrf.mxu0
        %v1910 = vadd.f32 0.0, %v1909
        %v1911 = vpop.f32.mrf.mxu0
        %v1912 = vadd.f32 0.0, %v1911
        %1913 = vmatmul.bf16.gmra.mxu0 %v1873
        %v1914 = vpop.f32.mrf.mxu0
        %v1915 = vadd.f32 0.0, %v1914
        %v1916 = vpop.f32.mrf.mxu0
        %v1917 = vadd.f32 0.0, %v1916
        %1918 = vmatmul.bf16.gmra.mxu0 %v1876
        %v1919 = vpop.f32.mrf.mxu0
        %v1920 = vadd.f32 0.0, %v1919
        %v1921 = vpop.f32.mrf.mxu0
        %v1922 = vadd.f32 0.0, %v1921
        %1923 = vmatmul.bf16.gmra.mxu0 %v1879
        %v1924 = vpop.f32.mrf.mxu0
        %v1925 = vadd.f32 0.0, %v1924
        %v1926 = vpop.f32.mrf.mxu0
        %v1927 = vadd.f32 0.0, %v1926
        %1928 = vmatmul.bf16.gmra.mxu0 %v1882
        %v1929 = vpop.f32.mrf.mxu0
        %v1930 = vadd.f32 0.0, %v1929
        %v1931 = vpop.f32.mrf.mxu0
        %v1932 = vadd.f32 0.0, %v1931
        %1933 = vmatmul.bf16.gmra.mxu0 %v1885
        %v1934 = vpop.f32.mrf.mxu0
        %v1935 = vadd.f32 0.0, %v1934
        %v1936 = vpop.f32.mrf.mxu0
        %v1937 = vadd.f32 0.0, %v1936
        %1938 = vdwg.mxu0
        %1939 = vxpose.xlu0.c.b16.start [1/8] %v1749, 128
        %1940 = vxpose.xlu0.c.b16.cont [2/8] 0, 128
        %1941 = vxpose.xlu0.c.b16.cont [3/8] 0, 128
        %1942 = vxpose.xlu0.c.b16.cont [4/8] 0, 128
        %1943 = vxpose.xlu0.c.b16.cont [5/8] 0, 128
        %1944 = vxpose.xlu0.c.b16.cont [6/8] 0, 128
        %1945 = vxpose.xlu0.c.b16.cont [7/8] 0, 128
        %1946 = vxpose.xlu0.c.b16.end [8/8] 0, 128
        %v1947 = vpop.trf.xlu0
        %v1948 = vpop.trf.xlu0
        %v1949 = vpop.trf.xlu0
        %v1950 = vpop.trf.xlu0
        %v1951 = vpop.trf.xlu0
        %v1952 = vpop.trf.xlu0
        %v1953 = vpop.trf.xlu0
        %v1954 = vpop.trf.xlu0
        %v1956 = vsel %vm786, %v1947, 0
        %v1959 = vsel %vm786, %v1948, 0
        %v1962 = vsel %vm786, %v1949, 0
        %v1965 = vsel %vm786, %v1950, 0
        %v1968 = vsel %vm786, %v1951, 0
        %v1971 = vsel %vm786, %v1952, 0
        %v1974 = vsel %vm786, %v1953, 0
        %v1977 = vsel %vm786, %v1954, 0
        %v1980 = vsel %vm811, %v1745, 0
        %1982 = vmatpush.bf16.msra.mxu0 0
        %1983 = vmatpush.bf16.msra.mxu0 0
        %1984 = vmatpush.bf16.msra.mxu0 0
        %1985 = vmatpush.bf16.msra.mxu0 0
        %1986 = vmatpush.bf16.msra.mxu0 0
        %1987 = vmatpush.bf16.msra.mxu0 0
        %1988 = vmatpush.bf16.msra.mxu0 0
        %1989 = vmatpush.bf16.msra.mxu0 %v1980
        %1990 = vmatmul.bf16.gmra.mxu0 %v1956
        %v1991 = vpop.f32.mrf.mxu0
        %v1992 = vadd.f32 0.0, %v1991
        %v1993 = vpop.f32.mrf.mxu0
        %v1994 = vadd.f32 0.0, %v1993
        %1995 = vmatmul.bf16.gmra.mxu0 %v1959
        %v1996 = vpop.f32.mrf.mxu0
        %v1997 = vadd.f32 0.0, %v1996
        %v1998 = vpop.f32.mrf.mxu0
        %v1999 = vadd.f32 0.0, %v1998
        %2000 = vmatmul.bf16.gmra.mxu0 %v1962
        %v2001 = vpop.f32.mrf.mxu0
        %v2002 = vadd.f32 0.0, %v2001
        %v2003 = vpop.f32.mrf.mxu0
        %v2004 = vadd.f32 0.0, %v2003
        %2005 = vmatmul.bf16.gmra.mxu0 %v1965
        %v2006 = vpop.f32.mrf.mxu0
        %v2007 = vadd.f32 0.0, %v2006
        %v2008 = vpop.f32.mrf.mxu0
        %v2009 = vadd.f32 0.0, %v2008
        %2010 = vmatmul.bf16.gmra.mxu0 %v1968
        %v2011 = vpop.f32.mrf.mxu0
        %v2012 = vadd.f32 0.0, %v2011
        %v2013 = vpop.f32.mrf.mxu0
        %v2014 = vadd.f32 0.0, %v2013
        %2015 = vmatmul.bf16.gmra.mxu0 %v1971
        %v2016 = vpop.f32.mrf.mxu0
        %v2017 = vadd.f32 0.0, %v2016
        %v2018 = vpop.f32.mrf.mxu0
        %v2019 = vadd.f32 0.0, %v2018
        %2020 = vmatmul.bf16.gmra.mxu0 %v1974
        %v2021 = vpop.f32.mrf.mxu0
        %v2022 = vadd.f32 0.0, %v2021
        %v2023 = vpop.f32.mrf.mxu0
        %v2024 = vadd.f32 0.0, %v2023
        %2025 = vmatmul.bf16.gmra.mxu0 %v1977
        %v2026 = vpop.f32.mrf.mxu0
        %v2027 = vadd.f32 0.0, %v2026
        %v2028 = vpop.f32.mrf.mxu0
        %v2029 = vadd.f32 0.0, %v2028
        %2030 = vdwg.mxu0
        %2031 = vxpose.xlu0.c.b16.start [1/8] %v1750, 128
        %2032 = vxpose.xlu0.c.b16.cont [2/8] 0, 128
        %2033 = vxpose.xlu0.c.b16.cont [3/8] 0, 128
        %2034 = vxpose.xlu0.c.b16.cont [4/8] 0, 128
        %2035 = vxpose.xlu0.c.b16.cont [5/8] 0, 128
        %2036 = vxpose.xlu0.c.b16.cont [6/8] 0, 128
        %2037 = vxpose.xlu0.c.b16.cont [7/8] 0, 128
        %2038 = vxpose.xlu0.c.b16.end [8/8] 0, 128
        %v2039 = vpop.trf.xlu0
        %v2040 = vpop.trf.xlu0
        %v2041 = vpop.trf.xlu0
        %v2042 = vpop.trf.xlu0
        %v2043 = vpop.trf.xlu0
        %v2044 = vpop.trf.xlu0
        %v2045 = vpop.trf.xlu0
        %v2046 = vpop.trf.xlu0
        %v2048 = vsel %vm786, %v2039, 0
        %v2051 = vsel %vm786, %v2040, 0
        %v2054 = vsel %vm786, %v2041, 0
        %v2057 = vsel %vm786, %v2042, 0
        %v2060 = vsel %vm786, %v2043, 0
        %v2063 = vsel %vm786, %v2044, 0
        %v2066 = vsel %vm786, %v2045, 0
        %v2069 = vsel %vm786, %v2046, 0
        %v2072 = vsel %vm811, %v1746, 0
        %2074 = vmatpush.bf16.msra.mxu0 0
        %2075 = vmatpush.bf16.msra.mxu0 0
        %2076 = vmatpush.bf16.msra.mxu0 0
        %2077 = vmatpush.bf16.msra.mxu0 0
        %2078 = vmatpush.bf16.msra.mxu0 0
        %2079 = vmatpush.bf16.msra.mxu0 0
        %2080 = vmatpush.bf16.msra.mxu0 0
        %2081 = vmatpush.bf16.msra.mxu0 %v2072
        %2082 = vmatmul.bf16.gmra.mxu0 %v2048
        %v2083 = vpop.f32.mrf.mxu0
        %v2084 = vadd.f32 0.0, %v2083
        %v2085 = vpop.f32.mrf.mxu0
        %v2086 = vadd.f32 0.0, %v2085
        %2087 = vmatmul.bf16.gmra.mxu0 %v2051
        %v2088 = vpop.f32.mrf.mxu0
        %v2089 = vadd.f32 0.0, %v2088
        %v2090 = vpop.f32.mrf.mxu0
        %v2091 = vadd.f32 0.0, %v2090
        %2092 = vmatmul.bf16.gmra.mxu0 %v2054
        %v2093 = vpop.f32.mrf.mxu0
        %v2094 = vadd.f32 0.0, %v2093
        %v2095 = vpop.f32.mrf.mxu0
        %v2096 = vadd.f32 0.0, %v2095
        %2097 = vmatmul.bf16.gmra.mxu0 %v2057
        %v2098 = vpop.f32.mrf.mxu0
        %v2099 = vadd.f32 0.0, %v2098
        %v2100 = vpop.f32.mrf.mxu0
        %v2101 = vadd.f32 0.0, %v2100
        %2102 = vmatmul.bf16.gmra.mxu0 %v2060
        %v2103 = vpop.f32.mrf.mxu0
        %v2104 = vadd.f32 0.0, %v2103
        %v2105 = vpop.f32.mrf.mxu0
        %v2106 = vadd.f32 0.0, %v2105
        %2107 = vmatmul.bf16.gmra.mxu0 %v2063
        %v2108 = vpop.f32.mrf.mxu0
        %v2109 = vadd.f32 0.0, %v2108
        %v2110 = vpop.f32.mrf.mxu0
        %v2111 = vadd.f32 0.0, %v2110
        %2112 = vmatmul.bf16.gmra.mxu0 %v2066
        %v2113 = vpop.f32.mrf.mxu0
        %v2114 = vadd.f32 0.0, %v2113
        %v2115 = vpop.f32.mrf.mxu0
        %v2116 = vadd.f32 0.0, %v2115
        %2117 = vmatmul.bf16.gmra.mxu0 %v2069
        %v2118 = vpop.f32.mrf.mxu0
        %v2119 = vadd.f32 0.0, %v2118
        %v2120 = vpop.f32.mrf.mxu0
        %v2121 = vadd.f32 0.0, %v2120
        %2122 = vdwg.mxu0
        %v2123 = vpack.c.bf16 %v1808, %v1808
        %v2124 = vpack.c.bf16 %v1810, %v1810
        %v2125 = vpack.c.bf16 %v1813, %v1813
        %v2126 = vpack.c.bf16 %v1815, %v1815
        %v2127 = vpack.c.bf16 %v1818, %v1818
        %v2128 = vpack.c.bf16 %v1820, %v1820
        %v2129 = vpack.c.bf16 %v1823, %v1823
        %v2130 = vpack.c.bf16 %v1825, %v1825
        %v2131 = vpack.c.bf16 %v1828, %v1828
        %v2132 = vpack.c.bf16 %v1830, %v1830
        %v2133 = vpack.c.bf16 %v1833, %v1833
        %v2134 = vpack.c.bf16 %v1835, %v1835
        %v2135 = vpack.c.bf16 %v1838, %v1838
        %v2136 = vpack.c.bf16 %v1840, %v1840
        %v2137 = vpack.c.bf16 %v1843, %v1843
        %v2138 = vpack.c.bf16 %v1845, %v1845
        %v2139 = vpack.c.bf16 %v1900, %v1900
        %v2140 = vpack.c.bf16 %v1902, %v1902
        %v2141 = vpack.c.bf16 %v1905, %v1905
        %v2142 = vpack.c.bf16 %v1907, %v1907
        %v2143 = vpack.c.bf16 %v1910, %v1910
        %v2144 = vpack.c.bf16 %v1912, %v1912
        %v2145 = vpack.c.bf16 %v1915, %v1915
        %v2146 = vpack.c.bf16 %v1917, %v1917
        %v2147 = vpack.c.bf16 %v1920, %v1920
        %v2148 = vpack.c.bf16 %v1922, %v1922
        %v2149 = vpack.c.bf16 %v1925, %v1925
        %v2150 = vpack.c.bf16 %v1927, %v1927
        %v2151 = vpack.c.bf16 %v1930, %v1930
        %v2152 = vpack.c.bf16 %v1932, %v1932
        %v2153 = vpack.c.bf16 %v1935, %v1935
        %v2154 = vpack.c.bf16 %v1937, %v1937
        %v2155 = vpack.c.bf16 %v1992, %v1992
        %v2156 = vpack.c.bf16 %v1994, %v1994
        %v2157 = vpack.c.bf16 %v1997, %v1997
        %v2158 = vpack.c.bf16 %v1999, %v1999
        %v2159 = vpack.c.bf16 %v2002, %v2002
        %v2160 = vpack.c.bf16 %v2004, %v2004
        %v2161 = vpack.c.bf16 %v2007, %v2007
        %v2162 = vpack.c.bf16 %v2009, %v2009
        %v2163 = vpack.c.bf16 %v2012, %v2012
        %v2164 = vpack.c.bf16 %v2014, %v2014
        %v2165 = vpack.c.bf16 %v2017, %v2017
        %v2166 = vpack.c.bf16 %v2019, %v2019
        %v2167 = vpack.c.bf16 %v2022, %v2022
        %v2168 = vpack.c.bf16 %v2024, %v2024
        %v2169 = vpack.c.bf16 %v2027, %v2027
        %v2170 = vpack.c.bf16 %v2029, %v2029
        %v2171 = vpack.c.bf16 %v2084, %v2084
        %v2172 = vpack.c.bf16 %v2086, %v2086
        %v2173 = vpack.c.bf16 %v2089, %v2089
        %v2174 = vpack.c.bf16 %v2091, %v2091
        %v2175 = vpack.c.bf16 %v2094, %v2094
        %v2176 = vpack.c.bf16 %v2096, %v2096
        %v2177 = vpack.c.bf16 %v2099, %v2099
        %v2178 = vpack.c.bf16 %v2101, %v2101
        %v2179 = vpack.c.bf16 %v2104, %v2104
        %v2180 = vpack.c.bf16 %v2106, %v2106
        %v2181 = vpack.c.bf16 %v2109, %v2109
        %v2182 = vpack.c.bf16 %v2111, %v2111
        %v2183 = vpack.c.bf16 %v2114, %v2114
        %v2184 = vpack.c.bf16 %v2116, %v2116
        %v2185 = vpack.c.bf16 %v2119, %v2119
        %v2186 = vpack.c.bf16 %v2121, %v2121
        %v2203 = vunpack.c.l.b16 %v2123
        %v2204 = vunpack.c.l.b16 %v2124
        %v2205 = vunpack.c.l.b16 %v2125
        %v2206 = vunpack.c.l.b16 %v2126
        %v2207 = vunpack.c.l.b16 %v2127
        %v2208 = vunpack.c.l.b16 %v2128
        %v2209 = vunpack.c.l.b16 %v2129
        %v2210 = vunpack.c.l.b16 %v2130
        %v2211 = vunpack.c.l.b16 %v2131
        %v2212 = vunpack.c.l.b16 %v2132
        %v2213 = vunpack.c.l.b16 %v2133
        %v2214 = vunpack.c.l.b16 %v2134
        %v2215 = vunpack.c.l.b16 %v2135
        %v2216 = vunpack.c.l.b16 %v2136
        %v2217 = vunpack.c.l.b16 %v2137
        %v2218 = vunpack.c.l.b16 %v2138
        %v2219 = vpack.c.b16 %v2204, %v2203
        %v2220 = vpack.c.b16 %v2206, %v2205
        %v2221 = vpack.c.b16 %v2208, %v2207
        %v2222 = vpack.c.b16 %v2210, %v2209
        %v2223 = vpack.c.b16 %v2212, %v2211
        %v2224 = vpack.c.b16 %v2214, %v2213
        %v2225 = vpack.c.b16 %v2216, %v2215
        %v2226 = vpack.c.b16 %v2218, %v2217
        %2235 = vmatpush.bf16.msra.mxu0 %v2226
        %2236 = vmatpush.bf16.msra.mxu0 %v2225
        %2237 = vmatpush.bf16.msra.mxu0 %v2224
        %2238 = vmatpush.bf16.msra.mxu0 %v2223
        %2239 = vmatpush.bf16.msra.mxu0 %v2222
        %2240 = vmatpush.bf16.msra.mxu0 %v2221
        %2241 = vmatpush.bf16.msra.mxu0 %v2220
        %2242 = vmatpush.bf16.msra.mxu0 %v2219
        %2243 = vmatmul.bf16.gmra.mxu0 %v1751
        %v2244 = vpop.f32.mrf.mxu0
        %v2245 = vadd.f32 0.0, %v2244
        %v2246 = vpop.f32.mrf.mxu0
        %2247 = vdwg.mxu0
        %v2264 = vunpack.c.l.b16 %v2139
        %v2265 = vunpack.c.l.b16 %v2140
        %v2266 = vunpack.c.l.b16 %v2141
        %v2267 = vunpack.c.l.b16 %v2142
        %v2268 = vunpack.c.l.b16 %v2143
        %v2269 = vunpack.c.l.b16 %v2144
        %v2270 = vunpack.c.l.b16 %v2145
        %v2271 = vunpack.c.l.b16 %v2146
        %v2272 = vunpack.c.l.b16 %v2147
        %v2273 = vunpack.c.l.b16 %v2148
        %v2274 = vunpack.c.l.b16 %v2149
        %v2275 = vunpack.c.l.b16 %v2150
        %v2276 = vunpack.c.l.b16 %v2151
        %v2277 = vunpack.c.l.b16 %v2152
        %v2278 = vunpack.c.l.b16 %v2153
        %v2279 = vunpack.c.l.b16 %v2154
        %v2280 = vpack.c.b16 %v2265, %v2264
        %v2281 = vpack.c.b16 %v2267, %v2266
        %v2282 = vpack.c.b16 %v2269, %v2268
        %v2283 = vpack.c.b16 %v2271, %v2270
        %v2284 = vpack.c.b16 %v2273, %v2272
        %v2285 = vpack.c.b16 %v2275, %v2274
        %v2286 = vpack.c.b16 %v2277, %v2276
        %v2287 = vpack.c.b16 %v2279, %v2278
        %2296 = vmatpush.bf16.msra.mxu0 %v2287
        %2297 = vmatpush.bf16.msra.mxu0 %v2286
        %2298 = vmatpush.bf16.msra.mxu0 %v2285
        %2299 = vmatpush.bf16.msra.mxu0 %v2284
        %2300 = vmatpush.bf16.msra.mxu0 %v2283
        %2301 = vmatpush.bf16.msra.mxu0 %v2282
        %2302 = vmatpush.bf16.msra.mxu0 %v2281
        %2303 = vmatpush.bf16.msra.mxu0 %v2280
        %2304 = vmatmul.bf16.gmra.mxu0 %v1752
        %v2305 = vpop.f32.mrf.mxu0
        %v2306 = vadd.f32 0.0, %v2305
        %v2307 = vpop.f32.mrf.mxu0
        %2308 = vdwg.mxu0
        %v2325 = vunpack.c.l.b16 %v2155
        %v2326 = vunpack.c.l.b16 %v2156
        %v2327 = vunpack.c.l.b16 %v2157
        %v2328 = vunpack.c.l.b16 %v2158
        %v2329 = vunpack.c.l.b16 %v2159
        %v2330 = vunpack.c.l.b16 %v2160
        %v2331 = vunpack.c.l.b16 %v2161
        %v2332 = vunpack.c.l.b16 %v2162
        %v2333 = vunpack.c.l.b16 %v2163
        %v2334 = vunpack.c.l.b16 %v2164
        %v2335 = vunpack.c.l.b16 %v2165
        %v2336 = vunpack.c.l.b16 %v2166
        %v2337 = vunpack.c.l.b16 %v2167
        %v2338 = vunpack.c.l.b16 %v2168
        %v2339 = vunpack.c.l.b16 %v2169
        %v2340 = vunpack.c.l.b16 %v2170
        %v2341 = vpack.c.b16 %v2326, %v2325
        %v2342 = vpack.c.b16 %v2328, %v2327
        %v2343 = vpack.c.b16 %v2330, %v2329
        %v2344 = vpack.c.b16 %v2332, %v2331
        %v2345 = vpack.c.b16 %v2334, %v2333
        %v2346 = vpack.c.b16 %v2336, %v2335
        %v2347 = vpack.c.b16 %v2338, %v2337
        %v2348 = vpack.c.b16 %v2340, %v2339
        %2357 = vmatpush.bf16.msra.mxu0 %v2348
        %2358 = vmatpush.bf16.msra.mxu0 %v2347
        %2359 = vmatpush.bf16.msra.mxu0 %v2346
        %2360 = vmatpush.bf16.msra.mxu0 %v2345
        %2361 = vmatpush.bf16.msra.mxu0 %v2344
        %2362 = vmatpush.bf16.msra.mxu0 %v2343
        %2363 = vmatpush.bf16.msra.mxu0 %v2342
        %2364 = vmatpush.bf16.msra.mxu0 %v2341
        %2365 = vmatmul.bf16.gmra.mxu0 %v1753
        %v2366 = vpop.f32.mrf.mxu0
        %v2367 = vadd.f32 0.0, %v2366
        %v2368 = vpop.f32.mrf.mxu0
        %2369 = vdwg.mxu0
        %v2386 = vunpack.c.l.b16 %v2171
        %v2387 = vunpack.c.l.b16 %v2172
        %v2388 = vunpack.c.l.b16 %v2173
        %v2389 = vunpack.c.l.b16 %v2174
        %v2390 = vunpack.c.l.b16 %v2175
        %v2391 = vunpack.c.l.b16 %v2176
        %v2392 = vunpack.c.l.b16 %v2177
        %v2393 = vunpack.c.l.b16 %v2178
        %v2394 = vunpack.c.l.b16 %v2179
        %v2395 = vunpack.c.l.b16 %v2180
        %v2396 = vunpack.c.l.b16 %v2181
        %v2397 = vunpack.c.l.b16 %v2182
        %v2398 = vunpack.c.l.b16 %v2183
        %v2399 = vunpack.c.l.b16 %v2184
        %v2400 = vunpack.c.l.b16 %v2185
        %v2401 = vunpack.c.l.b16 %v2186
        %v2402 = vpack.c.b16 %v2387, %v2386
        %v2403 = vpack.c.b16 %v2389, %v2388
        %v2404 = vpack.c.b16 %v2391, %v2390
        %v2405 = vpack.c.b16 %v2393, %v2392
        %v2406 = vpack.c.b16 %v2395, %v2394
        %v2407 = vpack.c.b16 %v2397, %v2396
        %v2408 = vpack.c.b16 %v2399, %v2398
        %v2409 = vpack.c.b16 %v2401, %v2400
        %2418 = vmatpush.bf16.msra.mxu0 %v2409
        %2419 = vmatpush.bf16.msra.mxu0 %v2408
        %2420 = vmatpush.bf16.msra.mxu0 %v2407
        %2421 = vmatpush.bf16.msra.mxu0 %v2406
        %2422 = vmatpush.bf16.msra.mxu0 %v2405
        %2423 = vmatpush.bf16.msra.mxu0 %v2404
        %2424 = vmatpush.bf16.msra.mxu0 %v2403
        %2425 = vmatpush.bf16.msra.mxu0 %v2402
        %2426 = vmatmul.bf16.gmra.mxu0 %v1754
        %v2427 = vpop.f32.mrf.mxu0
        %v2428 = vadd.f32 0.0, %v2427
        %v2429 = vpop.f32.mrf.mxu0
        %2430 = vdwg.mxu0
        %v2431 = vmul.f32 %v2245, 0.125
        %v2432 = vmul.f32 %v2306, 0.125
        %v2433 = vmul.f32 %v2367, 0.125
        %v2434 = vmul.f32 %v2428, 0.125
        %v2435 = vld [vmem:[#allocation3] sm:$0xff]
        %v2436 = vld [vmem:[#allocation3 + $0x8] sm:$0xff]
        %v2437 = vld [vmem:[#allocation3 + $0x10] sm:$0xff]
        %v2438 = vld [vmem:[#allocation3 + $0x18] sm:$0xff]
        %v2439 = vsub.f32 %v2431, %v2435
        %v2440 = vsub.f32 %v2432, %v2436
        %v2441 = vsub.f32 %v2433, %v2437
        %v2442 = vsub.f32 %v2434, %v2438
        %v2443 = vmul.f32 %v2439, 0.6666667
        %v2444 = vmul.f32 %v2440, 0.6666667
        %v2445 = vmul.f32 %v2441, 0.6666667
        %v2446 = vmul.f32 %v2442, 0.6666667
        %v2447 = vadd.f32 %v2435, %v2443
        %v2448 = vadd.f32 %v2436, %v2444
        %v2449 = vadd.f32 %v2437, %v2445
        %v2450 = vadd.f32 %v2438, %v2446
        %vm2451 = vcmp.ge.f32.partialorder %v2447, 0.5
        %vm2452 = vcmp.ge.f32.partialorder %v2448, 0.5
        %vm2453 = vcmp.ge.f32.partialorder %v2449, 0.5
        %vm2454 = vcmp.ge.f32.partialorder %v2450, 0.5
        %v2455 = vsel %vm2451, 1, 0
        %v2456 = vsel %vm2452, 1, 0
        %v2457 = vsel %vm2453, 1, 0
        %v2458 = vsel %vm2454, 1, 0
        %v2459 = vcvt.s32.f32 %v2455
        %v2460 = vcvt.s32.f32 %v2456
        %v2461 = vcvt.s32.f32 %v2457
        %v2462 = vcvt.s32.f32 %v2458
        %v2463 = vsub.f32 1.0, %v2459
        %v2464 = vsub.f32 1.0, %v2460
        %v2465 = vsub.f32 1.0, %v2461
        %v2466 = vsub.f32 1.0, %v2462
        %v2467 = vmul.f32 %v2447, %v2463
        %v2468 = vmul.f32 %v2448, %v2464
        %v2469 = vmul.f32 %v2449, %v2465
        %v2470 = vmul.f32 %v2450, %v2466
        %2471 = vst [vmem:[#allocation3] sm:$0xff] %v2467
        %2472 = vst [vmem:[#allocation3 + $0x8] sm:$0xff] %v2468
        %2473 = vst [vmem:[#allocation3 + $0x10] sm:$0xff] %v2469
        %2474 = vst [vmem:[#allocation3 + $0x18] sm:$0xff] %v2470
        %2475 = vmatpush.msra.mxu0 0.0
        %2476 = vmatpush.msra.mxu0 0.0
        %2477 = vmatpush.msra.mxu0 0.0
        %2478 = vmatpush.msra.mxu0 0.0
        %2479 = vmatpush.msra.mxu0 0.0
        %2480 = vmatpush.msra.mxu0 0.0
        %2481 = vmatpush.msra.mxu0 0.0
        %2482 = vmatpush.msra.mxu0 0.0
        %2483 = vmatpush.msra.mxu0 0.0
        %2484 = vmatpush.msra.mxu0 0.0
        %2485 = vmatpush.msra.mxu0 0.0
        %2486 = vmatpush.msra.mxu0 0.0
        %2487 = vmatpush.msra.mxu0 %v2462
        %2488 = vmatpush.msra.mxu0 %v2461
        %2489 = vmatpush.msra.mxu0 %v2460
        %2490 = vmatpush.msra.mxu0 %v2459
        %2491 = vmatmul.f32.gmra.mxu0 %v1514
        %v2492 = vpop.f32.mrf.mxu0
        %v2493 = vadd.f32 %v1495, %v2492
        %2494 = vmatmul.f32.gmra.mxu0 %v1517
        %v2495 = vpop.f32.mrf.mxu0
        %v2496 = vadd.f32 %v1500, %v2495
        %2497 = vmatmul.f32.gmra.mxu0 %v1520
        %v2498 = vpop.f32.mrf.mxu0
        %v2499 = vadd.f32 %v1505, %v2498
        %2500 = vmatmul.f32.gmra.mxu0 %v1523
        %v2501 = vpop.f32.mrf.mxu0
        %v2502 = vadd.f32 %v1510, %v2501
        %2503 = vdwg.mxu0
        %s2504 = scalar_lea.vmem %s400, 32 [#allocation7]
        %2505 = vst [vmem:[%s2504] sm:$0xff] %v2493
        %2506 = vst [vmem:[%s2504 + $0x8] sm:$0xff] %v2496
        %2507 = vst [vmem:[%s2504 + $0x10] sm:$0xff] %v2499
        %2508 = vst [vmem:[%s2504 + $0x18] sm:$0xff] %v2502
        %v2509 = vld [vmem:[#allocation4] sm:$0xff]
        %v2510 = vld [vmem:[#allocation4 + $0x8] sm:$0xff]
        %v2511 = vld [vmem:[#allocation4 + $0x10] sm:$0xff]
        %v2512 = vld [vmem:[#allocation4 + $0x18] sm:$0xff]
        %v2513 = vadd.f32 %v2509, %v2493
        %v2514 = vadd.f32 %v2510, %v2496
        %v2515 = vadd.f32 %v2511, %v2499
        %v2516 = vadd.f32 %v2512, %v2502
        %2517 = vst [vmem:[#allocation4] sm:$0xff] %v2513
        %2518 = vst [vmem:[#allocation4 + $0x8] sm:$0xff] %v2514
        %2519 = vst [vmem:[#allocation4 + $0x10] sm:$0xff] %v2515
        %2520 = vst [vmem:[#allocation4 + $0x18] sm:$0xff] %v2516
        %v2521 = vld [vmem:[#allocation5] sm:$0xff]
        %v2522 = vld [vmem:[#allocation5 + $0x8] sm:$0xff]
        %v2523 = vld [vmem:[#allocation5 + $0x10] sm:$0xff]
        %v2524 = vld [vmem:[#allocation5 + $0x18] sm:$0xff]
        %v2525 = vmul.f32 %v2493, %v2493
        %v2526 = vmul.f32 %v2496, %v2496
        %v2527 = vmul.f32 %v2499, %v2499
        %v2528 = vmul.f32 %v2502, %v2502
        %v2529 = vadd.f32 %v2521, %v2525
        %v2530 = vadd.f32 %v2522, %v2526
        %v2531 = vadd.f32 %v2523, %v2527
        %v2532 = vadd.f32 %v2524, %v2528
        %2533 = vst [vmem:[#allocation5] sm:$0xff] %v2529
        %2534 = vst [vmem:[#allocation5 + $0x8] sm:$0xff] %v2530
        %2535 = vst [vmem:[#allocation5 + $0x10] sm:$0xff] %v2531
        %2536 = vst [vmem:[#allocation5 + $0x18] sm:$0xff] %v2532
        %v2537 = vld [vmem:[#allocation4] sm:$0xff]
        %v2538 = vld [vmem:[#allocation4 + $0x8] sm:$0xff]
        %v2539 = vld [vmem:[#allocation4 + $0x10] sm:$0xff]
        %v2540 = vld [vmem:[#allocation4 + $0x18] sm:$0xff]
        %2541 = vadd.xlane.f32.xlu0 %v2537
        %v2542 = vpop.xlane.xlu0 %2541
        %2543 = vadd.xlane.f32.xlu0 %v2538
        %v2544 = vpop.xlane.xlu0 %2543
        %2545 = vadd.xlane.f32.xlu0 %v2539
        %v2546 = vpop.xlane.xlu0 %2545
        %2547 = vadd.xlane.f32.xlu0 %v2540
        %v2548 = vpop.xlane.xlu0 %2547
        %vm2549 = vcmask 7168
        %2550 = vst.msk [vmem:[%s419] sm:$0xff] %vm2549, %v2542
        %2551 = vst.msk [vmem:[%s419 + $0x8] sm:$0xff] %vm2549, %v2544
        %2552 = vst.msk [vmem:[%s419 + $0x10] sm:$0xff] %vm2549, %v2546
        %2553 = vst.msk [vmem:[%s419 + $0x18] sm:$0xff] %vm2549, %v2548
        %v2554 = vld [vmem:[#allocation5] sm:$0xff]
        %v2555 = vld [vmem:[#allocation5 + $0x8] sm:$0xff]
        %v2556 = vld [vmem:[#allocation5 + $0x10] sm:$0xff]
        %v2557 = vld [vmem:[#allocation5 + $0x18] sm:$0xff]
        %2558 = vadd.xlane.f32.xlu0 %v2554
        %v2559 = vpop.xlane.xlu0 %2558
        %2560 = vadd.xlane.f32.xlu0 %v2555
        %v2561 = vpop.xlane.xlu0 %2560
        %2562 = vadd.xlane.f32.xlu0 %v2556
        %v2563 = vpop.xlane.xlu0 %2562
        %2564 = vadd.xlane.f32.xlu0 %v2557
        %v2565 = vpop.xlane.xlu0 %2564
        %2566 = vst.msk [vmem:[%s424] sm:$0xff] %vm2549, %v2559
        %2567 = vst.msk [vmem:[%s424 + $0x8] sm:$0xff] %vm2549, %v2561
        %2568 = vst.msk [vmem:[%s424 + $0x10] sm:$0xff] %vm2549, %v2563
        %2569 = vst.msk [vmem:[%s424 + $0x18] sm:$0xff] %vm2549, %v2565
        %s2570 = sand.u32 %s137, 1
        %s2571 = sand.u32 %s137, 1
        %s2572 = smul.addr %s2571, 64
        %s2573 = scalar_lea.vmem [#allocation7], %s2572
        %p2574 = scmp.lt.s32.totalorder %s19, 1
        %s2575 = scalar_select %p2574, %s19, 1
        %s2576 = smul.addr %s2575, 4
        %s2577 = smul.addr %s2576, 8
        %s2578 = scalar_lea.vmem %s6, %s2577
        %p2579 = scmp.lt.s32.totalorder %s19, 1
        %s2580 = scalar_select %p2579, %s19, 1
        %s2581 = smul.addr %s2580, 4
        %s2582 = smul.addr %s2581, 8
        %s2583 = scalar_lea.vmem %s7, %s2582
        // Predicated region
        $region79: #{vit_snn_forward.11} parent=73 // pred_check
          %p2584 = pneg %p147
        $region80: #{vit_snn_forward.11} parent=73 // pred_check_branch
          %2586 = sbr.rel (%p2584) target = $region82
        $region81: #{vit_snn_forward.11} parent=73 // pred_region
          %s2587 = smul.addr %s19, 8
          %s2588 = scalar_lea.vmem %s5, %s2587
          // Predicated region
          $region83: #{vit_snn_forward.11} parent=81 // pred_check
            _
          $region84: #{vit_snn_forward.11} parent=81 // pred_check_branch
            %2590 = sbr.rel (0) target = $region86
          $region85: #{vit_snn_forward.11} parent=81 // pred_region
            // Predicated region
            $region87: #{vit_snn_forward.11} parent=85 // pred_check
              _
            $region88: #{vit_snn_forward.11} parent=85 // pred_check_branch
              %2592 = sbr.rel (0) target = $region90
            $region89: #{vit_snn_forward.11} parent=85 // pred_region
              // Predicated region
              $region102: #{vit_snn_forward.11} parent=89 // pred_check
                _
              $region103: #{vit_snn_forward.11} parent=89 // pred_check_branch
                %2622 = sbr.rel (0) target = $region105
              $region104: #{vit_snn_forward.11} parent=89 // pred_region
                loop: start=0, step=1, limit=1
                $region106: #{vit_snn_forward.11} parent=104 // loop_pre_header
                  _
                $region107: #{vit_snn_forward.11} parent=104 // loop_header
                  %s2624 = sphi 0, %s2628
                  %p2625 = scmp.ge.s32.totalorder %s2624, 1
                  %s2629 = sphi %s2573, %s2573
                  %s2630 = sphi %s2588, %s2588
                $region108: #{vit_snn_forward.11} parent=104 // loop_header_branch
                  %2627 = sbr.rel (%p2625) target = $region112
                $region109: #{vit_snn_forward.11} parent=104 // loop_body
                  %v2631 = vld [vmem:[%s2629] sm:$0xff]
                  %2632 = vst [vmem:[%s2630] sm:$0xff] %v2631
                  %v2633 = vld [vmem:[%s2629 + $0x8] sm:$0xff]
                  %2634 = vst [vmem:[%s2630 + $0x10] sm:$0xff] %v2633
                  %v2635 = vld [vmem:[%s2629 + $0x10] sm:$0xff]
                  %2636 = vst [vmem:[%s2630 + $0x20] sm:$0xff] %v2635
                  %v2637 = vld [vmem:[%s2629 + $0x18] sm:$0xff]
                  %2638 = vst [vmem:[%s2630 + $0x30] sm:$0xff] %v2637
                  %v2639 = vld [vmem:[%s2629 + $0x20] sm:$0xff]
                  %2640 = vst [vmem:[%s2630 + $0x40] sm:$0xff] %v2639
                  %v2641 = vld [vmem:[%s2629 + $0x28] sm:$0xff]
                  %2642 = vst [vmem:[%s2630 + $0x50] sm:$0xff] %v2641
                  %v2643 = vld [vmem:[%s2629 + $0x30] sm:$0xff]
                  %2644 = vst [vmem:[%s2630 + $0x60] sm:$0xff] %v2643
                  %v2645 = vld [vmem:[%s2629 + $0x38] sm:$0xff]
                  %2646 = vst [vmem:[%s2630 + $0x70] sm:$0xff] %v2645
                $region110: #{vit_snn_forward.11} parent=104 // loop_footer
                  %s2628 = sadd.s32 1, %s2624
                $region111: #{vit_snn_forward.11} parent=104 // loop_footer_branch
                  %2623 = sbr.rel target = $region107
                $region112: #{vit_snn_forward.11} parent=104 // loop_exit
                  _
              $region105: #{vit_snn_forward.11} parent=89 // pred_fallthru
                _
              // Predicated region
              $region113: #{vit_snn_forward.11} parent=89 // pred_check
                _
              $region114: #{vit_snn_forward.11} parent=89 // pred_check_branch
                %2648 = sbr.rel target = $region116
              $region115: #{vit_snn_forward.11} parent=89 // pred_region
                _
              $region116: #{vit_snn_forward.11} parent=89 // pred_fallthru
                _
            $region90: #{vit_snn_forward.11} parent=85 // pred_fallthru
              _
            // Predicated region
            $region91: #{vit_snn_forward.11} parent=85 // pred_check
              _
            $region92: #{vit_snn_forward.11} parent=85 // pred_check_branch
              %2594 = sbr.rel target = $region94
            $region93: #{vit_snn_forward.11} parent=85 // pred_region
              %s2596 = ssub.s32 256, 1
              loop: start=0, step=1, limit=1
              $region95: #{vit_snn_forward.11} parent=93 // loop_pre_header
                _
              $region96: #{vit_snn_forward.11} parent=93 // loop_header
                %s2598 = sphi 0, %s2602
                %p2599 = scmp.ge.s32.totalorder %s2598, 1
                %s2603 = sphi %s2573, %s2573
                %s2604 = sphi %s2588, %s2588
              $region97: #{vit_snn_forward.11} parent=93 // loop_header_branch
                %2601 = sbr.rel (%p2599) target = $region101
              $region98: #{vit_snn_forward.11} parent=93 // loop_body
                %v2605 = vld [vmem:[%s2603] sm:%s2596]
                %2606 = vst [vmem:[%s2604] sm:%s2596] %v2605
                %v2607 = vld [vmem:[%s2603 + $0x8] sm:%s2596]
                %2608 = vst [vmem:[%s2604 + $0x10] sm:%s2596] %v2607
                %v2609 = vld [vmem:[%s2603 + $0x10] sm:%s2596]
                %2610 = vst [vmem:[%s2604 + $0x20] sm:%s2596] %v2609
                %v2611 = vld [vmem:[%s2603 + $0x18] sm:%s2596]
                %2612 = vst [vmem:[%s2604 + $0x30] sm:%s2596] %v2611
                %v2613 = vld [vmem:[%s2603 + $0x20] sm:%s2596]
                %2614 = vst [vmem:[%s2604 + $0x40] sm:%s2596] %v2613
                %v2615 = vld [vmem:[%s2603 + $0x28] sm:%s2596]
                %2616 = vst [vmem:[%s2604 + $0x50] sm:%s2596] %v2615
                %v2617 = vld [vmem:[%s2603 + $0x30] sm:%s2596]
                %2618 = vst [vmem:[%s2604 + $0x60] sm:%s2596] %v2617
                %v2619 = vld [vmem:[%s2603 + $0x38] sm:%s2596]
                %2620 = vst [vmem:[%s2604 + $0x70] sm:%s2596] %v2619
              $region99: #{vit_snn_forward.11} parent=93 // loop_footer
                %s2602 = sadd.s32 1, %s2598
              $region100: #{vit_snn_forward.11} parent=93 // loop_footer_branch
                %2597 = sbr.rel target = $region96
              $region101: #{vit_snn_forward.11} parent=93 // loop_exit
                _
            $region94: #{vit_snn_forward.11} parent=85 // pred_fallthru
              _
          $region86: #{vit_snn_forward.11} parent=81 // pred_fallthru
            _
          %2649 = vnop
        $region82: #{vit_snn_forward.11} parent=73 // pred_fallthru
          _
        // Predicated region
        $region117: #{vit_snn_forward.11} parent=73 // pred_check
          %p2650 = pneg %p173
        $region118: #{vit_snn_forward.11} parent=73 // pred_check_branch
          %2652 = sbr.rel (%p2650) target = $region120
        $region119: #{vit_snn_forward.11} parent=73 // pred_region
          _
        $region120: #{vit_snn_forward.11} parent=73 // pred_fallthru
          _
        // Predicated region
        $region121: #{vit_snn_forward.11} parent=73 // pred_check
          %p2653 = pneg %p199
        $region122: #{vit_snn_forward.11} parent=73 // pred_check_branch
          %2655 = sbr.rel (%p2653) target = $region124
        $region123: #{vit_snn_forward.11} parent=73 // pred_region
          _
        $region124: #{vit_snn_forward.11} parent=73 // pred_fallthru
          _
      $region74: #{vit_snn_forward.11} parent=5 // pred_fallthru
        _
      %p2656 = scmp.le.s32.totalorder 2, %s14
      // Predicated region
      $region125: #{vit_snn_forward.11} parent=5 // pred_check
        %p2657 = pneg %p2656
      $region126: #{vit_snn_forward.11} parent=5 // pred_check_branch
        %2659 = sbr.rel (%p2657) target = $region128
      $region127: #{vit_snn_forward.11} parent=5 // pred_region
        %s2660 = ssub.s32 %s14, 2
        // Predicated region
        $region129: #{vit_snn_forward.11} parent=127 // pred_check
          %p2661 = pneg %p153
        $region130: #{vit_snn_forward.11} parent=127 // pred_check_branch
          %2663 = sbr.rel (%p2661) target = $region132
        $region131: #{vit_snn_forward.11} parent=127 // pred_region
          %s2664 = sand.u32 %s138, 1
          %s2665 = sand.u32 %s138, 1
          %s2666 = smul.addr %s2665, 64
          %s2667 = scalar_lea.vmem [#allocation7], %s2666
        $region132: #{vit_snn_forward.11} parent=127 // pred_fallthru
          _
        // Predicated region
        $region133: #{vit_snn_forward.11} parent=127 // pred_check
          %p2668 = pneg %p179
        $region134: #{vit_snn_forward.11} parent=127 // pred_check_branch
          %2670 = sbr.rel (%p2668) target = $region136
        $region135: #{vit_snn_forward.11} parent=127 // pred_region
          %p2671 = scmp.lt.s32.totalorder %s20, 1
          %s2672 = scalar_select %p2671, %s20, 1
          %s2673 = smul.addr %s2672, 4
          %s2674 = smul.addr %s2673, 8
          %s2675 = scalar_lea.vmem %s6, %s2674
        $region136: #{vit_snn_forward.11} parent=127 // pred_fallthru
          _
        // Predicated region
        $region137: #{vit_snn_forward.11} parent=127 // pred_check
          %p2676 = pneg %p205
        $region138: #{vit_snn_forward.11} parent=127 // pred_check_branch
          %2678 = sbr.rel (%p2676) target = $region140
        $region139: #{vit_snn_forward.11} parent=127 // pred_region
          %p2679 = scmp.lt.s32.totalorder %s20, 1
          %s2680 = scalar_select %p2679, %s20, 1
          %s2681 = smul.addr %s2680, 4
          %s2682 = smul.addr %s2681, 8
          %s2683 = scalar_lea.vmem %s7, %s2682
        $region140: #{vit_snn_forward.11} parent=127 // pred_fallthru
          _
      $region128: #{vit_snn_forward.11} parent=5 // pred_fallthru
        _
    $region6: #{vit_snn_forward.11} parent=1 // loop_footer
      %s18 = sadd.s32 1, %s14
    $region7: #{vit_snn_forward.11} parent=1 // loop_footer_branch
      %13 = sbr.rel target = $region3
    $region8: #{vit_snn_forward.11} parent=1 // loop_exit
      _

// kernel: vit_snn_forward.14
$region0: #{vit_snn_forward.14}
  #allocation0 [shape = 'u32[]', space=smem, size = 0x4, offset = 0x4, fixed_abs, tag = 'smem constant byte address 0x4 - core index']
  #allocation1 [shape = 'u32[72,128]{1,0:T(1,128)}', space=vmem, size = 0x9000, scoped, tag = 'internal scratch']
  %s0 = inlined_call_operand.vmem [shape: f32[2,32,256], index: 0, kind: input, shape index: {}]
  %s1 = inlined_call_operand.vmem [shape: f32[32,1], index: 1, kind: input, shape index: {}]
  %s2 = inlined_call_operand.vmem [shape: f32[32,1], index: 2, kind: input, shape index: {}]
  %s3 = inlined_call_operand.vmem [shape: f32[2,32,256], index: 3, kind: input, shape index: {}]
  %s4 = inlined_call_operand.vmem [shape: f32[32,1], index: 4, kind: input, shape index: {}]
  %s5 = inlined_call_operand.vmem [shape: f32[32,1], index: 5, kind: input, shape index: {}]
  %s6 = inlined_call_operand.vmem [shape: f32[2,32,256], index: 6, kind: input, shape index: {}]
  %s7 = inlined_call_operand.vmem [shape: f32[2,32,256], index: 7, kind: output, shape index: {}]
  %s8 = sld [smem:[#allocation0]]
  $region209: #{vit_snn_forward.14} parent=0
    _
  %s10 = ssub.s32 1, %s8
  %s11 = scalar_select 0, %s10, %s8
  $region1: #{vit_snn_forward.14} parent=0
    #allocation2 [shape = 'u8[65536]{0}', space=vmem, size = 0x10000, scoped, tag = 'input window, operand 0']
    #allocation3 [shape = 'u8[65536]{0}', space=vmem, size = 0x10000, scoped, tag = 'input window, operand 3']
    #allocation4 [shape = 'u8[65536]{0}', space=vmem, size = 0x10000, scoped, tag = 'input window, operand 6']
    #allocation5 [shape = 'u8[65536]{0}', space=vmem, size = 0x10000, scoped, tag = 'output window, operand 0']
    loop: start=0, step=1, limit=4
    $region2: #{vit_snn_forward.14} parent=1 // loop_pre_header
      _
    $region3: #{vit_snn_forward.14} parent=1 // loop_header
      %s13 = sphi 0, %s17
      %p14 = scmp.ge.s32.totalorder %s13, 4
      %s23 = sphi 0, %s25
      %s26 = sphi 0, %s23
      %s27 = sphi 0, %s26
      %s43 = sphi 0, %s27
      %s47 = sphi 0, %s47
      %s49 = sphi 0, %s47
      %s50 = sphi 0, %s49
      %s64 = sphi 0, %s50
      %s68 = sphi 0, %s68
      %s70 = sphi 0, %s68
      %s71 = sphi 0, %s70
      %s85 = sphi 0, %s71
      %s91 = sphi 0, %s93
      %s94 = sphi 0, %s91
      %s95 = sphi 0, %s94
      %s111 = sphi 0, %s95
      %s115 = sphi 0, %s115
      %s117 = sphi 0, %s115
      %s118 = sphi 0, %s117
      %s132 = sphi 0, %s118
      %s136 = sphi 0, %s136
      %s138 = sphi 0, %s136
      %s139 = sphi 0, %s138
      %s153 = sphi 0, %s139
      %s159 = sphi 0, %s161
      %s162 = sphi 0, %s159
      %s163 = sphi 0, %s162
      %s179 = sphi 0, %s163
      %s185 = sphi 0, %s187
      %s188 = sphi 0, %s185
      %s189 = sphi 0, %s188
      %s205 = sphi 0, %s189
    $region4: #{vit_snn_forward.14} parent=1 // loop_header_branch
      %16 = sbr.rel (%p14) target = $region8
    $region5: #{vit_snn_forward.14} parent=1 // loop_body
      %s18 = ssub.s32 %s13, 1
      %s19 = ssub.s32 %s13, 2
      %s20 = sadd.s32 %s13, 1
      %s21 = ssub.s32 %s13, %s20
      %p22 = scmp.eq.s32.totalorder %s21, 0
      %s24 = sadd.s32 %s23, 1
      %s25 = scalar_select %p22, %s23, %s24
      %p28 = pneg %p22
      %p29 = scmp.eq.s32.totalorder %s13, 1
      %p30 = por %p28, %p29
      %p31 = scmp.ne.s32.totalorder %s23, %s26
      %p32 = scmp.eq.s32.totalorder %s13, 0
      %p33 = por %p31, %p32
      %p34 = scmp.ne.s32.totalorder %s23, %s26
      %p35 = scmp.eq.s32.totalorder %s18, 1
      %p36 = por %p34, %p35
      %p37 = scmp.ne.s32.totalorder %s26, %s27
      %p38 = scmp.eq.s32.totalorder %s18, 0
      %p39 = por %p37, %p38
      %p40 = scmp.ne.s32.totalorder %s26, %s27
      %p41 = scmp.eq.s32.totalorder %s19, 1
      %p42 = por %p40, %p41
      %p44 = scmp.ne.s32.totalorder %s27, %s43
      %p45 = scmp.eq.s32.totalorder %s19, 0
      %p46 = por %p44, %p45
      %s48 = sadd.s32 %s47, 1
      %p51 = scmp.eq.s32.totalorder %s13, 1
      %p52 = scmp.ne.s32.totalorder %s47, %s49
      %p53 = scmp.eq.s32.totalorder %s13, 0
      %p54 = por %p52, %p53
      %p55 = scmp.ne.s32.totalorder %s47, %s49
      %p56 = scmp.eq.s32.totalorder %s18, 1
      %p57 = por %p55, %p56
      %p58 = scmp.ne.s32.totalorder %s49, %s50
      %p59 = scmp.eq.s32.totalorder %s18, 0
      %p60 = por %p58, %p59
      %p61 = scmp.ne.s32.totalorder %s49, %s50
      %p62 = scmp.eq.s32.totalorder %s19, 1
      %p63 = por %p61, %p62
      %p65 = scmp.ne.s32.totalorder %s50, %s64
      %p66 = scmp.eq.s32.totalorder %s19, 0
      %p67 = por %p65, %p66
      %s69 = sadd.s32 %s68, 1
      %p72 = scmp.eq.s32.totalorder %s13, 1
      %p73 = scmp.ne.s32.totalorder %s68, %s70
      %p74 = scmp.eq.s32.totalorder %s13, 0
      %p75 = por %p73, %p74
      %p76 = scmp.ne.s32.totalorder %s68, %s70
      %p77 = scmp.eq.s32.totalorder %s18, 1
      %p78 = por %p76, %p77
      %p79 = scmp.ne.s32.totalorder %s70, %s71
      %p80 = scmp.eq.s32.totalorder %s18, 0
      %p81 = por %p79, %p80
      %p82 = scmp.ne.s32.totalorder %s70, %s71
      %p83 = scmp.eq.s32.totalorder %s19, 1
      %p84 = por %p82, %p83
      %p86 = scmp.ne.s32.totalorder %s71, %s85
      %p87 = scmp.eq.s32.totalorder %s19, 0
      %p88 = por %p86, %p87
      %s89 = ssub.s32 %s13, %s20
      %p90 = scmp.eq.s32.totalorder %s89, 0
      %s92 = sadd.s32 %s91, 1
      %s93 = scalar_select %p90, %s91, %s92
      %p96 = pneg %p90
      %p97 = scmp.eq.s32.totalorder %s13, 1
      %p98 = por %p96, %p97
      %p99 = scmp.ne.s32.totalorder %s91, %s94
      %p100 = scmp.eq.s32.totalorder %s13, 0
      %p101 = por %p99, %p100
      %p102 = scmp.ne.s32.totalorder %s91, %s94
      %p103 = scmp.eq.s32.totalorder %s18, 1
      %p104 = por %p102, %p103
      %p105 = scmp.ne.s32.totalorder %s94, %s95
      %p106 = scmp.eq.s32.totalorder %s18, 0
      %p107 = por %p105, %p106
      %p108 = scmp.ne.s32.totalorder %s94, %s95
      %p109 = scmp.eq.s32.totalorder %s19, 1
      %p110 = por %p108, %p109
      %p112 = scmp.ne.s32.totalorder %s95, %s111
      %p113 = scmp.eq.s32.totalorder %s19, 0
      %p114 = por %p112, %p113
      %s116 = sadd.s32 %s115, 1
      %p119 = scmp.eq.s32.totalorder %s13, 1
      %p120 = scmp.ne.s32.totalorder %s115, %s117
      %p121 = scmp.eq.s32.totalorder %s13, 0
      %p122 = por %p120, %p121
      %p123 = scmp.ne.s32.totalorder %s115, %s117
      %p124 = scmp.eq.s32.totalorder %s18, 1
      %p125 = por %p123, %p124
      %p126 = scmp.ne.s32.totalorder %s117, %s118
      %p127 = scmp.eq.s32.totalorder %s18, 0
      %p128 = por %p126, %p127
      %p129 = scmp.ne.s32.totalorder %s117, %s118
      %p130 = scmp.eq.s32.totalorder %s19, 1
      %p131 = por %p129, %p130
      %p133 = scmp.ne.s32.totalorder %s118, %s132
      %p134 = scmp.eq.s32.totalorder %s19, 0
      %p135 = por %p133, %p134
      %s137 = sadd.s32 %s136, 1
      %p140 = scmp.eq.s32.totalorder %s13, 1
      %p141 = scmp.ne.s32.totalorder %s136, %s138
      %p142 = scmp.eq.s32.totalorder %s13, 0
      %p143 = por %p141, %p142
      %p144 = scmp.ne.s32.totalorder %s136, %s138
      %p145 = scmp.eq.s32.totalorder %s18, 1
      %p146 = por %p144, %p145
      %p147 = scmp.ne.s32.totalorder %s138, %s139
      %p148 = scmp.eq.s32.totalorder %s18, 0
      %p149 = por %p147, %p148
      %p150 = scmp.ne.s32.totalorder %s138, %s139
      %p151 = scmp.eq.s32.totalorder %s19, 1
      %p152 = por %p150, %p151
      %p154 = scmp.ne.s32.totalorder %s139, %s153
      %p155 = scmp.eq.s32.totalorder %s19, 0
      %p156 = por %p154, %p155
      %s157 = ssub.s32 %s13, %s20
      %p158 = scmp.eq.s32.totalorder %s157, 0
      %s160 = sadd.s32 %s159, 1
      %s161 = scalar_select %p158, %s159, %s160
      %p164 = pneg %p158
      %p165 = scmp.eq.s32.totalorder %s13, 1
      %p166 = por %p164, %p165
      %p167 = scmp.ne.s32.totalorder %s159, %s162
      %p168 = scmp.eq.s32.totalorder %s13, 0
      %p169 = por %p167, %p168
      %p170 = scmp.ne.s32.totalorder %s159, %s162
      %p171 = scmp.eq.s32.totalorder %s18, 1
      %p172 = por %p170, %p171
      %p173 = scmp.ne.s32.totalorder %s162, %s163
      %p174 = scmp.eq.s32.totalorder %s18, 0
      %p175 = por %p173, %p174
      %p176 = scmp.ne.s32.totalorder %s162, %s163
      %p177 = scmp.eq.s32.totalorder %s19, 1
      %p178 = por %p176, %p177
      %p180 = scmp.ne.s32.totalorder %s163, %s179
      %p181 = scmp.eq.s32.totalorder %s19, 0
      %p182 = por %p180, %p181
      %s183 = ssub.s32 %s13, %s20
      %p184 = scmp.eq.s32.totalorder %s183, 0
      %s186 = sadd.s32 %s185, 1
      %s187 = scalar_select %p184, %s185, %s186
      %p190 = pneg %p184
      %p191 = scmp.eq.s32.totalorder %s13, 1
      %p192 = por %p190, %p191
      %p193 = scmp.ne.s32.totalorder %s185, %s188
      %p194 = scmp.eq.s32.totalorder %s13, 0
      %p195 = por %p193, %p194
      %p196 = scmp.ne.s32.totalorder %s185, %s188
      %p197 = scmp.eq.s32.totalorder %s18, 1
      %p198 = por %p196, %p197
      %p199 = scmp.ne.s32.totalorder %s188, %s189
      %p200 = scmp.eq.s32.totalorder %s18, 0
      %p201 = por %p199, %p200
      %p202 = scmp.ne.s32.totalorder %s188, %s189
      %p203 = scmp.eq.s32.totalorder %s19, 1
      %p204 = por %p202, %p203
      %p206 = scmp.ne.s32.totalorder %s189, %s205
      %p207 = scmp.eq.s32.totalorder %s19, 0
      %p208 = por %p206, %p207
      %p209 = scmp.le.s32.totalorder 1, %s13
      %p210 = scmp.lt.s32.totalorder %s13, 3
      %p211 = pnand %p209, %p210
      %p212 = pneg %p211
      // Predicated region
      $region9: #{vit_snn_forward.14} parent=5 // pred_check
        _
      $region10: #{vit_snn_forward.14} parent=5 // pred_check_branch
        %214 = sbr.rel (%p211) target = $region12
      $region11: #{vit_snn_forward.14} parent=5 // pred_region
        %s215 = ssub.s32 %s13, 1
        // Predicated region
        $region13: #{vit_snn_forward.14} parent=11 // pred_check
          %p216 = pneg %p60
        $region14: #{vit_snn_forward.14} parent=11 // pred_check_branch
          %218 = sbr.rel (%p216) target = $region16
        $region15: #{vit_snn_forward.14} parent=11 // pred_region
          _
        $region16: #{vit_snn_forward.14} parent=11 // pred_fallthru
          _
        // Predicated region
        $region17: #{vit_snn_forward.14} parent=11 // pred_check
          %p219 = pneg %p81
        $region18: #{vit_snn_forward.14} parent=11 // pred_check_branch
          %221 = sbr.rel (%p219) target = $region20
        $region19: #{vit_snn_forward.14} parent=11 // pred_region
          _
        $region20: #{vit_snn_forward.14} parent=11 // pred_fallthru
          _
        // Predicated region
        $region21: #{vit_snn_forward.14} parent=11 // pred_check
          %p222 = pneg %p128
        $region22: #{vit_snn_forward.14} parent=11 // pred_check_branch
          %224 = sbr.rel (%p222) target = $region24
        $region23: #{vit_snn_forward.14} parent=11 // pred_region
          _
        $region24: #{vit_snn_forward.14} parent=11 // pred_fallthru
          _
        // Predicated region
        $region25: #{vit_snn_forward.14} parent=11 // pred_check
          %p225 = pneg %p149
        $region26: #{vit_snn_forward.14} parent=11 // pred_check_branch
          %227 = sbr.rel (%p225) target = $region28
        $region27: #{vit_snn_forward.14} parent=11 // pred_region
          _
        $region28: #{vit_snn_forward.14} parent=11 // pred_fallthru
          _
      $region12: #{vit_snn_forward.14} parent=5 // pred_fallthru
        _
      %p228 = scmp.lt.s32.totalorder %s13, 2
      // Predicated region
      $region29: #{vit_snn_forward.14} parent=5 // pred_check
        %p229 = pneg %p228
      $region30: #{vit_snn_forward.14} parent=5 // pred_check_branch
        %231 = sbr.rel (%p229) target = $region32
      $region31: #{vit_snn_forward.14} parent=5 // pred_region
        // Predicated region
        $region33: #{vit_snn_forward.14} parent=31 // pred_check
          %p232 = pneg %p33
        $region34: #{vit_snn_forward.14} parent=31 // pred_check_branch
          %234 = sbr.rel (%p232) target = $region36
        $region35: #{vit_snn_forward.14} parent=31 // pred_region
          %s235 = sand.u32 %s23, 1
          %s236 = sand.u32 %s23, 1
          %s237 = smul.addr %s236, 64
          %s238 = scalar_lea.vmem [#allocation2], %s237
          %s239 = smul.addr %s13, 8
          %s240 = scalar_lea.vmem %s0, %s239
          // Predicated region
          $region37: #{vit_snn_forward.14} parent=35 // pred_check
            _
          $region38: #{vit_snn_forward.14} parent=35 // pred_check_branch
            %242 = sbr.rel (0) target = $region40
          $region39: #{vit_snn_forward.14} parent=35 // pred_region
            // Predicated region
            $region41: #{vit_snn_forward.14} parent=39 // pred_check
              _
            $region42: #{vit_snn_forward.14} parent=39 // pred_check_branch
              %244 = sbr.rel (0) target = $region44
            $region43: #{vit_snn_forward.14} parent=39 // pred_region
              // Predicated region
              $region56: #{vit_snn_forward.14} parent=43 // pred_check
                _
              $region57: #{vit_snn_forward.14} parent=43 // pred_check_branch
                %274 = sbr.rel (0) target = $region59
              $region58: #{vit_snn_forward.14} parent=43 // pred_region
                loop: start=0, step=1, limit=1
                $region60: #{vit_snn_forward.14} parent=58 // loop_pre_header
                  _
                $region61: #{vit_snn_forward.14} parent=58 // loop_header
                  %s276 = sphi 0, %s280
                  %p277 = scmp.ge.s32.totalorder %s276, 1
                  %s281 = sphi %s240, %s240
                  %s282 = sphi %s238, %s238
                $region62: #{vit_snn_forward.14} parent=58 // loop_header_branch
                  %279 = sbr.rel (%p277) target = $region66
                $region63: #{vit_snn_forward.14} parent=58 // loop_body
                  %v283 = vld [vmem:[%s281] sm:$0xff]
                  %284 = vst [vmem:[%s282] sm:$0xff] %v283
                  %v285 = vld [vmem:[%s281 + $0x10] sm:$0xff]
                  %286 = vst [vmem:[%s282 + $0x8] sm:$0xff] %v285
                  %v287 = vld [vmem:[%s281 + $0x20] sm:$0xff]
                  %288 = vst [vmem:[%s282 + $0x10] sm:$0xff] %v287
                  %v289 = vld [vmem:[%s281 + $0x30] sm:$0xff]
                  %290 = vst [vmem:[%s282 + $0x18] sm:$0xff] %v289
                  %v291 = vld [vmem:[%s281 + $0x40] sm:$0xff]
                  %292 = vst [vmem:[%s282 + $0x20] sm:$0xff] %v291
                  %v293 = vld [vmem:[%s281 + $0x50] sm:$0xff]
                  %294 = vst [vmem:[%s282 + $0x28] sm:$0xff] %v293
                  %v295 = vld [vmem:[%s281 + $0x60] sm:$0xff]
                  %296 = vst [vmem:[%s282 + $0x30] sm:$0xff] %v295
                  %v297 = vld [vmem:[%s281 + $0x70] sm:$0xff]
                  %298 = vst [vmem:[%s282 + $0x38] sm:$0xff] %v297
                $region64: #{vit_snn_forward.14} parent=58 // loop_footer
                  %s280 = sadd.s32 1, %s276
                $region65: #{vit_snn_forward.14} parent=58 // loop_footer_branch
                  %275 = sbr.rel target = $region61
                $region66: #{vit_snn_forward.14} parent=58 // loop_exit
                  _
              $region59: #{vit_snn_forward.14} parent=43 // pred_fallthru
                _
              // Predicated region
              $region67: #{vit_snn_forward.14} parent=43 // pred_check
                _
              $region68: #{vit_snn_forward.14} parent=43 // pred_check_branch
                %300 = sbr.rel target = $region70
              $region69: #{vit_snn_forward.14} parent=43 // pred_region
                _
              $region70: #{vit_snn_forward.14} parent=43 // pred_fallthru
                _
            $region44: #{vit_snn_forward.14} parent=39 // pred_fallthru
              _
            // Predicated region
            $region45: #{vit_snn_forward.14} parent=39 // pred_check
              _
            $region46: #{vit_snn_forward.14} parent=39 // pred_check_branch
              %246 = sbr.rel target = $region48
            $region47: #{vit_snn_forward.14} parent=39 // pred_region
              %s248 = ssub.s32 256, 1
              loop: start=0, step=1, limit=1
              $region49: #{vit_snn_forward.14} parent=47 // loop_pre_header
                _
              $region50: #{vit_snn_forward.14} parent=47 // loop_header
                %s250 = sphi 0, %s254
                %p251 = scmp.ge.s32.totalorder %s250, 1
                %s255 = sphi %s240, %s240
                %s256 = sphi %s238, %s238
              $region51: #{vit_snn_forward.14} parent=47 // loop_header_branch
                %253 = sbr.rel (%p251) target = $region55
              $region52: #{vit_snn_forward.14} parent=47 // loop_body
                %v257 = vld [vmem:[%s255] sm:%s248]
                %258 = vst [vmem:[%s256] sm:%s248] %v257
                %v259 = vld [vmem:[%s255 + $0x10] sm:%s248]
                %260 = vst [vmem:[%s256 + $0x8] sm:%s248] %v259
                %v261 = vld [vmem:[%s255 + $0x20] sm:%s248]
                %262 = vst [vmem:[%s256 + $0x10] sm:%s248] %v261
                %v263 = vld [vmem:[%s255 + $0x30] sm:%s248]
                %264 = vst [vmem:[%s256 + $0x18] sm:%s248] %v263
                %v265 = vld [vmem:[%s255 + $0x40] sm:%s248]
                %266 = vst [vmem:[%s256 + $0x20] sm:%s248] %v265
                %v267 = vld [vmem:[%s255 + $0x50] sm:%s248]
                %268 = vst [vmem:[%s256 + $0x28] sm:%s248] %v267
                %v269 = vld [vmem:[%s255 + $0x60] sm:%s248]
                %270 = vst [vmem:[%s256 + $0x30] sm:%s248] %v269
                %v271 = vld [vmem:[%s255 + $0x70] sm:%s248]
                %272 = vst [vmem:[%s256 + $0x38] sm:%s248] %v271
              $region53: #{vit_snn_forward.14} parent=47 // loop_footer
                %s254 = sadd.s32 1, %s250
              $region54: #{vit_snn_forward.14} parent=47 // loop_footer_branch
                %249 = sbr.rel target = $region50
              $region55: #{vit_snn_forward.14} parent=47 // loop_exit
                _
            $region48: #{vit_snn_forward.14} parent=39 // pred_fallthru
              _
          $region40: #{vit_snn_forward.14} parent=35 // pred_fallthru
            _
          %301 = vnop
        $region36: #{vit_snn_forward.14} parent=31 // pred_fallthru
          _
        // Predicated region
        $region71: #{vit_snn_forward.14} parent=31 // pred_check
          %p302 = pneg %p101
        $region72: #{vit_snn_forward.14} parent=31 // pred_check_branch
          %304 = sbr.rel (%p302) target = $region74
        $region73: #{vit_snn_forward.14} parent=31 // pred_region
          %s305 = sand.u32 %s91, 1
          %s306 = sand.u32 %s91, 1
          %s307 = smul.addr %s306, 64
          %s308 = scalar_lea.vmem [#allocation3], %s307
          %s309 = smul.addr %s13, 8
          %s310 = scalar_lea.vmem %s3, %s309
          // Predicated region
          $region75: #{vit_snn_forward.14} parent=73 // pred_check
            _
          $region76: #{vit_snn_forward.14} parent=73 // pred_check_branch
            %312 = sbr.rel (0) target = $region78
          $region77: #{vit_snn_forward.14} parent=73 // pred_region
            // Predicated region
            $region79: #{vit_snn_forward.14} parent=77 // pred_check
              _
            $region80: #{vit_snn_forward.14} parent=77 // pred_check_branch
              %314 = sbr.rel (0) target = $region82
            $region81: #{vit_snn_forward.14} parent=77 // pred_region
              // Predicated region
              $region94: #{vit_snn_forward.14} parent=81 // pred_check
                _
              $region95: #{vit_snn_forward.14} parent=81 // pred_check_branch
                %344 = sbr.rel (0) target = $region97
              $region96: #{vit_snn_forward.14} parent=81 // pred_region
                loop: start=0, step=1, limit=1
                $region98: #{vit_snn_forward.14} parent=96 // loop_pre_header
                  _
                $region99: #{vit_snn_forward.14} parent=96 // loop_header
                  %s346 = sphi 0, %s350
                  %p347 = scmp.ge.s32.totalorder %s346, 1
                  %s351 = sphi %s310, %s310
                  %s352 = sphi %s308, %s308
                $region100: #{vit_snn_forward.14} parent=96 // loop_header_branch
                  %349 = sbr.rel (%p347) target = $region104
                $region101: #{vit_snn_forward.14} parent=96 // loop_body
                  %v353 = vld [vmem:[%s351] sm:$0xff]
                  %354 = vst [vmem:[%s352] sm:$0xff] %v353
                  %v355 = vld [vmem:[%s351 + $0x10] sm:$0xff]
                  %356 = vst [vmem:[%s352 + $0x8] sm:$0xff] %v355
                  %v357 = vld [vmem:[%s351 + $0x20] sm:$0xff]
                  %358 = vst [vmem:[%s352 + $0x10] sm:$0xff] %v357
                  %v359 = vld [vmem:[%s351 + $0x30] sm:$0xff]
                  %360 = vst [vmem:[%s352 + $0x18] sm:$0xff] %v359
                  %v361 = vld [vmem:[%s351 + $0x40] sm:$0xff]
                  %362 = vst [vmem:[%s352 + $0x20] sm:$0xff] %v361
                  %v363 = vld [vmem:[%s351 + $0x50] sm:$0xff]
                  %364 = vst [vmem:[%s352 + $0x28] sm:$0xff] %v363
                  %v365 = vld [vmem:[%s351 + $0x60] sm:$0xff]
                  %366 = vst [vmem:[%s352 + $0x30] sm:$0xff] %v365
                  %v367 = vld [vmem:[%s351 + $0x70] sm:$0xff]
                  %368 = vst [vmem:[%s352 + $0x38] sm:$0xff] %v367
                $region102: #{vit_snn_forward.14} parent=96 // loop_footer
                  %s350 = sadd.s32 1, %s346
                $region103: #{vit_snn_forward.14} parent=96 // loop_footer_branch
                  %345 = sbr.rel target = $region99
                $region104: #{vit_snn_forward.14} parent=96 // loop_exit
                  _
              $region97: #{vit_snn_forward.14} parent=81 // pred_fallthru
                _
              // Predicated region
              $region105: #{vit_snn_forward.14} parent=81 // pred_check
                _
              $region106: #{vit_snn_forward.14} parent=81 // pred_check_branch
                %370 = sbr.rel target = $region108
              $region107: #{vit_snn_forward.14} parent=81 // pred_region
                _
              $region108: #{vit_snn_forward.14} parent=81 // pred_fallthru
                _
            $region82: #{vit_snn_forward.14} parent=77 // pred_fallthru
              _
            // Predicated region
            $region83: #{vit_snn_forward.14} parent=77 // pred_check
              _
            $region84: #{vit_snn_forward.14} parent=77 // pred_check_branch
              %316 = sbr.rel target = $region86
            $region85: #{vit_snn_forward.14} parent=77 // pred_region
              %s318 = ssub.s32 256, 1
              loop: start=0, step=1, limit=1
              $region87: #{vit_snn_forward.14} parent=85 // loop_pre_header
                _
              $region88: #{vit_snn_forward.14} parent=85 // loop_header
                %s320 = sphi 0, %s324
                %p321 = scmp.ge.s32.totalorder %s320, 1
                %s325 = sphi %s310, %s310
                %s326 = sphi %s308, %s308
              $region89: #{vit_snn_forward.14} parent=85 // loop_header_branch
                %323 = sbr.rel (%p321) target = $region93
              $region90: #{vit_snn_forward.14} parent=85 // loop_body
                %v327 = vld [vmem:[%s325] sm:%s318]
                %328 = vst [vmem:[%s326] sm:%s318] %v327
                %v329 = vld [vmem:[%s325 + $0x10] sm:%s318]
                %330 = vst [vmem:[%s326 + $0x8] sm:%s318] %v329
                %v331 = vld [vmem:[%s325 + $0x20] sm:%s318]
                %332 = vst [vmem:[%s326 + $0x10] sm:%s318] %v331
                %v333 = vld [vmem:[%s325 + $0x30] sm:%s318]
                %334 = vst [vmem:[%s326 + $0x18] sm:%s318] %v333
                %v335 = vld [vmem:[%s325 + $0x40] sm:%s318]
                %336 = vst [vmem:[%s326 + $0x20] sm:%s318] %v335
                %v337 = vld [vmem:[%s325 + $0x50] sm:%s318]
                %338 = vst [vmem:[%s326 + $0x28] sm:%s318] %v337
                %v339 = vld [vmem:[%s325 + $0x60] sm:%s318]
                %340 = vst [vmem:[%s326 + $0x30] sm:%s318] %v339
                %v341 = vld [vmem:[%s325 + $0x70] sm:%s318]
                %342 = vst [vmem:[%s326 + $0x38] sm:%s318] %v341
              $region91: #{vit_snn_forward.14} parent=85 // loop_footer
                %s324 = sadd.s32 1, %s320
              $region92: #{vit_snn_forward.14} parent=85 // loop_footer_branch
                %319 = sbr.rel target = $region88
              $region93: #{vit_snn_forward.14} parent=85 // loop_exit
                _
            $region86: #{vit_snn_forward.14} parent=77 // pred_fallthru
              _
          $region78: #{vit_snn_forward.14} parent=73 // pred_fallthru
            _
          %371 = vnop
        $region74: #{vit_snn_forward.14} parent=31 // pred_fallthru
          _
        // Predicated region
        $region109: #{vit_snn_forward.14} parent=31 // pred_check
          %p372 = pneg %p169
        $region110: #{vit_snn_forward.14} parent=31 // pred_check_branch
          %374 = sbr.rel (%p372) target = $region112
        $region111: #{vit_snn_forward.14} parent=31 // pred_region
          %s375 = sand.u32 %s159, 1
          %s376 = sand.u32 %s159, 1
          %s377 = smul.addr %s376, 64
          %s378 = scalar_lea.vmem [#allocation4], %s377
          %s379 = smul.addr %s13, 8
          %s380 = scalar_lea.vmem %s6, %s379
          // Predicated region
          $region113: #{vit_snn_forward.14} parent=111 // pred_check
            _
          $region114: #{vit_snn_forward.14} parent=111 // pred_check_branch
            %382 = sbr.rel (0) target = $region116
          $region115: #{vit_snn_forward.14} parent=111 // pred_region
            // Predicated region
            $region117: #{vit_snn_forward.14} parent=115 // pred_check
              _
            $region118: #{vit_snn_forward.14} parent=115 // pred_check_branch
              %384 = sbr.rel (0) target = $region120
            $region119: #{vit_snn_forward.14} parent=115 // pred_region
              // Predicated region
              $region132: #{vit_snn_forward.14} parent=119 // pred_check
                _
              $region133: #{vit_snn_forward.14} parent=119 // pred_check_branch
                %414 = sbr.rel (0) target = $region135
              $region134: #{vit_snn_forward.14} parent=119 // pred_region
                loop: start=0, step=1, limit=1
                $region136: #{vit_snn_forward.14} parent=134 // loop_pre_header
                  _
                $region137: #{vit_snn_forward.14} parent=134 // loop_header
                  %s416 = sphi 0, %s420
                  %p417 = scmp.ge.s32.totalorder %s416, 1
                  %s421 = sphi %s380, %s380
                  %s422 = sphi %s378, %s378
                $region138: #{vit_snn_forward.14} parent=134 // loop_header_branch
                  %419 = sbr.rel (%p417) target = $region142
                $region139: #{vit_snn_forward.14} parent=134 // loop_body
                  %v423 = vld [vmem:[%s421] sm:$0xff]
                  %424 = vst [vmem:[%s422] sm:$0xff] %v423
                  %v425 = vld [vmem:[%s421 + $0x10] sm:$0xff]
                  %426 = vst [vmem:[%s422 + $0x8] sm:$0xff] %v425
                  %v427 = vld [vmem:[%s421 + $0x20] sm:$0xff]
                  %428 = vst [vmem:[%s422 + $0x10] sm:$0xff] %v427
                  %v429 = vld [vmem:[%s421 + $0x30] sm:$0xff]
                  %430 = vst [vmem:[%s422 + $0x18] sm:$0xff] %v429
                  %v431 = vld [vmem:[%s421 + $0x40] sm:$0xff]
                  %432 = vst [vmem:[%s422 + $0x20] sm:$0xff] %v431
                  %v433 = vld [vmem:[%s421 + $0x50] sm:$0xff]
                  %434 = vst [vmem:[%s422 + $0x28] sm:$0xff] %v433
                  %v435 = vld [vmem:[%s421 + $0x60] sm:$0xff]
                  %436 = vst [vmem:[%s422 + $0x30] sm:$0xff] %v435
                  %v437 = vld [vmem:[%s421 + $0x70] sm:$0xff]
                  %438 = vst [vmem:[%s422 + $0x38] sm:$0xff] %v437
                $region140: #{vit_snn_forward.14} parent=134 // loop_footer
                  %s420 = sadd.s32 1, %s416
                $region141: #{vit_snn_forward.14} parent=134 // loop_footer_branch
                  %415 = sbr.rel target = $region137
                $region142: #{vit_snn_forward.14} parent=134 // loop_exit
                  _
              $region135: #{vit_snn_forward.14} parent=119 // pred_fallthru
                _
              // Predicated region
              $region143: #{vit_snn_forward.14} parent=119 // pred_check
                _
              $region144: #{vit_snn_forward.14} parent=119 // pred_check_branch
                %440 = sbr.rel target = $region146
              $region145: #{vit_snn_forward.14} parent=119 // pred_region
                _
              $region146: #{vit_snn_forward.14} parent=119 // pred_fallthru
                _
            $region120: #{vit_snn_forward.14} parent=115 // pred_fallthru
              _
            // Predicated region
            $region121: #{vit_snn_forward.14} parent=115 // pred_check
              _
            $region122: #{vit_snn_forward.14} parent=115 // pred_check_branch
              %386 = sbr.rel target = $region124
            $region123: #{vit_snn_forward.14} parent=115 // pred_region
              %s388 = ssub.s32 256, 1
              loop: start=0, step=1, limit=1
              $region125: #{vit_snn_forward.14} parent=123 // loop_pre_header
                _
              $region126: #{vit_snn_forward.14} parent=123 // loop_header
                %s390 = sphi 0, %s394
                %p391 = scmp.ge.s32.totalorder %s390, 1
                %s395 = sphi %s380, %s380
                %s396 = sphi %s378, %s378
              $region127: #{vit_snn_forward.14} parent=123 // loop_header_branch
                %393 = sbr.rel (%p391) target = $region131
              $region128: #{vit_snn_forward.14} parent=123 // loop_body
                %v397 = vld [vmem:[%s395] sm:%s388]
                %398 = vst [vmem:[%s396] sm:%s388] %v397
                %v399 = vld [vmem:[%s395 + $0x10] sm:%s388]
                %400 = vst [vmem:[%s396 + $0x8] sm:%s388] %v399
                %v401 = vld [vmem:[%s395 + $0x20] sm:%s388]
                %402 = vst [vmem:[%s396 + $0x10] sm:%s388] %v401
                %v403 = vld [vmem:[%s395 + $0x30] sm:%s388]
                %404 = vst [vmem:[%s396 + $0x18] sm:%s388] %v403
                %v405 = vld [vmem:[%s395 + $0x40] sm:%s388]
                %406 = vst [vmem:[%s396 + $0x20] sm:%s388] %v405
                %v407 = vld [vmem:[%s395 + $0x50] sm:%s388]
                %408 = vst [vmem:[%s396 + $0x28] sm:%s388] %v407
                %v409 = vld [vmem:[%s395 + $0x60] sm:%s388]
                %410 = vst [vmem:[%s396 + $0x30] sm:%s388] %v409
                %v411 = vld [vmem:[%s395 + $0x70] sm:%s388]
                %412 = vst [vmem:[%s396 + $0x38] sm:%s388] %v411
              $region129: #{vit_snn_forward.14} parent=123 // loop_footer
                %s394 = sadd.s32 1, %s390
              $region130: #{vit_snn_forward.14} parent=123 // loop_footer_branch
                %389 = sbr.rel target = $region126
              $region131: #{vit_snn_forward.14} parent=123 // loop_exit
                _
            $region124: #{vit_snn_forward.14} parent=115 // pred_fallthru
              _
          $region116: #{vit_snn_forward.14} parent=111 // pred_fallthru
            _
          %441 = vnop
        $region112: #{vit_snn_forward.14} parent=31 // pred_fallthru
          _
      $region32: #{vit_snn_forward.14} parent=5 // pred_fallthru
        _
      %p442 = scmp.le.s32.totalorder 1, %s13
      %p443 = scmp.lt.s32.totalorder %s13, 3
      %p444 = pnand %p442, %p443
      %p445 = pneg %p444
      // Predicated region
      $region147: #{vit_snn_forward.14} parent=5 // pred_check
        _
      $region148: #{vit_snn_forward.14} parent=5 // pred_check_branch
        %447 = sbr.rel (%p444) target = $region150
      $region149: #{vit_snn_forward.14} parent=5 // pred_region
        %s448 = ssub.s32 %s13, 1
        %s449 = sand.u32 %s26, 1
        %s450 = sand.u32 %s26, 1
        %s451 = smul.addr %s450, 64
        %s452 = scalar_lea.vmem [#allocation2], %s451
        // Predicated region
        $region151: #{vit_snn_forward.14} parent=149 // pred_check
          %p453 = pneg %p39
        $region152: #{vit_snn_forward.14} parent=149 // pred_check_branch
          %455 = sbr.rel (%p453) target = $region154
        $region153: #{vit_snn_forward.14} parent=149 // pred_region
          _
        $region154: #{vit_snn_forward.14} parent=149 // pred_fallthru
          _
        %s456 = sand.u32 %s94, 1
        %s457 = sand.u32 %s94, 1
        %s458 = smul.addr %s457, 64
        %s459 = scalar_lea.vmem [#allocation3], %s458
        // Predicated region
        $region155: #{vit_snn_forward.14} parent=149 // pred_check
          %p460 = pneg %p107
        $region156: #{vit_snn_forward.14} parent=149 // pred_check_branch
          %462 = sbr.rel (%p460) target = $region158
        $region157: #{vit_snn_forward.14} parent=149 // pred_region
          _
        $region158: #{vit_snn_forward.14} parent=149 // pred_fallthru
          _
        %s463 = sand.u32 %s162, 1
        %s464 = sand.u32 %s162, 1
        %s465 = smul.addr %s464, 64
        %s466 = scalar_lea.vmem [#allocation4], %s465
        // Predicated region
        $region159: #{vit_snn_forward.14} parent=149 // pred_check
          %p467 = pneg %p175
        $region160: #{vit_snn_forward.14} parent=149 // pred_check_branch
          %469 = sbr.rel (%p467) target = $region162
        $region161: #{vit_snn_forward.14} parent=149 // pred_region
          _
        $region162: #{vit_snn_forward.14} parent=149 // pred_fallthru
          _
        %s470 = sand.u32 %s26, 1
        %s471 = sand.u32 %s26, 1
        %s472 = smul.addr %s471, 64
        %s473 = scalar_lea.vmem [#allocation2], %s472
        %p474 = pneg %p39
        %p475 = pneg %p36
        %p476 = pneg %p60
        %p477 = pneg %p57
        %p478 = pneg %p81
        %p479 = pneg %p78
        %s480 = sand.u32 %s94, 1
        %s481 = sand.u32 %s94, 1
        %s482 = smul.addr %s481, 64
        %s483 = scalar_lea.vmem [#allocation3], %s482
        %p484 = pneg %p107
        %p485 = pneg %p104
        %p486 = pneg %p128
        %p487 = pneg %p125
        %p488 = pneg %p149
        %p489 = pneg %p146
        %s490 = sand.u32 %s162, 1
        %s491 = sand.u32 %s162, 1
        %s492 = smul.addr %s491, 64
        %s493 = scalar_lea.vmem [#allocation4], %s492
        %p494 = pneg %p175
        %p495 = pneg %p172
        %p496 = pneg %p201
        %p497 = pneg %p198
        %s498 = sand.u32 %s188, 1
        %s499 = sand.u32 %s188, 1
        %s500 = smul.addr %s499, 64
        %s501 = scalar_lea.vmem [#allocation5], %s500
        %v502 = vld [vmem:[%s459] sm:$0xff]
        %v503 = vld [vmem:[%s459 + $0x8] sm:$0xff]
        %v504 = vld [vmem:[%s459 + $0x10] sm:$0xff]
        %v505 = vld [vmem:[%s459 + $0x18] sm:$0xff]
        %v506 = vld [vmem:[%s459 + $0x20] sm:$0xff]
        %v507 = vld [vmem:[%s459 + $0x28] sm:$0xff]
        %v508 = vld [vmem:[%s459 + $0x30] sm:$0xff]
        %v509 = vld [vmem:[%s459 + $0x38] sm:$0xff]
        %v510 = vld [vmem:[%s4] sm:$0xff]
        %v511 = vld [vmem:[%s4 + $0x8] sm:$0xff]
        %v512 = vld [vmem:[%s4 + $0x10] sm:$0xff]
        %v513 = vld [vmem:[%s4 + $0x18] sm:$0xff]
        %515 = vset.pattern.permute.xlu0 0
        %516 = vperm.xlu0 %515, %v510
        %v517 = vpop.permute.xlu0 %516
        %520 = vset.pattern.permute.xlu0 0
        %521 = vperm.xlu0 %520, %v511
        %v522 = vpop.permute.xlu0 %521
        %525 = vset.pattern.permute.xlu0 0
        %526 = vperm.xlu0 %525, %v512
        %v527 = vpop.permute.xlu0 %526
        %530 = vset.pattern.permute.xlu0 0
        %531 = vperm.xlu0 %530, %v513
        %v532 = vpop.permute.xlu0 %531
        %v534 = vmul.f32 %v502, %v517
        %v535 = vmul.f32 %v503, %v522
        %v536 = vmul.f32 %v504, %v527
        %v537 = vmul.f32 %v505, %v532
        %v538 = vmul.f32 %v506, %v517
        %v539 = vmul.f32 %v507, %v522
        %v540 = vmul.f32 %v508, %v527
        %v541 = vmul.f32 %v509, %v532
        %v542 = vld [vmem:[%s5] sm:$0xff]
        %v543 = vld [vmem:[%s5 + $0x8] sm:$0xff]
        %v544 = vld [vmem:[%s5 + $0x10] sm:$0xff]
        %v545 = vld [vmem:[%s5 + $0x18] sm:$0xff]
        %547 = vset.pattern.permute.xlu0 0
        %548 = vperm.xlu0 %547, %v542
        %v549 = vpop.permute.xlu0 %548
        %552 = vset.pattern.permute.xlu0 0
        %553 = vperm.xlu0 %552, %v543
        %v554 = vpop.permute.xlu0 %553
        %557 = vset.pattern.permute.xlu0 0
        %558 = vperm.xlu0 %557, %v544
        %v559 = vpop.permute.xlu0 %558
        %562 = vset.pattern.permute.xlu0 0
        %563 = vperm.xlu0 %562, %v545
        %v564 = vpop.permute.xlu0 %563
        %v566 = vadd.f32 %v534, %v549
        %v567 = vadd.f32 %v535, %v554
        %v568 = vadd.f32 %v536, %v559
        %v569 = vadd.f32 %v537, %v564
        %v570 = vadd.f32 %v538, %v549
        %v571 = vadd.f32 %v539, %v554
        %v572 = vadd.f32 %v540, %v559
        %v573 = vadd.f32 %v541, %v564
        %v574 = vld [vmem:[%s466] sm:$0xff]
        %v575 = vld [vmem:[%s466 + $0x8] sm:$0xff]
        %v576 = vld [vmem:[%s466 + $0x10] sm:$0xff]
        %v577 = vld [vmem:[%s466 + $0x18] sm:$0xff]
        %v578 = vld [vmem:[%s466 + $0x20] sm:$0xff]
        %v579 = vld [vmem:[%s466 + $0x28] sm:$0xff]
        %v580 = vld [vmem:[%s466 + $0x30] sm:$0xff]
        %v581 = vld [vmem:[%s466 + $0x38] sm:$0xff]
        %v582 = vadd.f32 %v566, %v574
        %v583 = vadd.f32 %v567, %v575
        %v584 = vadd.f32 %v568, %v576
        %v585 = vadd.f32 %v569, %v577
        %v586 = vadd.f32 %v570, %v578
        %v587 = vadd.f32 %v571, %v579
        %v588 = vadd.f32 %v572, %v580
        %v589 = vadd.f32 %v573, %v581
        %v590 = vld [vmem:[%s452] sm:$0xff]
        %v591 = vld [vmem:[%s452 + $0x8] sm:$0xff]
        %v592 = vld [vmem:[%s452 + $0x10] sm:$0xff]
        %v593 = vld [vmem:[%s452 + $0x18] sm:$0xff]
        %v594 = vld [vmem:[%s452 + $0x20] sm:$0xff]
        %v595 = vld [vmem:[%s452 + $0x28] sm:$0xff]
        %v596 = vld [vmem:[%s452 + $0x30] sm:$0xff]
        %v597 = vld [vmem:[%s452 + $0x38] sm:$0xff]
        %v598 = vld [vmem:[%s1] sm:$0xff]
        %v599 = vld [vmem:[%s1 + $0x8] sm:$0xff]
        %v600 = vld [vmem:[%s1 + $0x10] sm:$0xff]
        %v601 = vld [vmem:[%s1 + $0x18] sm:$0xff]
        %603 = vset.pattern.permute.xlu0 0
        %604 = vperm.xlu0 %603, %v598
        %v605 = vpop.permute.xlu0 %604
        %608 = vset.pattern.permute.xlu0 0
        %609 = vperm.xlu0 %608, %v599
        %v610 = vpop.permute.xlu0 %609
        %613 = vset.pattern.permute.xlu0 0
        %614 = vperm.xlu0 %613, %v600
        %v615 = vpop.permute.xlu0 %614
        %618 = vset.pattern.permute.xlu0 0
        %619 = vperm.xlu0 %618, %v601
        %v620 = vpop.permute.xlu0 %619
        %v622 = vmul.f32 %v590, %v605
        %v623 = vmul.f32 %v591, %v610
        %v624 = vmul.f32 %v592, %v615
        %v625 = vmul.f32 %v593, %v620
        %v626 = vmul.f32 %v594, %v605
        %v627 = vmul.f32 %v595, %v610
        %v628 = vmul.f32 %v596, %v615
        %v629 = vmul.f32 %v597, %v620
        %v630 = vld [vmem:[%s2] sm:$0xff]
        %v631 = vld [vmem:[%s2 + $0x8] sm:$0xff]
        %v632 = vld [vmem:[%s2 + $0x10] sm:$0xff]
        %v633 = vld [vmem:[%s2 + $0x18] sm:$0xff]
        %635 = vset.pattern.permute.xlu0 0
        %636 = vperm.xlu0 %635, %v630
        %v637 = vpop.permute.xlu0 %636
        %640 = vset.pattern.permute.xlu0 0
        %641 = vperm.xlu0 %640, %v631
        %v642 = vpop.permute.xlu0 %641
        %645 = vset.pattern.permute.xlu0 0
        %646 = vperm.xlu0 %645, %v632
        %v647 = vpop.permute.xlu0 %646
        %650 = vset.pattern.permute.xlu0 0
        %651 = vperm.xlu0 %650, %v633
        %v652 = vpop.permute.xlu0 %651
        %v654 = vadd.f32 %v622, %v637
        %v655 = vadd.f32 %v623, %v642
        %v656 = vadd.f32 %v624, %v647
        %v657 = vadd.f32 %v625, %v652
        %v658 = vadd.f32 %v626, %v637
        %v659 = vadd.f32 %v627, %v642
        %v660 = vadd.f32 %v628, %v647
        %v661 = vadd.f32 %v629, %v652
        %v662 = vadd.f32 %v654, %v582
        %v663 = vadd.f32 %v655, %v583
        %v664 = vadd.f32 %v656, %v584
        %v665 = vadd.f32 %v657, %v585
        %v666 = vadd.f32 %v658, %v586
        %v667 = vadd.f32 %v659, %v587
        %v668 = vadd.f32 %v660, %v588
        %v669 = vadd.f32 %v661, %v589
        %670 = vst [vmem:[%s501] sm:$0xff] %v662
        %671 = vst [vmem:[%s501 + $0x8] sm:$0xff] %v663
        %672 = vst [vmem:[%s501 + $0x10] sm:$0xff] %v664
        %673 = vst [vmem:[%s501 + $0x18] sm:$0xff] %v665
        %674 = vst [vmem:[%s501 + $0x20] sm:$0xff] %v666
        %675 = vst [vmem:[%s501 + $0x28] sm:$0xff] %v667
        %676 = vst [vmem:[%s501 + $0x30] sm:$0xff] %v668
        %677 = vst [vmem:[%s501 + $0x38] sm:$0xff] %v669
        %s678 = sand.u32 %s188, 1
        %s679 = sand.u32 %s188, 1
        %s680 = smul.addr %s679, 64
        %s681 = scalar_lea.vmem [#allocation5], %s680
        // Predicated region
        $region163: #{vit_snn_forward.14} parent=149 // pred_check
          %p682 = pneg %p198
        $region164: #{vit_snn_forward.14} parent=149 // pred_check_branch
          %684 = sbr.rel (%p682) target = $region166
        $region165: #{vit_snn_forward.14} parent=149 // pred_region
          %s685 = smul.addr %s18, 8
          %s686 = scalar_lea.vmem %s7, %s685
          // Predicated region
          $region167: #{vit_snn_forward.14} parent=165 // pred_check
            _
          $region168: #{vit_snn_forward.14} parent=165 // pred_check_branch
            %688 = sbr.rel (0) target = $region170
          $region169: #{vit_snn_forward.14} parent=165 // pred_region
            // Predicated region
            $region171: #{vit_snn_forward.14} parent=169 // pred_check
              _
            $region172: #{vit_snn_forward.14} parent=169 // pred_check_branch
              %690 = sbr.rel (0) target = $region174
            $region173: #{vit_snn_forward.14} parent=169 // pred_region
              // Predicated region
              $region186: #{vit_snn_forward.14} parent=173 // pred_check
                _
              $region187: #{vit_snn_forward.14} parent=173 // pred_check_branch
                %720 = sbr.rel (0) target = $region189
              $region188: #{vit_snn_forward.14} parent=173 // pred_region
                loop: start=0, step=1, limit=1
                $region190: #{vit_snn_forward.14} parent=188 // loop_pre_header
                  _
                $region191: #{vit_snn_forward.14} parent=188 // loop_header
                  %s722 = sphi 0, %s726
                  %p723 = scmp.ge.s32.totalorder %s722, 1
                  %s727 = sphi %s681, %s681
                  %s728 = sphi %s686, %s686
                $region192: #{vit_snn_forward.14} parent=188 // loop_header_branch
                  %725 = sbr.rel (%p723) target = $region196
                $region193: #{vit_snn_forward.14} parent=188 // loop_body
                  %v729 = vld [vmem:[%s727] sm:$0xff]
                  %730 = vst [vmem:[%s728] sm:$0xff] %v729
                  %v731 = vld [vmem:[%s727 + $0x8] sm:$0xff]
                  %732 = vst [vmem:[%s728 + $0x10] sm:$0xff] %v731
                  %v733 = vld [vmem:[%s727 + $0x10] sm:$0xff]
                  %734 = vst [vmem:[%s728 + $0x20] sm:$0xff] %v733
                  %v735 = vld [vmem:[%s727 + $0x18] sm:$0xff]
                  %736 = vst [vmem:[%s728 + $0x30] sm:$0xff] %v735
                  %v737 = vld [vmem:[%s727 + $0x20] sm:$0xff]
                  %738 = vst [vmem:[%s728 + $0x40] sm:$0xff] %v737
                  %v739 = vld [vmem:[%s727 + $0x28] sm:$0xff]
                  %740 = vst [vmem:[%s728 + $0x50] sm:$0xff] %v739
                  %v741 = vld [vmem:[%s727 + $0x30] sm:$0xff]
                  %742 = vst [vmem:[%s728 + $0x60] sm:$0xff] %v741
                  %v743 = vld [vmem:[%s727 + $0x38] sm:$0xff]
                  %744 = vst [vmem:[%s728 + $0x70] sm:$0xff] %v743
                $region194: #{vit_snn_forward.14} parent=188 // loop_footer
                  %s726 = sadd.s32 1, %s722
                $region195: #{vit_snn_forward.14} parent=188 // loop_footer_branch
                  %721 = sbr.rel target = $region191
                $region196: #{vit_snn_forward.14} parent=188 // loop_exit
                  _
              $region189: #{vit_snn_forward.14} parent=173 // pred_fallthru
                _
              // Predicated region
              $region197: #{vit_snn_forward.14} parent=173 // pred_check
                _
              $region198: #{vit_snn_forward.14} parent=173 // pred_check_branch
                %746 = sbr.rel target = $region200
              $region199: #{vit_snn_forward.14} parent=173 // pred_region
                _
              $region200: #{vit_snn_forward.14} parent=173 // pred_fallthru
                _
            $region174: #{vit_snn_forward.14} parent=169 // pred_fallthru
              _
            // Predicated region
            $region175: #{vit_snn_forward.14} parent=169 // pred_check
              _
            $region176: #{vit_snn_forward.14} parent=169 // pred_check_branch
              %692 = sbr.rel target = $region178
            $region177: #{vit_snn_forward.14} parent=169 // pred_region
              %s694 = ssub.s32 256, 1
              loop: start=0, step=1, limit=1
              $region179: #{vit_snn_forward.14} parent=177 // loop_pre_header
                _
              $region180: #{vit_snn_forward.14} parent=177 // loop_header
                %s696 = sphi 0, %s700
                %p697 = scmp.ge.s32.totalorder %s696, 1
                %s701 = sphi %s681, %s681
                %s702 = sphi %s686, %s686
              $region181: #{vit_snn_forward.14} parent=177 // loop_header_branch
                %699 = sbr.rel (%p697) target = $region185
              $region182: #{vit_snn_forward.14} parent=177 // loop_body
                %v703 = vld [vmem:[%s701] sm:%s694]
                %704 = vst [vmem:[%s702] sm:%s694] %v703
                %v705 = vld [vmem:[%s701 + $0x8] sm:%s694]
                %706 = vst [vmem:[%s702 + $0x10] sm:%s694] %v705
                %v707 = vld [vmem:[%s701 + $0x10] sm:%s694]
                %708 = vst [vmem:[%s702 + $0x20] sm:%s694] %v707
                %v709 = vld [vmem:[%s701 + $0x18] sm:%s694]
                %710 = vst [vmem:[%s702 + $0x30] sm:%s694] %v709
                %v711 = vld [vmem:[%s701 + $0x20] sm:%s694]
                %712 = vst [vmem:[%s702 + $0x40] sm:%s694] %v711
                %v713 = vld [vmem:[%s701 + $0x28] sm:%s694]
                %714 = vst [vmem:[%s702 + $0x50] sm:%s694] %v713
                %v715 = vld [vmem:[%s701 + $0x30] sm:%s694]
                %716 = vst [vmem:[%s702 + $0x60] sm:%s694] %v715
                %v717 = vld [vmem:[%s701 + $0x38] sm:%s694]
                %718 = vst [vmem:[%s702 + $0x70] sm:%s694] %v717
              $region183: #{vit_snn_forward.14} parent=177 // loop_footer
                %s700 = sadd.s32 1, %s696
              $region184: #{vit_snn_forward.14} parent=177 // loop_footer_branch
                %695 = sbr.rel target = $region180
              $region185: #{vit_snn_forward.14} parent=177 // loop_exit
                _
            $region178: #{vit_snn_forward.14} parent=169 // pred_fallthru
              _
          $region170: #{vit_snn_forward.14} parent=165 // pred_fallthru
            _
          %747 = vnop
        $region166: #{vit_snn_forward.14} parent=149 // pred_fallthru
          _
      $region150: #{vit_snn_forward.14} parent=5 // pred_fallthru
        _
      %p748 = scmp.le.s32.totalorder 2, %s13
      // Predicated region
      $region201: #{vit_snn_forward.14} parent=5 // pred_check
        %p749 = pneg %p748
      $region202: #{vit_snn_forward.14} parent=5 // pred_check_branch
        %751 = sbr.rel (%p749) target = $region204
      $region203: #{vit_snn_forward.14} parent=5 // pred_region
        %s752 = ssub.s32 %s13, 2
        // Predicated region
        $region205: #{vit_snn_forward.14} parent=203 // pred_check
          %p753 = pneg %p204
        $region206: #{vit_snn_forward.14} parent=203 // pred_check_branch
          %755 = sbr.rel (%p753) target = $region208
        $region207: #{vit_snn_forward.14} parent=203 // pred_region
          %s756 = sand.u32 %s189, 1
          %s757 = sand.u32 %s189, 1
          %s758 = smul.addr %s757, 64
          %s759 = scalar_lea.vmem [#allocation5], %s758
        $region208: #{vit_snn_forward.14} parent=203 // pred_fallthru
          _
      $region204: #{vit_snn_forward.14} parent=5 // pred_fallthru
        _
    $region6: #{vit_snn_forward.14} parent=1 // loop_footer
      %s17 = sadd.s32 1, %s13
    $region7: #{vit_snn_forward.14} parent=1 // loop_footer_branch
      %12 = sbr.rel target = $region3
    $region8: #{vit_snn_forward.14} parent=1 // loop_exit
      _

</llo_original>
